<compile_context>
chip_gen: v7x
topology: tpu7x:2x2x1
jax: 0.10.0
libtpu: 0.0.40
codegen_flags: <defaults>
</compile_context>

<pallas_src>
import functools

import jax
import jax.numpy as jnp
import numpy as np
from jax.experimental import pallas as pl
from jax.experimental.pallas import tpu as pltpu


def _round_up(x, m):
    return (x + m - 1) // m * m


def _apply_act(x, act):
    if act == "relu":
        return jnp.maximum(x, 0.0)
    if act == "leakyrelu":
        # The PyTorch module explicitly uses nn.LeakyReLU(negative_slope=0.2).
        return jnp.where(x >= 0.0, x, 0.2 * x)
    if act == "tanh":
        return jnp.tanh(x)
    if act == "sigmoid":
        return jax.nn.sigmoid(x)
    if act == "linear":
        return x
    raise ValueError(act)


# ---------------------------------------------------------------------------
# In-kernel helpers (operate on VMEM-resident traced values)
# ---------------------------------------------------------------------------
def _decimate(x, axis, offset, stride, out_size):
    """Select x[..., offset + stride*a, ...] for a in [0, out_size) on a LEADING axis.

    stride in {1, 2}.  The stride-2 path avoids strided slices: pad the axis to
    even length, split it into (half, 2) (a free leading-dim reshape), then take
    a static slice plus a parity index.
    """
    if stride == 1:
        return jax.lax.slice_in_dim(x, offset, offset + out_size, axis=axis)
    assert stride == 2
    if x.shape[axis] % 2:
        pad_shape = list(x.shape)
        pad_shape[axis] = 1
        x = jnp.concatenate([x, jnp.zeros(pad_shape, x.dtype)], axis=axis)
    d = x.shape[axis]
    x = x.reshape(x.shape[:axis] + (d // 2, 2) + x.shape[axis + 1:])
    q0, parity = offset // 2, offset % 2
    assert q0 + out_size <= d // 2
    idx = [slice(None)] * x.ndim
    idx[axis] = slice(q0, q0 + out_size)
    idx[axis + 1] = parity
    return x[tuple(idx)]


def _conv_layer(h, w_mat, bias, *, ksize, stride, act):
    """One Conv2d (VALID padding) + bias + activation, fully in VMEM.

    h:     (H, W, N, C) float32 activation (channels in the lane dim).
    w_mat: (K_pad, O) bfloat16; K is laid out (kh, kw, C) with zero rows
           appended so K_pad is a multiple of 128.
    bias:  (1, O) float32.
    Returns (Ho, Wo, N, O) float32.
    """
    H, W, N, C = h.shape
    Ho = (H - ksize) // stride + 1
    Wo = (W - ksize) // stride + 1
    O = w_mat.shape[1]
    k_real = ksize * ksize * C

    if C == 1:
        # Tiny contraction (K = k*k <= 9): do it as broadcast FMAs on the VPU
        # instead of a barely-utilized MXU pass.  Operands are bf16-rounded so
        # numerics match the bf16 MXU path / reference (products exact in f32).
        w_rows = w_mat.astype(jnp.float32)                      # (K_pad, O)
        acc = jnp.zeros((Ho, Wo, N, O), jnp.float32)
        t = 0
        for i in range(ksize):
            hi = _decimate(h, 0, i, stride, Ho)
            for j in range(ksize):
                tap = _decimate(hi, 1, j, stride, Wo)           # (Ho, Wo, N, 1)
                tap32 = tap.astype(jnp.bfloat16).astype(jnp.float32)
                acc = acc + tap32 * w_rows[t:t + 1, :]          # -> (Ho, Wo, N, O)
                t += 1
    else:
        # im2col: gather the k*k taps (each (Ho, Wo, N, C)), concat on lanes.
        taps = []
        for i in range(ksize):
            hi = _decimate(h, 0, i, stride, Ho)
            for j in range(ksize):
                taps.append(_decimate(hi, 1, j, stride, Wo))
        a = jnp.concatenate(taps, axis=-1)                      # (Ho, Wo, N, k*k*C)
        rows = Ho * Wo * N
        a = a.reshape(rows, k_real).astype(jnp.bfloat16)

        k_pad = w_mat.shape[0]
        rows_pad = _round_up(rows, 8)
        if k_pad > k_real:                                      # lane-align K
            a = jnp.concatenate(
                [a, jnp.zeros((rows, k_pad - k_real), jnp.bfloat16)], axis=1)
        if rows_pad > rows:                                     # sublane-align M
            a = jnp.concatenate(
                [a, jnp.zeros((rows_pad - rows, k_pad), jnp.bfloat16)], axis=0)

        # bf16 x bf16 -> f32 accumulate on the MXU (single pass).
        acc = jnp.dot(a, w_mat, preferred_element_type=jnp.float32)
        acc = acc[:rows].reshape(Ho, Wo, N, O)

    acc = acc + bias.reshape(1, 1, 1, O)
    return _apply_act(acc, act)


def _convnet28_kernel(*refs, layer_cfg, activation, out_activation):
    x_ref, o_ref = refs[0], refs[-1]
    wb_refs = refs[1:-1]
    h = x_ref[...]                                              # (H, W, Nblk, C_in) f32
    n_layers = len(layer_cfg)
    for li, (ksize, stride) in enumerate(layer_cfg):
        w_ref = wb_refs[2 * li]
        b_ref = wb_refs[2 * li + 1]
        act = out_activation if li == n_layers - 1 else activation
        h = _conv_layer(h, w_ref[...], b_ref[...],
                        ksize=ksize, stride=stride, act=act)
    # For a 28x28 input the final feature map is 1x1: h is (1, 1, Nblk, out_chan).
    o_ref[...] = h.reshape(o_ref.shape).astype(o_ref.dtype)


# ---------------------------------------------------------------------------
# Host-side wrapper
# ---------------------------------------------------------------------------
def _flatten_weight(w):
    """(O, C, kh, kw) -> (K_pad, O) bf16 with K laid out (kh, kw, C) and
    zero-padded to a multiple of 128 (lane aligned)."""
    o, c, kh, kw = w.shape
    k = kh * kw * c
    wm = jnp.transpose(w, (2, 3, 1, 0)).reshape(k, o)
    k_pad = _round_up(k, 128)
    if k_pad > k:
        wm = jnp.concatenate([wm, jnp.zeros((k_pad - k, o), wm.dtype)], axis=0)
    return wm.astype(jnp.bfloat16)


def convnet28_forward(params, x, activation="relu", out_activation="linear"):
    """x: (N, in_chan, 28, 28) NCHW (PyTorch convention) -> (N, out_chan)."""
    n, c_in, hh, ww = x.shape
    strides = (2, 2, 2, 2, 1)
    ksizes = tuple(int(w.shape[2]) for (w, _) in params)
    out_chan = int(params[-1][0].shape[0])

    # One-time host-side prep (tiny): channels-last / batch-in-sublane input
    # layout and pre-flattened bf16 weights for the in-kernel GEMMs.
    x_hwnc = jnp.transpose(x, (2, 3, 0, 1)).astype(jnp.float32)   # (H, W, N, C_in)
    flat_args = []
    for (w, b) in params:
        flat_args.append(_flatten_weight(w))
        flat_args.append(b.reshape(1, -1).astype(jnp.float32))

    # Batch-block the grid: bounds per-step VMEM and lets large batches
    # pipeline / split across TensorCores (v7x) via "parallel" semantics.
    nb = n if n <= 8 else 8
    assert n % nb == 0, "wrapper assumes batch % 8 == 0 when batch > 8"
    grid = (n // nb,)

    in_specs = [pl.BlockSpec((hh, ww, nb, c_in), lambda b: (0, 0, b, 0))]
    for arr in flat_args:                                         # all 2-D, resident
        in_specs.append(pl.BlockSpec(arr.shape, lambda b: (0, 0)))
    out_specs = pl.BlockSpec((nb, out_chan), lambda b: (b, 0))

    kernel = functools.partial(
        _convnet28_kernel,
        layer_cfg=tuple(zip(ksizes, strides)),
        activation=activation,
        out_activation=out_activation,
    )
    return pl.pallas_call(
        kernel,
        out_shape=jax.ShapeDtypeStruct((n, out_chan), jnp.float32),
        grid=grid,
        in_specs=in_specs,
        out_specs=out_specs,
        compiler_params=pltpu.CompilerParams(
            dimension_semantics=("parallel",),
            vmem_limit_bytes=48 * 1024 * 1024,
        ),
    )(x_hwnc, *flat_args)


# ---------------------------------------------------------------------------
# Parameters + pure-JAX reference (precision-matched: bf16 operands, f32 acc)
# ---------------------------------------------------------------------------
def init_convnet28_params(key, in_chan=1, out_chan=64, nh=32):
    """Deterministic Kaiming-uniform-style init (like nn.Conv2d defaults)."""
    specs = [
        (nh * 4, in_chan, 3),
        (nh * 8, nh * 4, 3),
        (nh * 16, nh * 8, 3),
        (nh * 32, nh * 16, 2),
        (out_chan, nh * 32, 1),
    ]
    params = []
    for (oc, ic, k) in specs:
        key, kw_, kb_ = jax.random.split(key, 3)
        fan_in = ic * k * k
        bound = 1.0 / np.sqrt(fan_in)
        w = jax.random.uniform(kw_, (oc, ic, k, k), jnp.float32, -bound, bound)
        b = jax.random.uniform(kb_, (oc,), jnp.float32, -bound, bound)
        params.append((w, b))
    return params


def convnet28_reference(params, x, activation="relu", out_activation="linear"):
    """Pure-JAX reference with matching numerics (bf16 operands, f32 accum)."""
    strides = (2, 2, 2, 2, 1)
    h = x.astype(jnp.float32)
    for li, ((w, b), s) in enumerate(zip(params, strides)):
        h = jax.lax.conv_general_dilated(
            h.astype(jnp.bfloat16), w.astype(jnp.bfloat16),
            window_strides=(s, s), padding="VALID",
            dimension_numbers=("NCHW", "OIHW", "NCHW"),
            preferred_element_type=jnp.float32,
        ) + b.reshape(1, -1, 1, 1).astype(jnp.float32)
        act = out_activation if li == len(params) - 1 else activation
        h = _apply_act(h, act)
    return h.squeeze(3).squeeze(2)


if __name__ == "__main__":
    # Architecture requires 28x28 spatial input so the final feature map is 1x1.
    batch, in_chan, nh, out_chan = 2, 1, 8, 16

    key = jax.random.PRNGKey(0)
    key, kx = jax.random.split(key)
    x = jax.random.normal(kx, (batch, in_chan, 28, 28), jnp.float32)
    params = init_convnet28_params(key, in_chan=in_chan, out_chan=out_chan, nh=nh)

    fwd = jax.jit(convnet28_forward)
    out = jax.block_until_ready(fwd(params, x))
    assert out.shape == (batch, out_chan), out.shape

    ref = jax.block_until_ready(convnet28_reference(params, x))
    np.testing.assert_allclose(np.asarray(out), np.asarray(ref), rtol=1e-3, atol=1e-3)

    print("KERNEL_OK")
</pallas_src>

<mosaic_0001>
module attributes {stable_mosaic.version = 11 : i64} {
  func.func @_convnet28_kernel(%arg0: i32, %arg1: memref<28x28x2x1xf32, #tpu.memory_space<vmem>>, %arg2: memref<128x32xbf16, #tpu.memory_space<vmem>>, %arg3: memref<1x32xf32, #tpu.memory_space<vmem>>, %arg4: memref<384x64xbf16, #tpu.memory_space<vmem>>, %arg5: memref<1x64xf32, #tpu.memory_space<vmem>>, %arg6: memref<640x128xbf16, #tpu.memory_space<vmem>>, %arg7: memref<1x128xf32, #tpu.memory_space<vmem>>, %arg8: memref<512x256xbf16, #tpu.memory_space<vmem>>, %arg9: memref<1x256xf32, #tpu.memory_space<vmem>>, %arg10: memref<256x16xbf16, #tpu.memory_space<vmem>>, %arg11: memref<1x16xf32, #tpu.memory_space<vmem>>, %arg12: memref<2x16xf32, #tpu.memory_space<vmem>>) attributes {dimension_semantics = [#tpu.dimension_semantics<parallel>], iteration_bounds = array<i64: 1>, scalar_prefetch = 0 : i64, scratch_operands = 0 : i64, tpu.core_type = #tpu.core_type<tc>, window_params = [{transform_indices = @transform_0, window_bounds = array<i64: 28, 28, 2, 1>}, {pipeline_mode = #tpu.pipeline_mode<synchronous>, transform_indices = @transform_1, window_bounds = array<i64: 128, 32>}, {pipeline_mode = #tpu.pipeline_mode<synchronous>, transform_indices = @transform_2, window_bounds = array<i64: 1, 32>}, {pipeline_mode = #tpu.pipeline_mode<synchronous>, transform_indices = @transform_3, window_bounds = array<i64: 384, 64>}, {pipeline_mode = #tpu.pipeline_mode<synchronous>, transform_indices = @transform_4, window_bounds = array<i64: 1, 64>}, {pipeline_mode = #tpu.pipeline_mode<synchronous>, transform_indices = @transform_5, window_bounds = array<i64: 640, 128>}, {pipeline_mode = #tpu.pipeline_mode<synchronous>, transform_indices = @transform_6, window_bounds = array<i64: 1, 128>}, {pipeline_mode = #tpu.pipeline_mode<synchronous>, transform_indices = @transform_7, window_bounds = array<i64: 512, 256>}, {pipeline_mode = #tpu.pipeline_mode<synchronous>, transform_indices = @transform_8, window_bounds = array<i64: 1, 256>}, {pipeline_mode = #tpu.pipeline_mode<synchronous>, transform_indices = @transform_9, window_bounds = array<i64: 256, 16>}, {pipeline_mode = #tpu.pipeline_mode<synchronous>, transform_indices = @transform_10, window_bounds = array<i64: 1, 16>}, {transform_indices = @transform_11, window_bounds = array<i64: 2, 16>}]} {
    %c0 = arith.constant 0 : index
    %c0_0 = arith.constant 0 : index
    %c0_1 = arith.constant 0 : index
    %c0_2 = arith.constant 0 : index
    %0 = vector.load %arg1[%c0, %c0_0, %c0_1, %c0_2] : memref<28x28x2x1xf32, #tpu.memory_space<vmem>>, vector<28x28x2x1xf32>
    %c0_3 = arith.constant 0 : index
    %c0_4 = arith.constant 0 : index
    %1 = vector.load %arg2[%c0_3, %c0_4] : memref<128x32xbf16, #tpu.memory_space<vmem>>, vector<128x32xbf16>
    %c0_5 = arith.constant 0 : index
    %c0_6 = arith.constant 0 : index
    %2 = vector.load %arg3[%c0_5, %c0_6] : memref<1x32xf32, #tpu.memory_space<vmem>>, vector<1x32xf32>
    %3 = arith.extf %1 : vector<128x32xbf16> to vector<128x32xf32>
    %cst = arith.constant 0.000000e+00 : f32
    %4 = vector.broadcast %cst : f32 to vector<13x13x2x32xf32>
    %5 = vector.shape_cast %0 : vector<28x28x2x1xf32> to vector<14x2x28x2x1xf32>
    %6 = vector.extract_strided_slice %5 {offsets = [0, 0, 0, 0, 0], sizes = [13, 1, 28, 2, 1], strides = [1, 1, 1, 1, 1]} : vector<14x2x28x2x1xf32> to vector<13x1x28x2x1xf32>
    %7 = vector.shape_cast %6 : vector<13x1x28x2x1xf32> to vector<13x28x2x1xf32>
    %8 = vector.shape_cast %7 : vector<13x28x2x1xf32> to vector<13x14x2x2x1xf32>
    %9 = vector.extract_strided_slice %8 {offsets = [0, 0, 0, 0, 0], sizes = [13, 13, 1, 2, 1], strides = [1, 1, 1, 1, 1]} : vector<13x14x2x2x1xf32> to vector<13x13x1x2x1xf32>
    %10 = vector.shape_cast %9 : vector<13x13x1x2x1xf32> to vector<13x13x2x1xf32>
    %11 = arith.truncf %10 : vector<13x13x2x1xf32> to vector<13x13x2x1xbf16>
    %12 = arith.extf %11 : vector<13x13x2x1xbf16> to vector<13x13x2x1xf32>
    %13 = vector.extract_strided_slice %3 {offsets = [0, 0], sizes = [1, 32], strides = [1, 1]} : vector<128x32xf32> to vector<1x32xf32>
    %14 = vector.shape_cast %13 : vector<1x32xf32> to vector<1x1x1x32xf32>
    %15 = vector.broadcast %12 : vector<13x13x2x1xf32> to vector<13x13x2x32xf32>
    %16 = vector.broadcast %14 : vector<1x1x1x32xf32> to vector<13x13x2x32xf32>
    %17 = arith.mulf %15, %16 : vector<13x13x2x32xf32>
    %18 = arith.addf %4, %17 : vector<13x13x2x32xf32>
    %19 = vector.shape_cast %7 : vector<13x28x2x1xf32> to vector<13x14x2x2x1xf32>
    %20 = vector.extract_strided_slice %19 {offsets = [0, 0, 1, 0, 0], sizes = [13, 13, 1, 2, 1], strides = [1, 1, 1, 1, 1]} : vector<13x14x2x2x1xf32> to vector<13x13x1x2x1xf32>
    %21 = vector.shape_cast %20 : vector<13x13x1x2x1xf32> to vector<13x13x2x1xf32>
    %22 = arith.truncf %21 : vector<13x13x2x1xf32> to vector<13x13x2x1xbf16>
    %23 = arith.extf %22 : vector<13x13x2x1xbf16> to vector<13x13x2x1xf32>
    %24 = vector.extract_strided_slice %3 {offsets = [1, 0], sizes = [1, 32], strides = [1, 1]} : vector<128x32xf32> to vector<1x32xf32>
    %25 = vector.shape_cast %24 : vector<1x32xf32> to vector<1x1x1x32xf32>
    %26 = vector.broadcast %23 : vector<13x13x2x1xf32> to vector<13x13x2x32xf32>
    %27 = vector.broadcast %25 : vector<1x1x1x32xf32> to vector<13x13x2x32xf32>
    %28 = arith.mulf %26, %27 : vector<13x13x2x32xf32>
    %29 = arith.addf %18, %28 : vector<13x13x2x32xf32>
    %30 = vector.shape_cast %7 : vector<13x28x2x1xf32> to vector<13x14x2x2x1xf32>
    %31 = vector.extract_strided_slice %30 {offsets = [0, 1, 0, 0, 0], sizes = [13, 13, 1, 2, 1], strides = [1, 1, 1, 1, 1]} : vector<13x14x2x2x1xf32> to vector<13x13x1x2x1xf32>
    %32 = vector.shape_cast %31 : vector<13x13x1x2x1xf32> to vector<13x13x2x1xf32>
    %33 = arith.truncf %32 : vector<13x13x2x1xf32> to vector<13x13x2x1xbf16>
    %34 = arith.extf %33 : vector<13x13x2x1xbf16> to vector<13x13x2x1xf32>
    %35 = vector.extract_strided_slice %3 {offsets = [2, 0], sizes = [1, 32], strides = [1, 1]} : vector<128x32xf32> to vector<1x32xf32>
    %36 = vector.shape_cast %35 : vector<1x32xf32> to vector<1x1x1x32xf32>
    %37 = vector.broadcast %34 : vector<13x13x2x1xf32> to vector<13x13x2x32xf32>
    %38 = vector.broadcast %36 : vector<1x1x1x32xf32> to vector<13x13x2x32xf32>
    %39 = arith.mulf %37, %38 : vector<13x13x2x32xf32>
    %40 = arith.addf %29, %39 : vector<13x13x2x32xf32>
    %41 = vector.shape_cast %0 : vector<28x28x2x1xf32> to vector<14x2x28x2x1xf32>
    %42 = vector.extract_strided_slice %41 {offsets = [0, 1, 0, 0, 0], sizes = [13, 1, 28, 2, 1], strides = [1, 1, 1, 1, 1]} : vector<14x2x28x2x1xf32> to vector<13x1x28x2x1xf32>
    %43 = vector.shape_cast %42 : vector<13x1x28x2x1xf32> to vector<13x28x2x1xf32>
    %44 = vector.shape_cast %43 : vector<13x28x2x1xf32> to vector<13x14x2x2x1xf32>
    %45 = vector.extract_strided_slice %44 {offsets = [0, 0, 0, 0, 0], sizes = [13, 13, 1, 2, 1], strides = [1, 1, 1, 1, 1]} : vector<13x14x2x2x1xf32> to vector<13x13x1x2x1xf32>
    %46 = vector.shape_cast %45 : vector<13x13x1x2x1xf32> to vector<13x13x2x1xf32>
    %47 = arith.truncf %46 : vector<13x13x2x1xf32> to vector<13x13x2x1xbf16>
    %48 = arith.extf %47 : vector<13x13x2x1xbf16> to vector<13x13x2x1xf32>
    %49 = vector.extract_strided_slice %3 {offsets = [3, 0], sizes = [1, 32], strides = [1, 1]} : vector<128x32xf32> to vector<1x32xf32>
    %50 = vector.shape_cast %49 : vector<1x32xf32> to vector<1x1x1x32xf32>
    %51 = vector.broadcast %48 : vector<13x13x2x1xf32> to vector<13x13x2x32xf32>
    %52 = vector.broadcast %50 : vector<1x1x1x32xf32> to vector<13x13x2x32xf32>
    %53 = arith.mulf %51, %52 : vector<13x13x2x32xf32>
    %54 = arith.addf %40, %53 : vector<13x13x2x32xf32>
    %55 = vector.shape_cast %43 : vector<13x28x2x1xf32> to vector<13x14x2x2x1xf32>
    %56 = vector.extract_strided_slice %55 {offsets = [0, 0, 1, 0, 0], sizes = [13, 13, 1, 2, 1], strides = [1, 1, 1, 1, 1]} : vector<13x14x2x2x1xf32> to vector<13x13x1x2x1xf32>
    %57 = vector.shape_cast %56 : vector<13x13x1x2x1xf32> to vector<13x13x2x1xf32>
    %58 = arith.truncf %57 : vector<13x13x2x1xf32> to vector<13x13x2x1xbf16>
    %59 = arith.extf %58 : vector<13x13x2x1xbf16> to vector<13x13x2x1xf32>
    %60 = vector.extract_strided_slice %3 {offsets = [4, 0], sizes = [1, 32], strides = [1, 1]} : vector<128x32xf32> to vector<1x32xf32>
    %61 = vector.shape_cast %60 : vector<1x32xf32> to vector<1x1x1x32xf32>
    %62 = vector.broadcast %59 : vector<13x13x2x1xf32> to vector<13x13x2x32xf32>
    %63 = vector.broadcast %61 : vector<1x1x1x32xf32> to vector<13x13x2x32xf32>
    %64 = arith.mulf %62, %63 : vector<13x13x2x32xf32>
    %65 = arith.addf %54, %64 : vector<13x13x2x32xf32>
    %66 = vector.shape_cast %43 : vector<13x28x2x1xf32> to vector<13x14x2x2x1xf32>
    %67 = vector.extract_strided_slice %66 {offsets = [0, 1, 0, 0, 0], sizes = [13, 13, 1, 2, 1], strides = [1, 1, 1, 1, 1]} : vector<13x14x2x2x1xf32> to vector<13x13x1x2x1xf32>
    %68 = vector.shape_cast %67 : vector<13x13x1x2x1xf32> to vector<13x13x2x1xf32>
    %69 = arith.truncf %68 : vector<13x13x2x1xf32> to vector<13x13x2x1xbf16>
    %70 = arith.extf %69 : vector<13x13x2x1xbf16> to vector<13x13x2x1xf32>
    %71 = vector.extract_strided_slice %3 {offsets = [5, 0], sizes = [1, 32], strides = [1, 1]} : vector<128x32xf32> to vector<1x32xf32>
    %72 = vector.shape_cast %71 : vector<1x32xf32> to vector<1x1x1x32xf32>
    %73 = vector.broadcast %70 : vector<13x13x2x1xf32> to vector<13x13x2x32xf32>
    %74 = vector.broadcast %72 : vector<1x1x1x32xf32> to vector<13x13x2x32xf32>
    %75 = arith.mulf %73, %74 : vector<13x13x2x32xf32>
    %76 = arith.addf %65, %75 : vector<13x13x2x32xf32>
    %77 = vector.shape_cast %0 : vector<28x28x2x1xf32> to vector<14x2x28x2x1xf32>
    %78 = vector.extract_strided_slice %77 {offsets = [1, 0, 0, 0, 0], sizes = [13, 1, 28, 2, 1], strides = [1, 1, 1, 1, 1]} : vector<14x2x28x2x1xf32> to vector<13x1x28x2x1xf32>
    %79 = vector.shape_cast %78 : vector<13x1x28x2x1xf32> to vector<13x28x2x1xf32>
    %80 = vector.shape_cast %79 : vector<13x28x2x1xf32> to vector<13x14x2x2x1xf32>
    %81 = vector.extract_strided_slice %80 {offsets = [0, 0, 0, 0, 0], sizes = [13, 13, 1, 2, 1], strides = [1, 1, 1, 1, 1]} : vector<13x14x2x2x1xf32> to vector<13x13x1x2x1xf32>
    %82 = vector.shape_cast %81 : vector<13x13x1x2x1xf32> to vector<13x13x2x1xf32>
    %83 = arith.truncf %82 : vector<13x13x2x1xf32> to vector<13x13x2x1xbf16>
    %84 = arith.extf %83 : vector<13x13x2x1xbf16> to vector<13x13x2x1xf32>
    %85 = vector.extract_strided_slice %3 {offsets = [6, 0], sizes = [1, 32], strides = [1, 1]} : vector<128x32xf32> to vector<1x32xf32>
    %86 = vector.shape_cast %85 : vector<1x32xf32> to vector<1x1x1x32xf32>
    %87 = vector.broadcast %84 : vector<13x13x2x1xf32> to vector<13x13x2x32xf32>
    %88 = vector.broadcast %86 : vector<1x1x1x32xf32> to vector<13x13x2x32xf32>
    %89 = arith.mulf %87, %88 : vector<13x13x2x32xf32>
    %90 = arith.addf %76, %89 : vector<13x13x2x32xf32>
    %91 = vector.shape_cast %79 : vector<13x28x2x1xf32> to vector<13x14x2x2x1xf32>
    %92 = vector.extract_strided_slice %91 {offsets = [0, 0, 1, 0, 0], sizes = [13, 13, 1, 2, 1], strides = [1, 1, 1, 1, 1]} : vector<13x14x2x2x1xf32> to vector<13x13x1x2x1xf32>
    %93 = vector.shape_cast %92 : vector<13x13x1x2x1xf32> to vector<13x13x2x1xf32>
    %94 = arith.truncf %93 : vector<13x13x2x1xf32> to vector<13x13x2x1xbf16>
    %95 = arith.extf %94 : vector<13x13x2x1xbf16> to vector<13x13x2x1xf32>
    %96 = vector.extract_strided_slice %3 {offsets = [7, 0], sizes = [1, 32], strides = [1, 1]} : vector<128x32xf32> to vector<1x32xf32>
    %97 = vector.shape_cast %96 : vector<1x32xf32> to vector<1x1x1x32xf32>
    %98 = vector.broadcast %95 : vector<13x13x2x1xf32> to vector<13x13x2x32xf32>
    %99 = vector.broadcast %97 : vector<1x1x1x32xf32> to vector<13x13x2x32xf32>
    %100 = arith.mulf %98, %99 : vector<13x13x2x32xf32>
    %101 = arith.addf %90, %100 : vector<13x13x2x32xf32>
    %102 = vector.shape_cast %79 : vector<13x28x2x1xf32> to vector<13x14x2x2x1xf32>
    %103 = vector.extract_strided_slice %102 {offsets = [0, 1, 0, 0, 0], sizes = [13, 13, 1, 2, 1], strides = [1, 1, 1, 1, 1]} : vector<13x14x2x2x1xf32> to vector<13x13x1x2x1xf32>
    %104 = vector.shape_cast %103 : vector<13x13x1x2x1xf32> to vector<13x13x2x1xf32>
    %105 = arith.truncf %104 : vector<13x13x2x1xf32> to vector<13x13x2x1xbf16>
    %106 = arith.extf %105 : vector<13x13x2x1xbf16> to vector<13x13x2x1xf32>
    %107 = vector.extract_strided_slice %3 {offsets = [8, 0], sizes = [1, 32], strides = [1, 1]} : vector<128x32xf32> to vector<1x32xf32>
    %108 = vector.shape_cast %107 : vector<1x32xf32> to vector<1x1x1x32xf32>
    %109 = vector.broadcast %106 : vector<13x13x2x1xf32> to vector<13x13x2x32xf32>
    %110 = vector.broadcast %108 : vector<1x1x1x32xf32> to vector<13x13x2x32xf32>
    %111 = arith.mulf %109, %110 : vector<13x13x2x32xf32>
    %112 = arith.addf %101, %111 : vector<13x13x2x32xf32>
    %113 = vector.shape_cast %2 : vector<1x32xf32> to vector<1x1x1x32xf32>
    %114 = vector.broadcast %113 : vector<1x1x1x32xf32> to vector<13x13x2x32xf32>
    %115 = arith.addf %112, %114 : vector<13x13x2x32xf32>
    %cst_7 = arith.constant 0.000000e+00 : f32
    %116 = vector.broadcast %cst_7 : f32 to vector<13x13x2x32xf32>
    %117 = arith.maximumf %115, %116 : vector<13x13x2x32xf32>
    %c0_8 = arith.constant 0 : index
    %c0_9 = arith.constant 0 : index
    %118 = vector.load %arg4[%c0_8, %c0_9] : memref<384x64xbf16, #tpu.memory_space<vmem>>, vector<384x64xbf16>
    %c0_10 = arith.constant 0 : index
    %c0_11 = arith.constant 0 : index
    %119 = vector.load %arg5[%c0_10, %c0_11] : memref<1x64xf32, #tpu.memory_space<vmem>>, vector<1x64xf32>
    %cst_12 = arith.constant 0.000000e+00 : f32
    %120 = vector.broadcast %cst_12 : f32 to vector<1x13x2x32xf32>
    %121 = tpu.concatenate %117, %120 in 0 : vector<13x13x2x32xf32>, vector<1x13x2x32xf32> -> vector<14x13x2x32xf32>
    %122 = vector.shape_cast %121 : vector<14x13x2x32xf32> to vector<7x2x13x2x32xf32>
    %123 = vector.extract_strided_slice %122 {offsets = [0, 0, 0, 0, 0], sizes = [6, 1, 13, 2, 32], strides = [1, 1, 1, 1, 1]} : vector<7x2x13x2x32xf32> to vector<6x1x13x2x32xf32>
    %124 = vector.shape_cast %123 : vector<6x1x13x2x32xf32> to vector<6x13x2x32xf32>
    %cst_13 = arith.constant 0.000000e+00 : f32
    %125 = vector.broadcast %cst_13 : f32 to vector<6x1x2x32xf32>
    %126 = tpu.concatenate %124, %125 in 1 : vector<6x13x2x32xf32>, vector<6x1x2x32xf32> -> vector<6x14x2x32xf32>
    %127 = vector.shape_cast %126 : vector<6x14x2x32xf32> to vector<6x7x2x2x32xf32>
    %128 = vector.extract_strided_slice %127 {offsets = [0, 0, 0, 0, 0], sizes = [6, 6, 1, 2, 32], strides = [1, 1, 1, 1, 1]} : vector<6x7x2x2x32xf32> to vector<6x6x1x2x32xf32>
    %129 = vector.shape_cast %128 : vector<6x6x1x2x32xf32> to vector<6x6x2x32xf32>
    %cst_14 = arith.constant 0.000000e+00 : f32
    %130 = vector.broadcast %cst_14 : f32 to vector<6x1x2x32xf32>
    %131 = tpu.concatenate %124, %130 in 1 : vector<6x13x2x32xf32>, vector<6x1x2x32xf32> -> vector<6x14x2x32xf32>
    %132 = vector.shape_cast %131 : vector<6x14x2x32xf32> to vector<6x7x2x2x32xf32>
    %133 = vector.extract_strided_slice %132 {offsets = [0, 0, 1, 0, 0], sizes = [6, 6, 1, 2, 32], strides = [1, 1, 1, 1, 1]} : vector<6x7x2x2x32xf32> to vector<6x6x1x2x32xf32>
    %134 = vector.shape_cast %133 : vector<6x6x1x2x32xf32> to vector<6x6x2x32xf32>
    %cst_15 = arith.constant 0.000000e+00 : f32
    %135 = vector.broadcast %cst_15 : f32 to vector<6x1x2x32xf32>
    %136 = tpu.concatenate %124, %135 in 1 : vector<6x13x2x32xf32>, vector<6x1x2x32xf32> -> vector<6x14x2x32xf32>
    %137 = vector.shape_cast %136 : vector<6x14x2x32xf32> to vector<6x7x2x2x32xf32>
    %138 = vector.extract_strided_slice %137 {offsets = [0, 1, 0, 0, 0], sizes = [6, 6, 1, 2, 32], strides = [1, 1, 1, 1, 1]} : vector<6x7x2x2x32xf32> to vector<6x6x1x2x32xf32>
    %139 = vector.shape_cast %138 : vector<6x6x1x2x32xf32> to vector<6x6x2x32xf32>
    %cst_16 = arith.constant 0.000000e+00 : f32
    %140 = vector.broadcast %cst_16 : f32 to vector<1x13x2x32xf32>
    %141 = tpu.concatenate %117, %140 in 0 : vector<13x13x2x32xf32>, vector<1x13x2x32xf32> -> vector<14x13x2x32xf32>
    %142 = vector.shape_cast %141 : vector<14x13x2x32xf32> to vector<7x2x13x2x32xf32>
    %143 = vector.extract_strided_slice %142 {offsets = [0, 1, 0, 0, 0], sizes = [6, 1, 13, 2, 32], strides = [1, 1, 1, 1, 1]} : vector<7x2x13x2x32xf32> to vector<6x1x13x2x32xf32>
    %144 = vector.shape_cast %143 : vector<6x1x13x2x32xf32> to vector<6x13x2x32xf32>
    %cst_17 = arith.constant 0.000000e+00 : f32
    %145 = vector.broadcast %cst_17 : f32 to vector<6x1x2x32xf32>
    %146 = tpu.concatenate %144, %145 in 1 : vector<6x13x2x32xf32>, vector<6x1x2x32xf32> -> vector<6x14x2x32xf32>
    %147 = vector.shape_cast %146 : vector<6x14x2x32xf32> to vector<6x7x2x2x32xf32>
    %148 = vector.extract_strided_slice %147 {offsets = [0, 0, 0, 0, 0], sizes = [6, 6, 1, 2, 32], strides = [1, 1, 1, 1, 1]} : vector<6x7x2x2x32xf32> to vector<6x6x1x2x32xf32>
    %149 = vector.shape_cast %148 : vector<6x6x1x2x32xf32> to vector<6x6x2x32xf32>
    %cst_18 = arith.constant 0.000000e+00 : f32
    %150 = vector.broadcast %cst_18 : f32 to vector<6x1x2x32xf32>
    %151 = tpu.concatenate %144, %150 in 1 : vector<6x13x2x32xf32>, vector<6x1x2x32xf32> -> vector<6x14x2x32xf32>
    %152 = vector.shape_cast %151 : vector<6x14x2x32xf32> to vector<6x7x2x2x32xf32>
    %153 = vector.extract_strided_slice %152 {offsets = [0, 0, 1, 0, 0], sizes = [6, 6, 1, 2, 32], strides = [1, 1, 1, 1, 1]} : vector<6x7x2x2x32xf32> to vector<6x6x1x2x32xf32>
    %154 = vector.shape_cast %153 : vector<6x6x1x2x32xf32> to vector<6x6x2x32xf32>
    %cst_19 = arith.constant 0.000000e+00 : f32
    %155 = vector.broadcast %cst_19 : f32 to vector<6x1x2x32xf32>
    %156 = tpu.concatenate %144, %155 in 1 : vector<6x13x2x32xf32>, vector<6x1x2x32xf32> -> vector<6x14x2x32xf32>
    %157 = vector.shape_cast %156 : vector<6x14x2x32xf32> to vector<6x7x2x2x32xf32>
    %158 = vector.extract_strided_slice %157 {offsets = [0, 1, 0, 0, 0], sizes = [6, 6, 1, 2, 32], strides = [1, 1, 1, 1, 1]} : vector<6x7x2x2x32xf32> to vector<6x6x1x2x32xf32>
    %159 = vector.shape_cast %158 : vector<6x6x1x2x32xf32> to vector<6x6x2x32xf32>
    %cst_20 = arith.constant 0.000000e+00 : f32
    %160 = vector.broadcast %cst_20 : f32 to vector<1x13x2x32xf32>
    %161 = tpu.concatenate %117, %160 in 0 : vector<13x13x2x32xf32>, vector<1x13x2x32xf32> -> vector<14x13x2x32xf32>
    %162 = vector.shape_cast %161 : vector<14x13x2x32xf32> to vector<7x2x13x2x32xf32>
    %163 = vector.extract_strided_slice %162 {offsets = [1, 0, 0, 0, 0], sizes = [6, 1, 13, 2, 32], strides = [1, 1, 1, 1, 1]} : vector<7x2x13x2x32xf32> to vector<6x1x13x2x32xf32>
    %164 = vector.shape_cast %163 : vector<6x1x13x2x32xf32> to vector<6x13x2x32xf32>
    %cst_21 = arith.constant 0.000000e+00 : f32
    %165 = vector.broadcast %cst_21 : f32 to vector<6x1x2x32xf32>
    %166 = tpu.concatenate %164, %165 in 1 : vector<6x13x2x32xf32>, vector<6x1x2x32xf32> -> vector<6x14x2x32xf32>
    %167 = vector.shape_cast %166 : vector<6x14x2x32xf32> to vector<6x7x2x2x32xf32>
    %168 = vector.extract_strided_slice %167 {offsets = [0, 0, 0, 0, 0], sizes = [6, 6, 1, 2, 32], strides = [1, 1, 1, 1, 1]} : vector<6x7x2x2x32xf32> to vector<6x6x1x2x32xf32>
    %169 = vector.shape_cast %168 : vector<6x6x1x2x32xf32> to vector<6x6x2x32xf32>
    %cst_22 = arith.constant 0.000000e+00 : f32
    %170 = vector.broadcast %cst_22 : f32 to vector<6x1x2x32xf32>
    %171 = tpu.concatenate %164, %170 in 1 : vector<6x13x2x32xf32>, vector<6x1x2x32xf32> -> vector<6x14x2x32xf32>
    %172 = vector.shape_cast %171 : vector<6x14x2x32xf32> to vector<6x7x2x2x32xf32>
    %173 = vector.extract_strided_slice %172 {offsets = [0, 0, 1, 0, 0], sizes = [6, 6, 1, 2, 32], strides = [1, 1, 1, 1, 1]} : vector<6x7x2x2x32xf32> to vector<6x6x1x2x32xf32>
    %174 = vector.shape_cast %173 : vector<6x6x1x2x32xf32> to vector<6x6x2x32xf32>
    %cst_23 = arith.constant 0.000000e+00 : f32
    %175 = vector.broadcast %cst_23 : f32 to vector<6x1x2x32xf32>
    %176 = tpu.concatenate %164, %175 in 1 : vector<6x13x2x32xf32>, vector<6x1x2x32xf32> -> vector<6x14x2x32xf32>
    %177 = vector.shape_cast %176 : vector<6x14x2x32xf32> to vector<6x7x2x2x32xf32>
    %178 = vector.extract_strided_slice %177 {offsets = [0, 1, 0, 0, 0], sizes = [6, 6, 1, 2, 32], strides = [1, 1, 1, 1, 1]} : vector<6x7x2x2x32xf32> to vector<6x6x1x2x32xf32>
    %179 = vector.shape_cast %178 : vector<6x6x1x2x32xf32> to vector<6x6x2x32xf32>
    %180 = tpu.concatenate %129, %134, %139, %149, %154, %159, %169, %174, %179 in 3 : vector<6x6x2x32xf32>, vector<6x6x2x32xf32>, vector<6x6x2x32xf32>, vector<6x6x2x32xf32>, vector<6x6x2x32xf32>, vector<6x6x2x32xf32>, vector<6x6x2x32xf32>, vector<6x6x2x32xf32>, vector<6x6x2x32xf32> -> vector<6x6x2x288xf32>
    %181 = vector.shape_cast %180 : vector<6x6x2x288xf32> to vector<72x288xf32>
    %182 = arith.truncf %181 : vector<72x288xf32> to vector<72x288xbf16>
    %cst_24 = arith.constant 0.000000e+00 : bf16
    %183 = vector.broadcast %cst_24 : bf16 to vector<72x96xbf16>
    %184 = tpu.concatenate %182, %183 in 1 : vector<72x288xbf16>, vector<72x96xbf16> -> vector<72x384xbf16>
    %cst_25 = arith.constant dense<0.000000e+00> : vector<72x64xf32>
    %185 = tpu.matmul %184, %118, %cst_25 {dimension_numbers = #tpu.dot_dimension_numbers<[1], [0], [0], [1], [0, 0, 1, 1], [], []>} : vector<72x384xbf16>, vector<384x64xbf16>, vector<72x64xf32> -> vector<72x64xf32>
    %186 = vector.shape_cast %185 : vector<72x64xf32> to vector<6x6x2x64xf32>
    %187 = vector.shape_cast %119 : vector<1x64xf32> to vector<1x1x1x64xf32>
    %188 = vector.broadcast %187 : vector<1x1x1x64xf32> to vector<6x6x2x64xf32>
    %189 = arith.addf %186, %188 : vector<6x6x2x64xf32>
    %cst_26 = arith.constant 0.000000e+00 : f32
    %190 = vector.broadcast %cst_26 : f32 to vector<6x6x2x64xf32>
    %191 = arith.maximumf %189, %190 : vector<6x6x2x64xf32>
    %c0_27 = arith.constant 0 : index
    %c0_28 = arith.constant 0 : index
    %192 = vector.load %arg6[%c0_27, %c0_28] : memref<640x128xbf16, #tpu.memory_space<vmem>>, vector<640x128xbf16>
    %c0_29 = arith.constant 0 : index
    %c0_30 = arith.constant 0 : index
    %193 = vector.load %arg7[%c0_29, %c0_30] : memref<1x128xf32, #tpu.memory_space<vmem>>, vector<1x128xf32>
    %194 = vector.shape_cast %191 : vector<6x6x2x64xf32> to vector<3x2x6x2x64xf32>
    %195 = vector.extract_strided_slice %194 {offsets = [0, 0, 0, 0, 0], sizes = [2, 1, 6, 2, 64], strides = [1, 1, 1, 1, 1]} : vector<3x2x6x2x64xf32> to vector<2x1x6x2x64xf32>
    %196 = vector.shape_cast %195 : vector<2x1x6x2x64xf32> to vector<2x6x2x64xf32>
    %197 = vector.shape_cast %196 : vector<2x6x2x64xf32> to vector<2x3x2x2x64xf32>
    %198 = vector.extract_strided_slice %197 {offsets = [0, 0, 0, 0, 0], sizes = [2, 2, 1, 2, 64], strides = [1, 1, 1, 1, 1]} : vector<2x3x2x2x64xf32> to vector<2x2x1x2x64xf32>
    %199 = vector.shape_cast %198 : vector<2x2x1x2x64xf32> to vector<2x2x2x64xf32>
    %200 = vector.shape_cast %196 : vector<2x6x2x64xf32> to vector<2x3x2x2x64xf32>
    %201 = vector.extract_strided_slice %200 {offsets = [0, 0, 1, 0, 0], sizes = [2, 2, 1, 2, 64], strides = [1, 1, 1, 1, 1]} : vector<2x3x2x2x64xf32> to vector<2x2x1x2x64xf32>
    %202 = vector.shape_cast %201 : vector<2x2x1x2x64xf32> to vector<2x2x2x64xf32>
    %203 = vector.shape_cast %196 : vector<2x6x2x64xf32> to vector<2x3x2x2x64xf32>
    %204 = vector.extract_strided_slice %203 {offsets = [0, 1, 0, 0, 0], sizes = [2, 2, 1, 2, 64], strides = [1, 1, 1, 1, 1]} : vector<2x3x2x2x64xf32> to vector<2x2x1x2x64xf32>
    %205 = vector.shape_cast %204 : vector<2x2x1x2x64xf32> to vector<2x2x2x64xf32>
    %206 = vector.shape_cast %191 : vector<6x6x2x64xf32> to vector<3x2x6x2x64xf32>
    %207 = vector.extract_strided_slice %206 {offsets = [0, 1, 0, 0, 0], sizes = [2, 1, 6, 2, 64], strides = [1, 1, 1, 1, 1]} : vector<3x2x6x2x64xf32> to vector<2x1x6x2x64xf32>
    %208 = vector.shape_cast %207 : vector<2x1x6x2x64xf32> to vector<2x6x2x64xf32>
    %209 = vector.shape_cast %208 : vector<2x6x2x64xf32> to vector<2x3x2x2x64xf32>
    %210 = vector.extract_strided_slice %209 {offsets = [0, 0, 0, 0, 0], sizes = [2, 2, 1, 2, 64], strides = [1, 1, 1, 1, 1]} : vector<2x3x2x2x64xf32> to vector<2x2x1x2x64xf32>
    %211 = vector.shape_cast %210 : vector<2x2x1x2x64xf32> to vector<2x2x2x64xf32>
    %212 = vector.shape_cast %208 : vector<2x6x2x64xf32> to vector<2x3x2x2x64xf32>
    %213 = vector.extract_strided_slice %212 {offsets = [0, 0, 1, 0, 0], sizes = [2, 2, 1, 2, 64], strides = [1, 1, 1, 1, 1]} : vector<2x3x2x2x64xf32> to vector<2x2x1x2x64xf32>
    %214 = vector.shape_cast %213 : vector<2x2x1x2x64xf32> to vector<2x2x2x64xf32>
    %215 = vector.shape_cast %208 : vector<2x6x2x64xf32> to vector<2x3x2x2x64xf32>
    %216 = vector.extract_strided_slice %215 {offsets = [0, 1, 0, 0, 0], sizes = [2, 2, 1, 2, 64], strides = [1, 1, 1, 1, 1]} : vector<2x3x2x2x64xf32> to vector<2x2x1x2x64xf32>
    %217 = vector.shape_cast %216 : vector<2x2x1x2x64xf32> to vector<2x2x2x64xf32>
    %218 = vector.shape_cast %191 : vector<6x6x2x64xf32> to vector<3x2x6x2x64xf32>
    %219 = vector.extract_strided_slice %218 {offsets = [1, 0, 0, 0, 0], sizes = [2, 1, 6, 2, 64], strides = [1, 1, 1, 1, 1]} : vector<3x2x6x2x64xf32> to vector<2x1x6x2x64xf32>
    %220 = vector.shape_cast %219 : vector<2x1x6x2x64xf32> to vector<2x6x2x64xf32>
    %221 = vector.shape_cast %220 : vector<2x6x2x64xf32> to vector<2x3x2x2x64xf32>
    %222 = vector.extract_strided_slice %221 {offsets = [0, 0, 0, 0, 0], sizes = [2, 2, 1, 2, 64], strides = [1, 1, 1, 1, 1]} : vector<2x3x2x2x64xf32> to vector<2x2x1x2x64xf32>
    %223 = vector.shape_cast %222 : vector<2x2x1x2x64xf32> to vector<2x2x2x64xf32>
    %224 = vector.shape_cast %220 : vector<2x6x2x64xf32> to vector<2x3x2x2x64xf32>
    %225 = vector.extract_strided_slice %224 {offsets = [0, 0, 1, 0, 0], sizes = [2, 2, 1, 2, 64], strides = [1, 1, 1, 1, 1]} : vector<2x3x2x2x64xf32> to vector<2x2x1x2x64xf32>
    %226 = vector.shape_cast %225 : vector<2x2x1x2x64xf32> to vector<2x2x2x64xf32>
    %227 = vector.shape_cast %220 : vector<2x6x2x64xf32> to vector<2x3x2x2x64xf32>
    %228 = vector.extract_strided_slice %227 {offsets = [0, 1, 0, 0, 0], sizes = [2, 2, 1, 2, 64], strides = [1, 1, 1, 1, 1]} : vector<2x3x2x2x64xf32> to vector<2x2x1x2x64xf32>
    %229 = vector.shape_cast %228 : vector<2x2x1x2x64xf32> to vector<2x2x2x64xf32>
    %230 = tpu.concatenate %199, %202, %205, %211, %214, %217, %223, %226, %229 in 3 : vector<2x2x2x64xf32>, vector<2x2x2x64xf32>, vector<2x2x2x64xf32>, vector<2x2x2x64xf32>, vector<2x2x2x64xf32>, vector<2x2x2x64xf32>, vector<2x2x2x64xf32>, vector<2x2x2x64xf32>, vector<2x2x2x64xf32> -> vector<2x2x2x576xf32>
    %231 = vector.shape_cast %230 : vector<2x2x2x576xf32> to vector<8x576xf32>
    %232 = arith.truncf %231 : vector<8x576xf32> to vector<8x576xbf16>
    %cst_31 = arith.constant 0.000000e+00 : bf16
    %233 = vector.broadcast %cst_31 : bf16 to vector<8x64xbf16>
    %234 = tpu.concatenate %232, %233 in 1 : vector<8x576xbf16>, vector<8x64xbf16> -> vector<8x640xbf16>
    %cst_32 = arith.constant dense<0.000000e+00> : vector<8x128xf32>
    %235 = tpu.matmul %234, %192, %cst_32 {dimension_numbers = #tpu.dot_dimension_numbers<[1], [0], [0], [1], [0, 0, 1, 1], [], []>} : vector<8x640xbf16>, vector<640x128xbf16>, vector<8x128xf32> -> vector<8x128xf32>
    %236 = vector.shape_cast %235 : vector<8x128xf32> to vector<2x2x2x128xf32>
    %237 = vector.shape_cast %193 : vector<1x128xf32> to vector<1x1x1x128xf32>
    %238 = vector.broadcast %237 : vector<1x1x1x128xf32> to vector<2x2x2x128xf32>
    %239 = arith.addf %236, %238 : vector<2x2x2x128xf32>
    %cst_33 = arith.constant 0.000000e+00 : f32
    %240 = vector.broadcast %cst_33 : f32 to vector<2x2x2x128xf32>
    %241 = arith.maximumf %239, %240 : vector<2x2x2x128xf32>
    %c0_34 = arith.constant 0 : index
    %c0_35 = arith.constant 0 : index
    %242 = vector.load %arg8[%c0_34, %c0_35] : memref<512x256xbf16, #tpu.memory_space<vmem>>, vector<512x256xbf16>
    %c0_36 = arith.constant 0 : index
    %c0_37 = arith.constant 0 : index
    %243 = vector.load %arg9[%c0_36, %c0_37] : memref<1x256xf32, #tpu.memory_space<vmem>>, vector<1x256xf32>
    %244 = vector.shape_cast %241 : vector<2x2x2x128xf32> to vector<1x2x2x2x128xf32>
    %245 = vector.extract_strided_slice %244 {offsets = [0, 0, 0, 0, 0], sizes = [1, 1, 2, 2, 128], strides = [1, 1, 1, 1, 1]} : vector<1x2x2x2x128xf32> to vector<1x1x2x2x128xf32>
    %246 = vector.shape_cast %245 : vector<1x1x2x2x128xf32> to vector<1x2x2x128xf32>
    %247 = vector.shape_cast %246 : vector<1x2x2x128xf32> to vector<1x1x2x2x128xf32>
    %248 = vector.extract_strided_slice %247 {offsets = [0, 0, 0, 0, 0], sizes = [1, 1, 1, 2, 128], strides = [1, 1, 1, 1, 1]} : vector<1x1x2x2x128xf32> to vector<1x1x1x2x128xf32>
    %249 = vector.shape_cast %248 : vector<1x1x1x2x128xf32> to vector<1x1x2x128xf32>
    %250 = vector.shape_cast %246 : vector<1x2x2x128xf32> to vector<1x1x2x2x128xf32>
    %251 = vector.extract_strided_slice %250 {offsets = [0, 0, 1, 0, 0], sizes = [1, 1, 1, 2, 128], strides = [1, 1, 1, 1, 1]} : vector<1x1x2x2x128xf32> to vector<1x1x1x2x128xf32>
    %252 = vector.shape_cast %251 : vector<1x1x1x2x128xf32> to vector<1x1x2x128xf32>
    %253 = vector.shape_cast %241 : vector<2x2x2x128xf32> to vector<1x2x2x2x128xf32>
    %254 = vector.extract_strided_slice %253 {offsets = [0, 1, 0, 0, 0], sizes = [1, 1, 2, 2, 128], strides = [1, 1, 1, 1, 1]} : vector<1x2x2x2x128xf32> to vector<1x1x2x2x128xf32>
    %255 = vector.shape_cast %254 : vector<1x1x2x2x128xf32> to vector<1x2x2x128xf32>
    %256 = vector.shape_cast %255 : vector<1x2x2x128xf32> to vector<1x1x2x2x128xf32>
    %257 = vector.extract_strided_slice %256 {offsets = [0, 0, 0, 0, 0], sizes = [1, 1, 1, 2, 128], strides = [1, 1, 1, 1, 1]} : vector<1x1x2x2x128xf32> to vector<1x1x1x2x128xf32>
    %258 = vector.shape_cast %257 : vector<1x1x1x2x128xf32> to vector<1x1x2x128xf32>
    %259 = vector.shape_cast %255 : vector<1x2x2x128xf32> to vector<1x1x2x2x128xf32>
    %260 = vector.extract_strided_slice %259 {offsets = [0, 0, 1, 0, 0], sizes = [1, 1, 1, 2, 128], strides = [1, 1, 1, 1, 1]} : vector<1x1x2x2x128xf32> to vector<1x1x1x2x128xf32>
    %261 = vector.shape_cast %260 : vector<1x1x1x2x128xf32> to vector<1x1x2x128xf32>
    %262 = tpu.concatenate %249, %252, %258, %261 in 3 : vector<1x1x2x128xf32>, vector<1x1x2x128xf32>, vector<1x1x2x128xf32>, vector<1x1x2x128xf32> -> vector<1x1x2x512xf32>
    %263 = vector.shape_cast %262 : vector<1x1x2x512xf32> to vector<2x512xf32>
    %264 = arith.truncf %263 : vector<2x512xf32> to vector<2x512xbf16>
    %cst_38 = arith.constant 0.000000e+00 : bf16
    %265 = vector.broadcast %cst_38 : bf16 to vector<6x512xbf16>
    %266 = tpu.concatenate %264, %265 in 0 : vector<2x512xbf16>, vector<6x512xbf16> -> vector<8x512xbf16>
    %cst_39 = arith.constant dense<0.000000e+00> : vector<8x256xf32>
    %267 = tpu.matmul %266, %242, %cst_39 {dimension_numbers = #tpu.dot_dimension_numbers<[1], [0], [0], [1], [0, 0, 1, 1], [], []>} : vector<8x512xbf16>, vector<512x256xbf16>, vector<8x256xf32> -> vector<8x256xf32>
    %268 = vector.extract_strided_slice %267 {offsets = [0, 0], sizes = [2, 256], strides = [1, 1]} : vector<8x256xf32> to vector<2x256xf32>
    %269 = vector.shape_cast %268 : vector<2x256xf32> to vector<1x1x2x256xf32>
    %270 = vector.shape_cast %243 : vector<1x256xf32> to vector<1x1x1x256xf32>
    %271 = vector.broadcast %270 : vector<1x1x1x256xf32> to vector<1x1x2x256xf32>
    %272 = arith.addf %269, %271 : vector<1x1x2x256xf32>
    %cst_40 = arith.constant 0.000000e+00 : f32
    %273 = vector.broadcast %cst_40 : f32 to vector<1x1x2x256xf32>
    %274 = arith.maximumf %272, %273 : vector<1x1x2x256xf32>
    %c0_41 = arith.constant 0 : index
    %c0_42 = arith.constant 0 : index
    %275 = vector.load %arg10[%c0_41, %c0_42] : memref<256x16xbf16, #tpu.memory_space<vmem>>, vector<256x16xbf16>
    %c0_43 = arith.constant 0 : index
    %c0_44 = arith.constant 0 : index
    %276 = vector.load %arg11[%c0_43, %c0_44] : memref<1x16xf32, #tpu.memory_space<vmem>>, vector<1x16xf32>
    %277 = vector.extract_strided_slice %274 {offsets = [0, 0, 0, 0], sizes = [1, 1, 2, 256], strides = [1, 1, 1, 1]} : vector<1x1x2x256xf32> to vector<1x1x2x256xf32>
    %278 = vector.extract_strided_slice %277 {offsets = [0, 0, 0, 0], sizes = [1, 1, 2, 256], strides = [1, 1, 1, 1]} : vector<1x1x2x256xf32> to vector<1x1x2x256xf32>
    %279 = vector.shape_cast %278 : vector<1x1x2x256xf32> to vector<2x256xf32>
    %280 = arith.truncf %279 : vector<2x256xf32> to vector<2x256xbf16>
    %cst_45 = arith.constant 0.000000e+00 : bf16
    %281 = vector.broadcast %cst_45 : bf16 to vector<6x256xbf16>
    %282 = tpu.concatenate %280, %281 in 0 : vector<2x256xbf16>, vector<6x256xbf16> -> vector<8x256xbf16>
    %cst_46 = arith.constant dense<0.000000e+00> : vector<8x16xf32>
    %283 = tpu.matmul %282, %275, %cst_46 {dimension_numbers = #tpu.dot_dimension_numbers<[1], [0], [0], [1], [0, 0, 1, 1], [], []>} : vector<8x256xbf16>, vector<256x16xbf16>, vector<8x16xf32> -> vector<8x16xf32>
    %284 = vector.extract_strided_slice %283 {offsets = [0, 0], sizes = [2, 16], strides = [1, 1]} : vector<8x16xf32> to vector<2x16xf32>
    %285 = vector.shape_cast %284 : vector<2x16xf32> to vector<1x1x2x16xf32>
    %286 = vector.shape_cast %276 : vector<1x16xf32> to vector<1x1x1x16xf32>
    %287 = vector.broadcast %286 : vector<1x1x1x16xf32> to vector<1x1x2x16xf32>
    %288 = arith.addf %285, %287 : vector<1x1x2x16xf32>
    %289 = vector.shape_cast %288 : vector<1x1x2x16xf32> to vector<2x16xf32>
    %c0_47 = arith.constant 0 : index
    %c0_48 = arith.constant 0 : index
    %290 = vector.load %arg12[%c0_47, %c0_48] : memref<2x16xf32, #tpu.memory_space<vmem>>, vector<2x16xf32>
    tpu.vector_store %arg12[%c0_47, %c0_48], %289 {strides = array<i32>} : memref<2x16xf32, #tpu.memory_space<vmem>>, vector<2x16xf32>,
    return
  }
  func.func @transform_0(%arg0: i32) -> (i32, i32, i32, i32) {
    %c0_i32 = arith.constant 0 : i32
    %c0_i32_0 = arith.constant 0 : i32
    %c0_i32_1 = arith.constant 0 : i32
    %c0_i32_2 = arith.constant 0 : i32
    return %c0_i32, %c0_i32_0, %arg0, %c0_i32_1 : i32, i32, i32, i32
  }
  func.func @transform_1(%arg0: i32) -> (i32, i32) {
    %c0_i32 = arith.constant 0 : i32
    %c0_i32_0 = arith.constant 0 : i32
    %c0_i32_1 = arith.constant 0 : i32
    return %c0_i32, %c0_i32_0 : i32, i32
  }
  func.func @transform_2(%arg0: i32) -> (i32, i32) {
    %c0_i32 = arith.constant 0 : i32
    %c0_i32_0 = arith.constant 0 : i32
    %c0_i32_1 = arith.constant 0 : i32
    return %c0_i32, %c0_i32_0 : i32, i32
  }
  func.func @transform_3(%arg0: i32) -> (i32, i32) {
    %c0_i32 = arith.constant 0 : i32
    %c0_i32_0 = arith.constant 0 : i32
    %c0_i32_1 = arith.constant 0 : i32
    return %c0_i32, %c0_i32_0 : i32, i32
  }
  func.func @transform_4(%arg0: i32) -> (i32, i32) {
    %c0_i32 = arith.constant 0 : i32
    %c0_i32_0 = arith.constant 0 : i32
    %c0_i32_1 = arith.constant 0 : i32
    return %c0_i32, %c0_i32_0 : i32, i32
  }
  func.func @transform_5(%arg0: i32) -> (i32, i32) {
    %c0_i32 = arith.constant 0 : i32
    %c0_i32_0 = arith.constant 0 : i32
    %c0_i32_1 = arith.constant 0 : i32
    return %c0_i32, %c0_i32_0 : i32, i32
  }
  func.func @transform_6(%arg0: i32) -> (i32, i32) {
    %c0_i32 = arith.constant 0 : i32
    %c0_i32_0 = arith.constant 0 : i32
    %c0_i32_1 = arith.constant 0 : i32
    return %c0_i32, %c0_i32_0 : i32, i32
  }
  func.func @transform_7(%arg0: i32) -> (i32, i32) {
    %c0_i32 = arith.constant 0 : i32
    %c0_i32_0 = arith.constant 0 : i32
    %c0_i32_1 = arith.constant 0 : i32
    return %c0_i32, %c0_i32_0 : i32, i32
  }
  func.func @transform_8(%arg0: i32) -> (i32, i32) {
    %c0_i32 = arith.constant 0 : i32
    %c0_i32_0 = arith.constant 0 : i32
    %c0_i32_1 = arith.constant 0 : i32
    return %c0_i32, %c0_i32_0 : i32, i32
  }
  func.func @transform_9(%arg0: i32) -> (i32, i32) {
    %c0_i32 = arith.constant 0 : i32
    %c0_i32_0 = arith.constant 0 : i32
    %c0_i32_1 = arith.constant 0 : i32
    return %c0_i32, %c0_i32_0 : i32, i32
  }
  func.func @transform_10(%arg0: i32) -> (i32, i32) {
    %c0_i32 = arith.constant 0 : i32
    %c0_i32_0 = arith.constant 0 : i32
    %c0_i32_1 = arith.constant 0 : i32
    return %c0_i32, %c0_i32_0 : i32, i32
  }
  func.func @transform_11(%arg0: i32) -> (i32, i32) {
    %c0_i32 = arith.constant 0 : i32
    %c0_i32_0 = arith.constant 0 : i32
    return %arg0, %c0_i32 : i32, i32
  }
}

</mosaic_0001>

<llo_original>
// kernel: convnet28_forward.1
$region0: #{convnet28_forward.1}
  #allocation0 [shape = 'u32[]', space=smem, size = 0x4, offset = 0x4, fixed_abs, tag = 'smem constant byte address 0x4 - core index']
  #allocation1 [shape = 'u32[144,128]{1,0:T(1,128)}', space=vmem, size = 0x12000, scoped, tag = 'internal scratch']
  %s0 = inlined_call_operand.vmem [shape: f32[28,28,2,1], index: 0, kind: input, shape index: {}]
  %s1 = inlined_call_operand.vmem [shape: bf16[128,32], index: 1, kind: input, shape index: {}]
  %s2 = inlined_call_operand.vmem [shape: f32[1,32], index: 2, kind: input, shape index: {}]
  %s3 = inlined_call_operand.vmem [shape: bf16[384,64], index: 3, kind: input, shape index: {}]
  %s4 = inlined_call_operand.vmem [shape: f32[1,64], index: 4, kind: input, shape index: {}]
  %s5 = inlined_call_operand.vmem [shape: bf16[640,128], index: 5, kind: input, shape index: {}]
  %s6 = inlined_call_operand.vmem [shape: f32[1,128], index: 6, kind: input, shape index: {}]
  %s7 = inlined_call_operand.vmem [shape: bf16[512,256], index: 7, kind: input, shape index: {}]
  %s8 = inlined_call_operand.vmem [shape: f32[1,256], index: 8, kind: input, shape index: {}]
  %s9 = inlined_call_operand.vmem [shape: bf16[256,16], index: 9, kind: input, shape index: {}]
  %s10 = inlined_call_operand.vmem [shape: f32[1,16], index: 10, kind: input, shape index: {}]
  %s11 = inlined_call_operand.hbm [shape: f32[2,16], index: 11, kind: output, shape index: {}]
  %s12 = sld [smem:[#allocation0]]
  $region54: #{convnet28_forward.1} parent=0
    _
  %s14 = ssub.s32 1, %s12
  %s15 = scalar_select 0, %s14, %s12
  $region1: #{convnet28_forward.1} parent=0
    #allocation2 [shape = 'u8[1024]{0}', space=vmem, size = 0x400, scoped, tag = 'output window, operand 0, single buffered']
    #allocation3 [shape = 's32[1]{0}', space=sflag, size = 0x4, scoped, tag = 'scoped memory for convnet28_forward.1']
    %16 = vsyncpa [#allocation3], 0
    // Predicated region
    $region2: #{convnet28_forward.1} parent=1 // pred_check
      _
    $region3: #{convnet28_forward.1} parent=1 // pred_check_branch
      %18 = sbr.rel (0) target = $region5
    $region4: #{convnet28_forward.1} parent=1 // pred_region
      _
    $region5: #{convnet28_forward.1} parent=1 // pred_fallthru
      _
    // Predicated region
    $region6: #{convnet28_forward.1} parent=1 // pred_check
      _
    $region7: #{convnet28_forward.1} parent=1 // pred_check_branch
      %20 = sbr.rel (0) target = $region9
    $region8: #{convnet28_forward.1} parent=1 // pred_region
      _
    $region9: #{convnet28_forward.1} parent=1 // pred_fallthru
      _
    // Predicated region
    $region10: #{convnet28_forward.1} parent=1 // pred_check
      _
    $region11: #{convnet28_forward.1} parent=1 // pred_check_branch
      %22 = sbr.rel (0) target = $region13
    $region12: #{convnet28_forward.1} parent=1 // pred_region
      _
    $region13: #{convnet28_forward.1} parent=1 // pred_fallthru
      _
    // Predicated region
    $region14: #{convnet28_forward.1} parent=1 // pred_check
      _
    $region15: #{convnet28_forward.1} parent=1 // pred_check_branch
      %24 = sbr.rel (0) target = $region17
    $region16: #{convnet28_forward.1} parent=1 // pred_region
      _
    $region17: #{convnet28_forward.1} parent=1 // pred_fallthru
      _
    // Predicated region
    $region18: #{convnet28_forward.1} parent=1 // pred_check
      _
    $region19: #{convnet28_forward.1} parent=1 // pred_check_branch
      %26 = sbr.rel (0) target = $region21
    $region20: #{convnet28_forward.1} parent=1 // pred_region
      _
    $region21: #{convnet28_forward.1} parent=1 // pred_fallthru
      _
    // Predicated region
    $region22: #{convnet28_forward.1} parent=1 // pred_check
      _
    $region23: #{convnet28_forward.1} parent=1 // pred_check_branch
      %28 = sbr.rel (0) target = $region25
    $region24: #{convnet28_forward.1} parent=1 // pred_region
      _
    $region25: #{convnet28_forward.1} parent=1 // pred_fallthru
      _
    // Predicated region
    $region26: #{convnet28_forward.1} parent=1 // pred_check
      _
    $region27: #{convnet28_forward.1} parent=1 // pred_check_branch
      %30 = sbr.rel (0) target = $region29
    $region28: #{convnet28_forward.1} parent=1 // pred_region
      _
    $region29: #{convnet28_forward.1} parent=1 // pred_fallthru
      _
    // Predicated region
    $region30: #{convnet28_forward.1} parent=1 // pred_check
      _
    $region31: #{convnet28_forward.1} parent=1 // pred_check_branch
      %32 = sbr.rel (0) target = $region33
    $region32: #{convnet28_forward.1} parent=1 // pred_region
      _
    $region33: #{convnet28_forward.1} parent=1 // pred_fallthru
      _
    // Predicated region
    $region34: #{convnet28_forward.1} parent=1 // pred_check
      _
    $region35: #{convnet28_forward.1} parent=1 // pred_check_branch
      %34 = sbr.rel (0) target = $region37
    $region36: #{convnet28_forward.1} parent=1 // pred_region
      _
    $region37: #{convnet28_forward.1} parent=1 // pred_fallthru
      _
    // Predicated region
    $region38: #{convnet28_forward.1} parent=1 // pred_check
      _
    $region39: #{convnet28_forward.1} parent=1 // pred_check_branch
      %36 = sbr.rel (0) target = $region41
    $region40: #{convnet28_forward.1} parent=1 // pred_region
      _
    $region41: #{convnet28_forward.1} parent=1 // pred_fallthru
      _
    // Predicated region
    $region42: #{convnet28_forward.1} parent=1 // pred_check
      _
    $region43: #{convnet28_forward.1} parent=1 // pred_check_branch
      %38 = sbr.rel (0) target = $region45
    $region44: #{convnet28_forward.1} parent=1 // pred_region
      _
    $region45: #{convnet28_forward.1} parent=1 // pred_fallthru
      _
    %v40 = vld [vmem:[%s0] sm:$0x3]
    %v41 = vld [vmem:[%s0 + $0x2] sm:$0x3]
    %v42 = vld [vmem:[%s0 + $0x4] sm:$0x3]
    %v43 = vld [vmem:[%s0 + $0x6] sm:$0x3]
    %v44 = vld [vmem:[%s0 + $0x8] sm:$0x3]
    %v45 = vld [vmem:[%s0 + $0xa] sm:$0x3]
    %v46 = vld [vmem:[%s0 + $0xc] sm:$0x3]
    %v47 = vld [vmem:[%s0 + $0xe] sm:$0x3]
    %v48 = vld [vmem:[%s0 + $0x10] sm:$0x3]
    %v49 = vld [vmem:[%s0 + $0x12] sm:$0x3]
    %v50 = vld [vmem:[%s0 + $0x14] sm:$0x3]
    %v51 = vld [vmem:[%s0 + $0x16] sm:$0x3]
    %v52 = vld [vmem:[%s0 + $0x18] sm:$0x3]
    %v53 = vld [vmem:[%s0 + $0x1a] sm:$0x3]
    %v54 = vld [vmem:[%s0 + $0x1c] sm:$0x3]
    %v55 = vld [vmem:[%s0 + $0x1e] sm:$0x3]
    %v56 = vld [vmem:[%s0 + $0x20] sm:$0x3]
    %v57 = vld [vmem:[%s0 + $0x22] sm:$0x3]
    %v58 = vld [vmem:[%s0 + $0x24] sm:$0x3]
    %v59 = vld [vmem:[%s0 + $0x26] sm:$0x3]
    %v60 = vld [vmem:[%s0 + $0x28] sm:$0x3]
    %v61 = vld [vmem:[%s0 + $0x2a] sm:$0x3]
    %v62 = vld [vmem:[%s0 + $0x2c] sm:$0x3]
    %v63 = vld [vmem:[%s0 + $0x2e] sm:$0x3]
    %v64 = vld [vmem:[%s0 + $0x30] sm:$0x3]
    %v65 = vld [vmem:[%s0 + $0x32] sm:$0x3]
    %v66 = vld [vmem:[%s0 + $0x34] sm:$0x3]
    %v67 = vld [vmem:[%s0 + $0x38] sm:$0x3]
    %v68 = vld [vmem:[%s0 + $0x3a] sm:$0x3]
    %v69 = vld [vmem:[%s0 + $0x3c] sm:$0x3]
    %v70 = vld [vmem:[%s0 + $0x3e] sm:$0x3]
    %v71 = vld [vmem:[%s0 + $0x40] sm:$0x3]
    %v72 = vld [vmem:[%s0 + $0x42] sm:$0x3]
    %v73 = vld [vmem:[%s0 + $0x44] sm:$0x3]
    %v74 = vld [vmem:[%s0 + $0x46] sm:$0x3]
    %v75 = vld [vmem:[%s0 + $0x48] sm:$0x3]
    %v76 = vld [vmem:[%s0 + $0x4a] sm:$0x3]
    %v77 = vld [vmem:[%s0 + $0x4c] sm:$0x3]
    %v78 = vld [vmem:[%s0 + $0x4e] sm:$0x3]
    %v79 = vld [vmem:[%s0 + $0x50] sm:$0x3]
    %v80 = vld [vmem:[%s0 + $0x52] sm:$0x3]
    %v81 = vld [vmem:[%s0 + $0x54] sm:$0x3]
    %v82 = vld [vmem:[%s0 + $0x56] sm:$0x3]
    %v83 = vld [vmem:[%s0 + $0x58] sm:$0x3]
    %v84 = vld [vmem:[%s0 + $0x5a] sm:$0x3]
    %v85 = vld [vmem:[%s0 + $0x5c] sm:$0x3]
    %v86 = vld [vmem:[%s0 + $0x5e] sm:$0x3]
    %v87 = vld [vmem:[%s0 + $0x60] sm:$0x3]
    %v88 = vld [vmem:[%s0 + $0x62] sm:$0x3]
    %v89 = vld [vmem:[%s0 + $0x64] sm:$0x3]
    %v90 = vld [vmem:[%s0 + $0x66] sm:$0x3]
    %v91 = vld [vmem:[%s0 + $0x68] sm:$0x3]
    %v92 = vld [vmem:[%s0 + $0x6a] sm:$0x3]
    %v93 = vld [vmem:[%s0 + $0x6c] sm:$0x3]
    %v94 = vld [vmem:[%s0 + $0x70] sm:$0x3]
    %v95 = vld [vmem:[%s0 + $0x72] sm:$0x3]
    %v96 = vld [vmem:[%s0 + $0x74] sm:$0x3]
    %v97 = vld [vmem:[%s0 + $0x76] sm:$0x3]
    %v98 = vld [vmem:[%s0 + $0x78] sm:$0x3]
    %v99 = vld [vmem:[%s0 + $0x7a] sm:$0x3]
    %v100 = vld [vmem:[%s0 + $0x7c] sm:$0x3]
    %v101 = vld [vmem:[%s0 + $0x7e] sm:$0x3]
    %v102 = vld [vmem:[%s0 + $0x80] sm:$0x3]
    %v103 = vld [vmem:[%s0 + $0x82] sm:$0x3]
    %v104 = vld [vmem:[%s0 + $0x84] sm:$0x3]
    %v105 = vld [vmem:[%s0 + $0x86] sm:$0x3]
    %v106 = vld [vmem:[%s0 + $0x88] sm:$0x3]
    %v107 = vld [vmem:[%s0 + $0x8a] sm:$0x3]
    %v108 = vld [vmem:[%s0 + $0x8c] sm:$0x3]
    %v109 = vld [vmem:[%s0 + $0x8e] sm:$0x3]
    %v110 = vld [vmem:[%s0 + $0x90] sm:$0x3]
    %v111 = vld [vmem:[%s0 + $0x92] sm:$0x3]
    %v112 = vld [vmem:[%s0 + $0x94] sm:$0x3]
    %v113 = vld [vmem:[%s0 + $0x96] sm:$0x3]
    %v114 = vld [vmem:[%s0 + $0x98] sm:$0x3]
    %v115 = vld [vmem:[%s0 + $0x9a] sm:$0x3]
    %v116 = vld [vmem:[%s0 + $0x9c] sm:$0x3]
    %v117 = vld [vmem:[%s0 + $0x9e] sm:$0x3]
    %v118 = vld [vmem:[%s0 + $0xa0] sm:$0x3]
    %v119 = vld [vmem:[%s0 + $0xa2] sm:$0x3]
    %v120 = vld [vmem:[%s0 + $0xa4] sm:$0x3]
    %v121 = vld [vmem:[%s0 + $0xa8] sm:$0x3]
    %v122 = vld [vmem:[%s0 + $0xaa] sm:$0x3]
    %v123 = vld [vmem:[%s0 + $0xac] sm:$0x3]
    %v124 = vld [vmem:[%s0 + $0xae] sm:$0x3]
    %v125 = vld [vmem:[%s0 + $0xb0] sm:$0x3]
    %v126 = vld [vmem:[%s0 + $0xb2] sm:$0x3]
    %v127 = vld [vmem:[%s0 + $0xb4] sm:$0x3]
    %v128 = vld [vmem:[%s0 + $0xb6] sm:$0x3]
    %v129 = vld [vmem:[%s0 + $0xb8] sm:$0x3]
    %v130 = vld [vmem:[%s0 + $0xba] sm:$0x3]
    %v131 = vld [vmem:[%s0 + $0xbc] sm:$0x3]
    %v132 = vld [vmem:[%s0 + $0xbe] sm:$0x3]
    %v133 = vld [vmem:[%s0 + $0xc0] sm:$0x3]
    %v134 = vld [vmem:[%s0 + $0xc2] sm:$0x3]
    %v135 = vld [vmem:[%s0 + $0xc4] sm:$0x3]
    %v136 = vld [vmem:[%s0 + $0xc6] sm:$0x3]
    %v137 = vld [vmem:[%s0 + $0xc8] sm:$0x3]
    %v138 = vld [vmem:[%s0 + $0xca] sm:$0x3]
    %v139 = vld [vmem:[%s0 + $0xcc] sm:$0x3]
    %v140 = vld [vmem:[%s0 + $0xce] sm:$0x3]
    %v141 = vld [vmem:[%s0 + $0xd0] sm:$0x3]
    %v142 = vld [vmem:[%s0 + $0xd2] sm:$0x3]
    %v143 = vld [vmem:[%s0 + $0xd4] sm:$0x3]
    %v144 = vld [vmem:[%s0 + $0xd6] sm:$0x3]
    %v145 = vld [vmem:[%s0 + $0xd8] sm:$0x3]
    %v146 = vld [vmem:[%s0 + $0xda] sm:$0x3]
    %v147 = vld [vmem:[%s0 + $0xdc] sm:$0x3]
    %v148 = vld [vmem:[%s0 + $0xe0] sm:$0x3]
    %v149 = vld [vmem:[%s0 + $0xe2] sm:$0x3]
    %v150 = vld [vmem:[%s0 + $0xe4] sm:$0x3]
    %v151 = vld [vmem:[%s0 + $0xe6] sm:$0x3]
    %v152 = vld [vmem:[%s0 + $0xe8] sm:$0x3]
    %v153 = vld [vmem:[%s0 + $0xea] sm:$0x3]
    %v154 = vld [vmem:[%s0 + $0xec] sm:$0x3]
    %v155 = vld [vmem:[%s0 + $0xee] sm:$0x3]
    %v156 = vld [vmem:[%s0 + $0xf0] sm:$0x3]
    %v157 = vld [vmem:[%s0 + $0xf2] sm:$0x3]
    %v158 = vld [vmem:[%s0 + $0xf4] sm:$0x3]
    %v159 = vld [vmem:[%s0 + $0xf6] sm:$0x3]
    %v160 = vld [vmem:[%s0 + $0xf8] sm:$0x3]
    %v161 = vld [vmem:[%s0 + $0xfa] sm:$0x3]
    %v162 = vld [vmem:[%s0 + $0xfc] sm:$0x3]
    %v163 = vld [vmem:[%s0 + $0xfe] sm:$0x3]
    %v164 = vld [vmem:[%s0 + $0x100] sm:$0x3]
    %v165 = vld [vmem:[%s0 + $0x102] sm:$0x3]
    %v166 = vld [vmem:[%s0 + $0x104] sm:$0x3]
    %v167 = vld [vmem:[%s0 + $0x106] sm:$0x3]
    %v168 = vld [vmem:[%s0 + $0x108] sm:$0x3]
    %v169 = vld [vmem:[%s0 + $0x10a] sm:$0x3]
    %v170 = vld [vmem:[%s0 + $0x10c] sm:$0x3]
    %v171 = vld [vmem:[%s0 + $0x10e] sm:$0x3]
    %v172 = vld [vmem:[%s0 + $0x110] sm:$0x3]
    %v173 = vld [vmem:[%s0 + $0x112] sm:$0x3]
    %v174 = vld [vmem:[%s0 + $0x114] sm:$0x3]
    %v175 = vld [vmem:[%s0 + $0x118] sm:$0x3]
    %v176 = vld [vmem:[%s0 + $0x11a] sm:$0x3]
    %v177 = vld [vmem:[%s0 + $0x11c] sm:$0x3]
    %v178 = vld [vmem:[%s0 + $0x11e] sm:$0x3]
    %v179 = vld [vmem:[%s0 + $0x120] sm:$0x3]
    %v180 = vld [vmem:[%s0 + $0x122] sm:$0x3]
    %v181 = vld [vmem:[%s0 + $0x124] sm:$0x3]
    %v182 = vld [vmem:[%s0 + $0x126] sm:$0x3]
    %v183 = vld [vmem:[%s0 + $0x128] sm:$0x3]
    %v184 = vld [vmem:[%s0 + $0x12a] sm:$0x3]
    %v185 = vld [vmem:[%s0 + $0x12c] sm:$0x3]
    %v186 = vld [vmem:[%s0 + $0x12e] sm:$0x3]
    %v187 = vld [vmem:[%s0 + $0x130] sm:$0x3]
    %v188 = vld [vmem:[%s0 + $0x132] sm:$0x3]
    %v189 = vld [vmem:[%s0 + $0x134] sm:$0x3]
    %v190 = vld [vmem:[%s0 + $0x136] sm:$0x3]
    %v191 = vld [vmem:[%s0 + $0x138] sm:$0x3]
    %v192 = vld [vmem:[%s0 + $0x13a] sm:$0x3]
    %v193 = vld [vmem:[%s0 + $0x13c] sm:$0x3]
    %v194 = vld [vmem:[%s0 + $0x13e] sm:$0x3]
    %v195 = vld [vmem:[%s0 + $0x140] sm:$0x3]
    %v196 = vld [vmem:[%s0 + $0x142] sm:$0x3]
    %v197 = vld [vmem:[%s0 + $0x144] sm:$0x3]
    %v198 = vld [vmem:[%s0 + $0x146] sm:$0x3]
    %v199 = vld [vmem:[%s0 + $0x148] sm:$0x3]
    %v200 = vld [vmem:[%s0 + $0x14a] sm:$0x3]
    %v201 = vld [vmem:[%s0 + $0x14c] sm:$0x3]
    %v202 = vld [vmem:[%s0 + $0x150] sm:$0x3]
    %v203 = vld [vmem:[%s0 + $0x152] sm:$0x3]
    %v204 = vld [vmem:[%s0 + $0x154] sm:$0x3]
    %v205 = vld [vmem:[%s0 + $0x156] sm:$0x3]
    %v206 = vld [vmem:[%s0 + $0x158] sm:$0x3]
    %v207 = vld [vmem:[%s0 + $0x15a] sm:$0x3]
    %v208 = vld [vmem:[%s0 + $0x15c] sm:$0x3]
    %v209 = vld [vmem:[%s0 + $0x15e] sm:$0x3]
    %v210 = vld [vmem:[%s0 + $0x160] sm:$0x3]
    %v211 = vld [vmem:[%s0 + $0x162] sm:$0x3]
    %v212 = vld [vmem:[%s0 + $0x164] sm:$0x3]
    %v213 = vld [vmem:[%s0 + $0x166] sm:$0x3]
    %v214 = vld [vmem:[%s0 + $0x168] sm:$0x3]
    %v215 = vld [vmem:[%s0 + $0x16a] sm:$0x3]
    %v216 = vld [vmem:[%s0 + $0x16c] sm:$0x3]
    %v217 = vld [vmem:[%s0 + $0x16e] sm:$0x3]
    %v218 = vld [vmem:[%s0 + $0x170] sm:$0x3]
    %v219 = vld [vmem:[%s0 + $0x172] sm:$0x3]
    %v220 = vld [vmem:[%s0 + $0x174] sm:$0x3]
    %v221 = vld [vmem:[%s0 + $0x176] sm:$0x3]
    %v222 = vld [vmem:[%s0 + $0x178] sm:$0x3]
    %v223 = vld [vmem:[%s0 + $0x17a] sm:$0x3]
    %v224 = vld [vmem:[%s0 + $0x17c] sm:$0x3]
    %v225 = vld [vmem:[%s0 + $0x17e] sm:$0x3]
    %v226 = vld [vmem:[%s0 + $0x180] sm:$0x3]
    %v227 = vld [vmem:[%s0 + $0x182] sm:$0x3]
    %v228 = vld [vmem:[%s0 + $0x184] sm:$0x3]
    %v229 = vld [vmem:[%s0 + $0x188] sm:$0x3]
    %v230 = vld [vmem:[%s0 + $0x18a] sm:$0x3]
    %v231 = vld [vmem:[%s0 + $0x18c] sm:$0x3]
    %v232 = vld [vmem:[%s0 + $0x18e] sm:$0x3]
    %v233 = vld [vmem:[%s0 + $0x190] sm:$0x3]
    %v234 = vld [vmem:[%s0 + $0x192] sm:$0x3]
    %v235 = vld [vmem:[%s0 + $0x194] sm:$0x3]
    %v236 = vld [vmem:[%s0 + $0x196] sm:$0x3]
    %v237 = vld [vmem:[%s0 + $0x198] sm:$0x3]
    %v238 = vld [vmem:[%s0 + $0x19a] sm:$0x3]
    %v239 = vld [vmem:[%s0 + $0x19c] sm:$0x3]
    %v240 = vld [vmem:[%s0 + $0x19e] sm:$0x3]
    %v241 = vld [vmem:[%s0 + $0x1a0] sm:$0x3]
    %v242 = vld [vmem:[%s0 + $0x1a2] sm:$0x3]
    %v243 = vld [vmem:[%s0 + $0x1a4] sm:$0x3]
    %v244 = vld [vmem:[%s0 + $0x1a6] sm:$0x3]
    %v245 = vld [vmem:[%s0 + $0x1a8] sm:$0x3]
    %v246 = vld [vmem:[%s0 + $0x1aa] sm:$0x3]
    %v247 = vld [vmem:[%s0 + $0x1ac] sm:$0x3]
    %v248 = vld [vmem:[%s0 + $0x1ae] sm:$0x3]
    %v249 = vld [vmem:[%s0 + $0x1b0] sm:$0x3]
    %v250 = vld [vmem:[%s0 + $0x1b2] sm:$0x3]
    %v251 = vld [vmem:[%s0 + $0x1b4] sm:$0x3]
    %v252 = vld [vmem:[%s0 + $0x1b6] sm:$0x3]
    %v253 = vld [vmem:[%s0 + $0x1b8] sm:$0x3]
    %v254 = vld [vmem:[%s0 + $0x1ba] sm:$0x3]
    %v255 = vld [vmem:[%s0 + $0x1bc] sm:$0x3]
    %v256 = vld [vmem:[%s0 + $0x1c0] sm:$0x3]
    %v257 = vld [vmem:[%s0 + $0x1c2] sm:$0x3]
    %v258 = vld [vmem:[%s0 + $0x1c4] sm:$0x3]
    %v259 = vld [vmem:[%s0 + $0x1c6] sm:$0x3]
    %v260 = vld [vmem:[%s0 + $0x1c8] sm:$0x3]
    %v261 = vld [vmem:[%s0 + $0x1ca] sm:$0x3]
    %v262 = vld [vmem:[%s0 + $0x1cc] sm:$0x3]
    %v263 = vld [vmem:[%s0 + $0x1ce] sm:$0x3]
    %v264 = vld [vmem:[%s0 + $0x1d0] sm:$0x3]
    %v265 = vld [vmem:[%s0 + $0x1d2] sm:$0x3]
    %v266 = vld [vmem:[%s0 + $0x1d4] sm:$0x3]
    %v267 = vld [vmem:[%s0 + $0x1d6] sm:$0x3]
    %v268 = vld [vmem:[%s0 + $0x1d8] sm:$0x3]
    %v269 = vld [vmem:[%s0 + $0x1da] sm:$0x3]
    %v270 = vld [vmem:[%s0 + $0x1dc] sm:$0x3]
    %v271 = vld [vmem:[%s0 + $0x1de] sm:$0x3]
    %v272 = vld [vmem:[%s0 + $0x1e0] sm:$0x3]
    %v273 = vld [vmem:[%s0 + $0x1e2] sm:$0x3]
    %v274 = vld [vmem:[%s0 + $0x1e4] sm:$0x3]
    %v275 = vld [vmem:[%s0 + $0x1e6] sm:$0x3]
    %v276 = vld [vmem:[%s0 + $0x1e8] sm:$0x3]
    %v277 = vld [vmem:[%s0 + $0x1ea] sm:$0x3]
    %v278 = vld [vmem:[%s0 + $0x1ec] sm:$0x3]
    %v279 = vld [vmem:[%s0 + $0x1ee] sm:$0x3]
    %v280 = vld [vmem:[%s0 + $0x1f0] sm:$0x3]
    %v281 = vld [vmem:[%s0 + $0x1f2] sm:$0x3]
    %v282 = vld [vmem:[%s0 + $0x1f4] sm:$0x3]
    %v283 = vld [vmem:[%s0 + $0x1f8] sm:$0x3]
    %v284 = vld [vmem:[%s0 + $0x1fa] sm:$0x3]
    %v285 = vld [vmem:[%s0 + $0x1fc] sm:$0x3]
    %v286 = vld [vmem:[%s0 + $0x1fe] sm:$0x3]
    %v287 = vld [vmem:[%s0 + $0x200] sm:$0x3]
    %v288 = vld [vmem:[%s0 + $0x202] sm:$0x3]
    %v289 = vld [vmem:[%s0 + $0x204] sm:$0x3]
    %v290 = vld [vmem:[%s0 + $0x206] sm:$0x3]
    %v291 = vld [vmem:[%s0 + $0x208] sm:$0x3]
    %v292 = vld [vmem:[%s0 + $0x20a] sm:$0x3]
    %v293 = vld [vmem:[%s0 + $0x20c] sm:$0x3]
    %v294 = vld [vmem:[%s0 + $0x20e] sm:$0x3]
    %v295 = vld [vmem:[%s0 + $0x210] sm:$0x3]
    %v296 = vld [vmem:[%s0 + $0x212] sm:$0x3]
    %v297 = vld [vmem:[%s0 + $0x214] sm:$0x3]
    %v298 = vld [vmem:[%s0 + $0x216] sm:$0x3]
    %v299 = vld [vmem:[%s0 + $0x218] sm:$0x3]
    %v300 = vld [vmem:[%s0 + $0x21a] sm:$0x3]
    %v301 = vld [vmem:[%s0 + $0x21c] sm:$0x3]
    %v302 = vld [vmem:[%s0 + $0x21e] sm:$0x3]
    %v303 = vld [vmem:[%s0 + $0x220] sm:$0x3]
    %v304 = vld [vmem:[%s0 + $0x222] sm:$0x3]
    %v305 = vld [vmem:[%s0 + $0x224] sm:$0x3]
    %v306 = vld [vmem:[%s0 + $0x226] sm:$0x3]
    %v307 = vld [vmem:[%s0 + $0x228] sm:$0x3]
    %v308 = vld [vmem:[%s0 + $0x22a] sm:$0x3]
    %v309 = vld [vmem:[%s0 + $0x22c] sm:$0x3]
    %v310 = vld [vmem:[%s0 + $0x230] sm:$0x3]
    %v311 = vld [vmem:[%s0 + $0x232] sm:$0x3]
    %v312 = vld [vmem:[%s0 + $0x234] sm:$0x3]
    %v313 = vld [vmem:[%s0 + $0x236] sm:$0x3]
    %v314 = vld [vmem:[%s0 + $0x238] sm:$0x3]
    %v315 = vld [vmem:[%s0 + $0x23a] sm:$0x3]
    %v316 = vld [vmem:[%s0 + $0x23c] sm:$0x3]
    %v317 = vld [vmem:[%s0 + $0x23e] sm:$0x3]
    %v318 = vld [vmem:[%s0 + $0x240] sm:$0x3]
    %v319 = vld [vmem:[%s0 + $0x242] sm:$0x3]
    %v320 = vld [vmem:[%s0 + $0x244] sm:$0x3]
    %v321 = vld [vmem:[%s0 + $0x246] sm:$0x3]
    %v322 = vld [vmem:[%s0 + $0x248] sm:$0x3]
    %v323 = vld [vmem:[%s0 + $0x24a] sm:$0x3]
    %v324 = vld [vmem:[%s0 + $0x24c] sm:$0x3]
    %v325 = vld [vmem:[%s0 + $0x24e] sm:$0x3]
    %v326 = vld [vmem:[%s0 + $0x250] sm:$0x3]
    %v327 = vld [vmem:[%s0 + $0x252] sm:$0x3]
    %v328 = vld [vmem:[%s0 + $0x254] sm:$0x3]
    %v329 = vld [vmem:[%s0 + $0x256] sm:$0x3]
    %v330 = vld [vmem:[%s0 + $0x258] sm:$0x3]
    %v331 = vld [vmem:[%s0 + $0x25a] sm:$0x3]
    %v332 = vld [vmem:[%s0 + $0x25c] sm:$0x3]
    %v333 = vld [vmem:[%s0 + $0x25e] sm:$0x3]
    %v334 = vld [vmem:[%s0 + $0x260] sm:$0x3]
    %v335 = vld [vmem:[%s0 + $0x262] sm:$0x3]
    %v336 = vld [vmem:[%s0 + $0x264] sm:$0x3]
    %v337 = vld [vmem:[%s0 + $0x268] sm:$0x3]
    %v338 = vld [vmem:[%s0 + $0x26a] sm:$0x3]
    %v339 = vld [vmem:[%s0 + $0x26c] sm:$0x3]
    %v340 = vld [vmem:[%s0 + $0x26e] sm:$0x3]
    %v341 = vld [vmem:[%s0 + $0x270] sm:$0x3]
    %v342 = vld [vmem:[%s0 + $0x272] sm:$0x3]
    %v343 = vld [vmem:[%s0 + $0x274] sm:$0x3]
    %v344 = vld [vmem:[%s0 + $0x276] sm:$0x3]
    %v345 = vld [vmem:[%s0 + $0x278] sm:$0x3]
    %v346 = vld [vmem:[%s0 + $0x27a] sm:$0x3]
    %v347 = vld [vmem:[%s0 + $0x27c] sm:$0x3]
    %v348 = vld [vmem:[%s0 + $0x27e] sm:$0x3]
    %v349 = vld [vmem:[%s0 + $0x280] sm:$0x3]
    %v350 = vld [vmem:[%s0 + $0x282] sm:$0x3]
    %v351 = vld [vmem:[%s0 + $0x284] sm:$0x3]
    %v352 = vld [vmem:[%s0 + $0x286] sm:$0x3]
    %v353 = vld [vmem:[%s0 + $0x288] sm:$0x3]
    %v354 = vld [vmem:[%s0 + $0x28a] sm:$0x3]
    %v355 = vld [vmem:[%s0 + $0x28c] sm:$0x3]
    %v356 = vld [vmem:[%s0 + $0x28e] sm:$0x3]
    %v357 = vld [vmem:[%s0 + $0x290] sm:$0x3]
    %v358 = vld [vmem:[%s0 + $0x292] sm:$0x3]
    %v359 = vld [vmem:[%s0 + $0x294] sm:$0x3]
    %v360 = vld [vmem:[%s0 + $0x296] sm:$0x3]
    %v361 = vld [vmem:[%s0 + $0x298] sm:$0x3]
    %v362 = vld [vmem:[%s0 + $0x29a] sm:$0x3]
    %v363 = vld [vmem:[%s0 + $0x29c] sm:$0x3]
    %v364 = vld [vmem:[%s0 + $0x2a0] sm:$0x3]
    %v365 = vld [vmem:[%s0 + $0x2a2] sm:$0x3]
    %v366 = vld [vmem:[%s0 + $0x2a4] sm:$0x3]
    %v367 = vld [vmem:[%s0 + $0x2a6] sm:$0x3]
    %v368 = vld [vmem:[%s0 + $0x2a8] sm:$0x3]
    %v369 = vld [vmem:[%s0 + $0x2aa] sm:$0x3]
    %v370 = vld [vmem:[%s0 + $0x2ac] sm:$0x3]
    %v371 = vld [vmem:[%s0 + $0x2ae] sm:$0x3]
    %v372 = vld [vmem:[%s0 + $0x2b0] sm:$0x3]
    %v373 = vld [vmem:[%s0 + $0x2b2] sm:$0x3]
    %v374 = vld [vmem:[%s0 + $0x2b4] sm:$0x3]
    %v375 = vld [vmem:[%s0 + $0x2b6] sm:$0x3]
    %v376 = vld [vmem:[%s0 + $0x2b8] sm:$0x3]
    %v377 = vld [vmem:[%s0 + $0x2ba] sm:$0x3]
    %v378 = vld [vmem:[%s0 + $0x2bc] sm:$0x3]
    %v379 = vld [vmem:[%s0 + $0x2be] sm:$0x3]
    %v380 = vld [vmem:[%s0 + $0x2c0] sm:$0x3]
    %v381 = vld [vmem:[%s0 + $0x2c2] sm:$0x3]
    %v382 = vld [vmem:[%s0 + $0x2c4] sm:$0x3]
    %v383 = vld [vmem:[%s0 + $0x2c6] sm:$0x3]
    %v384 = vld [vmem:[%s0 + $0x2c8] sm:$0x3]
    %v385 = vld [vmem:[%s0 + $0x2ca] sm:$0x3]
    %v386 = vld [vmem:[%s0 + $0x2cc] sm:$0x3]
    %v387 = vld [vmem:[%s0 + $0x2ce] sm:$0x3]
    %v388 = vld [vmem:[%s0 + $0x2d0] sm:$0x3]
    %v389 = vld [vmem:[%s0 + $0x2d2] sm:$0x3]
    %v390 = vld [vmem:[%s0 + $0x2d4] sm:$0x3]
    %v391 = vld [vmem:[%s0 + $0x2d8] sm:$0x3]
    %v392 = vld [vmem:[%s0 + $0x2da] sm:$0x3]
    %v393 = vld [vmem:[%s0 + $0x2dc] sm:$0x3]
    %v394 = vld [vmem:[%s0 + $0x2de] sm:$0x3]
    %v395 = vld [vmem:[%s0 + $0x2e0] sm:$0x3]
    %v396 = vld [vmem:[%s0 + $0x2e2] sm:$0x3]
    %v397 = vld [vmem:[%s0 + $0x2e4] sm:$0x3]
    %v398 = vld [vmem:[%s0 + $0x2e6] sm:$0x3]
    %v399 = vld [vmem:[%s0 + $0x2e8] sm:$0x3]
    %v400 = vld [vmem:[%s0 + $0x2ea] sm:$0x3]
    %v401 = vld [vmem:[%s0 + $0x2ec] sm:$0x3]
    %v402 = vld [vmem:[%s0 + $0x2ee] sm:$0x3]
    %v403 = vld [vmem:[%s0 + $0x2f0] sm:$0x3]
    %v404 = vld [vmem:[%s0 + $0x2f2] sm:$0x3]
    %v405 = vld [vmem:[%s0 + $0x2f4] sm:$0x3]
    %v406 = vld [vmem:[%s0 + $0x2f6] sm:$0x3]
    %v407 = vld [vmem:[%s0 + $0x2f8] sm:$0x3]
    %v408 = vld [vmem:[%s0 + $0x2fa] sm:$0x3]
    %v409 = vld [vmem:[%s0 + $0x2fc] sm:$0x3]
    %v410 = vld [vmem:[%s0 + $0x2fe] sm:$0x3]
    %v411 = vld [vmem:[%s0 + $0x300] sm:$0x3]
    %v412 = vld [vmem:[%s0 + $0x302] sm:$0x3]
    %v413 = vld [vmem:[%s0 + $0x304] sm:$0x3]
    %v414 = vld [vmem:[%s0 + $0x306] sm:$0x3]
    %v415 = vld [vmem:[%s0 + $0x308] sm:$0x3]
    %v416 = vld [vmem:[%s0 + $0x30a] sm:$0x3]
    %v417 = vld [vmem:[%s0 + $0x30c] sm:$0x3]
    %v418 = vld [vmem:[%s0 + $0x310] sm:$0x3]
    %v419 = vld [vmem:[%s0 + $0x312] sm:$0x3]
    %v420 = vld [vmem:[%s0 + $0x314] sm:$0x3]
    %v421 = vld [vmem:[%s0 + $0x316] sm:$0x3]
    %v422 = vld [vmem:[%s0 + $0x318] sm:$0x3]
    %v423 = vld [vmem:[%s0 + $0x31a] sm:$0x3]
    %v424 = vld [vmem:[%s0 + $0x31c] sm:$0x3]
    %v425 = vld [vmem:[%s0 + $0x31e] sm:$0x3]
    %v426 = vld [vmem:[%s0 + $0x320] sm:$0x3]
    %v427 = vld [vmem:[%s0 + $0x322] sm:$0x3]
    %v428 = vld [vmem:[%s0 + $0x324] sm:$0x3]
    %v429 = vld [vmem:[%s0 + $0x326] sm:$0x3]
    %v430 = vld [vmem:[%s0 + $0x328] sm:$0x3]
    %v431 = vld [vmem:[%s0 + $0x32a] sm:$0x3]
    %v432 = vld [vmem:[%s0 + $0x32c] sm:$0x3]
    %v433 = vld [vmem:[%s0 + $0x32e] sm:$0x3]
    %v434 = vld [vmem:[%s0 + $0x330] sm:$0x3]
    %v435 = vld [vmem:[%s0 + $0x332] sm:$0x3]
    %v436 = vld [vmem:[%s0 + $0x334] sm:$0x3]
    %v437 = vld [vmem:[%s0 + $0x336] sm:$0x3]
    %v438 = vld [vmem:[%s0 + $0x338] sm:$0x3]
    %v439 = vld [vmem:[%s0 + $0x33a] sm:$0x3]
    %v440 = vld [vmem:[%s0 + $0x33c] sm:$0x3]
    %v441 = vld [vmem:[%s0 + $0x33e] sm:$0x3]
    %v442 = vld [vmem:[%s0 + $0x340] sm:$0x3]
    %v443 = vld [vmem:[%s0 + $0x342] sm:$0x3]
    %v444 = vld [vmem:[%s0 + $0x344] sm:$0x3]
    %v445 = vld [vmem:[%s0 + $0x348] sm:$0x3]
    %v446 = vld [vmem:[%s0 + $0x34a] sm:$0x3]
    %v447 = vld [vmem:[%s0 + $0x34c] sm:$0x3]
    %v448 = vld [vmem:[%s0 + $0x34e] sm:$0x3]
    %v449 = vld [vmem:[%s0 + $0x350] sm:$0x3]
    %v450 = vld [vmem:[%s0 + $0x352] sm:$0x3]
    %v451 = vld [vmem:[%s0 + $0x354] sm:$0x3]
    %v452 = vld [vmem:[%s0 + $0x356] sm:$0x3]
    %v453 = vld [vmem:[%s0 + $0x358] sm:$0x3]
    %v454 = vld [vmem:[%s0 + $0x35a] sm:$0x3]
    %v455 = vld [vmem:[%s0 + $0x35c] sm:$0x3]
    %v456 = vld [vmem:[%s0 + $0x35e] sm:$0x3]
    %v457 = vld [vmem:[%s0 + $0x360] sm:$0x3]
    %v458 = vld [vmem:[%s0 + $0x362] sm:$0x3]
    %v459 = vld [vmem:[%s0 + $0x364] sm:$0x3]
    %v460 = vld [vmem:[%s0 + $0x366] sm:$0x3]
    %v461 = vld [vmem:[%s0 + $0x368] sm:$0x3]
    %v462 = vld [vmem:[%s0 + $0x36a] sm:$0x3]
    %v463 = vld [vmem:[%s0 + $0x36c] sm:$0x3]
    %v464 = vld [vmem:[%s0 + $0x36e] sm:$0x3]
    %v465 = vld [vmem:[%s0 + $0x370] sm:$0x3]
    %v466 = vld [vmem:[%s0 + $0x372] sm:$0x3]
    %v467 = vld [vmem:[%s0 + $0x374] sm:$0x3]
    %v468 = vld [vmem:[%s0 + $0x376] sm:$0x3]
    %v469 = vld [vmem:[%s0 + $0x378] sm:$0x3]
    %v470 = vld [vmem:[%s0 + $0x37a] sm:$0x3]
    %v471 = vld [vmem:[%s0 + $0x37c] sm:$0x3]
    %v472 = vld [vmem:[%s0 + $0x380] sm:$0x3]
    %v473 = vld [vmem:[%s0 + $0x382] sm:$0x3]
    %v474 = vld [vmem:[%s0 + $0x384] sm:$0x3]
    %v475 = vld [vmem:[%s0 + $0x386] sm:$0x3]
    %v476 = vld [vmem:[%s0 + $0x388] sm:$0x3]
    %v477 = vld [vmem:[%s0 + $0x38a] sm:$0x3]
    %v478 = vld [vmem:[%s0 + $0x38c] sm:$0x3]
    %v479 = vld [vmem:[%s0 + $0x38e] sm:$0x3]
    %v480 = vld [vmem:[%s0 + $0x390] sm:$0x3]
    %v481 = vld [vmem:[%s0 + $0x392] sm:$0x3]
    %v482 = vld [vmem:[%s0 + $0x394] sm:$0x3]
    %v483 = vld [vmem:[%s0 + $0x396] sm:$0x3]
    %v484 = vld [vmem:[%s0 + $0x398] sm:$0x3]
    %v485 = vld [vmem:[%s0 + $0x39a] sm:$0x3]
    %v486 = vld [vmem:[%s0 + $0x39c] sm:$0x3]
    %v487 = vld [vmem:[%s0 + $0x39e] sm:$0x3]
    %v488 = vld [vmem:[%s0 + $0x3a0] sm:$0x3]
    %v489 = vld [vmem:[%s0 + $0x3a2] sm:$0x3]
    %v490 = vld [vmem:[%s0 + $0x3a4] sm:$0x3]
    %v491 = vld [vmem:[%s0 + $0x3a6] sm:$0x3]
    %v492 = vld [vmem:[%s0 + $0x3a8] sm:$0x3]
    %v493 = vld [vmem:[%s0 + $0x3aa] sm:$0x3]
    %v494 = vld [vmem:[%s0 + $0x3ac] sm:$0x3]
    %v495 = vld [vmem:[%s0 + $0x3ae] sm:$0x3]
    %v496 = vld [vmem:[%s0 + $0x3b0] sm:$0x3]
    %v497 = vld [vmem:[%s0 + $0x3b2] sm:$0x3]
    %v498 = vld [vmem:[%s0 + $0x3b4] sm:$0x3]
    %v499 = vld [vmem:[%s0 + $0x3b8] sm:$0x3]
    %v500 = vld [vmem:[%s0 + $0x3ba] sm:$0x3]
    %v501 = vld [vmem:[%s0 + $0x3bc] sm:$0x3]
    %v502 = vld [vmem:[%s0 + $0x3be] sm:$0x3]
    %v503 = vld [vmem:[%s0 + $0x3c0] sm:$0x3]
    %v504 = vld [vmem:[%s0 + $0x3c2] sm:$0x3]
    %v505 = vld [vmem:[%s0 + $0x3c4] sm:$0x3]
    %v506 = vld [vmem:[%s0 + $0x3c6] sm:$0x3]
    %v507 = vld [vmem:[%s0 + $0x3c8] sm:$0x3]
    %v508 = vld [vmem:[%s0 + $0x3ca] sm:$0x3]
    %v509 = vld [vmem:[%s0 + $0x3cc] sm:$0x3]
    %v510 = vld [vmem:[%s0 + $0x3ce] sm:$0x3]
    %v511 = vld [vmem:[%s0 + $0x3d0] sm:$0x3]
    %v512 = vld [vmem:[%s0 + $0x3d2] sm:$0x3]
    %v513 = vld [vmem:[%s0 + $0x3d4] sm:$0x3]
    %v514 = vld [vmem:[%s0 + $0x3d6] sm:$0x3]
    %v515 = vld [vmem:[%s0 + $0x3d8] sm:$0x3]
    %v516 = vld [vmem:[%s0 + $0x3da] sm:$0x3]
    %v517 = vld [vmem:[%s0 + $0x3dc] sm:$0x3]
    %v518 = vld [vmem:[%s0 + $0x3de] sm:$0x3]
    %v519 = vld [vmem:[%s0 + $0x3e0] sm:$0x3]
    %v520 = vld [vmem:[%s0 + $0x3e2] sm:$0x3]
    %v521 = vld [vmem:[%s0 + $0x3e4] sm:$0x3]
    %v522 = vld [vmem:[%s0 + $0x3e6] sm:$0x3]
    %v523 = vld [vmem:[%s0 + $0x3e8] sm:$0x3]
    %v524 = vld [vmem:[%s0 + $0x3ea] sm:$0x3]
    %v525 = vld [vmem:[%s0 + $0x3ec] sm:$0x3]
    %v526 = vld [vmem:[%s0 + $0x3f0] sm:$0x3]
    %v527 = vld [vmem:[%s0 + $0x3f2] sm:$0x3]
    %v528 = vld [vmem:[%s0 + $0x3f4] sm:$0x3]
    %v529 = vld [vmem:[%s0 + $0x3f6] sm:$0x3]
    %v530 = vld [vmem:[%s0 + $0x3f8] sm:$0x3]
    %v531 = vld [vmem:[%s0 + $0x3fa] sm:$0x3]
    %v532 = vld [vmem:[%s0 + $0x3fc] sm:$0x3]
    %v533 = vld [vmem:[%s0 + $0x3fe] sm:$0x3]
    %v534 = vld [vmem:[%s0 + $0x400] sm:$0x3]
    %v535 = vld [vmem:[%s0 + $0x402] sm:$0x3]
    %v536 = vld [vmem:[%s0 + $0x404] sm:$0x3]
    %v537 = vld [vmem:[%s0 + $0x406] sm:$0x3]
    %v538 = vld [vmem:[%s0 + $0x408] sm:$0x3]
    %v539 = vld [vmem:[%s0 + $0x40a] sm:$0x3]
    %v540 = vld [vmem:[%s0 + $0x40c] sm:$0x3]
    %v541 = vld [vmem:[%s0 + $0x40e] sm:$0x3]
    %v542 = vld [vmem:[%s0 + $0x410] sm:$0x3]
    %v543 = vld [vmem:[%s0 + $0x412] sm:$0x3]
    %v544 = vld [vmem:[%s0 + $0x414] sm:$0x3]
    %v545 = vld [vmem:[%s0 + $0x416] sm:$0x3]
    %v546 = vld [vmem:[%s0 + $0x418] sm:$0x3]
    %v547 = vld [vmem:[%s0 + $0x41a] sm:$0x3]
    %v548 = vld [vmem:[%s0 + $0x41c] sm:$0x3]
    %v549 = vld [vmem:[%s0 + $0x41e] sm:$0x3]
    %v550 = vld [vmem:[%s0 + $0x420] sm:$0x3]
    %v551 = vld [vmem:[%s0 + $0x422] sm:$0x3]
    %v552 = vld [vmem:[%s0 + $0x424] sm:$0x3]
    %v553 = vld [vmem:[%s0 + $0x428] sm:$0x3]
    %v554 = vld [vmem:[%s0 + $0x42a] sm:$0x3]
    %v555 = vld [vmem:[%s0 + $0x42c] sm:$0x3]
    %v556 = vld [vmem:[%s0 + $0x42e] sm:$0x3]
    %v557 = vld [vmem:[%s0 + $0x430] sm:$0x3]
    %v558 = vld [vmem:[%s0 + $0x432] sm:$0x3]
    %v559 = vld [vmem:[%s0 + $0x434] sm:$0x3]
    %v560 = vld [vmem:[%s0 + $0x436] sm:$0x3]
    %v561 = vld [vmem:[%s0 + $0x438] sm:$0x3]
    %v562 = vld [vmem:[%s0 + $0x43a] sm:$0x3]
    %v563 = vld [vmem:[%s0 + $0x43c] sm:$0x3]
    %v564 = vld [vmem:[%s0 + $0x43e] sm:$0x3]
    %v565 = vld [vmem:[%s0 + $0x440] sm:$0x3]
    %v566 = vld [vmem:[%s0 + $0x442] sm:$0x3]
    %v567 = vld [vmem:[%s0 + $0x444] sm:$0x3]
    %v568 = vld [vmem:[%s0 + $0x446] sm:$0x3]
    %v569 = vld [vmem:[%s0 + $0x448] sm:$0x3]
    %v570 = vld [vmem:[%s0 + $0x44a] sm:$0x3]
    %v571 = vld [vmem:[%s0 + $0x44c] sm:$0x3]
    %v572 = vld [vmem:[%s0 + $0x44e] sm:$0x3]
    %v573 = vld [vmem:[%s0 + $0x450] sm:$0x3]
    %v574 = vld [vmem:[%s0 + $0x452] sm:$0x3]
    %v575 = vld [vmem:[%s0 + $0x454] sm:$0x3]
    %v576 = vld [vmem:[%s0 + $0x456] sm:$0x3]
    %v577 = vld [vmem:[%s0 + $0x458] sm:$0x3]
    %v578 = vld [vmem:[%s0 + $0x45a] sm:$0x3]
    %v579 = vld [vmem:[%s0 + $0x45c] sm:$0x3]
    %v580 = vld [vmem:[%s0 + $0x460] sm:$0x3]
    %v581 = vld [vmem:[%s0 + $0x462] sm:$0x3]
    %v582 = vld [vmem:[%s0 + $0x464] sm:$0x3]
    %v583 = vld [vmem:[%s0 + $0x466] sm:$0x3]
    %v584 = vld [vmem:[%s0 + $0x468] sm:$0x3]
    %v585 = vld [vmem:[%s0 + $0x46a] sm:$0x3]
    %v586 = vld [vmem:[%s0 + $0x46c] sm:$0x3]
    %v587 = vld [vmem:[%s0 + $0x46e] sm:$0x3]
    %v588 = vld [vmem:[%s0 + $0x470] sm:$0x3]
    %v589 = vld [vmem:[%s0 + $0x472] sm:$0x3]
    %v590 = vld [vmem:[%s0 + $0x474] sm:$0x3]
    %v591 = vld [vmem:[%s0 + $0x476] sm:$0x3]
    %v592 = vld [vmem:[%s0 + $0x478] sm:$0x3]
    %v593 = vld [vmem:[%s0 + $0x47a] sm:$0x3]
    %v594 = vld [vmem:[%s0 + $0x47c] sm:$0x3]
    %v595 = vld [vmem:[%s0 + $0x47e] sm:$0x3]
    %v596 = vld [vmem:[%s0 + $0x480] sm:$0x3]
    %v597 = vld [vmem:[%s0 + $0x482] sm:$0x3]
    %v598 = vld [vmem:[%s0 + $0x484] sm:$0x3]
    %v599 = vld [vmem:[%s0 + $0x486] sm:$0x3]
    %v600 = vld [vmem:[%s0 + $0x488] sm:$0x3]
    %v601 = vld [vmem:[%s0 + $0x48a] sm:$0x3]
    %v602 = vld [vmem:[%s0 + $0x48c] sm:$0x3]
    %v603 = vld [vmem:[%s0 + $0x48e] sm:$0x3]
    %v604 = vld [vmem:[%s0 + $0x490] sm:$0x3]
    %v605 = vld [vmem:[%s0 + $0x492] sm:$0x3]
    %v606 = vld [vmem:[%s0 + $0x494] sm:$0x3]
    %v607 = vld [vmem:[%s0 + $0x498] sm:$0x3]
    %v608 = vld [vmem:[%s0 + $0x49a] sm:$0x3]
    %v609 = vld [vmem:[%s0 + $0x49c] sm:$0x3]
    %v610 = vld [vmem:[%s0 + $0x49e] sm:$0x3]
    %v611 = vld [vmem:[%s0 + $0x4a0] sm:$0x3]
    %v612 = vld [vmem:[%s0 + $0x4a2] sm:$0x3]
    %v613 = vld [vmem:[%s0 + $0x4a4] sm:$0x3]
    %v614 = vld [vmem:[%s0 + $0x4a6] sm:$0x3]
    %v615 = vld [vmem:[%s0 + $0x4a8] sm:$0x3]
    %v616 = vld [vmem:[%s0 + $0x4aa] sm:$0x3]
    %v617 = vld [vmem:[%s0 + $0x4ac] sm:$0x3]
    %v618 = vld [vmem:[%s0 + $0x4ae] sm:$0x3]
    %v619 = vld [vmem:[%s0 + $0x4b0] sm:$0x3]
    %v620 = vld [vmem:[%s0 + $0x4b2] sm:$0x3]
    %v621 = vld [vmem:[%s0 + $0x4b4] sm:$0x3]
    %v622 = vld [vmem:[%s0 + $0x4b6] sm:$0x3]
    %v623 = vld [vmem:[%s0 + $0x4b8] sm:$0x3]
    %v624 = vld [vmem:[%s0 + $0x4ba] sm:$0x3]
    %v625 = vld [vmem:[%s0 + $0x4bc] sm:$0x3]
    %v626 = vld [vmem:[%s0 + $0x4be] sm:$0x3]
    %v627 = vld [vmem:[%s0 + $0x4c0] sm:$0x3]
    %v628 = vld [vmem:[%s0 + $0x4c2] sm:$0x3]
    %v629 = vld [vmem:[%s0 + $0x4c4] sm:$0x3]
    %v630 = vld [vmem:[%s0 + $0x4c6] sm:$0x3]
    %v631 = vld [vmem:[%s0 + $0x4c8] sm:$0x3]
    %v632 = vld [vmem:[%s0 + $0x4ca] sm:$0x3]
    %v633 = vld [vmem:[%s0 + $0x4cc] sm:$0x3]
    %v634 = vld [vmem:[%s0 + $0x4d0] sm:$0x3]
    %v635 = vld [vmem:[%s0 + $0x4d2] sm:$0x3]
    %v636 = vld [vmem:[%s0 + $0x4d4] sm:$0x3]
    %v637 = vld [vmem:[%s0 + $0x4d6] sm:$0x3]
    %v638 = vld [vmem:[%s0 + $0x4d8] sm:$0x3]
    %v639 = vld [vmem:[%s0 + $0x4da] sm:$0x3]
    %v640 = vld [vmem:[%s0 + $0x4dc] sm:$0x3]
    %v641 = vld [vmem:[%s0 + $0x4de] sm:$0x3]
    %v642 = vld [vmem:[%s0 + $0x4e0] sm:$0x3]
    %v643 = vld [vmem:[%s0 + $0x4e2] sm:$0x3]
    %v644 = vld [vmem:[%s0 + $0x4e4] sm:$0x3]
    %v645 = vld [vmem:[%s0 + $0x4e6] sm:$0x3]
    %v646 = vld [vmem:[%s0 + $0x4e8] sm:$0x3]
    %v647 = vld [vmem:[%s0 + $0x4ea] sm:$0x3]
    %v648 = vld [vmem:[%s0 + $0x4ec] sm:$0x3]
    %v649 = vld [vmem:[%s0 + $0x4ee] sm:$0x3]
    %v650 = vld [vmem:[%s0 + $0x4f0] sm:$0x3]
    %v651 = vld [vmem:[%s0 + $0x4f2] sm:$0x3]
    %v652 = vld [vmem:[%s0 + $0x4f4] sm:$0x3]
    %v653 = vld [vmem:[%s0 + $0x4f6] sm:$0x3]
    %v654 = vld [vmem:[%s0 + $0x4f8] sm:$0x3]
    %v655 = vld [vmem:[%s0 + $0x4fa] sm:$0x3]
    %v656 = vld [vmem:[%s0 + $0x4fc] sm:$0x3]
    %v657 = vld [vmem:[%s0 + $0x4fe] sm:$0x3]
    %v658 = vld [vmem:[%s0 + $0x500] sm:$0x3]
    %v659 = vld [vmem:[%s0 + $0x502] sm:$0x3]
    %v660 = vld [vmem:[%s0 + $0x504] sm:$0x3]
    %v661 = vld [vmem:[%s0 + $0x508] sm:$0x3]
    %v662 = vld [vmem:[%s0 + $0x50a] sm:$0x3]
    %v663 = vld [vmem:[%s0 + $0x50c] sm:$0x3]
    %v664 = vld [vmem:[%s0 + $0x50e] sm:$0x3]
    %v665 = vld [vmem:[%s0 + $0x510] sm:$0x3]
    %v666 = vld [vmem:[%s0 + $0x512] sm:$0x3]
    %v667 = vld [vmem:[%s0 + $0x514] sm:$0x3]
    %v668 = vld [vmem:[%s0 + $0x516] sm:$0x3]
    %v669 = vld [vmem:[%s0 + $0x518] sm:$0x3]
    %v670 = vld [vmem:[%s0 + $0x51a] sm:$0x3]
    %v671 = vld [vmem:[%s0 + $0x51c] sm:$0x3]
    %v672 = vld [vmem:[%s0 + $0x51e] sm:$0x3]
    %v673 = vld [vmem:[%s0 + $0x520] sm:$0x3]
    %v674 = vld [vmem:[%s0 + $0x522] sm:$0x3]
    %v675 = vld [vmem:[%s0 + $0x524] sm:$0x3]
    %v676 = vld [vmem:[%s0 + $0x526] sm:$0x3]
    %v677 = vld [vmem:[%s0 + $0x528] sm:$0x3]
    %v678 = vld [vmem:[%s0 + $0x52a] sm:$0x3]
    %v679 = vld [vmem:[%s0 + $0x52c] sm:$0x3]
    %v680 = vld [vmem:[%s0 + $0x52e] sm:$0x3]
    %v681 = vld [vmem:[%s0 + $0x530] sm:$0x3]
    %v682 = vld [vmem:[%s0 + $0x532] sm:$0x3]
    %v683 = vld [vmem:[%s0 + $0x534] sm:$0x3]
    %v684 = vld [vmem:[%s0 + $0x536] sm:$0x3]
    %v685 = vld [vmem:[%s0 + $0x538] sm:$0x3]
    %v686 = vld [vmem:[%s0 + $0x53a] sm:$0x3]
    %v687 = vld [vmem:[%s0 + $0x53c] sm:$0x3]
    %v688 = vld [vmem:[%s0 + $0x540] sm:$0x3]
    %v689 = vld [vmem:[%s0 + $0x542] sm:$0x3]
    %v690 = vld [vmem:[%s0 + $0x544] sm:$0x3]
    %v691 = vld [vmem:[%s0 + $0x546] sm:$0x3]
    %v692 = vld [vmem:[%s0 + $0x548] sm:$0x3]
    %v693 = vld [vmem:[%s0 + $0x54a] sm:$0x3]
    %v694 = vld [vmem:[%s0 + $0x54c] sm:$0x3]
    %v695 = vld [vmem:[%s0 + $0x54e] sm:$0x3]
    %v696 = vld [vmem:[%s0 + $0x550] sm:$0x3]
    %v697 = vld [vmem:[%s0 + $0x552] sm:$0x3]
    %v698 = vld [vmem:[%s0 + $0x554] sm:$0x3]
    %v699 = vld [vmem:[%s0 + $0x556] sm:$0x3]
    %v700 = vld [vmem:[%s0 + $0x558] sm:$0x3]
    %v701 = vld [vmem:[%s0 + $0x55a] sm:$0x3]
    %v702 = vld [vmem:[%s0 + $0x55c] sm:$0x3]
    %v703 = vld [vmem:[%s0 + $0x55e] sm:$0x3]
    %v704 = vld [vmem:[%s0 + $0x560] sm:$0x3]
    %v705 = vld [vmem:[%s0 + $0x562] sm:$0x3]
    %v706 = vld [vmem:[%s0 + $0x564] sm:$0x3]
    %v707 = vld [vmem:[%s0 + $0x566] sm:$0x3]
    %v708 = vld [vmem:[%s0 + $0x568] sm:$0x3]
    %v709 = vld [vmem:[%s0 + $0x56a] sm:$0x3]
    %v710 = vld [vmem:[%s0 + $0x56c] sm:$0x3]
    %v711 = vld [vmem:[%s0 + $0x56e] sm:$0x3]
    %v712 = vld [vmem:[%s0 + $0x570] sm:$0x3]
    %v713 = vld [vmem:[%s0 + $0x572] sm:$0x3]
    %v714 = vld [vmem:[%s0 + $0x574] sm:$0x3]
    %v715 = vld [vmem:[%s0 + $0x578] sm:$0x3]
    %v716 = vld [vmem:[%s0 + $0x57a] sm:$0x3]
    %v717 = vld [vmem:[%s0 + $0x57c] sm:$0x3]
    %v718 = vld [vmem:[%s0 + $0x57e] sm:$0x3]
    %v719 = vld [vmem:[%s0 + $0x580] sm:$0x3]
    %v720 = vld [vmem:[%s0 + $0x582] sm:$0x3]
    %v721 = vld [vmem:[%s0 + $0x584] sm:$0x3]
    %v722 = vld [vmem:[%s0 + $0x586] sm:$0x3]
    %v723 = vld [vmem:[%s0 + $0x588] sm:$0x3]
    %v724 = vld [vmem:[%s0 + $0x58a] sm:$0x3]
    %v725 = vld [vmem:[%s0 + $0x58c] sm:$0x3]
    %v726 = vld [vmem:[%s0 + $0x58e] sm:$0x3]
    %v727 = vld [vmem:[%s0 + $0x590] sm:$0x3]
    %v728 = vld [vmem:[%s0 + $0x592] sm:$0x3]
    %v729 = vld [vmem:[%s0 + $0x594] sm:$0x3]
    %v730 = vld [vmem:[%s0 + $0x596] sm:$0x3]
    %v731 = vld [vmem:[%s0 + $0x598] sm:$0x3]
    %v732 = vld [vmem:[%s0 + $0x59a] sm:$0x3]
    %v733 = vld [vmem:[%s0 + $0x59c] sm:$0x3]
    %v734 = vld [vmem:[%s0 + $0x59e] sm:$0x3]
    %v735 = vld [vmem:[%s0 + $0x5a0] sm:$0x3]
    %v736 = vld [vmem:[%s0 + $0x5a2] sm:$0x3]
    %v737 = vld [vmem:[%s0 + $0x5a4] sm:$0x3]
    %v738 = vld [vmem:[%s0 + $0x5a6] sm:$0x3]
    %v739 = vld [vmem:[%s0 + $0x5a8] sm:$0x3]
    %v740 = vld [vmem:[%s0 + $0x5aa] sm:$0x3]
    %v741 = vld [vmem:[%s0 + $0x5ac] sm:$0x3]
    %v742 = vld [vmem:[%s0 + $0x5b0] sm:$0x3]
    %v743 = vld [vmem:[%s0 + $0x5b2] sm:$0x3]
    %v744 = vld [vmem:[%s0 + $0x5b4] sm:$0x3]
    %v745 = vld [vmem:[%s0 + $0x5b6] sm:$0x3]
    %v746 = vld [vmem:[%s0 + $0x5b8] sm:$0x3]
    %v747 = vld [vmem:[%s0 + $0x5ba] sm:$0x3]
    %v748 = vld [vmem:[%s0 + $0x5bc] sm:$0x3]
    %v749 = vld [vmem:[%s0 + $0x5be] sm:$0x3]
    %v750 = vld [vmem:[%s0 + $0x5c0] sm:$0x3]
    %v751 = vld [vmem:[%s0 + $0x5c2] sm:$0x3]
    %v752 = vld [vmem:[%s0 + $0x5c4] sm:$0x3]
    %v753 = vld [vmem:[%s0 + $0x5c6] sm:$0x3]
    %v754 = vld [vmem:[%s0 + $0x5c8] sm:$0x3]
    %v755 = vld [vmem:[%s0 + $0x5ca] sm:$0x3]
    %v756 = vld [vmem:[%s0 + $0x5cc] sm:$0x3]
    %v757 = vld [vmem:[%s0 + $0x5ce] sm:$0x3]
    %v758 = vld [vmem:[%s0 + $0x5d0] sm:$0x3]
    %v759 = vld [vmem:[%s0 + $0x5d2] sm:$0x3]
    %v760 = vld [vmem:[%s0 + $0x5d4] sm:$0x3]
    %v761 = vld [vmem:[%s0 + $0x5d6] sm:$0x3]
    %v762 = vld [vmem:[%s0 + $0x5d8] sm:$0x3]
    %v763 = vld [vmem:[%s0 + $0x5da] sm:$0x3]
    %v764 = vld [vmem:[%s0 + $0x5dc] sm:$0x3]
    %v765 = vld [vmem:[%s0 + $0x5de] sm:$0x3]
    %v766 = vld [vmem:[%s0 + $0x5e0] sm:$0x3]
    %v767 = vld [vmem:[%s0 + $0x5e2] sm:$0x3]
    %v768 = vld [vmem:[%s0 + $0x5e4] sm:$0x3]
    %v769 = vld [vmem:[%s1] sm:$0xf]
    %v770 = vld [vmem:[%s1 + $0x4] sm:$0xf]
    %v771 = vld [vmem:[%s2] sm:$0x1]
    %v772 = vunpack.c.l.bf16 %v769
    %v773 = vunpack.c.l.bf16 %v770
    %v774 = vpack.c.bf16 %v40, %v40
    %v775 = vpack.c.bf16 %v42, %v42
    %v776 = vpack.c.bf16 %v44, %v44
    %v777 = vpack.c.bf16 %v46, %v46
    %v778 = vpack.c.bf16 %v48, %v48
    %v779 = vpack.c.bf16 %v50, %v50
    %v780 = vpack.c.bf16 %v52, %v52
    %v781 = vpack.c.bf16 %v54, %v54
    %v782 = vpack.c.bf16 %v56, %v56
    %v783 = vpack.c.bf16 %v58, %v58
    %v784 = vpack.c.bf16 %v60, %v60
    %v785 = vpack.c.bf16 %v62, %v62
    %v786 = vpack.c.bf16 %v64, %v64
    %v787 = vpack.c.bf16 %v94, %v94
    %v788 = vpack.c.bf16 %v96, %v96
    %v789 = vpack.c.bf16 %v98, %v98
    %v790 = vpack.c.bf16 %v100, %v100
    %v791 = vpack.c.bf16 %v102, %v102
    %v792 = vpack.c.bf16 %v104, %v104
    %v793 = vpack.c.bf16 %v106, %v106
    %v794 = vpack.c.bf16 %v108, %v108
    %v795 = vpack.c.bf16 %v110, %v110
    %v796 = vpack.c.bf16 %v112, %v112
    %v797 = vpack.c.bf16 %v114, %v114
    %v798 = vpack.c.bf16 %v116, %v116
    %v799 = vpack.c.bf16 %v118, %v118
    %v800 = vpack.c.bf16 %v148, %v148
    %v801 = vpack.c.bf16 %v150, %v150
    %v802 = vpack.c.bf16 %v152, %v152
    %v803 = vpack.c.bf16 %v154, %v154
    %v804 = vpack.c.bf16 %v156, %v156
    %v805 = vpack.c.bf16 %v158, %v158
    %v806 = vpack.c.bf16 %v160, %v160
    %v807 = vpack.c.bf16 %v162, %v162
    %v808 = vpack.c.bf16 %v164, %v164
    %v809 = vpack.c.bf16 %v166, %v166
    %v810 = vpack.c.bf16 %v168, %v168
    %v811 = vpack.c.bf16 %v170, %v170
    %v812 = vpack.c.bf16 %v172, %v172
    %v813 = vpack.c.bf16 %v202, %v202
    %v814 = vpack.c.bf16 %v204, %v204
    %v815 = vpack.c.bf16 %v206, %v206
    %v816 = vpack.c.bf16 %v208, %v208
    %v817 = vpack.c.bf16 %v210, %v210
    %v818 = vpack.c.bf16 %v212, %v212
    %v819 = vpack.c.bf16 %v214, %v214
    %v820 = vpack.c.bf16 %v216, %v216
    %v821 = vpack.c.bf16 %v218, %v218
    %v822 = vpack.c.bf16 %v220, %v220
    %v823 = vpack.c.bf16 %v222, %v222
    %v824 = vpack.c.bf16 %v224, %v224
    %v825 = vpack.c.bf16 %v226, %v226
    %v826 = vpack.c.bf16 %v256, %v256
    %v827 = vpack.c.bf16 %v258, %v258
    %v828 = vpack.c.bf16 %v260, %v260
    %v829 = vpack.c.bf16 %v262, %v262
    %v830 = vpack.c.bf16 %v264, %v264
    %v831 = vpack.c.bf16 %v266, %v266
    %v832 = vpack.c.bf16 %v268, %v268
    %v833 = vpack.c.bf16 %v270, %v270
    %v834 = vpack.c.bf16 %v272, %v272
    %v835 = vpack.c.bf16 %v274, %v274
    %v836 = vpack.c.bf16 %v276, %v276
    %v837 = vpack.c.bf16 %v278, %v278
    %v838 = vpack.c.bf16 %v280, %v280
    %v839 = vpack.c.bf16 %v310, %v310
    %v840 = vpack.c.bf16 %v312, %v312
    %v841 = vpack.c.bf16 %v314, %v314
    %v842 = vpack.c.bf16 %v316, %v316
    %v843 = vpack.c.bf16 %v318, %v318
    %v844 = vpack.c.bf16 %v320, %v320
    %v845 = vpack.c.bf16 %v322, %v322
    %v846 = vpack.c.bf16 %v324, %v324
    %v847 = vpack.c.bf16 %v326, %v326
    %v848 = vpack.c.bf16 %v328, %v328
    %v849 = vpack.c.bf16 %v330, %v330
    %v850 = vpack.c.bf16 %v332, %v332
    %v851 = vpack.c.bf16 %v334, %v334
    %v852 = vpack.c.bf16 %v364, %v364
    %v853 = vpack.c.bf16 %v366, %v366
    %v854 = vpack.c.bf16 %v368, %v368
    %v855 = vpack.c.bf16 %v370, %v370
    %v856 = vpack.c.bf16 %v372, %v372
    %v857 = vpack.c.bf16 %v374, %v374
    %v858 = vpack.c.bf16 %v376, %v376
    %v859 = vpack.c.bf16 %v378, %v378
    %v860 = vpack.c.bf16 %v380, %v380
    %v861 = vpack.c.bf16 %v382, %v382
    %v862 = vpack.c.bf16 %v384, %v384
    %v863 = vpack.c.bf16 %v386, %v386
    %v864 = vpack.c.bf16 %v388, %v388
    %v865 = vpack.c.bf16 %v418, %v418
    %v866 = vpack.c.bf16 %v420, %v420
    %v867 = vpack.c.bf16 %v422, %v422
    %v868 = vpack.c.bf16 %v424, %v424
    %v869 = vpack.c.bf16 %v426, %v426
    %v870 = vpack.c.bf16 %v428, %v428
    %v871 = vpack.c.bf16 %v430, %v430
    %v872 = vpack.c.bf16 %v432, %v432
    %v873 = vpack.c.bf16 %v434, %v434
    %v874 = vpack.c.bf16 %v436, %v436
    %v875 = vpack.c.bf16 %v438, %v438
    %v876 = vpack.c.bf16 %v440, %v440
    %v877 = vpack.c.bf16 %v442, %v442
    %v878 = vpack.c.bf16 %v472, %v472
    %v879 = vpack.c.bf16 %v474, %v474
    %v880 = vpack.c.bf16 %v476, %v476
    %v881 = vpack.c.bf16 %v478, %v478
    %v882 = vpack.c.bf16 %v480, %v480
    %v883 = vpack.c.bf16 %v482, %v482
    %v884 = vpack.c.bf16 %v484, %v484
    %v885 = vpack.c.bf16 %v486, %v486
    %v886 = vpack.c.bf16 %v488, %v488
    %v887 = vpack.c.bf16 %v490, %v490
    %v888 = vpack.c.bf16 %v492, %v492
    %v889 = vpack.c.bf16 %v494, %v494
    %v890 = vpack.c.bf16 %v496, %v496
    %v891 = vpack.c.bf16 %v526, %v526
    %v892 = vpack.c.bf16 %v528, %v528
    %v893 = vpack.c.bf16 %v530, %v530
    %v894 = vpack.c.bf16 %v532, %v532
    %v895 = vpack.c.bf16 %v534, %v534
    %v896 = vpack.c.bf16 %v536, %v536
    %v897 = vpack.c.bf16 %v538, %v538
    %v898 = vpack.c.bf16 %v540, %v540
    %v899 = vpack.c.bf16 %v542, %v542
    %v900 = vpack.c.bf16 %v544, %v544
    %v901 = vpack.c.bf16 %v546, %v546
    %v902 = vpack.c.bf16 %v548, %v548
    %v903 = vpack.c.bf16 %v550, %v550
    %v904 = vpack.c.bf16 %v580, %v580
    %v905 = vpack.c.bf16 %v582, %v582
    %v906 = vpack.c.bf16 %v584, %v584
    %v907 = vpack.c.bf16 %v586, %v586
    %v908 = vpack.c.bf16 %v588, %v588
    %v909 = vpack.c.bf16 %v590, %v590
    %v910 = vpack.c.bf16 %v592, %v592
    %v911 = vpack.c.bf16 %v594, %v594
    %v912 = vpack.c.bf16 %v596, %v596
    %v913 = vpack.c.bf16 %v598, %v598
    %v914 = vpack.c.bf16 %v600, %v600
    %v915 = vpack.c.bf16 %v602, %v602
    %v916 = vpack.c.bf16 %v604, %v604
    %v917 = vpack.c.bf16 %v634, %v634
    %v918 = vpack.c.bf16 %v636, %v636
    %v919 = vpack.c.bf16 %v638, %v638
    %v920 = vpack.c.bf16 %v640, %v640
    %v921 = vpack.c.bf16 %v642, %v642
    %v922 = vpack.c.bf16 %v644, %v644
    %v923 = vpack.c.bf16 %v646, %v646
    %v924 = vpack.c.bf16 %v648, %v648
    %v925 = vpack.c.bf16 %v650, %v650
    %v926 = vpack.c.bf16 %v652, %v652
    %v927 = vpack.c.bf16 %v654, %v654
    %v928 = vpack.c.bf16 %v656, %v656
    %v929 = vpack.c.bf16 %v658, %v658
    %v930 = vpack.c.bf16 %v688, %v688
    %v931 = vpack.c.bf16 %v690, %v690
    %v932 = vpack.c.bf16 %v692, %v692
    %v933 = vpack.c.bf16 %v694, %v694
    %v934 = vpack.c.bf16 %v696, %v696
    %v935 = vpack.c.bf16 %v698, %v698
    %v936 = vpack.c.bf16 %v700, %v700
    %v937 = vpack.c.bf16 %v702, %v702
    %v938 = vpack.c.bf16 %v704, %v704
    %v939 = vpack.c.bf16 %v706, %v706
    %v940 = vpack.c.bf16 %v708, %v708
    %v941 = vpack.c.bf16 %v710, %v710
    %v942 = vpack.c.bf16 %v712, %v712
    %v943 = vunpack.c.l.bf16 %v774
    %v944 = vunpack.c.l.bf16 %v775
    %v945 = vunpack.c.l.bf16 %v776
    %v946 = vunpack.c.l.bf16 %v777
    %v947 = vunpack.c.l.bf16 %v778
    %v948 = vunpack.c.l.bf16 %v779
    %v949 = vunpack.c.l.bf16 %v780
    %v950 = vunpack.c.l.bf16 %v781
    %v951 = vunpack.c.l.bf16 %v782
    %v952 = vunpack.c.l.bf16 %v783
    %v953 = vunpack.c.l.bf16 %v784
    %v954 = vunpack.c.l.bf16 %v785
    %v955 = vunpack.c.l.bf16 %v786
    %v956 = vunpack.c.l.bf16 %v787
    %v957 = vunpack.c.l.bf16 %v788
    %v958 = vunpack.c.l.bf16 %v789
    %v959 = vunpack.c.l.bf16 %v790
    %v960 = vunpack.c.l.bf16 %v791
    %v961 = vunpack.c.l.bf16 %v792
    %v962 = vunpack.c.l.bf16 %v793
    %v963 = vunpack.c.l.bf16 %v794
    %v964 = vunpack.c.l.bf16 %v795
    %v965 = vunpack.c.l.bf16 %v796
    %v966 = vunpack.c.l.bf16 %v797
    %v967 = vunpack.c.l.bf16 %v798
    %v968 = vunpack.c.l.bf16 %v799
    %v969 = vunpack.c.l.bf16 %v800
    %v970 = vunpack.c.l.bf16 %v801
    %v971 = vunpack.c.l.bf16 %v802
    %v972 = vunpack.c.l.bf16 %v803
    %v973 = vunpack.c.l.bf16 %v804
    %v974 = vunpack.c.l.bf16 %v805
    %v975 = vunpack.c.l.bf16 %v806
    %v976 = vunpack.c.l.bf16 %v807
    %v977 = vunpack.c.l.bf16 %v808
    %v978 = vunpack.c.l.bf16 %v809
    %v979 = vunpack.c.l.bf16 %v810
    %v980 = vunpack.c.l.bf16 %v811
    %v981 = vunpack.c.l.bf16 %v812
    %v982 = vunpack.c.l.bf16 %v813
    %v983 = vunpack.c.l.bf16 %v814
    %v984 = vunpack.c.l.bf16 %v815
    %v985 = vunpack.c.l.bf16 %v816
    %v986 = vunpack.c.l.bf16 %v817
    %v987 = vunpack.c.l.bf16 %v818
    %v988 = vunpack.c.l.bf16 %v819
    %v989 = vunpack.c.l.bf16 %v820
    %v990 = vunpack.c.l.bf16 %v821
    %v991 = vunpack.c.l.bf16 %v822
    %v992 = vunpack.c.l.bf16 %v823
    %v993 = vunpack.c.l.bf16 %v824
    %v994 = vunpack.c.l.bf16 %v825
    %v995 = vunpack.c.l.bf16 %v826
    %v996 = vunpack.c.l.bf16 %v827
    %v997 = vunpack.c.l.bf16 %v828
    %v998 = vunpack.c.l.bf16 %v829
    %v999 = vunpack.c.l.bf16 %v830
    %v1000 = vunpack.c.l.bf16 %v831
    %v1001 = vunpack.c.l.bf16 %v832
    %v1002 = vunpack.c.l.bf16 %v833
    %v1003 = vunpack.c.l.bf16 %v834
    %v1004 = vunpack.c.l.bf16 %v835
    %v1005 = vunpack.c.l.bf16 %v836
    %v1006 = vunpack.c.l.bf16 %v837
    %v1007 = vunpack.c.l.bf16 %v838
    %v1008 = vunpack.c.l.bf16 %v839
    %v1009 = vunpack.c.l.bf16 %v840
    %v1010 = vunpack.c.l.bf16 %v841
    %v1011 = vunpack.c.l.bf16 %v842
    %v1012 = vunpack.c.l.bf16 %v843
    %v1013 = vunpack.c.l.bf16 %v844
    %v1014 = vunpack.c.l.bf16 %v845
    %v1015 = vunpack.c.l.bf16 %v846
    %v1016 = vunpack.c.l.bf16 %v847
    %v1017 = vunpack.c.l.bf16 %v848
    %v1018 = vunpack.c.l.bf16 %v849
    %v1019 = vunpack.c.l.bf16 %v850
    %v1020 = vunpack.c.l.bf16 %v851
    %v1021 = vunpack.c.l.bf16 %v852
    %v1022 = vunpack.c.l.bf16 %v853
    %v1023 = vunpack.c.l.bf16 %v854
    %v1024 = vunpack.c.l.bf16 %v855
    %v1025 = vunpack.c.l.bf16 %v856
    %v1026 = vunpack.c.l.bf16 %v857
    %v1027 = vunpack.c.l.bf16 %v858
    %v1028 = vunpack.c.l.bf16 %v859
    %v1029 = vunpack.c.l.bf16 %v860
    %v1030 = vunpack.c.l.bf16 %v861
    %v1031 = vunpack.c.l.bf16 %v862
    %v1032 = vunpack.c.l.bf16 %v863
    %v1033 = vunpack.c.l.bf16 %v864
    %v1034 = vunpack.c.l.bf16 %v865
    %v1035 = vunpack.c.l.bf16 %v866
    %v1036 = vunpack.c.l.bf16 %v867
    %v1037 = vunpack.c.l.bf16 %v868
    %v1038 = vunpack.c.l.bf16 %v869
    %v1039 = vunpack.c.l.bf16 %v870
    %v1040 = vunpack.c.l.bf16 %v871
    %v1041 = vunpack.c.l.bf16 %v872
    %v1042 = vunpack.c.l.bf16 %v873
    %v1043 = vunpack.c.l.bf16 %v874
    %v1044 = vunpack.c.l.bf16 %v875
    %v1045 = vunpack.c.l.bf16 %v876
    %v1046 = vunpack.c.l.bf16 %v877
    %v1047 = vunpack.c.l.bf16 %v878
    %v1048 = vunpack.c.l.bf16 %v879
    %v1049 = vunpack.c.l.bf16 %v880
    %v1050 = vunpack.c.l.bf16 %v881
    %v1051 = vunpack.c.l.bf16 %v882
    %v1052 = vunpack.c.l.bf16 %v883
    %v1053 = vunpack.c.l.bf16 %v884
    %v1054 = vunpack.c.l.bf16 %v885
    %v1055 = vunpack.c.l.bf16 %v886
    %v1056 = vunpack.c.l.bf16 %v887
    %v1057 = vunpack.c.l.bf16 %v888
    %v1058 = vunpack.c.l.bf16 %v889
    %v1059 = vunpack.c.l.bf16 %v890
    %v1060 = vunpack.c.l.bf16 %v891
    %v1061 = vunpack.c.l.bf16 %v892
    %v1062 = vunpack.c.l.bf16 %v893
    %v1063 = vunpack.c.l.bf16 %v894
    %v1064 = vunpack.c.l.bf16 %v895
    %v1065 = vunpack.c.l.bf16 %v896
    %v1066 = vunpack.c.l.bf16 %v897
    %v1067 = vunpack.c.l.bf16 %v898
    %v1068 = vunpack.c.l.bf16 %v899
    %v1069 = vunpack.c.l.bf16 %v900
    %v1070 = vunpack.c.l.bf16 %v901
    %v1071 = vunpack.c.l.bf16 %v902
    %v1072 = vunpack.c.l.bf16 %v903
    %v1073 = vunpack.c.l.bf16 %v904
    %v1074 = vunpack.c.l.bf16 %v905
    %v1075 = vunpack.c.l.bf16 %v906
    %v1076 = vunpack.c.l.bf16 %v907
    %v1077 = vunpack.c.l.bf16 %v908
    %v1078 = vunpack.c.l.bf16 %v909
    %v1079 = vunpack.c.l.bf16 %v910
    %v1080 = vunpack.c.l.bf16 %v911
    %v1081 = vunpack.c.l.bf16 %v912
    %v1082 = vunpack.c.l.bf16 %v913
    %v1083 = vunpack.c.l.bf16 %v914
    %v1084 = vunpack.c.l.bf16 %v915
    %v1085 = vunpack.c.l.bf16 %v916
    %v1086 = vunpack.c.l.bf16 %v917
    %v1087 = vunpack.c.l.bf16 %v918
    %v1088 = vunpack.c.l.bf16 %v919
    %v1089 = vunpack.c.l.bf16 %v920
    %v1090 = vunpack.c.l.bf16 %v921
    %v1091 = vunpack.c.l.bf16 %v922
    %v1092 = vunpack.c.l.bf16 %v923
    %v1093 = vunpack.c.l.bf16 %v924
    %v1094 = vunpack.c.l.bf16 %v925
    %v1095 = vunpack.c.l.bf16 %v926
    %v1096 = vunpack.c.l.bf16 %v927
    %v1097 = vunpack.c.l.bf16 %v928
    %v1098 = vunpack.c.l.bf16 %v929
    %v1099 = vunpack.c.l.bf16 %v930
    %v1100 = vunpack.c.l.bf16 %v931
    %v1101 = vunpack.c.l.bf16 %v932
    %v1102 = vunpack.c.l.bf16 %v933
    %v1103 = vunpack.c.l.bf16 %v934
    %v1104 = vunpack.c.l.bf16 %v935
    %v1105 = vunpack.c.l.bf16 %v936
    %v1106 = vunpack.c.l.bf16 %v937
    %v1107 = vunpack.c.l.bf16 %v938
    %v1108 = vunpack.c.l.bf16 %v939
    %v1109 = vunpack.c.l.bf16 %v940
    %v1110 = vunpack.c.l.bf16 %v941
    %v1111 = vunpack.c.l.bf16 %v942
    %1113 = vset.pattern.permute.xlu0 0
    %1114 = vperm.xlu0 %1113, %v943
    %v1115 = vpop.permute.xlu0 %1114
    %1118 = vset.pattern.permute.xlu0 0
    %1119 = vperm.xlu0 %1118, %v944
    %v1120 = vpop.permute.xlu0 %1119
    %1123 = vset.pattern.permute.xlu0 0
    %1124 = vperm.xlu0 %1123, %v945
    %v1125 = vpop.permute.xlu0 %1124
    %1128 = vset.pattern.permute.xlu0 0
    %1129 = vperm.xlu0 %1128, %v946
    %v1130 = vpop.permute.xlu0 %1129
    %1133 = vset.pattern.permute.xlu0 0
    %1134 = vperm.xlu0 %1133, %v947
    %v1135 = vpop.permute.xlu0 %1134
    %1138 = vset.pattern.permute.xlu0 0
    %1139 = vperm.xlu0 %1138, %v948
    %v1140 = vpop.permute.xlu0 %1139
    %1143 = vset.pattern.permute.xlu0 0
    %1144 = vperm.xlu0 %1143, %v949
    %v1145 = vpop.permute.xlu0 %1144
    %1148 = vset.pattern.permute.xlu0 0
    %1149 = vperm.xlu0 %1148, %v950
    %v1150 = vpop.permute.xlu0 %1149
    %1153 = vset.pattern.permute.xlu0 0
    %1154 = vperm.xlu0 %1153, %v951
    %v1155 = vpop.permute.xlu0 %1154
    %1158 = vset.pattern.permute.xlu0 0
    %1159 = vperm.xlu0 %1158, %v952
    %v1160 = vpop.permute.xlu0 %1159
    %1163 = vset.pattern.permute.xlu0 0
    %1164 = vperm.xlu0 %1163, %v953
    %v1165 = vpop.permute.xlu0 %1164
    %1168 = vset.pattern.permute.xlu0 0
    %1169 = vperm.xlu0 %1168, %v954
    %v1170 = vpop.permute.xlu0 %1169
    %1173 = vset.pattern.permute.xlu0 0
    %1174 = vperm.xlu0 %1173, %v955
    %v1175 = vpop.permute.xlu0 %1174
    %1178 = vset.pattern.permute.xlu0 0
    %1179 = vperm.xlu0 %1178, %v956
    %v1180 = vpop.permute.xlu0 %1179
    %1183 = vset.pattern.permute.xlu0 0
    %1184 = vperm.xlu0 %1183, %v957
    %v1185 = vpop.permute.xlu0 %1184
    %1188 = vset.pattern.permute.xlu0 0
    %1189 = vperm.xlu0 %1188, %v958
    %v1190 = vpop.permute.xlu0 %1189
    %1193 = vset.pattern.permute.xlu0 0
    %1194 = vperm.xlu0 %1193, %v959
    %v1195 = vpop.permute.xlu0 %1194
    %1198 = vset.pattern.permute.xlu0 0
    %1199 = vperm.xlu0 %1198, %v960
    %v1200 = vpop.permute.xlu0 %1199
    %1203 = vset.pattern.permute.xlu0 0
    %1204 = vperm.xlu0 %1203, %v961
    %v1205 = vpop.permute.xlu0 %1204
    %1208 = vset.pattern.permute.xlu0 0
    %1209 = vperm.xlu0 %1208, %v962
    %v1210 = vpop.permute.xlu0 %1209
    %1213 = vset.pattern.permute.xlu0 0
    %1214 = vperm.xlu0 %1213, %v963
    %v1215 = vpop.permute.xlu0 %1214
    %1218 = vset.pattern.permute.xlu0 0
    %1219 = vperm.xlu0 %1218, %v964
    %v1220 = vpop.permute.xlu0 %1219
    %1223 = vset.pattern.permute.xlu0 0
    %1224 = vperm.xlu0 %1223, %v965
    %v1225 = vpop.permute.xlu0 %1224
    %1228 = vset.pattern.permute.xlu0 0
    %1229 = vperm.xlu0 %1228, %v966
    %v1230 = vpop.permute.xlu0 %1229
    %1233 = vset.pattern.permute.xlu0 0
    %1234 = vperm.xlu0 %1233, %v967
    %v1235 = vpop.permute.xlu0 %1234
    %1238 = vset.pattern.permute.xlu0 0
    %1239 = vperm.xlu0 %1238, %v968
    %v1240 = vpop.permute.xlu0 %1239
    %1243 = vset.pattern.permute.xlu0 0
    %1244 = vperm.xlu0 %1243, %v969
    %v1245 = vpop.permute.xlu0 %1244
    %1248 = vset.pattern.permute.xlu0 0
    %1249 = vperm.xlu0 %1248, %v970
    %v1250 = vpop.permute.xlu0 %1249
    %1253 = vset.pattern.permute.xlu0 0
    %1254 = vperm.xlu0 %1253, %v971
    %v1255 = vpop.permute.xlu0 %1254
    %1258 = vset.pattern.permute.xlu0 0
    %1259 = vperm.xlu0 %1258, %v972
    %v1260 = vpop.permute.xlu0 %1259
    %1263 = vset.pattern.permute.xlu0 0
    %1264 = vperm.xlu0 %1263, %v973
    %v1265 = vpop.permute.xlu0 %1264
    %1268 = vset.pattern.permute.xlu0 0
    %1269 = vperm.xlu0 %1268, %v974
    %v1270 = vpop.permute.xlu0 %1269
    %1273 = vset.pattern.permute.xlu0 0
    %1274 = vperm.xlu0 %1273, %v975
    %v1275 = vpop.permute.xlu0 %1274
    %1278 = vset.pattern.permute.xlu0 0
    %1279 = vperm.xlu0 %1278, %v976
    %v1280 = vpop.permute.xlu0 %1279
    %1283 = vset.pattern.permute.xlu0 0
    %1284 = vperm.xlu0 %1283, %v977
    %v1285 = vpop.permute.xlu0 %1284
    %1288 = vset.pattern.permute.xlu0 0
    %1289 = vperm.xlu0 %1288, %v978
    %v1290 = vpop.permute.xlu0 %1289
    %1293 = vset.pattern.permute.xlu0 0
    %1294 = vperm.xlu0 %1293, %v979
    %v1295 = vpop.permute.xlu0 %1294
    %1298 = vset.pattern.permute.xlu0 0
    %1299 = vperm.xlu0 %1298, %v980
    %v1300 = vpop.permute.xlu0 %1299
    %1303 = vset.pattern.permute.xlu0 0
    %1304 = vperm.xlu0 %1303, %v981
    %v1305 = vpop.permute.xlu0 %1304
    %1308 = vset.pattern.permute.xlu0 0
    %1309 = vperm.xlu0 %1308, %v982
    %v1310 = vpop.permute.xlu0 %1309
    %1313 = vset.pattern.permute.xlu0 0
    %1314 = vperm.xlu0 %1313, %v983
    %v1315 = vpop.permute.xlu0 %1314
    %1318 = vset.pattern.permute.xlu0 0
    %1319 = vperm.xlu0 %1318, %v984
    %v1320 = vpop.permute.xlu0 %1319
    %1323 = vset.pattern.permute.xlu0 0
    %1324 = vperm.xlu0 %1323, %v985
    %v1325 = vpop.permute.xlu0 %1324
    %1328 = vset.pattern.permute.xlu0 0
    %1329 = vperm.xlu0 %1328, %v986
    %v1330 = vpop.permute.xlu0 %1329
    %1333 = vset.pattern.permute.xlu0 0
    %1334 = vperm.xlu0 %1333, %v987
    %v1335 = vpop.permute.xlu0 %1334
    %1338 = vset.pattern.permute.xlu0 0
    %1339 = vperm.xlu0 %1338, %v988
    %v1340 = vpop.permute.xlu0 %1339
    %1343 = vset.pattern.permute.xlu0 0
    %1344 = vperm.xlu0 %1343, %v989
    %v1345 = vpop.permute.xlu0 %1344
    %1348 = vset.pattern.permute.xlu0 0
    %1349 = vperm.xlu0 %1348, %v990
    %v1350 = vpop.permute.xlu0 %1349
    %1353 = vset.pattern.permute.xlu0 0
    %1354 = vperm.xlu0 %1353, %v991
    %v1355 = vpop.permute.xlu0 %1354
    %1358 = vset.pattern.permute.xlu0 0
    %1359 = vperm.xlu0 %1358, %v992
    %v1360 = vpop.permute.xlu0 %1359
    %1363 = vset.pattern.permute.xlu0 0
    %1364 = vperm.xlu0 %1363, %v993
    %v1365 = vpop.permute.xlu0 %1364
    %1368 = vset.pattern.permute.xlu0 0
    %1369 = vperm.xlu0 %1368, %v994
    %v1370 = vpop.permute.xlu0 %1369
    %1373 = vset.pattern.permute.xlu0 0
    %1374 = vperm.xlu0 %1373, %v995
    %v1375 = vpop.permute.xlu0 %1374
    %1378 = vset.pattern.permute.xlu0 0
    %1379 = vperm.xlu0 %1378, %v996
    %v1380 = vpop.permute.xlu0 %1379
    %1383 = vset.pattern.permute.xlu0 0
    %1384 = vperm.xlu0 %1383, %v997
    %v1385 = vpop.permute.xlu0 %1384
    %1388 = vset.pattern.permute.xlu0 0
    %1389 = vperm.xlu0 %1388, %v998
    %v1390 = vpop.permute.xlu0 %1389
    %1393 = vset.pattern.permute.xlu0 0
    %1394 = vperm.xlu0 %1393, %v999
    %v1395 = vpop.permute.xlu0 %1394
    %1398 = vset.pattern.permute.xlu0 0
    %1399 = vperm.xlu0 %1398, %v1000
    %v1400 = vpop.permute.xlu0 %1399
    %1403 = vset.pattern.permute.xlu0 0
    %1404 = vperm.xlu0 %1403, %v1001
    %v1405 = vpop.permute.xlu0 %1404
    %1408 = vset.pattern.permute.xlu0 0
    %1409 = vperm.xlu0 %1408, %v1002
    %v1410 = vpop.permute.xlu0 %1409
    %1413 = vset.pattern.permute.xlu0 0
    %1414 = vperm.xlu0 %1413, %v1003
    %v1415 = vpop.permute.xlu0 %1414
    %1418 = vset.pattern.permute.xlu0 0
    %1419 = vperm.xlu0 %1418, %v1004
    %v1420 = vpop.permute.xlu0 %1419
    %1423 = vset.pattern.permute.xlu0 0
    %1424 = vperm.xlu0 %1423, %v1005
    %v1425 = vpop.permute.xlu0 %1424
    %1428 = vset.pattern.permute.xlu0 0
    %1429 = vperm.xlu0 %1428, %v1006
    %v1430 = vpop.permute.xlu0 %1429
    %1433 = vset.pattern.permute.xlu0 0
    %1434 = vperm.xlu0 %1433, %v1007
    %v1435 = vpop.permute.xlu0 %1434
    %1438 = vset.pattern.permute.xlu0 0
    %1439 = vperm.xlu0 %1438, %v1008
    %v1440 = vpop.permute.xlu0 %1439
    %1443 = vset.pattern.permute.xlu0 0
    %1444 = vperm.xlu0 %1443, %v1009
    %v1445 = vpop.permute.xlu0 %1444
    %1448 = vset.pattern.permute.xlu0 0
    %1449 = vperm.xlu0 %1448, %v1010
    %v1450 = vpop.permute.xlu0 %1449
    %1453 = vset.pattern.permute.xlu0 0
    %1454 = vperm.xlu0 %1453, %v1011
    %v1455 = vpop.permute.xlu0 %1454
    %1458 = vset.pattern.permute.xlu0 0
    %1459 = vperm.xlu0 %1458, %v1012
    %v1460 = vpop.permute.xlu0 %1459
    %1463 = vset.pattern.permute.xlu0 0
    %1464 = vperm.xlu0 %1463, %v1013
    %v1465 = vpop.permute.xlu0 %1464
    %1468 = vset.pattern.permute.xlu0 0
    %1469 = vperm.xlu0 %1468, %v1014
    %v1470 = vpop.permute.xlu0 %1469
    %1473 = vset.pattern.permute.xlu0 0
    %1474 = vperm.xlu0 %1473, %v1015
    %v1475 = vpop.permute.xlu0 %1474
    %1478 = vset.pattern.permute.xlu0 0
    %1479 = vperm.xlu0 %1478, %v1016
    %v1480 = vpop.permute.xlu0 %1479
    %1483 = vset.pattern.permute.xlu0 0
    %1484 = vperm.xlu0 %1483, %v1017
    %v1485 = vpop.permute.xlu0 %1484
    %1488 = vset.pattern.permute.xlu0 0
    %1489 = vperm.xlu0 %1488, %v1018
    %v1490 = vpop.permute.xlu0 %1489
    %1493 = vset.pattern.permute.xlu0 0
    %1494 = vperm.xlu0 %1493, %v1019
    %v1495 = vpop.permute.xlu0 %1494
    %1498 = vset.pattern.permute.xlu0 0
    %1499 = vperm.xlu0 %1498, %v1020
    %v1500 = vpop.permute.xlu0 %1499
    %1503 = vset.pattern.permute.xlu0 0
    %1504 = vperm.xlu0 %1503, %v1021
    %v1505 = vpop.permute.xlu0 %1504
    %1508 = vset.pattern.permute.xlu0 0
    %1509 = vperm.xlu0 %1508, %v1022
    %v1510 = vpop.permute.xlu0 %1509
    %1513 = vset.pattern.permute.xlu0 0
    %1514 = vperm.xlu0 %1513, %v1023
    %v1515 = vpop.permute.xlu0 %1514
    %1518 = vset.pattern.permute.xlu0 0
    %1519 = vperm.xlu0 %1518, %v1024
    %v1520 = vpop.permute.xlu0 %1519
    %1523 = vset.pattern.permute.xlu0 0
    %1524 = vperm.xlu0 %1523, %v1025
    %v1525 = vpop.permute.xlu0 %1524
    %1528 = vset.pattern.permute.xlu0 0
    %1529 = vperm.xlu0 %1528, %v1026
    %v1530 = vpop.permute.xlu0 %1529
    %1533 = vset.pattern.permute.xlu0 0
    %1534 = vperm.xlu0 %1533, %v1027
    %v1535 = vpop.permute.xlu0 %1534
    %1538 = vset.pattern.permute.xlu0 0
    %1539 = vperm.xlu0 %1538, %v1028
    %v1540 = vpop.permute.xlu0 %1539
    %1543 = vset.pattern.permute.xlu0 0
    %1544 = vperm.xlu0 %1543, %v1029
    %v1545 = vpop.permute.xlu0 %1544
    %1548 = vset.pattern.permute.xlu0 0
    %1549 = vperm.xlu0 %1548, %v1030
    %v1550 = vpop.permute.xlu0 %1549
    %1553 = vset.pattern.permute.xlu0 0
    %1554 = vperm.xlu0 %1553, %v1031
    %v1555 = vpop.permute.xlu0 %1554
    %1558 = vset.pattern.permute.xlu0 0
    %1559 = vperm.xlu0 %1558, %v1032
    %v1560 = vpop.permute.xlu0 %1559
    %1563 = vset.pattern.permute.xlu0 0
    %1564 = vperm.xlu0 %1563, %v1033
    %v1565 = vpop.permute.xlu0 %1564
    %1568 = vset.pattern.permute.xlu0 0
    %1569 = vperm.xlu0 %1568, %v1034
    %v1570 = vpop.permute.xlu0 %1569
    %1573 = vset.pattern.permute.xlu0 0
    %1574 = vperm.xlu0 %1573, %v1035
    %v1575 = vpop.permute.xlu0 %1574
    %1578 = vset.pattern.permute.xlu0 0
    %1579 = vperm.xlu0 %1578, %v1036
    %v1580 = vpop.permute.xlu0 %1579
    %1583 = vset.pattern.permute.xlu0 0
    %1584 = vperm.xlu0 %1583, %v1037
    %v1585 = vpop.permute.xlu0 %1584
    %1588 = vset.pattern.permute.xlu0 0
    %1589 = vperm.xlu0 %1588, %v1038
    %v1590 = vpop.permute.xlu0 %1589
    %1593 = vset.pattern.permute.xlu0 0
    %1594 = vperm.xlu0 %1593, %v1039
    %v1595 = vpop.permute.xlu0 %1594
    %1598 = vset.pattern.permute.xlu0 0
    %1599 = vperm.xlu0 %1598, %v1040
    %v1600 = vpop.permute.xlu0 %1599
    %1603 = vset.pattern.permute.xlu0 0
    %1604 = vperm.xlu0 %1603, %v1041
    %v1605 = vpop.permute.xlu0 %1604
    %1608 = vset.pattern.permute.xlu0 0
    %1609 = vperm.xlu0 %1608, %v1042
    %v1610 = vpop.permute.xlu0 %1609
    %1613 = vset.pattern.permute.xlu0 0
    %1614 = vperm.xlu0 %1613, %v1043
    %v1615 = vpop.permute.xlu0 %1614
    %1618 = vset.pattern.permute.xlu0 0
    %1619 = vperm.xlu0 %1618, %v1044
    %v1620 = vpop.permute.xlu0 %1619
    %1623 = vset.pattern.permute.xlu0 0
    %1624 = vperm.xlu0 %1623, %v1045
    %v1625 = vpop.permute.xlu0 %1624
    %1628 = vset.pattern.permute.xlu0 0
    %1629 = vperm.xlu0 %1628, %v1046
    %v1630 = vpop.permute.xlu0 %1629
    %1633 = vset.pattern.permute.xlu0 0
    %1634 = vperm.xlu0 %1633, %v1047
    %v1635 = vpop.permute.xlu0 %1634
    %1638 = vset.pattern.permute.xlu0 0
    %1639 = vperm.xlu0 %1638, %v1048
    %v1640 = vpop.permute.xlu0 %1639
    %1643 = vset.pattern.permute.xlu0 0
    %1644 = vperm.xlu0 %1643, %v1049
    %v1645 = vpop.permute.xlu0 %1644
    %1648 = vset.pattern.permute.xlu0 0
    %1649 = vperm.xlu0 %1648, %v1050
    %v1650 = vpop.permute.xlu0 %1649
    %1653 = vset.pattern.permute.xlu0 0
    %1654 = vperm.xlu0 %1653, %v1051
    %v1655 = vpop.permute.xlu0 %1654
    %1658 = vset.pattern.permute.xlu0 0
    %1659 = vperm.xlu0 %1658, %v1052
    %v1660 = vpop.permute.xlu0 %1659
    %1663 = vset.pattern.permute.xlu0 0
    %1664 = vperm.xlu0 %1663, %v1053
    %v1665 = vpop.permute.xlu0 %1664
    %1668 = vset.pattern.permute.xlu0 0
    %1669 = vperm.xlu0 %1668, %v1054
    %v1670 = vpop.permute.xlu0 %1669
    %1673 = vset.pattern.permute.xlu0 0
    %1674 = vperm.xlu0 %1673, %v1055
    %v1675 = vpop.permute.xlu0 %1674
    %1678 = vset.pattern.permute.xlu0 0
    %1679 = vperm.xlu0 %1678, %v1056
    %v1680 = vpop.permute.xlu0 %1679
    %1683 = vset.pattern.permute.xlu0 0
    %1684 = vperm.xlu0 %1683, %v1057
    %v1685 = vpop.permute.xlu0 %1684
    %1688 = vset.pattern.permute.xlu0 0
    %1689 = vperm.xlu0 %1688, %v1058
    %v1690 = vpop.permute.xlu0 %1689
    %1693 = vset.pattern.permute.xlu0 0
    %1694 = vperm.xlu0 %1693, %v1059
    %v1695 = vpop.permute.xlu0 %1694
    %1698 = vset.pattern.permute.xlu0 0
    %1699 = vperm.xlu0 %1698, %v1060
    %v1700 = vpop.permute.xlu0 %1699
    %1703 = vset.pattern.permute.xlu0 0
    %1704 = vperm.xlu0 %1703, %v1061
    %v1705 = vpop.permute.xlu0 %1704
    %1708 = vset.pattern.permute.xlu0 0
    %1709 = vperm.xlu0 %1708, %v1062
    %v1710 = vpop.permute.xlu0 %1709
    %1713 = vset.pattern.permute.xlu0 0
    %1714 = vperm.xlu0 %1713, %v1063
    %v1715 = vpop.permute.xlu0 %1714
    %1718 = vset.pattern.permute.xlu0 0
    %1719 = vperm.xlu0 %1718, %v1064
    %v1720 = vpop.permute.xlu0 %1719
    %1723 = vset.pattern.permute.xlu0 0
    %1724 = vperm.xlu0 %1723, %v1065
    %v1725 = vpop.permute.xlu0 %1724
    %1728 = vset.pattern.permute.xlu0 0
    %1729 = vperm.xlu0 %1728, %v1066
    %v1730 = vpop.permute.xlu0 %1729
    %1733 = vset.pattern.permute.xlu0 0
    %1734 = vperm.xlu0 %1733, %v1067
    %v1735 = vpop.permute.xlu0 %1734
    %1738 = vset.pattern.permute.xlu0 0
    %1739 = vperm.xlu0 %1738, %v1068
    %v1740 = vpop.permute.xlu0 %1739
    %1743 = vset.pattern.permute.xlu0 0
    %1744 = vperm.xlu0 %1743, %v1069
    %v1745 = vpop.permute.xlu0 %1744
    %1748 = vset.pattern.permute.xlu0 0
    %1749 = vperm.xlu0 %1748, %v1070
    %v1750 = vpop.permute.xlu0 %1749
    %1753 = vset.pattern.permute.xlu0 0
    %1754 = vperm.xlu0 %1753, %v1071
    %v1755 = vpop.permute.xlu0 %1754
    %1758 = vset.pattern.permute.xlu0 0
    %1759 = vperm.xlu0 %1758, %v1072
    %v1760 = vpop.permute.xlu0 %1759
    %1763 = vset.pattern.permute.xlu0 0
    %1764 = vperm.xlu0 %1763, %v1073
    %v1765 = vpop.permute.xlu0 %1764
    %1768 = vset.pattern.permute.xlu0 0
    %1769 = vperm.xlu0 %1768, %v1074
    %v1770 = vpop.permute.xlu0 %1769
    %1773 = vset.pattern.permute.xlu0 0
    %1774 = vperm.xlu0 %1773, %v1075
    %v1775 = vpop.permute.xlu0 %1774
    %1778 = vset.pattern.permute.xlu0 0
    %1779 = vperm.xlu0 %1778, %v1076
    %v1780 = vpop.permute.xlu0 %1779
    %1783 = vset.pattern.permute.xlu0 0
    %1784 = vperm.xlu0 %1783, %v1077
    %v1785 = vpop.permute.xlu0 %1784
    %1788 = vset.pattern.permute.xlu0 0
    %1789 = vperm.xlu0 %1788, %v1078
    %v1790 = vpop.permute.xlu0 %1789
    %1793 = vset.pattern.permute.xlu0 0
    %1794 = vperm.xlu0 %1793, %v1079
    %v1795 = vpop.permute.xlu0 %1794
    %1798 = vset.pattern.permute.xlu0 0
    %1799 = vperm.xlu0 %1798, %v1080
    %v1800 = vpop.permute.xlu0 %1799
    %1803 = vset.pattern.permute.xlu0 0
    %1804 = vperm.xlu0 %1803, %v1081
    %v1805 = vpop.permute.xlu0 %1804
    %1808 = vset.pattern.permute.xlu0 0
    %1809 = vperm.xlu0 %1808, %v1082
    %v1810 = vpop.permute.xlu0 %1809
    %1813 = vset.pattern.permute.xlu0 0
    %1814 = vperm.xlu0 %1813, %v1083
    %v1815 = vpop.permute.xlu0 %1814
    %1818 = vset.pattern.permute.xlu0 0
    %1819 = vperm.xlu0 %1818, %v1084
    %v1820 = vpop.permute.xlu0 %1819
    %1823 = vset.pattern.permute.xlu0 0
    %1824 = vperm.xlu0 %1823, %v1085
    %v1825 = vpop.permute.xlu0 %1824
    %1828 = vset.pattern.permute.xlu0 0
    %1829 = vperm.xlu0 %1828, %v1086
    %v1830 = vpop.permute.xlu0 %1829
    %1833 = vset.pattern.permute.xlu0 0
    %1834 = vperm.xlu0 %1833, %v1087
    %v1835 = vpop.permute.xlu0 %1834
    %1838 = vset.pattern.permute.xlu0 0
    %1839 = vperm.xlu0 %1838, %v1088
    %v1840 = vpop.permute.xlu0 %1839
    %1843 = vset.pattern.permute.xlu0 0
    %1844 = vperm.xlu0 %1843, %v1089
    %v1845 = vpop.permute.xlu0 %1844
    %1848 = vset.pattern.permute.xlu0 0
    %1849 = vperm.xlu0 %1848, %v1090
    %v1850 = vpop.permute.xlu0 %1849
    %1853 = vset.pattern.permute.xlu0 0
    %1854 = vperm.xlu0 %1853, %v1091
    %v1855 = vpop.permute.xlu0 %1854
    %1858 = vset.pattern.permute.xlu0 0
    %1859 = vperm.xlu0 %1858, %v1092
    %v1860 = vpop.permute.xlu0 %1859
    %1863 = vset.pattern.permute.xlu0 0
    %1864 = vperm.xlu0 %1863, %v1093
    %v1865 = vpop.permute.xlu0 %1864
    %1868 = vset.pattern.permute.xlu0 0
    %1869 = vperm.xlu0 %1868, %v1094
    %v1870 = vpop.permute.xlu0 %1869
    %1873 = vset.pattern.permute.xlu0 0
    %1874 = vperm.xlu0 %1873, %v1095
    %v1875 = vpop.permute.xlu0 %1874
    %1878 = vset.pattern.permute.xlu0 0
    %1879 = vperm.xlu0 %1878, %v1096
    %v1880 = vpop.permute.xlu0 %1879
    %1883 = vset.pattern.permute.xlu0 0
    %1884 = vperm.xlu0 %1883, %v1097
    %v1885 = vpop.permute.xlu0 %1884
    %1888 = vset.pattern.permute.xlu0 0
    %1889 = vperm.xlu0 %1888, %v1098
    %v1890 = vpop.permute.xlu0 %1889
    %1893 = vset.pattern.permute.xlu0 0
    %1894 = vperm.xlu0 %1893, %v1099
    %v1895 = vpop.permute.xlu0 %1894
    %1898 = vset.pattern.permute.xlu0 0
    %1899 = vperm.xlu0 %1898, %v1100
    %v1900 = vpop.permute.xlu0 %1899
    %1903 = vset.pattern.permute.xlu0 0
    %1904 = vperm.xlu0 %1903, %v1101
    %v1905 = vpop.permute.xlu0 %1904
    %1908 = vset.pattern.permute.xlu0 0
    %1909 = vperm.xlu0 %1908, %v1102
    %v1910 = vpop.permute.xlu0 %1909
    %1913 = vset.pattern.permute.xlu0 0
    %1914 = vperm.xlu0 %1913, %v1103
    %v1915 = vpop.permute.xlu0 %1914
    %1918 = vset.pattern.permute.xlu0 0
    %1919 = vperm.xlu0 %1918, %v1104
    %v1920 = vpop.permute.xlu0 %1919
    %1923 = vset.pattern.permute.xlu0 0
    %1924 = vperm.xlu0 %1923, %v1105
    %v1925 = vpop.permute.xlu0 %1924
    %1928 = vset.pattern.permute.xlu0 0
    %1929 = vperm.xlu0 %1928, %v1106
    %v1930 = vpop.permute.xlu0 %1929
    %1933 = vset.pattern.permute.xlu0 0
    %1934 = vperm.xlu0 %1933, %v1107
    %v1935 = vpop.permute.xlu0 %1934
    %1938 = vset.pattern.permute.xlu0 0
    %1939 = vperm.xlu0 %1938, %v1108
    %v1940 = vpop.permute.xlu0 %1939
    %1943 = vset.pattern.permute.xlu0 0
    %1944 = vperm.xlu0 %1943, %v1109
    %v1945 = vpop.permute.xlu0 %1944
    %1948 = vset.pattern.permute.xlu0 0
    %1949 = vperm.xlu0 %1948, %v1110
    %v1950 = vpop.permute.xlu0 %1949
    %1953 = vset.pattern.permute.xlu0 0
    %1954 = vperm.xlu0 %1953, %v1111
    %v1955 = vpop.permute.xlu0 %1954
    %v1957 = vlaneseq
    %v1958 = vshrl.u32 %v1957, 7
    %v1959 = vsub.s32 0, %v1958
    %v1960 = vrot.slane %v772, %v1959
    %v1961 = vmul.f32 %v1115, %v1960
    %v1962 = vmul.f32 %v1120, %v1960
    %v1963 = vmul.f32 %v1125, %v1960
    %v1964 = vmul.f32 %v1130, %v1960
    %v1965 = vmul.f32 %v1135, %v1960
    %v1966 = vmul.f32 %v1140, %v1960
    %v1967 = vmul.f32 %v1145, %v1960
    %v1968 = vmul.f32 %v1150, %v1960
    %v1969 = vmul.f32 %v1155, %v1960
    %v1970 = vmul.f32 %v1160, %v1960
    %v1971 = vmul.f32 %v1165, %v1960
    %v1972 = vmul.f32 %v1170, %v1960
    %v1973 = vmul.f32 %v1175, %v1960
    %v1974 = vmul.f32 %v1180, %v1960
    %v1975 = vmul.f32 %v1185, %v1960
    %v1976 = vmul.f32 %v1190, %v1960
    %v1977 = vmul.f32 %v1195, %v1960
    %v1978 = vmul.f32 %v1200, %v1960
    %v1979 = vmul.f32 %v1205, %v1960
    %v1980 = vmul.f32 %v1210, %v1960
    %v1981 = vmul.f32 %v1215, %v1960
    %v1982 = vmul.f32 %v1220, %v1960
    %v1983 = vmul.f32 %v1225, %v1960
    %v1984 = vmul.f32 %v1230, %v1960
    %v1985 = vmul.f32 %v1235, %v1960
    %v1986 = vmul.f32 %v1240, %v1960
    %v1987 = vmul.f32 %v1245, %v1960
    %v1988 = vmul.f32 %v1250, %v1960
    %v1989 = vmul.f32 %v1255, %v1960
    %v1990 = vmul.f32 %v1260, %v1960
    %v1991 = vmul.f32 %v1265, %v1960
    %v1992 = vmul.f32 %v1270, %v1960
    %v1993 = vmul.f32 %v1275, %v1960
    %v1994 = vmul.f32 %v1280, %v1960
    %v1995 = vmul.f32 %v1285, %v1960
    %v1996 = vmul.f32 %v1290, %v1960
    %v1997 = vmul.f32 %v1295, %v1960
    %v1998 = vmul.f32 %v1300, %v1960
    %v1999 = vmul.f32 %v1305, %v1960
    %v2000 = vmul.f32 %v1310, %v1960
    %v2001 = vmul.f32 %v1315, %v1960
    %v2002 = vmul.f32 %v1320, %v1960
    %v2003 = vmul.f32 %v1325, %v1960
    %v2004 = vmul.f32 %v1330, %v1960
    %v2005 = vmul.f32 %v1335, %v1960
    %v2006 = vmul.f32 %v1340, %v1960
    %v2007 = vmul.f32 %v1345, %v1960
    %v2008 = vmul.f32 %v1350, %v1960
    %v2009 = vmul.f32 %v1355, %v1960
    %v2010 = vmul.f32 %v1360, %v1960
    %v2011 = vmul.f32 %v1365, %v1960
    %v2012 = vmul.f32 %v1370, %v1960
    %v2013 = vmul.f32 %v1375, %v1960
    %v2014 = vmul.f32 %v1380, %v1960
    %v2015 = vmul.f32 %v1385, %v1960
    %v2016 = vmul.f32 %v1390, %v1960
    %v2017 = vmul.f32 %v1395, %v1960
    %v2018 = vmul.f32 %v1400, %v1960
    %v2019 = vmul.f32 %v1405, %v1960
    %v2020 = vmul.f32 %v1410, %v1960
    %v2021 = vmul.f32 %v1415, %v1960
    %v2022 = vmul.f32 %v1420, %v1960
    %v2023 = vmul.f32 %v1425, %v1960
    %v2024 = vmul.f32 %v1430, %v1960
    %v2025 = vmul.f32 %v1435, %v1960
    %v2026 = vmul.f32 %v1440, %v1960
    %v2027 = vmul.f32 %v1445, %v1960
    %v2028 = vmul.f32 %v1450, %v1960
    %v2029 = vmul.f32 %v1455, %v1960
    %v2030 = vmul.f32 %v1460, %v1960
    %v2031 = vmul.f32 %v1465, %v1960
    %v2032 = vmul.f32 %v1470, %v1960
    %v2033 = vmul.f32 %v1475, %v1960
    %v2034 = vmul.f32 %v1480, %v1960
    %v2035 = vmul.f32 %v1485, %v1960
    %v2036 = vmul.f32 %v1490, %v1960
    %v2037 = vmul.f32 %v1495, %v1960
    %v2038 = vmul.f32 %v1500, %v1960
    %v2039 = vmul.f32 %v1505, %v1960
    %v2040 = vmul.f32 %v1510, %v1960
    %v2041 = vmul.f32 %v1515, %v1960
    %v2042 = vmul.f32 %v1520, %v1960
    %v2043 = vmul.f32 %v1525, %v1960
    %v2044 = vmul.f32 %v1530, %v1960
    %v2045 = vmul.f32 %v1535, %v1960
    %v2046 = vmul.f32 %v1540, %v1960
    %v2047 = vmul.f32 %v1545, %v1960
    %v2048 = vmul.f32 %v1550, %v1960
    %v2049 = vmul.f32 %v1555, %v1960
    %v2050 = vmul.f32 %v1560, %v1960
    %v2051 = vmul.f32 %v1565, %v1960
    %v2052 = vmul.f32 %v1570, %v1960
    %v2053 = vmul.f32 %v1575, %v1960
    %v2054 = vmul.f32 %v1580, %v1960
    %v2055 = vmul.f32 %v1585, %v1960
    %v2056 = vmul.f32 %v1590, %v1960
    %v2057 = vmul.f32 %v1595, %v1960
    %v2058 = vmul.f32 %v1600, %v1960
    %v2059 = vmul.f32 %v1605, %v1960
    %v2060 = vmul.f32 %v1610, %v1960
    %v2061 = vmul.f32 %v1615, %v1960
    %v2062 = vmul.f32 %v1620, %v1960
    %v2063 = vmul.f32 %v1625, %v1960
    %v2064 = vmul.f32 %v1630, %v1960
    %v2065 = vmul.f32 %v1635, %v1960
    %v2066 = vmul.f32 %v1640, %v1960
    %v2067 = vmul.f32 %v1645, %v1960
    %v2068 = vmul.f32 %v1650, %v1960
    %v2069 = vmul.f32 %v1655, %v1960
    %v2070 = vmul.f32 %v1660, %v1960
    %v2071 = vmul.f32 %v1665, %v1960
    %v2072 = vmul.f32 %v1670, %v1960
    %v2073 = vmul.f32 %v1675, %v1960
    %v2074 = vmul.f32 %v1680, %v1960
    %v2075 = vmul.f32 %v1685, %v1960
    %v2076 = vmul.f32 %v1690, %v1960
    %v2077 = vmul.f32 %v1695, %v1960
    %v2078 = vmul.f32 %v1700, %v1960
    %v2079 = vmul.f32 %v1705, %v1960
    %v2080 = vmul.f32 %v1710, %v1960
    %v2081 = vmul.f32 %v1715, %v1960
    %v2082 = vmul.f32 %v1720, %v1960
    %v2083 = vmul.f32 %v1725, %v1960
    %v2084 = vmul.f32 %v1730, %v1960
    %v2085 = vmul.f32 %v1735, %v1960
    %v2086 = vmul.f32 %v1740, %v1960
    %v2087 = vmul.f32 %v1745, %v1960
    %v2088 = vmul.f32 %v1750, %v1960
    %v2089 = vmul.f32 %v1755, %v1960
    %v2090 = vmul.f32 %v1760, %v1960
    %v2091 = vmul.f32 %v1765, %v1960
    %v2092 = vmul.f32 %v1770, %v1960
    %v2093 = vmul.f32 %v1775, %v1960
    %v2094 = vmul.f32 %v1780, %v1960
    %v2095 = vmul.f32 %v1785, %v1960
    %v2096 = vmul.f32 %v1790, %v1960
    %v2097 = vmul.f32 %v1795, %v1960
    %v2098 = vmul.f32 %v1800, %v1960
    %v2099 = vmul.f32 %v1805, %v1960
    %v2100 = vmul.f32 %v1810, %v1960
    %v2101 = vmul.f32 %v1815, %v1960
    %v2102 = vmul.f32 %v1820, %v1960
    %v2103 = vmul.f32 %v1825, %v1960
    %v2104 = vmul.f32 %v1830, %v1960
    %v2105 = vmul.f32 %v1835, %v1960
    %v2106 = vmul.f32 %v1840, %v1960
    %v2107 = vmul.f32 %v1845, %v1960
    %v2108 = vmul.f32 %v1850, %v1960
    %v2109 = vmul.f32 %v1855, %v1960
    %v2110 = vmul.f32 %v1860, %v1960
    %v2111 = vmul.f32 %v1865, %v1960
    %v2112 = vmul.f32 %v1870, %v1960
    %v2113 = vmul.f32 %v1875, %v1960
    %v2114 = vmul.f32 %v1880, %v1960
    %v2115 = vmul.f32 %v1885, %v1960
    %v2116 = vmul.f32 %v1890, %v1960
    %v2117 = vmul.f32 %v1895, %v1960
    %v2118 = vmul.f32 %v1900, %v1960
    %v2119 = vmul.f32 %v1905, %v1960
    %v2120 = vmul.f32 %v1910, %v1960
    %v2121 = vmul.f32 %v1915, %v1960
    %v2122 = vmul.f32 %v1920, %v1960
    %v2123 = vmul.f32 %v1925, %v1960
    %v2124 = vmul.f32 %v1930, %v1960
    %v2125 = vmul.f32 %v1935, %v1960
    %v2126 = vmul.f32 %v1940, %v1960
    %v2127 = vmul.f32 %v1945, %v1960
    %v2128 = vmul.f32 %v1950, %v1960
    %v2129 = vmul.f32 %v1955, %v1960
    %v2130 = vadd.f32 %v1961, 0.0
    %v2131 = vadd.f32 %v1962, 0.0
    %v2132 = vadd.f32 %v1963, 0.0
    %v2133 = vadd.f32 %v1964, 0.0
    %v2134 = vadd.f32 %v1965, 0.0
    %v2135 = vadd.f32 %v1966, 0.0
    %v2136 = vadd.f32 %v1967, 0.0
    %v2137 = vadd.f32 %v1968, 0.0
    %v2138 = vadd.f32 %v1969, 0.0
    %v2139 = vadd.f32 %v1970, 0.0
    %v2140 = vadd.f32 %v1971, 0.0
    %v2141 = vadd.f32 %v1972, 0.0
    %v2142 = vadd.f32 %v1973, 0.0
    %v2143 = vadd.f32 %v1974, 0.0
    %v2144 = vadd.f32 %v1975, 0.0
    %v2145 = vadd.f32 %v1976, 0.0
    %v2146 = vadd.f32 %v1977, 0.0
    %v2147 = vadd.f32 %v1978, 0.0
    %v2148 = vadd.f32 %v1979, 0.0
    %v2149 = vadd.f32 %v1980, 0.0
    %v2150 = vadd.f32 %v1981, 0.0
    %v2151 = vadd.f32 %v1982, 0.0
    %v2152 = vadd.f32 %v1983, 0.0
    %v2153 = vadd.f32 %v1984, 0.0
    %v2154 = vadd.f32 %v1985, 0.0
    %v2155 = vadd.f32 %v1986, 0.0
    %v2156 = vadd.f32 %v1987, 0.0
    %v2157 = vadd.f32 %v1988, 0.0
    %v2158 = vadd.f32 %v1989, 0.0
    %v2159 = vadd.f32 %v1990, 0.0
    %v2160 = vadd.f32 %v1991, 0.0
    %v2161 = vadd.f32 %v1992, 0.0
    %v2162 = vadd.f32 %v1993, 0.0
    %v2163 = vadd.f32 %v1994, 0.0
    %v2164 = vadd.f32 %v1995, 0.0
    %v2165 = vadd.f32 %v1996, 0.0
    %v2166 = vadd.f32 %v1997, 0.0
    %v2167 = vadd.f32 %v1998, 0.0
    %v2168 = vadd.f32 %v1999, 0.0
    %v2169 = vadd.f32 %v2000, 0.0
    %v2170 = vadd.f32 %v2001, 0.0
    %v2171 = vadd.f32 %v2002, 0.0
    %v2172 = vadd.f32 %v2003, 0.0
    %v2173 = vadd.f32 %v2004, 0.0
    %v2174 = vadd.f32 %v2005, 0.0
    %v2175 = vadd.f32 %v2006, 0.0
    %v2176 = vadd.f32 %v2007, 0.0
    %v2177 = vadd.f32 %v2008, 0.0
    %v2178 = vadd.f32 %v2009, 0.0
    %v2179 = vadd.f32 %v2010, 0.0
    %v2180 = vadd.f32 %v2011, 0.0
    %v2181 = vadd.f32 %v2012, 0.0
    %v2182 = vadd.f32 %v2013, 0.0
    %v2183 = vadd.f32 %v2014, 0.0
    %v2184 = vadd.f32 %v2015, 0.0
    %v2185 = vadd.f32 %v2016, 0.0
    %v2186 = vadd.f32 %v2017, 0.0
    %v2187 = vadd.f32 %v2018, 0.0
    %v2188 = vadd.f32 %v2019, 0.0
    %v2189 = vadd.f32 %v2020, 0.0
    %v2190 = vadd.f32 %v2021, 0.0
    %v2191 = vadd.f32 %v2022, 0.0
    %v2192 = vadd.f32 %v2023, 0.0
    %v2193 = vadd.f32 %v2024, 0.0
    %v2194 = vadd.f32 %v2025, 0.0
    %v2195 = vadd.f32 %v2026, 0.0
    %v2196 = vadd.f32 %v2027, 0.0
    %v2197 = vadd.f32 %v2028, 0.0
    %v2198 = vadd.f32 %v2029, 0.0
    %v2199 = vadd.f32 %v2030, 0.0
    %v2200 = vadd.f32 %v2031, 0.0
    %v2201 = vadd.f32 %v2032, 0.0
    %v2202 = vadd.f32 %v2033, 0.0
    %v2203 = vadd.f32 %v2034, 0.0
    %v2204 = vadd.f32 %v2035, 0.0
    %v2205 = vadd.f32 %v2036, 0.0
    %v2206 = vadd.f32 %v2037, 0.0
    %v2207 = vadd.f32 %v2038, 0.0
    %v2208 = vadd.f32 %v2039, 0.0
    %v2209 = vadd.f32 %v2040, 0.0
    %v2210 = vadd.f32 %v2041, 0.0
    %v2211 = vadd.f32 %v2042, 0.0
    %v2212 = vadd.f32 %v2043, 0.0
    %v2213 = vadd.f32 %v2044, 0.0
    %v2214 = vadd.f32 %v2045, 0.0
    %v2215 = vadd.f32 %v2046, 0.0
    %v2216 = vadd.f32 %v2047, 0.0
    %v2217 = vadd.f32 %v2048, 0.0
    %v2218 = vadd.f32 %v2049, 0.0
    %v2219 = vadd.f32 %v2050, 0.0
    %v2220 = vadd.f32 %v2051, 0.0
    %v2221 = vadd.f32 %v2052, 0.0
    %v2222 = vadd.f32 %v2053, 0.0
    %v2223 = vadd.f32 %v2054, 0.0
    %v2224 = vadd.f32 %v2055, 0.0
    %v2225 = vadd.f32 %v2056, 0.0
    %v2226 = vadd.f32 %v2057, 0.0
    %v2227 = vadd.f32 %v2058, 0.0
    %v2228 = vadd.f32 %v2059, 0.0
    %v2229 = vadd.f32 %v2060, 0.0
    %v2230 = vadd.f32 %v2061, 0.0
    %v2231 = vadd.f32 %v2062, 0.0
    %v2232 = vadd.f32 %v2063, 0.0
    %v2233 = vadd.f32 %v2064, 0.0
    %v2234 = vadd.f32 %v2065, 0.0
    %v2235 = vadd.f32 %v2066, 0.0
    %v2236 = vadd.f32 %v2067, 0.0
    %v2237 = vadd.f32 %v2068, 0.0
    %v2238 = vadd.f32 %v2069, 0.0
    %v2239 = vadd.f32 %v2070, 0.0
    %v2240 = vadd.f32 %v2071, 0.0
    %v2241 = vadd.f32 %v2072, 0.0
    %v2242 = vadd.f32 %v2073, 0.0
    %v2243 = vadd.f32 %v2074, 0.0
    %v2244 = vadd.f32 %v2075, 0.0
    %v2245 = vadd.f32 %v2076, 0.0
    %v2246 = vadd.f32 %v2077, 0.0
    %v2247 = vadd.f32 %v2078, 0.0
    %v2248 = vadd.f32 %v2079, 0.0
    %v2249 = vadd.f32 %v2080, 0.0
    %v2250 = vadd.f32 %v2081, 0.0
    %v2251 = vadd.f32 %v2082, 0.0
    %v2252 = vadd.f32 %v2083, 0.0
    %v2253 = vadd.f32 %v2084, 0.0
    %v2254 = vadd.f32 %v2085, 0.0
    %v2255 = vadd.f32 %v2086, 0.0
    %v2256 = vadd.f32 %v2087, 0.0
    %v2257 = vadd.f32 %v2088, 0.0
    %v2258 = vadd.f32 %v2089, 0.0
    %v2259 = vadd.f32 %v2090, 0.0
    %v2260 = vadd.f32 %v2091, 0.0
    %v2261 = vadd.f32 %v2092, 0.0
    %v2262 = vadd.f32 %v2093, 0.0
    %v2263 = vadd.f32 %v2094, 0.0
    %v2264 = vadd.f32 %v2095, 0.0
    %v2265 = vadd.f32 %v2096, 0.0
    %v2266 = vadd.f32 %v2097, 0.0
    %v2267 = vadd.f32 %v2098, 0.0
    %v2268 = vadd.f32 %v2099, 0.0
    %v2269 = vadd.f32 %v2100, 0.0
    %v2270 = vadd.f32 %v2101, 0.0
    %v2271 = vadd.f32 %v2102, 0.0
    %v2272 = vadd.f32 %v2103, 0.0
    %v2273 = vadd.f32 %v2104, 0.0
    %v2274 = vadd.f32 %v2105, 0.0
    %v2275 = vadd.f32 %v2106, 0.0
    %v2276 = vadd.f32 %v2107, 0.0
    %v2277 = vadd.f32 %v2108, 0.0
    %v2278 = vadd.f32 %v2109, 0.0
    %v2279 = vadd.f32 %v2110, 0.0
    %v2280 = vadd.f32 %v2111, 0.0
    %v2281 = vadd.f32 %v2112, 0.0
    %v2282 = vadd.f32 %v2113, 0.0
    %v2283 = vadd.f32 %v2114, 0.0
    %v2284 = vadd.f32 %v2115, 0.0
    %v2285 = vadd.f32 %v2116, 0.0
    %v2286 = vadd.f32 %v2117, 0.0
    %v2287 = vadd.f32 %v2118, 0.0
    %v2288 = vadd.f32 %v2119, 0.0
    %v2289 = vadd.f32 %v2120, 0.0
    %v2290 = vadd.f32 %v2121, 0.0
    %v2291 = vadd.f32 %v2122, 0.0
    %v2292 = vadd.f32 %v2123, 0.0
    %v2293 = vadd.f32 %v2124, 0.0
    %v2294 = vadd.f32 %v2125, 0.0
    %v2295 = vadd.f32 %v2126, 0.0
    %v2296 = vadd.f32 %v2127, 0.0
    %v2297 = vadd.f32 %v2128, 0.0
    %v2298 = vadd.f32 %v2129, 0.0
    %v2299 = vpack.c.bf16 %v41, %v41
    %v2300 = vpack.c.bf16 %v43, %v43
    %v2301 = vpack.c.bf16 %v45, %v45
    %v2302 = vpack.c.bf16 %v47, %v47
    %v2303 = vpack.c.bf16 %v49, %v49
    %v2304 = vpack.c.bf16 %v51, %v51
    %v2305 = vpack.c.bf16 %v53, %v53
    %v2306 = vpack.c.bf16 %v55, %v55
    %v2307 = vpack.c.bf16 %v57, %v57
    %v2308 = vpack.c.bf16 %v59, %v59
    %v2309 = vpack.c.bf16 %v61, %v61
    %v2310 = vpack.c.bf16 %v63, %v63
    %v2311 = vpack.c.bf16 %v65, %v65
    %v2312 = vpack.c.bf16 %v95, %v95
    %v2313 = vpack.c.bf16 %v97, %v97
    %v2314 = vpack.c.bf16 %v99, %v99
    %v2315 = vpack.c.bf16 %v101, %v101
    %v2316 = vpack.c.bf16 %v103, %v103
    %v2317 = vpack.c.bf16 %v105, %v105
    %v2318 = vpack.c.bf16 %v107, %v107
    %v2319 = vpack.c.bf16 %v109, %v109
    %v2320 = vpack.c.bf16 %v111, %v111
    %v2321 = vpack.c.bf16 %v113, %v113
    %v2322 = vpack.c.bf16 %v115, %v115
    %v2323 = vpack.c.bf16 %v117, %v117
    %v2324 = vpack.c.bf16 %v119, %v119
    %v2325 = vpack.c.bf16 %v149, %v149
    %v2326 = vpack.c.bf16 %v151, %v151
    %v2327 = vpack.c.bf16 %v153, %v153
    %v2328 = vpack.c.bf16 %v155, %v155
    %v2329 = vpack.c.bf16 %v157, %v157
    %v2330 = vpack.c.bf16 %v159, %v159
    %v2331 = vpack.c.bf16 %v161, %v161
    %v2332 = vpack.c.bf16 %v163, %v163
    %v2333 = vpack.c.bf16 %v165, %v165
    %v2334 = vpack.c.bf16 %v167, %v167
    %v2335 = vpack.c.bf16 %v169, %v169
    %v2336 = vpack.c.bf16 %v171, %v171
    %v2337 = vpack.c.bf16 %v173, %v173
    %v2338 = vpack.c.bf16 %v203, %v203
    %v2339 = vpack.c.bf16 %v205, %v205
    %v2340 = vpack.c.bf16 %v207, %v207
    %v2341 = vpack.c.bf16 %v209, %v209
    %v2342 = vpack.c.bf16 %v211, %v211
    %v2343 = vpack.c.bf16 %v213, %v213
    %v2344 = vpack.c.bf16 %v215, %v215
    %v2345 = vpack.c.bf16 %v217, %v217
    %v2346 = vpack.c.bf16 %v219, %v219
    %v2347 = vpack.c.bf16 %v221, %v221
    %v2348 = vpack.c.bf16 %v223, %v223
    %v2349 = vpack.c.bf16 %v225, %v225
    %v2350 = vpack.c.bf16 %v227, %v227
    %v2351 = vpack.c.bf16 %v257, %v257
    %v2352 = vpack.c.bf16 %v259, %v259
    %v2353 = vpack.c.bf16 %v261, %v261
    %v2354 = vpack.c.bf16 %v263, %v263
    %v2355 = vpack.c.bf16 %v265, %v265
    %v2356 = vpack.c.bf16 %v267, %v267
    %v2357 = vpack.c.bf16 %v269, %v269
    %v2358 = vpack.c.bf16 %v271, %v271
    %v2359 = vpack.c.bf16 %v273, %v273
    %v2360 = vpack.c.bf16 %v275, %v275
    %v2361 = vpack.c.bf16 %v277, %v277
    %v2362 = vpack.c.bf16 %v279, %v279
    %v2363 = vpack.c.bf16 %v281, %v281
    %v2364 = vpack.c.bf16 %v311, %v311
    %v2365 = vpack.c.bf16 %v313, %v313
    %v2366 = vpack.c.bf16 %v315, %v315
    %v2367 = vpack.c.bf16 %v317, %v317
    %v2368 = vpack.c.bf16 %v319, %v319
    %v2369 = vpack.c.bf16 %v321, %v321
    %v2370 = vpack.c.bf16 %v323, %v323
    %v2371 = vpack.c.bf16 %v325, %v325
    %v2372 = vpack.c.bf16 %v327, %v327
    %v2373 = vpack.c.bf16 %v329, %v329
    %v2374 = vpack.c.bf16 %v331, %v331
    %v2375 = vpack.c.bf16 %v333, %v333
    %v2376 = vpack.c.bf16 %v335, %v335
    %v2377 = vpack.c.bf16 %v365, %v365
    %v2378 = vpack.c.bf16 %v367, %v367
    %v2379 = vpack.c.bf16 %v369, %v369
    %v2380 = vpack.c.bf16 %v371, %v371
    %v2381 = vpack.c.bf16 %v373, %v373
    %v2382 = vpack.c.bf16 %v375, %v375
    %v2383 = vpack.c.bf16 %v377, %v377
    %v2384 = vpack.c.bf16 %v379, %v379
    %v2385 = vpack.c.bf16 %v381, %v381
    %v2386 = vpack.c.bf16 %v383, %v383
    %v2387 = vpack.c.bf16 %v385, %v385
    %v2388 = vpack.c.bf16 %v387, %v387
    %v2389 = vpack.c.bf16 %v389, %v389
    %v2390 = vpack.c.bf16 %v419, %v419
    %v2391 = vpack.c.bf16 %v421, %v421
    %v2392 = vpack.c.bf16 %v423, %v423
    %v2393 = vpack.c.bf16 %v425, %v425
    %v2394 = vpack.c.bf16 %v427, %v427
    %v2395 = vpack.c.bf16 %v429, %v429
    %v2396 = vpack.c.bf16 %v431, %v431
    %v2397 = vpack.c.bf16 %v433, %v433
    %v2398 = vpack.c.bf16 %v435, %v435
    %v2399 = vpack.c.bf16 %v437, %v437
    %v2400 = vpack.c.bf16 %v439, %v439
    %v2401 = vpack.c.bf16 %v441, %v441
    %v2402 = vpack.c.bf16 %v443, %v443
    %v2403 = vpack.c.bf16 %v473, %v473
    %v2404 = vpack.c.bf16 %v475, %v475
    %v2405 = vpack.c.bf16 %v477, %v477
    %v2406 = vpack.c.bf16 %v479, %v479
    %v2407 = vpack.c.bf16 %v481, %v481
    %v2408 = vpack.c.bf16 %v483, %v483
    %v2409 = vpack.c.bf16 %v485, %v485
    %v2410 = vpack.c.bf16 %v487, %v487
    %v2411 = vpack.c.bf16 %v489, %v489
    %v2412 = vpack.c.bf16 %v491, %v491
    %v2413 = vpack.c.bf16 %v493, %v493
    %v2414 = vpack.c.bf16 %v495, %v495
    %v2415 = vpack.c.bf16 %v497, %v497
    %v2416 = vpack.c.bf16 %v527, %v527
    %v2417 = vpack.c.bf16 %v529, %v529
    %v2418 = vpack.c.bf16 %v531, %v531
    %v2419 = vpack.c.bf16 %v533, %v533
    %v2420 = vpack.c.bf16 %v535, %v535
    %v2421 = vpack.c.bf16 %v537, %v537
    %v2422 = vpack.c.bf16 %v539, %v539
    %v2423 = vpack.c.bf16 %v541, %v541
    %v2424 = vpack.c.bf16 %v543, %v543
    %v2425 = vpack.c.bf16 %v545, %v545
    %v2426 = vpack.c.bf16 %v547, %v547
    %v2427 = vpack.c.bf16 %v549, %v549
    %v2428 = vpack.c.bf16 %v551, %v551
    %v2429 = vpack.c.bf16 %v581, %v581
    %v2430 = vpack.c.bf16 %v583, %v583
    %v2431 = vpack.c.bf16 %v585, %v585
    %v2432 = vpack.c.bf16 %v587, %v587
    %v2433 = vpack.c.bf16 %v589, %v589
    %v2434 = vpack.c.bf16 %v591, %v591
    %v2435 = vpack.c.bf16 %v593, %v593
    %v2436 = vpack.c.bf16 %v595, %v595
    %v2437 = vpack.c.bf16 %v597, %v597
    %v2438 = vpack.c.bf16 %v599, %v599
    %v2439 = vpack.c.bf16 %v601, %v601
    %v2440 = vpack.c.bf16 %v603, %v603
    %v2441 = vpack.c.bf16 %v605, %v605
    %v2442 = vpack.c.bf16 %v635, %v635
    %v2443 = vpack.c.bf16 %v637, %v637
    %v2444 = vpack.c.bf16 %v639, %v639
    %v2445 = vpack.c.bf16 %v641, %v641
    %v2446 = vpack.c.bf16 %v643, %v643
    %v2447 = vpack.c.bf16 %v645, %v645
    %v2448 = vpack.c.bf16 %v647, %v647
    %v2449 = vpack.c.bf16 %v649, %v649
    %v2450 = vpack.c.bf16 %v651, %v651
    %v2451 = vpack.c.bf16 %v653, %v653
    %v2452 = vpack.c.bf16 %v655, %v655
    %v2453 = vpack.c.bf16 %v657, %v657
    %v2454 = vpack.c.bf16 %v659, %v659
    %v2455 = vpack.c.bf16 %v689, %v689
    %v2456 = vpack.c.bf16 %v691, %v691
    %v2457 = vpack.c.bf16 %v693, %v693
    %v2458 = vpack.c.bf16 %v695, %v695
    %v2459 = vpack.c.bf16 %v697, %v697
    %v2460 = vpack.c.bf16 %v699, %v699
    %v2461 = vpack.c.bf16 %v701, %v701
    %v2462 = vpack.c.bf16 %v703, %v703
    %v2463 = vpack.c.bf16 %v705, %v705
    %v2464 = vpack.c.bf16 %v707, %v707
    %v2465 = vpack.c.bf16 %v709, %v709
    %v2466 = vpack.c.bf16 %v711, %v711
    %v2467 = vpack.c.bf16 %v713, %v713
    %v2468 = vunpack.c.l.bf16 %v2299
    %v2469 = vunpack.c.l.bf16 %v2300
    %v2470 = vunpack.c.l.bf16 %v2301
    %v2471 = vunpack.c.l.bf16 %v2302
    %v2472 = vunpack.c.l.bf16 %v2303
    %v2473 = vunpack.c.l.bf16 %v2304
    %v2474 = vunpack.c.l.bf16 %v2305
    %v2475 = vunpack.c.l.bf16 %v2306
    %v2476 = vunpack.c.l.bf16 %v2307
    %v2477 = vunpack.c.l.bf16 %v2308
    %v2478 = vunpack.c.l.bf16 %v2309
    %v2479 = vunpack.c.l.bf16 %v2310
    %v2480 = vunpack.c.l.bf16 %v2311
    %v2481 = vunpack.c.l.bf16 %v2312
    %v2482 = vunpack.c.l.bf16 %v2313
    %v2483 = vunpack.c.l.bf16 %v2314
    %v2484 = vunpack.c.l.bf16 %v2315
    %v2485 = vunpack.c.l.bf16 %v2316
    %v2486 = vunpack.c.l.bf16 %v2317
    %v2487 = vunpack.c.l.bf16 %v2318
    %v2488 = vunpack.c.l.bf16 %v2319
    %v2489 = vunpack.c.l.bf16 %v2320
    %v2490 = vunpack.c.l.bf16 %v2321
    %v2491 = vunpack.c.l.bf16 %v2322
    %v2492 = vunpack.c.l.bf16 %v2323
    %v2493 = vunpack.c.l.bf16 %v2324
    %v2494 = vunpack.c.l.bf16 %v2325
    %v2495 = vunpack.c.l.bf16 %v2326
    %v2496 = vunpack.c.l.bf16 %v2327
    %v2497 = vunpack.c.l.bf16 %v2328
    %v2498 = vunpack.c.l.bf16 %v2329
    %v2499 = vunpack.c.l.bf16 %v2330
    %v2500 = vunpack.c.l.bf16 %v2331
    %v2501 = vunpack.c.l.bf16 %v2332
    %v2502 = vunpack.c.l.bf16 %v2333
    %v2503 = vunpack.c.l.bf16 %v2334
    %v2504 = vunpack.c.l.bf16 %v2335
    %v2505 = vunpack.c.l.bf16 %v2336
    %v2506 = vunpack.c.l.bf16 %v2337
    %v2507 = vunpack.c.l.bf16 %v2338
    %v2508 = vunpack.c.l.bf16 %v2339
    %v2509 = vunpack.c.l.bf16 %v2340
    %v2510 = vunpack.c.l.bf16 %v2341
    %v2511 = vunpack.c.l.bf16 %v2342
    %v2512 = vunpack.c.l.bf16 %v2343
    %v2513 = vunpack.c.l.bf16 %v2344
    %v2514 = vunpack.c.l.bf16 %v2345
    %v2515 = vunpack.c.l.bf16 %v2346
    %v2516 = vunpack.c.l.bf16 %v2347
    %v2517 = vunpack.c.l.bf16 %v2348
    %v2518 = vunpack.c.l.bf16 %v2349
    %v2519 = vunpack.c.l.bf16 %v2350
    %v2520 = vunpack.c.l.bf16 %v2351
    %v2521 = vunpack.c.l.bf16 %v2352
    %v2522 = vunpack.c.l.bf16 %v2353
    %v2523 = vunpack.c.l.bf16 %v2354
    %v2524 = vunpack.c.l.bf16 %v2355
    %v2525 = vunpack.c.l.bf16 %v2356
    %v2526 = vunpack.c.l.bf16 %v2357
    %v2527 = vunpack.c.l.bf16 %v2358
    %v2528 = vunpack.c.l.bf16 %v2359
    %v2529 = vunpack.c.l.bf16 %v2360
    %v2530 = vunpack.c.l.bf16 %v2361
    %v2531 = vunpack.c.l.bf16 %v2362
    %v2532 = vunpack.c.l.bf16 %v2363
    %v2533 = vunpack.c.l.bf16 %v2364
    %v2534 = vunpack.c.l.bf16 %v2365
    %v2535 = vunpack.c.l.bf16 %v2366
    %v2536 = vunpack.c.l.bf16 %v2367
    %v2537 = vunpack.c.l.bf16 %v2368
    %v2538 = vunpack.c.l.bf16 %v2369
    %v2539 = vunpack.c.l.bf16 %v2370
    %v2540 = vunpack.c.l.bf16 %v2371
    %v2541 = vunpack.c.l.bf16 %v2372
    %v2542 = vunpack.c.l.bf16 %v2373
    %v2543 = vunpack.c.l.bf16 %v2374
    %v2544 = vunpack.c.l.bf16 %v2375
    %v2545 = vunpack.c.l.bf16 %v2376
    %v2546 = vunpack.c.l.bf16 %v2377
    %v2547 = vunpack.c.l.bf16 %v2378
    %v2548 = vunpack.c.l.bf16 %v2379
    %v2549 = vunpack.c.l.bf16 %v2380
    %v2550 = vunpack.c.l.bf16 %v2381
    %v2551 = vunpack.c.l.bf16 %v2382
    %v2552 = vunpack.c.l.bf16 %v2383
    %v2553 = vunpack.c.l.bf16 %v2384
    %v2554 = vunpack.c.l.bf16 %v2385
    %v2555 = vunpack.c.l.bf16 %v2386
    %v2556 = vunpack.c.l.bf16 %v2387
    %v2557 = vunpack.c.l.bf16 %v2388
    %v2558 = vunpack.c.l.bf16 %v2389
    %v2559 = vunpack.c.l.bf16 %v2390
    %v2560 = vunpack.c.l.bf16 %v2391
    %v2561 = vunpack.c.l.bf16 %v2392
    %v2562 = vunpack.c.l.bf16 %v2393
    %v2563 = vunpack.c.l.bf16 %v2394
    %v2564 = vunpack.c.l.bf16 %v2395
    %v2565 = vunpack.c.l.bf16 %v2396
    %v2566 = vunpack.c.l.bf16 %v2397
    %v2567 = vunpack.c.l.bf16 %v2398
    %v2568 = vunpack.c.l.bf16 %v2399
    %v2569 = vunpack.c.l.bf16 %v2400
    %v2570 = vunpack.c.l.bf16 %v2401
    %v2571 = vunpack.c.l.bf16 %v2402
    %v2572 = vunpack.c.l.bf16 %v2403
    %v2573 = vunpack.c.l.bf16 %v2404
    %v2574 = vunpack.c.l.bf16 %v2405
    %v2575 = vunpack.c.l.bf16 %v2406
    %v2576 = vunpack.c.l.bf16 %v2407
    %v2577 = vunpack.c.l.bf16 %v2408
    %v2578 = vunpack.c.l.bf16 %v2409
    %v2579 = vunpack.c.l.bf16 %v2410
    %v2580 = vunpack.c.l.bf16 %v2411
    %v2581 = vunpack.c.l.bf16 %v2412
    %v2582 = vunpack.c.l.bf16 %v2413
    %v2583 = vunpack.c.l.bf16 %v2414
    %v2584 = vunpack.c.l.bf16 %v2415
    %v2585 = vunpack.c.l.bf16 %v2416
    %v2586 = vunpack.c.l.bf16 %v2417
    %v2587 = vunpack.c.l.bf16 %v2418
    %v2588 = vunpack.c.l.bf16 %v2419
    %v2589 = vunpack.c.l.bf16 %v2420
    %v2590 = vunpack.c.l.bf16 %v2421
    %v2591 = vunpack.c.l.bf16 %v2422
    %v2592 = vunpack.c.l.bf16 %v2423
    %v2593 = vunpack.c.l.bf16 %v2424
    %v2594 = vunpack.c.l.bf16 %v2425
    %v2595 = vunpack.c.l.bf16 %v2426
    %v2596 = vunpack.c.l.bf16 %v2427
    %v2597 = vunpack.c.l.bf16 %v2428
    %v2598 = vunpack.c.l.bf16 %v2429
    %v2599 = vunpack.c.l.bf16 %v2430
    %v2600 = vunpack.c.l.bf16 %v2431
    %v2601 = vunpack.c.l.bf16 %v2432
    %v2602 = vunpack.c.l.bf16 %v2433
    %v2603 = vunpack.c.l.bf16 %v2434
    %v2604 = vunpack.c.l.bf16 %v2435
    %v2605 = vunpack.c.l.bf16 %v2436
    %v2606 = vunpack.c.l.bf16 %v2437
    %v2607 = vunpack.c.l.bf16 %v2438
    %v2608 = vunpack.c.l.bf16 %v2439
    %v2609 = vunpack.c.l.bf16 %v2440
    %v2610 = vunpack.c.l.bf16 %v2441
    %v2611 = vunpack.c.l.bf16 %v2442
    %v2612 = vunpack.c.l.bf16 %v2443
    %v2613 = vunpack.c.l.bf16 %v2444
    %v2614 = vunpack.c.l.bf16 %v2445
    %v2615 = vunpack.c.l.bf16 %v2446
    %v2616 = vunpack.c.l.bf16 %v2447
    %v2617 = vunpack.c.l.bf16 %v2448
    %v2618 = vunpack.c.l.bf16 %v2449
    %v2619 = vunpack.c.l.bf16 %v2450
    %v2620 = vunpack.c.l.bf16 %v2451
    %v2621 = vunpack.c.l.bf16 %v2452
    %v2622 = vunpack.c.l.bf16 %v2453
    %v2623 = vunpack.c.l.bf16 %v2454
    %v2624 = vunpack.c.l.bf16 %v2455
    %v2625 = vunpack.c.l.bf16 %v2456
    %v2626 = vunpack.c.l.bf16 %v2457
    %v2627 = vunpack.c.l.bf16 %v2458
    %v2628 = vunpack.c.l.bf16 %v2459
    %v2629 = vunpack.c.l.bf16 %v2460
    %v2630 = vunpack.c.l.bf16 %v2461
    %v2631 = vunpack.c.l.bf16 %v2462
    %v2632 = vunpack.c.l.bf16 %v2463
    %v2633 = vunpack.c.l.bf16 %v2464
    %v2634 = vunpack.c.l.bf16 %v2465
    %v2635 = vunpack.c.l.bf16 %v2466
    %v2636 = vunpack.c.l.bf16 %v2467
    %2638 = vset.pattern.permute.xlu0 0
    %2639 = vperm.xlu0 %2638, %v2468
    %v2640 = vpop.permute.xlu0 %2639
    %2643 = vset.pattern.permute.xlu0 0
    %2644 = vperm.xlu0 %2643, %v2469
    %v2645 = vpop.permute.xlu0 %2644
    %2648 = vset.pattern.permute.xlu0 0
    %2649 = vperm.xlu0 %2648, %v2470
    %v2650 = vpop.permute.xlu0 %2649
    %2653 = vset.pattern.permute.xlu0 0
    %2654 = vperm.xlu0 %2653, %v2471
    %v2655 = vpop.permute.xlu0 %2654
    %2658 = vset.pattern.permute.xlu0 0
    %2659 = vperm.xlu0 %2658, %v2472
    %v2660 = vpop.permute.xlu0 %2659
    %2663 = vset.pattern.permute.xlu0 0
    %2664 = vperm.xlu0 %2663, %v2473
    %v2665 = vpop.permute.xlu0 %2664
    %2668 = vset.pattern.permute.xlu0 0
    %2669 = vperm.xlu0 %2668, %v2474
    %v2670 = vpop.permute.xlu0 %2669
    %2673 = vset.pattern.permute.xlu0 0
    %2674 = vperm.xlu0 %2673, %v2475
    %v2675 = vpop.permute.xlu0 %2674
    %2678 = vset.pattern.permute.xlu0 0
    %2679 = vperm.xlu0 %2678, %v2476
    %v2680 = vpop.permute.xlu0 %2679
    %2683 = vset.pattern.permute.xlu0 0
    %2684 = vperm.xlu0 %2683, %v2477
    %v2685 = vpop.permute.xlu0 %2684
    %2688 = vset.pattern.permute.xlu0 0
    %2689 = vperm.xlu0 %2688, %v2478
    %v2690 = vpop.permute.xlu0 %2689
    %2693 = vset.pattern.permute.xlu0 0
    %2694 = vperm.xlu0 %2693, %v2479
    %v2695 = vpop.permute.xlu0 %2694
    %2698 = vset.pattern.permute.xlu0 0
    %2699 = vperm.xlu0 %2698, %v2480
    %v2700 = vpop.permute.xlu0 %2699
    %2703 = vset.pattern.permute.xlu0 0
    %2704 = vperm.xlu0 %2703, %v2481
    %v2705 = vpop.permute.xlu0 %2704
    %2708 = vset.pattern.permute.xlu0 0
    %2709 = vperm.xlu0 %2708, %v2482
    %v2710 = vpop.permute.xlu0 %2709
    %2713 = vset.pattern.permute.xlu0 0
    %2714 = vperm.xlu0 %2713, %v2483
    %v2715 = vpop.permute.xlu0 %2714
    %2718 = vset.pattern.permute.xlu0 0
    %2719 = vperm.xlu0 %2718, %v2484
    %v2720 = vpop.permute.xlu0 %2719
    %2723 = vset.pattern.permute.xlu0 0
    %2724 = vperm.xlu0 %2723, %v2485
    %v2725 = vpop.permute.xlu0 %2724
    %2728 = vset.pattern.permute.xlu0 0
    %2729 = vperm.xlu0 %2728, %v2486
    %v2730 = vpop.permute.xlu0 %2729
    %2733 = vset.pattern.permute.xlu0 0
    %2734 = vperm.xlu0 %2733, %v2487
    %v2735 = vpop.permute.xlu0 %2734
    %2738 = vset.pattern.permute.xlu0 0
    %2739 = vperm.xlu0 %2738, %v2488
    %v2740 = vpop.permute.xlu0 %2739
    %2743 = vset.pattern.permute.xlu0 0
    %2744 = vperm.xlu0 %2743, %v2489
    %v2745 = vpop.permute.xlu0 %2744
    %2748 = vset.pattern.permute.xlu0 0
    %2749 = vperm.xlu0 %2748, %v2490
    %v2750 = vpop.permute.xlu0 %2749
    %2753 = vset.pattern.permute.xlu0 0
    %2754 = vperm.xlu0 %2753, %v2491
    %v2755 = vpop.permute.xlu0 %2754
    %2758 = vset.pattern.permute.xlu0 0
    %2759 = vperm.xlu0 %2758, %v2492
    %v2760 = vpop.permute.xlu0 %2759
    %2763 = vset.pattern.permute.xlu0 0
    %2764 = vperm.xlu0 %2763, %v2493
    %v2765 = vpop.permute.xlu0 %2764
    %2768 = vset.pattern.permute.xlu0 0
    %2769 = vperm.xlu0 %2768, %v2494
    %v2770 = vpop.permute.xlu0 %2769
    %2773 = vset.pattern.permute.xlu0 0
    %2774 = vperm.xlu0 %2773, %v2495
    %v2775 = vpop.permute.xlu0 %2774
    %2778 = vset.pattern.permute.xlu0 0
    %2779 = vperm.xlu0 %2778, %v2496
    %v2780 = vpop.permute.xlu0 %2779
    %2783 = vset.pattern.permute.xlu0 0
    %2784 = vperm.xlu0 %2783, %v2497
    %v2785 = vpop.permute.xlu0 %2784
    %2788 = vset.pattern.permute.xlu0 0
    %2789 = vperm.xlu0 %2788, %v2498
    %v2790 = vpop.permute.xlu0 %2789
    %2793 = vset.pattern.permute.xlu0 0
    %2794 = vperm.xlu0 %2793, %v2499
    %v2795 = vpop.permute.xlu0 %2794
    %2798 = vset.pattern.permute.xlu0 0
    %2799 = vperm.xlu0 %2798, %v2500
    %v2800 = vpop.permute.xlu0 %2799
    %2803 = vset.pattern.permute.xlu0 0
    %2804 = vperm.xlu0 %2803, %v2501
    %v2805 = vpop.permute.xlu0 %2804
    %2808 = vset.pattern.permute.xlu0 0
    %2809 = vperm.xlu0 %2808, %v2502
    %v2810 = vpop.permute.xlu0 %2809
    %2813 = vset.pattern.permute.xlu0 0
    %2814 = vperm.xlu0 %2813, %v2503
    %v2815 = vpop.permute.xlu0 %2814
    %2818 = vset.pattern.permute.xlu0 0
    %2819 = vperm.xlu0 %2818, %v2504
    %v2820 = vpop.permute.xlu0 %2819
    %2823 = vset.pattern.permute.xlu0 0
    %2824 = vperm.xlu0 %2823, %v2505
    %v2825 = vpop.permute.xlu0 %2824
    %2828 = vset.pattern.permute.xlu0 0
    %2829 = vperm.xlu0 %2828, %v2506
    %v2830 = vpop.permute.xlu0 %2829
    %2833 = vset.pattern.permute.xlu0 0
    %2834 = vperm.xlu0 %2833, %v2507
    %v2835 = vpop.permute.xlu0 %2834
    %2838 = vset.pattern.permute.xlu0 0
    %2839 = vperm.xlu0 %2838, %v2508
    %v2840 = vpop.permute.xlu0 %2839
    %2843 = vset.pattern.permute.xlu0 0
    %2844 = vperm.xlu0 %2843, %v2509
    %v2845 = vpop.permute.xlu0 %2844
    %2848 = vset.pattern.permute.xlu0 0
    %2849 = vperm.xlu0 %2848, %v2510
    %v2850 = vpop.permute.xlu0 %2849
    %2853 = vset.pattern.permute.xlu0 0
    %2854 = vperm.xlu0 %2853, %v2511
    %v2855 = vpop.permute.xlu0 %2854
    %2858 = vset.pattern.permute.xlu0 0
    %2859 = vperm.xlu0 %2858, %v2512
    %v2860 = vpop.permute.xlu0 %2859
    %2863 = vset.pattern.permute.xlu0 0
    %2864 = vperm.xlu0 %2863, %v2513
    %v2865 = vpop.permute.xlu0 %2864
    %2868 = vset.pattern.permute.xlu0 0
    %2869 = vperm.xlu0 %2868, %v2514
    %v2870 = vpop.permute.xlu0 %2869
    %2873 = vset.pattern.permute.xlu0 0
    %2874 = vperm.xlu0 %2873, %v2515
    %v2875 = vpop.permute.xlu0 %2874
    %2878 = vset.pattern.permute.xlu0 0
    %2879 = vperm.xlu0 %2878, %v2516
    %v2880 = vpop.permute.xlu0 %2879
    %2883 = vset.pattern.permute.xlu0 0
    %2884 = vperm.xlu0 %2883, %v2517
    %v2885 = vpop.permute.xlu0 %2884
    %2888 = vset.pattern.permute.xlu0 0
    %2889 = vperm.xlu0 %2888, %v2518
    %v2890 = vpop.permute.xlu0 %2889
    %2893 = vset.pattern.permute.xlu0 0
    %2894 = vperm.xlu0 %2893, %v2519
    %v2895 = vpop.permute.xlu0 %2894
    %2898 = vset.pattern.permute.xlu0 0
    %2899 = vperm.xlu0 %2898, %v2520
    %v2900 = vpop.permute.xlu0 %2899
    %2903 = vset.pattern.permute.xlu0 0
    %2904 = vperm.xlu0 %2903, %v2521
    %v2905 = vpop.permute.xlu0 %2904
    %2908 = vset.pattern.permute.xlu0 0
    %2909 = vperm.xlu0 %2908, %v2522
    %v2910 = vpop.permute.xlu0 %2909
    %2913 = vset.pattern.permute.xlu0 0
    %2914 = vperm.xlu0 %2913, %v2523
    %v2915 = vpop.permute.xlu0 %2914
    %2918 = vset.pattern.permute.xlu0 0
    %2919 = vperm.xlu0 %2918, %v2524
    %v2920 = vpop.permute.xlu0 %2919
    %2923 = vset.pattern.permute.xlu0 0
    %2924 = vperm.xlu0 %2923, %v2525
    %v2925 = vpop.permute.xlu0 %2924
    %2928 = vset.pattern.permute.xlu0 0
    %2929 = vperm.xlu0 %2928, %v2526
    %v2930 = vpop.permute.xlu0 %2929
    %2933 = vset.pattern.permute.xlu0 0
    %2934 = vperm.xlu0 %2933, %v2527
    %v2935 = vpop.permute.xlu0 %2934
    %2938 = vset.pattern.permute.xlu0 0
    %2939 = vperm.xlu0 %2938, %v2528
    %v2940 = vpop.permute.xlu0 %2939
    %2943 = vset.pattern.permute.xlu0 0
    %2944 = vperm.xlu0 %2943, %v2529
    %v2945 = vpop.permute.xlu0 %2944
    %2948 = vset.pattern.permute.xlu0 0
    %2949 = vperm.xlu0 %2948, %v2530
    %v2950 = vpop.permute.xlu0 %2949
    %2953 = vset.pattern.permute.xlu0 0
    %2954 = vperm.xlu0 %2953, %v2531
    %v2955 = vpop.permute.xlu0 %2954
    %2958 = vset.pattern.permute.xlu0 0
    %2959 = vperm.xlu0 %2958, %v2532
    %v2960 = vpop.permute.xlu0 %2959
    %2963 = vset.pattern.permute.xlu0 0
    %2964 = vperm.xlu0 %2963, %v2533
    %v2965 = vpop.permute.xlu0 %2964
    %2968 = vset.pattern.permute.xlu0 0
    %2969 = vperm.xlu0 %2968, %v2534
    %v2970 = vpop.permute.xlu0 %2969
    %2973 = vset.pattern.permute.xlu0 0
    %2974 = vperm.xlu0 %2973, %v2535
    %v2975 = vpop.permute.xlu0 %2974
    %2978 = vset.pattern.permute.xlu0 0
    %2979 = vperm.xlu0 %2978, %v2536
    %v2980 = vpop.permute.xlu0 %2979
    %2983 = vset.pattern.permute.xlu0 0
    %2984 = vperm.xlu0 %2983, %v2537
    %v2985 = vpop.permute.xlu0 %2984
    %2988 = vset.pattern.permute.xlu0 0
    %2989 = vperm.xlu0 %2988, %v2538
    %v2990 = vpop.permute.xlu0 %2989
    %2993 = vset.pattern.permute.xlu0 0
    %2994 = vperm.xlu0 %2993, %v2539
    %v2995 = vpop.permute.xlu0 %2994
    %2998 = vset.pattern.permute.xlu0 0
    %2999 = vperm.xlu0 %2998, %v2540
    %v3000 = vpop.permute.xlu0 %2999
    %3003 = vset.pattern.permute.xlu0 0
    %3004 = vperm.xlu0 %3003, %v2541
    %v3005 = vpop.permute.xlu0 %3004
    %3008 = vset.pattern.permute.xlu0 0
    %3009 = vperm.xlu0 %3008, %v2542
    %v3010 = vpop.permute.xlu0 %3009
    %3013 = vset.pattern.permute.xlu0 0
    %3014 = vperm.xlu0 %3013, %v2543
    %v3015 = vpop.permute.xlu0 %3014
    %3018 = vset.pattern.permute.xlu0 0
    %3019 = vperm.xlu0 %3018, %v2544
    %v3020 = vpop.permute.xlu0 %3019
    %3023 = vset.pattern.permute.xlu0 0
    %3024 = vperm.xlu0 %3023, %v2545
    %v3025 = vpop.permute.xlu0 %3024
    %3028 = vset.pattern.permute.xlu0 0
    %3029 = vperm.xlu0 %3028, %v2546
    %v3030 = vpop.permute.xlu0 %3029
    %3033 = vset.pattern.permute.xlu0 0
    %3034 = vperm.xlu0 %3033, %v2547
    %v3035 = vpop.permute.xlu0 %3034
    %3038 = vset.pattern.permute.xlu0 0
    %3039 = vperm.xlu0 %3038, %v2548
    %v3040 = vpop.permute.xlu0 %3039
    %3043 = vset.pattern.permute.xlu0 0
    %3044 = vperm.xlu0 %3043, %v2549
    %v3045 = vpop.permute.xlu0 %3044
    %3048 = vset.pattern.permute.xlu0 0
    %3049 = vperm.xlu0 %3048, %v2550
    %v3050 = vpop.permute.xlu0 %3049
    %3053 = vset.pattern.permute.xlu0 0
    %3054 = vperm.xlu0 %3053, %v2551
    %v3055 = vpop.permute.xlu0 %3054
    %3058 = vset.pattern.permute.xlu0 0
    %3059 = vperm.xlu0 %3058, %v2552
    %v3060 = vpop.permute.xlu0 %3059
    %3063 = vset.pattern.permute.xlu0 0
    %3064 = vperm.xlu0 %3063, %v2553
    %v3065 = vpop.permute.xlu0 %3064
    %3068 = vset.pattern.permute.xlu0 0
    %3069 = vperm.xlu0 %3068, %v2554
    %v3070 = vpop.permute.xlu0 %3069
    %3073 = vset.pattern.permute.xlu0 0
    %3074 = vperm.xlu0 %3073, %v2555
    %v3075 = vpop.permute.xlu0 %3074
    %3078 = vset.pattern.permute.xlu0 0
    %3079 = vperm.xlu0 %3078, %v2556
    %v3080 = vpop.permute.xlu0 %3079
    %3083 = vset.pattern.permute.xlu0 0
    %3084 = vperm.xlu0 %3083, %v2557
    %v3085 = vpop.permute.xlu0 %3084
    %3088 = vset.pattern.permute.xlu0 0
    %3089 = vperm.xlu0 %3088, %v2558
    %v3090 = vpop.permute.xlu0 %3089
    %3093 = vset.pattern.permute.xlu0 0
    %3094 = vperm.xlu0 %3093, %v2559
    %v3095 = vpop.permute.xlu0 %3094
    %3098 = vset.pattern.permute.xlu0 0
    %3099 = vperm.xlu0 %3098, %v2560
    %v3100 = vpop.permute.xlu0 %3099
    %3103 = vset.pattern.permute.xlu0 0
    %3104 = vperm.xlu0 %3103, %v2561
    %v3105 = vpop.permute.xlu0 %3104
    %3108 = vset.pattern.permute.xlu0 0
    %3109 = vperm.xlu0 %3108, %v2562
    %v3110 = vpop.permute.xlu0 %3109
    %3113 = vset.pattern.permute.xlu0 0
    %3114 = vperm.xlu0 %3113, %v2563
    %v3115 = vpop.permute.xlu0 %3114
    %3118 = vset.pattern.permute.xlu0 0
    %3119 = vperm.xlu0 %3118, %v2564
    %v3120 = vpop.permute.xlu0 %3119
    %3123 = vset.pattern.permute.xlu0 0
    %3124 = vperm.xlu0 %3123, %v2565
    %v3125 = vpop.permute.xlu0 %3124
    %3128 = vset.pattern.permute.xlu0 0
    %3129 = vperm.xlu0 %3128, %v2566
    %v3130 = vpop.permute.xlu0 %3129
    %3133 = vset.pattern.permute.xlu0 0
    %3134 = vperm.xlu0 %3133, %v2567
    %v3135 = vpop.permute.xlu0 %3134
    %3138 = vset.pattern.permute.xlu0 0
    %3139 = vperm.xlu0 %3138, %v2568
    %v3140 = vpop.permute.xlu0 %3139
    %3143 = vset.pattern.permute.xlu0 0
    %3144 = vperm.xlu0 %3143, %v2569
    %v3145 = vpop.permute.xlu0 %3144
    %3148 = vset.pattern.permute.xlu0 0
    %3149 = vperm.xlu0 %3148, %v2570
    %v3150 = vpop.permute.xlu0 %3149
    %3153 = vset.pattern.permute.xlu0 0
    %3154 = vperm.xlu0 %3153, %v2571
    %v3155 = vpop.permute.xlu0 %3154
    %3158 = vset.pattern.permute.xlu0 0
    %3159 = vperm.xlu0 %3158, %v2572
    %v3160 = vpop.permute.xlu0 %3159
    %3163 = vset.pattern.permute.xlu0 0
    %3164 = vperm.xlu0 %3163, %v2573
    %v3165 = vpop.permute.xlu0 %3164
    %3168 = vset.pattern.permute.xlu0 0
    %3169 = vperm.xlu0 %3168, %v2574
    %v3170 = vpop.permute.xlu0 %3169
    %3173 = vset.pattern.permute.xlu0 0
    %3174 = vperm.xlu0 %3173, %v2575
    %v3175 = vpop.permute.xlu0 %3174
    %3178 = vset.pattern.permute.xlu0 0
    %3179 = vperm.xlu0 %3178, %v2576
    %v3180 = vpop.permute.xlu0 %3179
    %3183 = vset.pattern.permute.xlu0 0
    %3184 = vperm.xlu0 %3183, %v2577
    %v3185 = vpop.permute.xlu0 %3184
    %3188 = vset.pattern.permute.xlu0 0
    %3189 = vperm.xlu0 %3188, %v2578
    %v3190 = vpop.permute.xlu0 %3189
    %3193 = vset.pattern.permute.xlu0 0
    %3194 = vperm.xlu0 %3193, %v2579
    %v3195 = vpop.permute.xlu0 %3194
    %3198 = vset.pattern.permute.xlu0 0
    %3199 = vperm.xlu0 %3198, %v2580
    %v3200 = vpop.permute.xlu0 %3199
    %3203 = vset.pattern.permute.xlu0 0
    %3204 = vperm.xlu0 %3203, %v2581
    %v3205 = vpop.permute.xlu0 %3204
    %3208 = vset.pattern.permute.xlu0 0
    %3209 = vperm.xlu0 %3208, %v2582
    %v3210 = vpop.permute.xlu0 %3209
    %3213 = vset.pattern.permute.xlu0 0
    %3214 = vperm.xlu0 %3213, %v2583
    %v3215 = vpop.permute.xlu0 %3214
    %3218 = vset.pattern.permute.xlu0 0
    %3219 = vperm.xlu0 %3218, %v2584
    %v3220 = vpop.permute.xlu0 %3219
    %3223 = vset.pattern.permute.xlu0 0
    %3224 = vperm.xlu0 %3223, %v2585
    %v3225 = vpop.permute.xlu0 %3224
    %3228 = vset.pattern.permute.xlu0 0
    %3229 = vperm.xlu0 %3228, %v2586
    %v3230 = vpop.permute.xlu0 %3229
    %3233 = vset.pattern.permute.xlu0 0
    %3234 = vperm.xlu0 %3233, %v2587
    %v3235 = vpop.permute.xlu0 %3234
    %3238 = vset.pattern.permute.xlu0 0
    %3239 = vperm.xlu0 %3238, %v2588
    %v3240 = vpop.permute.xlu0 %3239
    %3243 = vset.pattern.permute.xlu0 0
    %3244 = vperm.xlu0 %3243, %v2589
    %v3245 = vpop.permute.xlu0 %3244
    %3248 = vset.pattern.permute.xlu0 0
    %3249 = vperm.xlu0 %3248, %v2590
    %v3250 = vpop.permute.xlu0 %3249
    %3253 = vset.pattern.permute.xlu0 0
    %3254 = vperm.xlu0 %3253, %v2591
    %v3255 = vpop.permute.xlu0 %3254
    %3258 = vset.pattern.permute.xlu0 0
    %3259 = vperm.xlu0 %3258, %v2592
    %v3260 = vpop.permute.xlu0 %3259
    %3263 = vset.pattern.permute.xlu0 0
    %3264 = vperm.xlu0 %3263, %v2593
    %v3265 = vpop.permute.xlu0 %3264
    %3268 = vset.pattern.permute.xlu0 0
    %3269 = vperm.xlu0 %3268, %v2594
    %v3270 = vpop.permute.xlu0 %3269
    %3273 = vset.pattern.permute.xlu0 0
    %3274 = vperm.xlu0 %3273, %v2595
    %v3275 = vpop.permute.xlu0 %3274
    %3278 = vset.pattern.permute.xlu0 0
    %3279 = vperm.xlu0 %3278, %v2596
    %v3280 = vpop.permute.xlu0 %3279
    %3283 = vset.pattern.permute.xlu0 0
    %3284 = vperm.xlu0 %3283, %v2597
    %v3285 = vpop.permute.xlu0 %3284
    %3288 = vset.pattern.permute.xlu0 0
    %3289 = vperm.xlu0 %3288, %v2598
    %v3290 = vpop.permute.xlu0 %3289
    %3293 = vset.pattern.permute.xlu0 0
    %3294 = vperm.xlu0 %3293, %v2599
    %v3295 = vpop.permute.xlu0 %3294
    %3298 = vset.pattern.permute.xlu0 0
    %3299 = vperm.xlu0 %3298, %v2600
    %v3300 = vpop.permute.xlu0 %3299
    %3303 = vset.pattern.permute.xlu0 0
    %3304 = vperm.xlu0 %3303, %v2601
    %v3305 = vpop.permute.xlu0 %3304
    %3308 = vset.pattern.permute.xlu0 0
    %3309 = vperm.xlu0 %3308, %v2602
    %v3310 = vpop.permute.xlu0 %3309
    %3313 = vset.pattern.permute.xlu0 0
    %3314 = vperm.xlu0 %3313, %v2603
    %v3315 = vpop.permute.xlu0 %3314
    %3318 = vset.pattern.permute.xlu0 0
    %3319 = vperm.xlu0 %3318, %v2604
    %v3320 = vpop.permute.xlu0 %3319
    %3323 = vset.pattern.permute.xlu0 0
    %3324 = vperm.xlu0 %3323, %v2605
    %v3325 = vpop.permute.xlu0 %3324
    %3328 = vset.pattern.permute.xlu0 0
    %3329 = vperm.xlu0 %3328, %v2606
    %v3330 = vpop.permute.xlu0 %3329
    %3333 = vset.pattern.permute.xlu0 0
    %3334 = vperm.xlu0 %3333, %v2607
    %v3335 = vpop.permute.xlu0 %3334
    %3338 = vset.pattern.permute.xlu0 0
    %3339 = vperm.xlu0 %3338, %v2608
    %v3340 = vpop.permute.xlu0 %3339
    %3343 = vset.pattern.permute.xlu0 0
    %3344 = vperm.xlu0 %3343, %v2609
    %v3345 = vpop.permute.xlu0 %3344
    %3348 = vset.pattern.permute.xlu0 0
    %3349 = vperm.xlu0 %3348, %v2610
    %v3350 = vpop.permute.xlu0 %3349
    %3353 = vset.pattern.permute.xlu0 0
    %3354 = vperm.xlu0 %3353, %v2611
    %v3355 = vpop.permute.xlu0 %3354
    %3358 = vset.pattern.permute.xlu0 0
    %3359 = vperm.xlu0 %3358, %v2612
    %v3360 = vpop.permute.xlu0 %3359
    %3363 = vset.pattern.permute.xlu0 0
    %3364 = vperm.xlu0 %3363, %v2613
    %v3365 = vpop.permute.xlu0 %3364
    %3368 = vset.pattern.permute.xlu0 0
    %3369 = vperm.xlu0 %3368, %v2614
    %v3370 = vpop.permute.xlu0 %3369
    %3373 = vset.pattern.permute.xlu0 0
    %3374 = vperm.xlu0 %3373, %v2615
    %v3375 = vpop.permute.xlu0 %3374
    %3378 = vset.pattern.permute.xlu0 0
    %3379 = vperm.xlu0 %3378, %v2616
    %v3380 = vpop.permute.xlu0 %3379
    %3383 = vset.pattern.permute.xlu0 0
    %3384 = vperm.xlu0 %3383, %v2617
    %v3385 = vpop.permute.xlu0 %3384
    %3388 = vset.pattern.permute.xlu0 0
    %3389 = vperm.xlu0 %3388, %v2618
    %v3390 = vpop.permute.xlu0 %3389
    %3393 = vset.pattern.permute.xlu0 0
    %3394 = vperm.xlu0 %3393, %v2619
    %v3395 = vpop.permute.xlu0 %3394
    %3398 = vset.pattern.permute.xlu0 0
    %3399 = vperm.xlu0 %3398, %v2620
    %v3400 = vpop.permute.xlu0 %3399
    %3403 = vset.pattern.permute.xlu0 0
    %3404 = vperm.xlu0 %3403, %v2621
    %v3405 = vpop.permute.xlu0 %3404
    %3408 = vset.pattern.permute.xlu0 0
    %3409 = vperm.xlu0 %3408, %v2622
    %v3410 = vpop.permute.xlu0 %3409
    %3413 = vset.pattern.permute.xlu0 0
    %3414 = vperm.xlu0 %3413, %v2623
    %v3415 = vpop.permute.xlu0 %3414
    %3418 = vset.pattern.permute.xlu0 0
    %3419 = vperm.xlu0 %3418, %v2624
    %v3420 = vpop.permute.xlu0 %3419
    %3423 = vset.pattern.permute.xlu0 0
    %3424 = vperm.xlu0 %3423, %v2625
    %v3425 = vpop.permute.xlu0 %3424
    %3428 = vset.pattern.permute.xlu0 0
    %3429 = vperm.xlu0 %3428, %v2626
    %v3430 = vpop.permute.xlu0 %3429
    %3433 = vset.pattern.permute.xlu0 0
    %3434 = vperm.xlu0 %3433, %v2627
    %v3435 = vpop.permute.xlu0 %3434
    %3438 = vset.pattern.permute.xlu0 0
    %3439 = vperm.xlu0 %3438, %v2628
    %v3440 = vpop.permute.xlu0 %3439
    %3443 = vset.pattern.permute.xlu0 0
    %3444 = vperm.xlu0 %3443, %v2629
    %v3445 = vpop.permute.xlu0 %3444
    %3448 = vset.pattern.permute.xlu0 0
    %3449 = vperm.xlu0 %3448, %v2630
    %v3450 = vpop.permute.xlu0 %3449
    %3453 = vset.pattern.permute.xlu0 0
    %3454 = vperm.xlu0 %3453, %v2631
    %v3455 = vpop.permute.xlu0 %3454
    %3458 = vset.pattern.permute.xlu0 0
    %3459 = vperm.xlu0 %3458, %v2632
    %v3460 = vpop.permute.xlu0 %3459
    %3463 = vset.pattern.permute.xlu0 0
    %3464 = vperm.xlu0 %3463, %v2633
    %v3465 = vpop.permute.xlu0 %3464
    %3468 = vset.pattern.permute.xlu0 0
    %3469 = vperm.xlu0 %3468, %v2634
    %v3470 = vpop.permute.xlu0 %3469
    %3473 = vset.pattern.permute.xlu0 0
    %3474 = vperm.xlu0 %3473, %v2635
    %v3475 = vpop.permute.xlu0 %3474
    %3478 = vset.pattern.permute.xlu0 0
    %3479 = vperm.xlu0 %3478, %v2636
    %v3480 = vpop.permute.xlu0 %3479
    %v3482 = vlaneseq
    %v3483 = vshrl.u32 %v3482, 7
    %v3484 = vsub.s32 1, %v3483
    %v3485 = vrot.slane %v772, %v3484
    %v3486 = vmul.f32 %v2640, %v3485
    %v3487 = vmul.f32 %v2645, %v3485
    %v3488 = vmul.f32 %v2650, %v3485
    %v3489 = vmul.f32 %v2655, %v3485
    %v3490 = vmul.f32 %v2660, %v3485
    %v3491 = vmul.f32 %v2665, %v3485
    %v3492 = vmul.f32 %v2670, %v3485
    %v3493 = vmul.f32 %v2675, %v3485
    %v3494 = vmul.f32 %v2680, %v3485
    %v3495 = vmul.f32 %v2685, %v3485
    %v3496 = vmul.f32 %v2690, %v3485
    %v3497 = vmul.f32 %v2695, %v3485
    %v3498 = vmul.f32 %v2700, %v3485
    %v3499 = vmul.f32 %v2705, %v3485
    %v3500 = vmul.f32 %v2710, %v3485
    %v3501 = vmul.f32 %v2715, %v3485
    %v3502 = vmul.f32 %v2720, %v3485
    %v3503 = vmul.f32 %v2725, %v3485
    %v3504 = vmul.f32 %v2730, %v3485
    %v3505 = vmul.f32 %v2735, %v3485
    %v3506 = vmul.f32 %v2740, %v3485
    %v3507 = vmul.f32 %v2745, %v3485
    %v3508 = vmul.f32 %v2750, %v3485
    %v3509 = vmul.f32 %v2755, %v3485
    %v3510 = vmul.f32 %v2760, %v3485
    %v3511 = vmul.f32 %v2765, %v3485
    %v3512 = vmul.f32 %v2770, %v3485
    %v3513 = vmul.f32 %v2775, %v3485
    %v3514 = vmul.f32 %v2780, %v3485
    %v3515 = vmul.f32 %v2785, %v3485
    %v3516 = vmul.f32 %v2790, %v3485
    %v3517 = vmul.f32 %v2795, %v3485
    %v3518 = vmul.f32 %v2800, %v3485
    %v3519 = vmul.f32 %v2805, %v3485
    %v3520 = vmul.f32 %v2810, %v3485
    %v3521 = vmul.f32 %v2815, %v3485
    %v3522 = vmul.f32 %v2820, %v3485
    %v3523 = vmul.f32 %v2825, %v3485
    %v3524 = vmul.f32 %v2830, %v3485
    %v3525 = vmul.f32 %v2835, %v3485
    %v3526 = vmul.f32 %v2840, %v3485
    %v3527 = vmul.f32 %v2845, %v3485
    %v3528 = vmul.f32 %v2850, %v3485
    %v3529 = vmul.f32 %v2855, %v3485
    %v3530 = vmul.f32 %v2860, %v3485
    %v3531 = vmul.f32 %v2865, %v3485
    %v3532 = vmul.f32 %v2870, %v3485
    %v3533 = vmul.f32 %v2875, %v3485
    %v3534 = vmul.f32 %v2880, %v3485
    %v3535 = vmul.f32 %v2885, %v3485
    %v3536 = vmul.f32 %v2890, %v3485
    %v3537 = vmul.f32 %v2895, %v3485
    %v3538 = vmul.f32 %v2900, %v3485
    %v3539 = vmul.f32 %v2905, %v3485
    %v3540 = vmul.f32 %v2910, %v3485
    %v3541 = vmul.f32 %v2915, %v3485
    %v3542 = vmul.f32 %v2920, %v3485
    %v3543 = vmul.f32 %v2925, %v3485
    %v3544 = vmul.f32 %v2930, %v3485
    %v3545 = vmul.f32 %v2935, %v3485
    %v3546 = vmul.f32 %v2940, %v3485
    %v3547 = vmul.f32 %v2945, %v3485
    %v3548 = vmul.f32 %v2950, %v3485
    %v3549 = vmul.f32 %v2955, %v3485
    %v3550 = vmul.f32 %v2960, %v3485
    %v3551 = vmul.f32 %v2965, %v3485
    %v3552 = vmul.f32 %v2970, %v3485
    %v3553 = vmul.f32 %v2975, %v3485
    %v3554 = vmul.f32 %v2980, %v3485
    %v3555 = vmul.f32 %v2985, %v3485
    %v3556 = vmul.f32 %v2990, %v3485
    %v3557 = vmul.f32 %v2995, %v3485
    %v3558 = vmul.f32 %v3000, %v3485
    %v3559 = vmul.f32 %v3005, %v3485
    %v3560 = vmul.f32 %v3010, %v3485
    %v3561 = vmul.f32 %v3015, %v3485
    %v3562 = vmul.f32 %v3020, %v3485
    %v3563 = vmul.f32 %v3025, %v3485
    %v3564 = vmul.f32 %v3030, %v3485
    %v3565 = vmul.f32 %v3035, %v3485
    %v3566 = vmul.f32 %v3040, %v3485
    %v3567 = vmul.f32 %v3045, %v3485
    %v3568 = vmul.f32 %v3050, %v3485
    %v3569 = vmul.f32 %v3055, %v3485
    %v3570 = vmul.f32 %v3060, %v3485
    %v3571 = vmul.f32 %v3065, %v3485
    %v3572 = vmul.f32 %v3070, %v3485
    %v3573 = vmul.f32 %v3075, %v3485
    %v3574 = vmul.f32 %v3080, %v3485
    %v3575 = vmul.f32 %v3085, %v3485
    %v3576 = vmul.f32 %v3090, %v3485
    %v3577 = vmul.f32 %v3095, %v3485
    %v3578 = vmul.f32 %v3100, %v3485
    %v3579 = vmul.f32 %v3105, %v3485
    %v3580 = vmul.f32 %v3110, %v3485
    %v3581 = vmul.f32 %v3115, %v3485
    %v3582 = vmul.f32 %v3120, %v3485
    %v3583 = vmul.f32 %v3125, %v3485
    %v3584 = vmul.f32 %v3130, %v3485
    %v3585 = vmul.f32 %v3135, %v3485
    %v3586 = vmul.f32 %v3140, %v3485
    %v3587 = vmul.f32 %v3145, %v3485
    %v3588 = vmul.f32 %v3150, %v3485
    %v3589 = vmul.f32 %v3155, %v3485
    %v3590 = vmul.f32 %v3160, %v3485
    %v3591 = vmul.f32 %v3165, %v3485
    %v3592 = vmul.f32 %v3170, %v3485
    %v3593 = vmul.f32 %v3175, %v3485
    %v3594 = vmul.f32 %v3180, %v3485
    %v3595 = vmul.f32 %v3185, %v3485
    %v3596 = vmul.f32 %v3190, %v3485
    %v3597 = vmul.f32 %v3195, %v3485
    %v3598 = vmul.f32 %v3200, %v3485
    %v3599 = vmul.f32 %v3205, %v3485
    %v3600 = vmul.f32 %v3210, %v3485
    %v3601 = vmul.f32 %v3215, %v3485
    %v3602 = vmul.f32 %v3220, %v3485
    %v3603 = vmul.f32 %v3225, %v3485
    %v3604 = vmul.f32 %v3230, %v3485
    %v3605 = vmul.f32 %v3235, %v3485
    %v3606 = vmul.f32 %v3240, %v3485
    %v3607 = vmul.f32 %v3245, %v3485
    %v3608 = vmul.f32 %v3250, %v3485
    %v3609 = vmul.f32 %v3255, %v3485
    %v3610 = vmul.f32 %v3260, %v3485
    %v3611 = vmul.f32 %v3265, %v3485
    %v3612 = vmul.f32 %v3270, %v3485
    %v3613 = vmul.f32 %v3275, %v3485
    %v3614 = vmul.f32 %v3280, %v3485
    %v3615 = vmul.f32 %v3285, %v3485
    %v3616 = vmul.f32 %v3290, %v3485
    %v3617 = vmul.f32 %v3295, %v3485
    %v3618 = vmul.f32 %v3300, %v3485
    %v3619 = vmul.f32 %v3305, %v3485
    %v3620 = vmul.f32 %v3310, %v3485
    %v3621 = vmul.f32 %v3315, %v3485
    %v3622 = vmul.f32 %v3320, %v3485
    %v3623 = vmul.f32 %v3325, %v3485
    %v3624 = vmul.f32 %v3330, %v3485
    %v3625 = vmul.f32 %v3335, %v3485
    %v3626 = vmul.f32 %v3340, %v3485
    %v3627 = vmul.f32 %v3345, %v3485
    %v3628 = vmul.f32 %v3350, %v3485
    %v3629 = vmul.f32 %v3355, %v3485
    %v3630 = vmul.f32 %v3360, %v3485
    %v3631 = vmul.f32 %v3365, %v3485
    %v3632 = vmul.f32 %v3370, %v3485
    %v3633 = vmul.f32 %v3375, %v3485
    %v3634 = vmul.f32 %v3380, %v3485
    %v3635 = vmul.f32 %v3385, %v3485
    %v3636 = vmul.f32 %v3390, %v3485
    %v3637 = vmul.f32 %v3395, %v3485
    %v3638 = vmul.f32 %v3400, %v3485
    %v3639 = vmul.f32 %v3405, %v3485
    %v3640 = vmul.f32 %v3410, %v3485
    %v3641 = vmul.f32 %v3415, %v3485
    %v3642 = vmul.f32 %v3420, %v3485
    %v3643 = vmul.f32 %v3425, %v3485
    %v3644 = vmul.f32 %v3430, %v3485
    %v3645 = vmul.f32 %v3435, %v3485
    %v3646 = vmul.f32 %v3440, %v3485
    %v3647 = vmul.f32 %v3445, %v3485
    %v3648 = vmul.f32 %v3450, %v3485
    %v3649 = vmul.f32 %v3455, %v3485
    %v3650 = vmul.f32 %v3460, %v3485
    %v3651 = vmul.f32 %v3465, %v3485
    %v3652 = vmul.f32 %v3470, %v3485
    %v3653 = vmul.f32 %v3475, %v3485
    %v3654 = vmul.f32 %v3480, %v3485
    %v3655 = vadd.f32 %v2130, %v3486
    %v3656 = vadd.f32 %v2131, %v3487
    %v3657 = vadd.f32 %v2132, %v3488
    %v3658 = vadd.f32 %v2133, %v3489
    %v3659 = vadd.f32 %v2134, %v3490
    %v3660 = vadd.f32 %v2135, %v3491
    %v3661 = vadd.f32 %v2136, %v3492
    %v3662 = vadd.f32 %v2137, %v3493
    %v3663 = vadd.f32 %v2138, %v3494
    %v3664 = vadd.f32 %v2139, %v3495
    %v3665 = vadd.f32 %v2140, %v3496
    %v3666 = vadd.f32 %v2141, %v3497
    %v3667 = vadd.f32 %v2142, %v3498
    %v3668 = vadd.f32 %v2143, %v3499
    %v3669 = vadd.f32 %v2144, %v3500
    %v3670 = vadd.f32 %v2145, %v3501
    %v3671 = vadd.f32 %v2146, %v3502
    %v3672 = vadd.f32 %v2147, %v3503
    %v3673 = vadd.f32 %v2148, %v3504
    %v3674 = vadd.f32 %v2149, %v3505
    %v3675 = vadd.f32 %v2150, %v3506
    %v3676 = vadd.f32 %v2151, %v3507
    %v3677 = vadd.f32 %v2152, %v3508
    %v3678 = vadd.f32 %v2153, %v3509
    %v3679 = vadd.f32 %v2154, %v3510
    %v3680 = vadd.f32 %v2155, %v3511
    %v3681 = vadd.f32 %v2156, %v3512
    %v3682 = vadd.f32 %v2157, %v3513
    %v3683 = vadd.f32 %v2158, %v3514
    %v3684 = vadd.f32 %v2159, %v3515
    %v3685 = vadd.f32 %v2160, %v3516
    %v3686 = vadd.f32 %v2161, %v3517
    %v3687 = vadd.f32 %v2162, %v3518
    %v3688 = vadd.f32 %v2163, %v3519
    %v3689 = vadd.f32 %v2164, %v3520
    %v3690 = vadd.f32 %v2165, %v3521
    %v3691 = vadd.f32 %v2166, %v3522
    %v3692 = vadd.f32 %v2167, %v3523
    %v3693 = vadd.f32 %v2168, %v3524
    %v3694 = vadd.f32 %v2169, %v3525
    %v3695 = vadd.f32 %v2170, %v3526
    %v3696 = vadd.f32 %v2171, %v3527
    %v3697 = vadd.f32 %v2172, %v3528
    %v3698 = vadd.f32 %v2173, %v3529
    %v3699 = vadd.f32 %v2174, %v3530
    %v3700 = vadd.f32 %v2175, %v3531
    %v3701 = vadd.f32 %v2176, %v3532
    %v3702 = vadd.f32 %v2177, %v3533
    %v3703 = vadd.f32 %v2178, %v3534
    %v3704 = vadd.f32 %v2179, %v3535
    %v3705 = vadd.f32 %v2180, %v3536
    %v3706 = vadd.f32 %v2181, %v3537
    %v3707 = vadd.f32 %v2182, %v3538
    %v3708 = vadd.f32 %v2183, %v3539
    %v3709 = vadd.f32 %v2184, %v3540
    %v3710 = vadd.f32 %v2185, %v3541
    %v3711 = vadd.f32 %v2186, %v3542
    %v3712 = vadd.f32 %v2187, %v3543
    %v3713 = vadd.f32 %v2188, %v3544
    %v3714 = vadd.f32 %v2189, %v3545
    %v3715 = vadd.f32 %v2190, %v3546
    %v3716 = vadd.f32 %v2191, %v3547
    %v3717 = vadd.f32 %v2192, %v3548
    %v3718 = vadd.f32 %v2193, %v3549
    %v3719 = vadd.f32 %v2194, %v3550
    %v3720 = vadd.f32 %v2195, %v3551
    %v3721 = vadd.f32 %v2196, %v3552
    %v3722 = vadd.f32 %v2197, %v3553
    %v3723 = vadd.f32 %v2198, %v3554
    %v3724 = vadd.f32 %v2199, %v3555
    %v3725 = vadd.f32 %v2200, %v3556
    %v3726 = vadd.f32 %v2201, %v3557
    %v3727 = vadd.f32 %v2202, %v3558
    %v3728 = vadd.f32 %v2203, %v3559
    %v3729 = vadd.f32 %v2204, %v3560
    %v3730 = vadd.f32 %v2205, %v3561
    %v3731 = vadd.f32 %v2206, %v3562
    %v3732 = vadd.f32 %v2207, %v3563
    %v3733 = vadd.f32 %v2208, %v3564
    %v3734 = vadd.f32 %v2209, %v3565
    %v3735 = vadd.f32 %v2210, %v3566
    %v3736 = vadd.f32 %v2211, %v3567
    %v3737 = vadd.f32 %v2212, %v3568
    %v3738 = vadd.f32 %v2213, %v3569
    %v3739 = vadd.f32 %v2214, %v3570
    %v3740 = vadd.f32 %v2215, %v3571
    %v3741 = vadd.f32 %v2216, %v3572
    %v3742 = vadd.f32 %v2217, %v3573
    %v3743 = vadd.f32 %v2218, %v3574
    %v3744 = vadd.f32 %v2219, %v3575
    %v3745 = vadd.f32 %v2220, %v3576
    %v3746 = vadd.f32 %v2221, %v3577
    %v3747 = vadd.f32 %v2222, %v3578
    %v3748 = vadd.f32 %v2223, %v3579
    %v3749 = vadd.f32 %v2224, %v3580
    %v3750 = vadd.f32 %v2225, %v3581
    %v3751 = vadd.f32 %v2226, %v3582
    %v3752 = vadd.f32 %v2227, %v3583
    %v3753 = vadd.f32 %v2228, %v3584
    %v3754 = vadd.f32 %v2229, %v3585
    %v3755 = vadd.f32 %v2230, %v3586
    %v3756 = vadd.f32 %v2231, %v3587
    %v3757 = vadd.f32 %v2232, %v3588
    %v3758 = vadd.f32 %v2233, %v3589
    %v3759 = vadd.f32 %v2234, %v3590
    %v3760 = vadd.f32 %v2235, %v3591
    %v3761 = vadd.f32 %v2236, %v3592
    %v3762 = vadd.f32 %v2237, %v3593
    %v3763 = vadd.f32 %v2238, %v3594
    %v3764 = vadd.f32 %v2239, %v3595
    %v3765 = vadd.f32 %v2240, %v3596
    %v3766 = vadd.f32 %v2241, %v3597
    %v3767 = vadd.f32 %v2242, %v3598
    %v3768 = vadd.f32 %v2243, %v3599
    %v3769 = vadd.f32 %v2244, %v3600
    %v3770 = vadd.f32 %v2245, %v3601
    %v3771 = vadd.f32 %v2246, %v3602
    %v3772 = vadd.f32 %v2247, %v3603
    %v3773 = vadd.f32 %v2248, %v3604
    %v3774 = vadd.f32 %v2249, %v3605
    %v3775 = vadd.f32 %v2250, %v3606
    %v3776 = vadd.f32 %v2251, %v3607
    %v3777 = vadd.f32 %v2252, %v3608
    %v3778 = vadd.f32 %v2253, %v3609
    %v3779 = vadd.f32 %v2254, %v3610
    %v3780 = vadd.f32 %v2255, %v3611
    %v3781 = vadd.f32 %v2256, %v3612
    %v3782 = vadd.f32 %v2257, %v3613
    %v3783 = vadd.f32 %v2258, %v3614
    %v3784 = vadd.f32 %v2259, %v3615
    %v3785 = vadd.f32 %v2260, %v3616
    %v3786 = vadd.f32 %v2261, %v3617
    %v3787 = vadd.f32 %v2262, %v3618
    %v3788 = vadd.f32 %v2263, %v3619
    %v3789 = vadd.f32 %v2264, %v3620
    %v3790 = vadd.f32 %v2265, %v3621
    %v3791 = vadd.f32 %v2266, %v3622
    %v3792 = vadd.f32 %v2267, %v3623
    %v3793 = vadd.f32 %v2268, %v3624
    %v3794 = vadd.f32 %v2269, %v3625
    %v3795 = vadd.f32 %v2270, %v3626
    %v3796 = vadd.f32 %v2271, %v3627
    %v3797 = vadd.f32 %v2272, %v3628
    %v3798 = vadd.f32 %v2273, %v3629
    %v3799 = vadd.f32 %v2274, %v3630
    %v3800 = vadd.f32 %v2275, %v3631
    %v3801 = vadd.f32 %v2276, %v3632
    %v3802 = vadd.f32 %v2277, %v3633
    %v3803 = vadd.f32 %v2278, %v3634
    %v3804 = vadd.f32 %v2279, %v3635
    %v3805 = vadd.f32 %v2280, %v3636
    %v3806 = vadd.f32 %v2281, %v3637
    %v3807 = vadd.f32 %v2282, %v3638
    %v3808 = vadd.f32 %v2283, %v3639
    %v3809 = vadd.f32 %v2284, %v3640
    %v3810 = vadd.f32 %v2285, %v3641
    %v3811 = vadd.f32 %v2286, %v3642
    %v3812 = vadd.f32 %v2287, %v3643
    %v3813 = vadd.f32 %v2288, %v3644
    %v3814 = vadd.f32 %v2289, %v3645
    %v3815 = vadd.f32 %v2290, %v3646
    %v3816 = vadd.f32 %v2291, %v3647
    %v3817 = vadd.f32 %v2292, %v3648
    %v3818 = vadd.f32 %v2293, %v3649
    %v3819 = vadd.f32 %v2294, %v3650
    %v3820 = vadd.f32 %v2295, %v3651
    %v3821 = vadd.f32 %v2296, %v3652
    %v3822 = vadd.f32 %v2297, %v3653
    %v3823 = vadd.f32 %v2298, %v3654
    %v3824 = vpack.c.bf16 %v66, %v66
    %v3825 = vpack.c.bf16 %v120, %v120
    %v3826 = vpack.c.bf16 %v174, %v174
    %v3827 = vpack.c.bf16 %v228, %v228
    %v3828 = vpack.c.bf16 %v282, %v282
    %v3829 = vpack.c.bf16 %v336, %v336
    %v3830 = vpack.c.bf16 %v390, %v390
    %v3831 = vpack.c.bf16 %v444, %v444
    %v3832 = vpack.c.bf16 %v498, %v498
    %v3833 = vpack.c.bf16 %v552, %v552
    %v3834 = vpack.c.bf16 %v606, %v606
    %v3835 = vpack.c.bf16 %v660, %v660
    %v3836 = vpack.c.bf16 %v714, %v714
    %v3837 = vunpack.c.l.bf16 %v3824
    %v3838 = vunpack.c.l.bf16 %v3825
    %v3839 = vunpack.c.l.bf16 %v3826
    %v3840 = vunpack.c.l.bf16 %v3827
    %v3841 = vunpack.c.l.bf16 %v3828
    %v3842 = vunpack.c.l.bf16 %v3829
    %v3843 = vunpack.c.l.bf16 %v3830
    %v3844 = vunpack.c.l.bf16 %v3831
    %v3845 = vunpack.c.l.bf16 %v3832
    %v3846 = vunpack.c.l.bf16 %v3833
    %v3847 = vunpack.c.l.bf16 %v3834
    %v3848 = vunpack.c.l.bf16 %v3835
    %v3849 = vunpack.c.l.bf16 %v3836
    %3851 = vset.pattern.permute.xlu0 0
    %3852 = vperm.xlu0 %3851, %v3837
    %v3853 = vpop.permute.xlu0 %3852
    %3856 = vset.pattern.permute.xlu0 0
    %3857 = vperm.xlu0 %3856, %v3838
    %v3858 = vpop.permute.xlu0 %3857
    %3861 = vset.pattern.permute.xlu0 0
    %3862 = vperm.xlu0 %3861, %v3839
    %v3863 = vpop.permute.xlu0 %3862
    %3866 = vset.pattern.permute.xlu0 0
    %3867 = vperm.xlu0 %3866, %v3840
    %v3868 = vpop.permute.xlu0 %3867
    %3871 = vset.pattern.permute.xlu0 0
    %3872 = vperm.xlu0 %3871, %v3841
    %v3873 = vpop.permute.xlu0 %3872
    %3876 = vset.pattern.permute.xlu0 0
    %3877 = vperm.xlu0 %3876, %v3842
    %v3878 = vpop.permute.xlu0 %3877
    %3881 = vset.pattern.permute.xlu0 0
    %3882 = vperm.xlu0 %3881, %v3843
    %v3883 = vpop.permute.xlu0 %3882
    %3886 = vset.pattern.permute.xlu0 0
    %3887 = vperm.xlu0 %3886, %v3844
    %v3888 = vpop.permute.xlu0 %3887
    %3891 = vset.pattern.permute.xlu0 0
    %3892 = vperm.xlu0 %3891, %v3845
    %v3893 = vpop.permute.xlu0 %3892
    %3896 = vset.pattern.permute.xlu0 0
    %3897 = vperm.xlu0 %3896, %v3846
    %v3898 = vpop.permute.xlu0 %3897
    %3901 = vset.pattern.permute.xlu0 0
    %3902 = vperm.xlu0 %3901, %v3847
    %v3903 = vpop.permute.xlu0 %3902
    %3906 = vset.pattern.permute.xlu0 0
    %3907 = vperm.xlu0 %3906, %v3848
    %v3908 = vpop.permute.xlu0 %3907
    %3911 = vset.pattern.permute.xlu0 0
    %3912 = vperm.xlu0 %3911, %v3849
    %v3913 = vpop.permute.xlu0 %3912
    %v3915 = vlaneseq
    %v3916 = vshrl.u32 %v3915, 7
    %v3917 = vsub.s32 2, %v3916
    %v3918 = vrot.slane %v772, %v3917
    %v3919 = vmul.f32 %v1120, %v3918
    %v3920 = vmul.f32 %v1125, %v3918
    %v3921 = vmul.f32 %v1130, %v3918
    %v3922 = vmul.f32 %v1135, %v3918
    %v3923 = vmul.f32 %v1140, %v3918
    %v3924 = vmul.f32 %v1145, %v3918
    %v3925 = vmul.f32 %v1150, %v3918
    %v3926 = vmul.f32 %v1155, %v3918
    %v3927 = vmul.f32 %v1160, %v3918
    %v3928 = vmul.f32 %v1165, %v3918
    %v3929 = vmul.f32 %v1170, %v3918
    %v3930 = vmul.f32 %v1175, %v3918
    %v3931 = vmul.f32 %v3853, %v3918
    %v3932 = vmul.f32 %v1185, %v3918
    %v3933 = vmul.f32 %v1190, %v3918
    %v3934 = vmul.f32 %v1195, %v3918
    %v3935 = vmul.f32 %v1200, %v3918
    %v3936 = vmul.f32 %v1205, %v3918
    %v3937 = vmul.f32 %v1210, %v3918
    %v3938 = vmul.f32 %v1215, %v3918
    %v3939 = vmul.f32 %v1220, %v3918
    %v3940 = vmul.f32 %v1225, %v3918
    %v3941 = vmul.f32 %v1230, %v3918
    %v3942 = vmul.f32 %v1235, %v3918
    %v3943 = vmul.f32 %v1240, %v3918
    %v3944 = vmul.f32 %v3858, %v3918
    %v3945 = vmul.f32 %v1250, %v3918
    %v3946 = vmul.f32 %v1255, %v3918
    %v3947 = vmul.f32 %v1260, %v3918
    %v3948 = vmul.f32 %v1265, %v3918
    %v3949 = vmul.f32 %v1270, %v3918
    %v3950 = vmul.f32 %v1275, %v3918
    %v3951 = vmul.f32 %v1280, %v3918
    %v3952 = vmul.f32 %v1285, %v3918
    %v3953 = vmul.f32 %v1290, %v3918
    %v3954 = vmul.f32 %v1295, %v3918
    %v3955 = vmul.f32 %v1300, %v3918
    %v3956 = vmul.f32 %v1305, %v3918
    %v3957 = vmul.f32 %v3863, %v3918
    %v3958 = vmul.f32 %v1315, %v3918
    %v3959 = vmul.f32 %v1320, %v3918
    %v3960 = vmul.f32 %v1325, %v3918
    %v3961 = vmul.f32 %v1330, %v3918
    %v3962 = vmul.f32 %v1335, %v3918
    %v3963 = vmul.f32 %v1340, %v3918
    %v3964 = vmul.f32 %v1345, %v3918
    %v3965 = vmul.f32 %v1350, %v3918
    %v3966 = vmul.f32 %v1355, %v3918
    %v3967 = vmul.f32 %v1360, %v3918
    %v3968 = vmul.f32 %v1365, %v3918
    %v3969 = vmul.f32 %v1370, %v3918
    %v3970 = vmul.f32 %v3868, %v3918
    %v3971 = vmul.f32 %v1380, %v3918
    %v3972 = vmul.f32 %v1385, %v3918
    %v3973 = vmul.f32 %v1390, %v3918
    %v3974 = vmul.f32 %v1395, %v3918
    %v3975 = vmul.f32 %v1400, %v3918
    %v3976 = vmul.f32 %v1405, %v3918
    %v3977 = vmul.f32 %v1410, %v3918
    %v3978 = vmul.f32 %v1415, %v3918
    %v3979 = vmul.f32 %v1420, %v3918
    %v3980 = vmul.f32 %v1425, %v3918
    %v3981 = vmul.f32 %v1430, %v3918
    %v3982 = vmul.f32 %v1435, %v3918
    %v3983 = vmul.f32 %v3873, %v3918
    %v3984 = vmul.f32 %v1445, %v3918
    %v3985 = vmul.f32 %v1450, %v3918
    %v3986 = vmul.f32 %v1455, %v3918
    %v3987 = vmul.f32 %v1460, %v3918
    %v3988 = vmul.f32 %v1465, %v3918
    %v3989 = vmul.f32 %v1470, %v3918
    %v3990 = vmul.f32 %v1475, %v3918
    %v3991 = vmul.f32 %v1480, %v3918
    %v3992 = vmul.f32 %v1485, %v3918
    %v3993 = vmul.f32 %v1490, %v3918
    %v3994 = vmul.f32 %v1495, %v3918
    %v3995 = vmul.f32 %v1500, %v3918
    %v3996 = vmul.f32 %v3878, %v3918
    %v3997 = vmul.f32 %v1510, %v3918
    %v3998 = vmul.f32 %v1515, %v3918
    %v3999 = vmul.f32 %v1520, %v3918
    %v4000 = vmul.f32 %v1525, %v3918
    %v4001 = vmul.f32 %v1530, %v3918
    %v4002 = vmul.f32 %v1535, %v3918
    %v4003 = vmul.f32 %v1540, %v3918
    %v4004 = vmul.f32 %v1545, %v3918
    %v4005 = vmul.f32 %v1550, %v3918
    %v4006 = vmul.f32 %v1555, %v3918
    %v4007 = vmul.f32 %v1560, %v3918
    %v4008 = vmul.f32 %v1565, %v3918
    %v4009 = vmul.f32 %v3883, %v3918
    %v4010 = vmul.f32 %v1575, %v3918
    %v4011 = vmul.f32 %v1580, %v3918
    %v4012 = vmul.f32 %v1585, %v3918
    %v4013 = vmul.f32 %v1590, %v3918
    %v4014 = vmul.f32 %v1595, %v3918
    %v4015 = vmul.f32 %v1600, %v3918
    %v4016 = vmul.f32 %v1605, %v3918
    %v4017 = vmul.f32 %v1610, %v3918
    %v4018 = vmul.f32 %v1615, %v3918
    %v4019 = vmul.f32 %v1620, %v3918
    %v4020 = vmul.f32 %v1625, %v3918
    %v4021 = vmul.f32 %v1630, %v3918
    %v4022 = vmul.f32 %v3888, %v3918
    %v4023 = vmul.f32 %v1640, %v3918
    %v4024 = vmul.f32 %v1645, %v3918
    %v4025 = vmul.f32 %v1650, %v3918
    %v4026 = vmul.f32 %v1655, %v3918
    %v4027 = vmul.f32 %v1660, %v3918
    %v4028 = vmul.f32 %v1665, %v3918
    %v4029 = vmul.f32 %v1670, %v3918
    %v4030 = vmul.f32 %v1675, %v3918
    %v4031 = vmul.f32 %v1680, %v3918
    %v4032 = vmul.f32 %v1685, %v3918
    %v4033 = vmul.f32 %v1690, %v3918
    %v4034 = vmul.f32 %v1695, %v3918
    %v4035 = vmul.f32 %v3893, %v3918
    %v4036 = vmul.f32 %v1705, %v3918
    %v4037 = vmul.f32 %v1710, %v3918
    %v4038 = vmul.f32 %v1715, %v3918
    %v4039 = vmul.f32 %v1720, %v3918
    %v4040 = vmul.f32 %v1725, %v3918
    %v4041 = vmul.f32 %v1730, %v3918
    %v4042 = vmul.f32 %v1735, %v3918
    %v4043 = vmul.f32 %v1740, %v3918
    %v4044 = vmul.f32 %v1745, %v3918
    %v4045 = vmul.f32 %v1750, %v3918
    %v4046 = vmul.f32 %v1755, %v3918
    %v4047 = vmul.f32 %v1760, %v3918
    %v4048 = vmul.f32 %v3898, %v3918
    %v4049 = vmul.f32 %v1770, %v3918
    %v4050 = vmul.f32 %v1775, %v3918
    %v4051 = vmul.f32 %v1780, %v3918
    %v4052 = vmul.f32 %v1785, %v3918
    %v4053 = vmul.f32 %v1790, %v3918
    %v4054 = vmul.f32 %v1795, %v3918
    %v4055 = vmul.f32 %v1800, %v3918
    %v4056 = vmul.f32 %v1805, %v3918
    %v4057 = vmul.f32 %v1810, %v3918
    %v4058 = vmul.f32 %v1815, %v3918
    %v4059 = vmul.f32 %v1820, %v3918
    %v4060 = vmul.f32 %v1825, %v3918
    %v4061 = vmul.f32 %v3903, %v3918
    %v4062 = vmul.f32 %v1835, %v3918
    %v4063 = vmul.f32 %v1840, %v3918
    %v4064 = vmul.f32 %v1845, %v3918
    %v4065 = vmul.f32 %v1850, %v3918
    %v4066 = vmul.f32 %v1855, %v3918
    %v4067 = vmul.f32 %v1860, %v3918
    %v4068 = vmul.f32 %v1865, %v3918
    %v4069 = vmul.f32 %v1870, %v3918
    %v4070 = vmul.f32 %v1875, %v3918
    %v4071 = vmul.f32 %v1880, %v3918
    %v4072 = vmul.f32 %v1885, %v3918
    %v4073 = vmul.f32 %v1890, %v3918
    %v4074 = vmul.f32 %v3908, %v3918
    %v4075 = vmul.f32 %v1900, %v3918
    %v4076 = vmul.f32 %v1905, %v3918
    %v4077 = vmul.f32 %v1910, %v3918
    %v4078 = vmul.f32 %v1915, %v3918
    %v4079 = vmul.f32 %v1920, %v3918
    %v4080 = vmul.f32 %v1925, %v3918
    %v4081 = vmul.f32 %v1930, %v3918
    %v4082 = vmul.f32 %v1935, %v3918
    %v4083 = vmul.f32 %v1940, %v3918
    %v4084 = vmul.f32 %v1945, %v3918
    %v4085 = vmul.f32 %v1950, %v3918
    %v4086 = vmul.f32 %v1955, %v3918
    %v4087 = vmul.f32 %v3913, %v3918
    %v4088 = vadd.f32 %v3655, %v3919
    %v4089 = vadd.f32 %v3656, %v3920
    %v4090 = vadd.f32 %v3657, %v3921
    %v4091 = vadd.f32 %v3658, %v3922
    %v4092 = vadd.f32 %v3659, %v3923
    %v4093 = vadd.f32 %v3660, %v3924
    %v4094 = vadd.f32 %v3661, %v3925
    %v4095 = vadd.f32 %v3662, %v3926
    %v4096 = vadd.f32 %v3663, %v3927
    %v4097 = vadd.f32 %v3664, %v3928
    %v4098 = vadd.f32 %v3665, %v3929
    %v4099 = vadd.f32 %v3666, %v3930
    %v4100 = vadd.f32 %v3667, %v3931
    %v4101 = vadd.f32 %v3668, %v3932
    %v4102 = vadd.f32 %v3669, %v3933
    %v4103 = vadd.f32 %v3670, %v3934
    %v4104 = vadd.f32 %v3671, %v3935
    %v4105 = vadd.f32 %v3672, %v3936
    %v4106 = vadd.f32 %v3673, %v3937
    %v4107 = vadd.f32 %v3674, %v3938
    %v4108 = vadd.f32 %v3675, %v3939
    %v4109 = vadd.f32 %v3676, %v3940
    %v4110 = vadd.f32 %v3677, %v3941
    %v4111 = vadd.f32 %v3678, %v3942
    %v4112 = vadd.f32 %v3679, %v3943
    %v4113 = vadd.f32 %v3680, %v3944
    %v4114 = vadd.f32 %v3681, %v3945
    %v4115 = vadd.f32 %v3682, %v3946
    %v4116 = vadd.f32 %v3683, %v3947
    %v4117 = vadd.f32 %v3684, %v3948
    %v4118 = vadd.f32 %v3685, %v3949
    %v4119 = vadd.f32 %v3686, %v3950
    %v4120 = vadd.f32 %v3687, %v3951
    %v4121 = vadd.f32 %v3688, %v3952
    %v4122 = vadd.f32 %v3689, %v3953
    %v4123 = vadd.f32 %v3690, %v3954
    %v4124 = vadd.f32 %v3691, %v3955
    %v4125 = vadd.f32 %v3692, %v3956
    %v4126 = vadd.f32 %v3693, %v3957
    %v4127 = vadd.f32 %v3694, %v3958
    %v4128 = vadd.f32 %v3695, %v3959
    %v4129 = vadd.f32 %v3696, %v3960
    %v4130 = vadd.f32 %v3697, %v3961
    %v4131 = vadd.f32 %v3698, %v3962
    %v4132 = vadd.f32 %v3699, %v3963
    %v4133 = vadd.f32 %v3700, %v3964
    %v4134 = vadd.f32 %v3701, %v3965
    %v4135 = vadd.f32 %v3702, %v3966
    %v4136 = vadd.f32 %v3703, %v3967
    %v4137 = vadd.f32 %v3704, %v3968
    %v4138 = vadd.f32 %v3705, %v3969
    %v4139 = vadd.f32 %v3706, %v3970
    %v4140 = vadd.f32 %v3707, %v3971
    %v4141 = vadd.f32 %v3708, %v3972
    %v4142 = vadd.f32 %v3709, %v3973
    %v4143 = vadd.f32 %v3710, %v3974
    %v4144 = vadd.f32 %v3711, %v3975
    %v4145 = vadd.f32 %v3712, %v3976
    %v4146 = vadd.f32 %v3713, %v3977
    %v4147 = vadd.f32 %v3714, %v3978
    %v4148 = vadd.f32 %v3715, %v3979
    %v4149 = vadd.f32 %v3716, %v3980
    %v4150 = vadd.f32 %v3717, %v3981
    %v4151 = vadd.f32 %v3718, %v3982
    %v4152 = vadd.f32 %v3719, %v3983
    %v4153 = vadd.f32 %v3720, %v3984
    %v4154 = vadd.f32 %v3721, %v3985
    %v4155 = vadd.f32 %v3722, %v3986
    %v4156 = vadd.f32 %v3723, %v3987
    %v4157 = vadd.f32 %v3724, %v3988
    %v4158 = vadd.f32 %v3725, %v3989
    %v4159 = vadd.f32 %v3726, %v3990
    %v4160 = vadd.f32 %v3727, %v3991
    %v4161 = vadd.f32 %v3728, %v3992
    %v4162 = vadd.f32 %v3729, %v3993
    %v4163 = vadd.f32 %v3730, %v3994
    %v4164 = vadd.f32 %v3731, %v3995
    %v4165 = vadd.f32 %v3732, %v3996
    %v4166 = vadd.f32 %v3733, %v3997
    %v4167 = vadd.f32 %v3734, %v3998
    %v4168 = vadd.f32 %v3735, %v3999
    %v4169 = vadd.f32 %v3736, %v4000
    %v4170 = vadd.f32 %v3737, %v4001
    %v4171 = vadd.f32 %v3738, %v4002
    %v4172 = vadd.f32 %v3739, %v4003
    %v4173 = vadd.f32 %v3740, %v4004
    %v4174 = vadd.f32 %v3741, %v4005
    %v4175 = vadd.f32 %v3742, %v4006
    %v4176 = vadd.f32 %v3743, %v4007
    %v4177 = vadd.f32 %v3744, %v4008
    %v4178 = vadd.f32 %v3745, %v4009
    %v4179 = vadd.f32 %v3746, %v4010
    %v4180 = vadd.f32 %v3747, %v4011
    %v4181 = vadd.f32 %v3748, %v4012
    %v4182 = vadd.f32 %v3749, %v4013
    %v4183 = vadd.f32 %v3750, %v4014
    %v4184 = vadd.f32 %v3751, %v4015
    %v4185 = vadd.f32 %v3752, %v4016
    %v4186 = vadd.f32 %v3753, %v4017
    %v4187 = vadd.f32 %v3754, %v4018
    %v4188 = vadd.f32 %v3755, %v4019
    %v4189 = vadd.f32 %v3756, %v4020
    %v4190 = vadd.f32 %v3757, %v4021
    %v4191 = vadd.f32 %v3758, %v4022
    %v4192 = vadd.f32 %v3759, %v4023
    %v4193 = vadd.f32 %v3760, %v4024
    %v4194 = vadd.f32 %v3761, %v4025
    %v4195 = vadd.f32 %v3762, %v4026
    %v4196 = vadd.f32 %v3763, %v4027
    %v4197 = vadd.f32 %v3764, %v4028
    %v4198 = vadd.f32 %v3765, %v4029
    %v4199 = vadd.f32 %v3766, %v4030
    %v4200 = vadd.f32 %v3767, %v4031
    %v4201 = vadd.f32 %v3768, %v4032
    %v4202 = vadd.f32 %v3769, %v4033
    %v4203 = vadd.f32 %v3770, %v4034
    %v4204 = vadd.f32 %v3771, %v4035
    %v4205 = vadd.f32 %v3772, %v4036
    %v4206 = vadd.f32 %v3773, %v4037
    %v4207 = vadd.f32 %v3774, %v4038
    %v4208 = vadd.f32 %v3775, %v4039
    %v4209 = vadd.f32 %v3776, %v4040
    %v4210 = vadd.f32 %v3777, %v4041
    %v4211 = vadd.f32 %v3778, %v4042
    %v4212 = vadd.f32 %v3779, %v4043
    %v4213 = vadd.f32 %v3780, %v4044
    %v4214 = vadd.f32 %v3781, %v4045
    %v4215 = vadd.f32 %v3782, %v4046
    %v4216 = vadd.f32 %v3783, %v4047
    %v4217 = vadd.f32 %v3784, %v4048
    %v4218 = vadd.f32 %v3785, %v4049
    %v4219 = vadd.f32 %v3786, %v4050
    %v4220 = vadd.f32 %v3787, %v4051
    %v4221 = vadd.f32 %v3788, %v4052
    %v4222 = vadd.f32 %v3789, %v4053
    %v4223 = vadd.f32 %v3790, %v4054
    %v4224 = vadd.f32 %v3791, %v4055
    %v4225 = vadd.f32 %v3792, %v4056
    %v4226 = vadd.f32 %v3793, %v4057
    %v4227 = vadd.f32 %v3794, %v4058
    %v4228 = vadd.f32 %v3795, %v4059
    %v4229 = vadd.f32 %v3796, %v4060
    %v4230 = vadd.f32 %v3797, %v4061
    %v4231 = vadd.f32 %v3798, %v4062
    %v4232 = vadd.f32 %v3799, %v4063
    %v4233 = vadd.f32 %v3800, %v4064
    %v4234 = vadd.f32 %v3801, %v4065
    %v4235 = vadd.f32 %v3802, %v4066
    %v4236 = vadd.f32 %v3803, %v4067
    %v4237 = vadd.f32 %v3804, %v4068
    %v4238 = vadd.f32 %v3805, %v4069
    %v4239 = vadd.f32 %v3806, %v4070
    %v4240 = vadd.f32 %v3807, %v4071
    %v4241 = vadd.f32 %v3808, %v4072
    %v4242 = vadd.f32 %v3809, %v4073
    %v4243 = vadd.f32 %v3810, %v4074
    %v4244 = vadd.f32 %v3811, %v4075
    %v4245 = vadd.f32 %v3812, %v4076
    %v4246 = vadd.f32 %v3813, %v4077
    %v4247 = vadd.f32 %v3814, %v4078
    %v4248 = vadd.f32 %v3815, %v4079
    %v4249 = vadd.f32 %v3816, %v4080
    %v4250 = vadd.f32 %v3817, %v4081
    %v4251 = vadd.f32 %v3818, %v4082
    %v4252 = vadd.f32 %v3819, %v4083
    %v4253 = vadd.f32 %v3820, %v4084
    %v4254 = vadd.f32 %v3821, %v4085
    %v4255 = vadd.f32 %v3822, %v4086
    %v4256 = vadd.f32 %v3823, %v4087
    %v4257 = vpack.c.bf16 %v67, %v67
    %v4258 = vpack.c.bf16 %v69, %v69
    %v4259 = vpack.c.bf16 %v71, %v71
    %v4260 = vpack.c.bf16 %v73, %v73
    %v4261 = vpack.c.bf16 %v75, %v75
    %v4262 = vpack.c.bf16 %v77, %v77
    %v4263 = vpack.c.bf16 %v79, %v79
    %v4264 = vpack.c.bf16 %v81, %v81
    %v4265 = vpack.c.bf16 %v83, %v83
    %v4266 = vpack.c.bf16 %v85, %v85
    %v4267 = vpack.c.bf16 %v87, %v87
    %v4268 = vpack.c.bf16 %v89, %v89
    %v4269 = vpack.c.bf16 %v91, %v91
    %v4270 = vpack.c.bf16 %v121, %v121
    %v4271 = vpack.c.bf16 %v123, %v123
    %v4272 = vpack.c.bf16 %v125, %v125
    %v4273 = vpack.c.bf16 %v127, %v127
    %v4274 = vpack.c.bf16 %v129, %v129
    %v4275 = vpack.c.bf16 %v131, %v131
    %v4276 = vpack.c.bf16 %v133, %v133
    %v4277 = vpack.c.bf16 %v135, %v135
    %v4278 = vpack.c.bf16 %v137, %v137
    %v4279 = vpack.c.bf16 %v139, %v139
    %v4280 = vpack.c.bf16 %v141, %v141
    %v4281 = vpack.c.bf16 %v143, %v143
    %v4282 = vpack.c.bf16 %v145, %v145
    %v4283 = vpack.c.bf16 %v175, %v175
    %v4284 = vpack.c.bf16 %v177, %v177
    %v4285 = vpack.c.bf16 %v179, %v179
    %v4286 = vpack.c.bf16 %v181, %v181
    %v4287 = vpack.c.bf16 %v183, %v183
    %v4288 = vpack.c.bf16 %v185, %v185
    %v4289 = vpack.c.bf16 %v187, %v187
    %v4290 = vpack.c.bf16 %v189, %v189
    %v4291 = vpack.c.bf16 %v191, %v191
    %v4292 = vpack.c.bf16 %v193, %v193
    %v4293 = vpack.c.bf16 %v195, %v195
    %v4294 = vpack.c.bf16 %v197, %v197
    %v4295 = vpack.c.bf16 %v199, %v199
    %v4296 = vpack.c.bf16 %v229, %v229
    %v4297 = vpack.c.bf16 %v231, %v231
    %v4298 = vpack.c.bf16 %v233, %v233
    %v4299 = vpack.c.bf16 %v235, %v235
    %v4300 = vpack.c.bf16 %v237, %v237
    %v4301 = vpack.c.bf16 %v239, %v239
    %v4302 = vpack.c.bf16 %v241, %v241
    %v4303 = vpack.c.bf16 %v243, %v243
    %v4304 = vpack.c.bf16 %v245, %v245
    %v4305 = vpack.c.bf16 %v247, %v247
    %v4306 = vpack.c.bf16 %v249, %v249
    %v4307 = vpack.c.bf16 %v251, %v251
    %v4308 = vpack.c.bf16 %v253, %v253
    %v4309 = vpack.c.bf16 %v283, %v283
    %v4310 = vpack.c.bf16 %v285, %v285
    %v4311 = vpack.c.bf16 %v287, %v287
    %v4312 = vpack.c.bf16 %v289, %v289
    %v4313 = vpack.c.bf16 %v291, %v291
    %v4314 = vpack.c.bf16 %v293, %v293
    %v4315 = vpack.c.bf16 %v295, %v295
    %v4316 = vpack.c.bf16 %v297, %v297
    %v4317 = vpack.c.bf16 %v299, %v299
    %v4318 = vpack.c.bf16 %v301, %v301
    %v4319 = vpack.c.bf16 %v303, %v303
    %v4320 = vpack.c.bf16 %v305, %v305
    %v4321 = vpack.c.bf16 %v307, %v307
    %v4322 = vpack.c.bf16 %v337, %v337
    %v4323 = vpack.c.bf16 %v339, %v339
    %v4324 = vpack.c.bf16 %v341, %v341
    %v4325 = vpack.c.bf16 %v343, %v343
    %v4326 = vpack.c.bf16 %v345, %v345
    %v4327 = vpack.c.bf16 %v347, %v347
    %v4328 = vpack.c.bf16 %v349, %v349
    %v4329 = vpack.c.bf16 %v351, %v351
    %v4330 = vpack.c.bf16 %v353, %v353
    %v4331 = vpack.c.bf16 %v355, %v355
    %v4332 = vpack.c.bf16 %v357, %v357
    %v4333 = vpack.c.bf16 %v359, %v359
    %v4334 = vpack.c.bf16 %v361, %v361
    %v4335 = vpack.c.bf16 %v391, %v391
    %v4336 = vpack.c.bf16 %v393, %v393
    %v4337 = vpack.c.bf16 %v395, %v395
    %v4338 = vpack.c.bf16 %v397, %v397
    %v4339 = vpack.c.bf16 %v399, %v399
    %v4340 = vpack.c.bf16 %v401, %v401
    %v4341 = vpack.c.bf16 %v403, %v403
    %v4342 = vpack.c.bf16 %v405, %v405
    %v4343 = vpack.c.bf16 %v407, %v407
    %v4344 = vpack.c.bf16 %v409, %v409
    %v4345 = vpack.c.bf16 %v411, %v411
    %v4346 = vpack.c.bf16 %v413, %v413
    %v4347 = vpack.c.bf16 %v415, %v415
    %v4348 = vpack.c.bf16 %v445, %v445
    %v4349 = vpack.c.bf16 %v447, %v447
    %v4350 = vpack.c.bf16 %v449, %v449
    %v4351 = vpack.c.bf16 %v451, %v451
    %v4352 = vpack.c.bf16 %v453, %v453
    %v4353 = vpack.c.bf16 %v455, %v455
    %v4354 = vpack.c.bf16 %v457, %v457
    %v4355 = vpack.c.bf16 %v459, %v459
    %v4356 = vpack.c.bf16 %v461, %v461
    %v4357 = vpack.c.bf16 %v463, %v463
    %v4358 = vpack.c.bf16 %v465, %v465
    %v4359 = vpack.c.bf16 %v467, %v467
    %v4360 = vpack.c.bf16 %v469, %v469
    %v4361 = vpack.c.bf16 %v499, %v499
    %v4362 = vpack.c.bf16 %v501, %v501
    %v4363 = vpack.c.bf16 %v503, %v503
    %v4364 = vpack.c.bf16 %v505, %v505
    %v4365 = vpack.c.bf16 %v507, %v507
    %v4366 = vpack.c.bf16 %v509, %v509
    %v4367 = vpack.c.bf16 %v511, %v511
    %v4368 = vpack.c.bf16 %v513, %v513
    %v4369 = vpack.c.bf16 %v515, %v515
    %v4370 = vpack.c.bf16 %v517, %v517
    %v4371 = vpack.c.bf16 %v519, %v519
    %v4372 = vpack.c.bf16 %v521, %v521
    %v4373 = vpack.c.bf16 %v523, %v523
    %v4374 = vpack.c.bf16 %v553, %v553
    %v4375 = vpack.c.bf16 %v555, %v555
    %v4376 = vpack.c.bf16 %v557, %v557
    %v4377 = vpack.c.bf16 %v559, %v559
    %v4378 = vpack.c.bf16 %v561, %v561
    %v4379 = vpack.c.bf16 %v563, %v563
    %v4380 = vpack.c.bf16 %v565, %v565
    %v4381 = vpack.c.bf16 %v567, %v567
    %v4382 = vpack.c.bf16 %v569, %v569
    %v4383 = vpack.c.bf16 %v571, %v571
    %v4384 = vpack.c.bf16 %v573, %v573
    %v4385 = vpack.c.bf16 %v575, %v575
    %v4386 = vpack.c.bf16 %v577, %v577
    %v4387 = vpack.c.bf16 %v607, %v607
    %v4388 = vpack.c.bf16 %v609, %v609
    %v4389 = vpack.c.bf16 %v611, %v611
    %v4390 = vpack.c.bf16 %v613, %v613
    %v4391 = vpack.c.bf16 %v615, %v615
    %v4392 = vpack.c.bf16 %v617, %v617
    %v4393 = vpack.c.bf16 %v619, %v619
    %v4394 = vpack.c.bf16 %v621, %v621
    %v4395 = vpack.c.bf16 %v623, %v623
    %v4396 = vpack.c.bf16 %v625, %v625
    %v4397 = vpack.c.bf16 %v627, %v627
    %v4398 = vpack.c.bf16 %v629, %v629
    %v4399 = vpack.c.bf16 %v631, %v631
    %v4400 = vpack.c.bf16 %v661, %v661
    %v4401 = vpack.c.bf16 %v663, %v663
    %v4402 = vpack.c.bf16 %v665, %v665
    %v4403 = vpack.c.bf16 %v667, %v667
    %v4404 = vpack.c.bf16 %v669, %v669
    %v4405 = vpack.c.bf16 %v671, %v671
    %v4406 = vpack.c.bf16 %v673, %v673
    %v4407 = vpack.c.bf16 %v675, %v675
    %v4408 = vpack.c.bf16 %v677, %v677
    %v4409 = vpack.c.bf16 %v679, %v679
    %v4410 = vpack.c.bf16 %v681, %v681
    %v4411 = vpack.c.bf16 %v683, %v683
    %v4412 = vpack.c.bf16 %v685, %v685
    %v4413 = vpack.c.bf16 %v715, %v715
    %v4414 = vpack.c.bf16 %v717, %v717
    %v4415 = vpack.c.bf16 %v719, %v719
    %v4416 = vpack.c.bf16 %v721, %v721
    %v4417 = vpack.c.bf16 %v723, %v723
    %v4418 = vpack.c.bf16 %v725, %v725
    %v4419 = vpack.c.bf16 %v727, %v727
    %v4420 = vpack.c.bf16 %v729, %v729
    %v4421 = vpack.c.bf16 %v731, %v731
    %v4422 = vpack.c.bf16 %v733, %v733
    %v4423 = vpack.c.bf16 %v735, %v735
    %v4424 = vpack.c.bf16 %v737, %v737
    %v4425 = vpack.c.bf16 %v739, %v739
    %v4426 = vunpack.c.l.bf16 %v4257
    %v4427 = vunpack.c.l.bf16 %v4258
    %v4428 = vunpack.c.l.bf16 %v4259
    %v4429 = vunpack.c.l.bf16 %v4260
    %v4430 = vunpack.c.l.bf16 %v4261
    %v4431 = vunpack.c.l.bf16 %v4262
    %v4432 = vunpack.c.l.bf16 %v4263
    %v4433 = vunpack.c.l.bf16 %v4264
    %v4434 = vunpack.c.l.bf16 %v4265
    %v4435 = vunpack.c.l.bf16 %v4266
    %v4436 = vunpack.c.l.bf16 %v4267
    %v4437 = vunpack.c.l.bf16 %v4268
    %v4438 = vunpack.c.l.bf16 %v4269
    %v4439 = vunpack.c.l.bf16 %v4270
    %v4440 = vunpack.c.l.bf16 %v4271
    %v4441 = vunpack.c.l.bf16 %v4272
    %v4442 = vunpack.c.l.bf16 %v4273
    %v4443 = vunpack.c.l.bf16 %v4274
    %v4444 = vunpack.c.l.bf16 %v4275
    %v4445 = vunpack.c.l.bf16 %v4276
    %v4446 = vunpack.c.l.bf16 %v4277
    %v4447 = vunpack.c.l.bf16 %v4278
    %v4448 = vunpack.c.l.bf16 %v4279
    %v4449 = vunpack.c.l.bf16 %v4280
    %v4450 = vunpack.c.l.bf16 %v4281
    %v4451 = vunpack.c.l.bf16 %v4282
    %v4452 = vunpack.c.l.bf16 %v4283
    %v4453 = vunpack.c.l.bf16 %v4284
    %v4454 = vunpack.c.l.bf16 %v4285
    %v4455 = vunpack.c.l.bf16 %v4286
    %v4456 = vunpack.c.l.bf16 %v4287
    %v4457 = vunpack.c.l.bf16 %v4288
    %v4458 = vunpack.c.l.bf16 %v4289
    %v4459 = vunpack.c.l.bf16 %v4290
    %v4460 = vunpack.c.l.bf16 %v4291
    %v4461 = vunpack.c.l.bf16 %v4292
    %v4462 = vunpack.c.l.bf16 %v4293
    %v4463 = vunpack.c.l.bf16 %v4294
    %v4464 = vunpack.c.l.bf16 %v4295
    %v4465 = vunpack.c.l.bf16 %v4296
    %v4466 = vunpack.c.l.bf16 %v4297
    %v4467 = vunpack.c.l.bf16 %v4298
    %v4468 = vunpack.c.l.bf16 %v4299
    %v4469 = vunpack.c.l.bf16 %v4300
    %v4470 = vunpack.c.l.bf16 %v4301
    %v4471 = vunpack.c.l.bf16 %v4302
    %v4472 = vunpack.c.l.bf16 %v4303
    %v4473 = vunpack.c.l.bf16 %v4304
    %v4474 = vunpack.c.l.bf16 %v4305
    %v4475 = vunpack.c.l.bf16 %v4306
    %v4476 = vunpack.c.l.bf16 %v4307
    %v4477 = vunpack.c.l.bf16 %v4308
    %v4478 = vunpack.c.l.bf16 %v4309
    %v4479 = vunpack.c.l.bf16 %v4310
    %v4480 = vunpack.c.l.bf16 %v4311
    %v4481 = vunpack.c.l.bf16 %v4312
    %v4482 = vunpack.c.l.bf16 %v4313
    %v4483 = vunpack.c.l.bf16 %v4314
    %v4484 = vunpack.c.l.bf16 %v4315
    %v4485 = vunpack.c.l.bf16 %v4316
    %v4486 = vunpack.c.l.bf16 %v4317
    %v4487 = vunpack.c.l.bf16 %v4318
    %v4488 = vunpack.c.l.bf16 %v4319
    %v4489 = vunpack.c.l.bf16 %v4320
    %v4490 = vunpack.c.l.bf16 %v4321
    %v4491 = vunpack.c.l.bf16 %v4322
    %v4492 = vunpack.c.l.bf16 %v4323
    %v4493 = vunpack.c.l.bf16 %v4324
    %v4494 = vunpack.c.l.bf16 %v4325
    %v4495 = vunpack.c.l.bf16 %v4326
    %v4496 = vunpack.c.l.bf16 %v4327
    %v4497 = vunpack.c.l.bf16 %v4328
    %v4498 = vunpack.c.l.bf16 %v4329
    %v4499 = vunpack.c.l.bf16 %v4330
    %v4500 = vunpack.c.l.bf16 %v4331
    %v4501 = vunpack.c.l.bf16 %v4332
    %v4502 = vunpack.c.l.bf16 %v4333
    %v4503 = vunpack.c.l.bf16 %v4334
    %v4504 = vunpack.c.l.bf16 %v4335
    %v4505 = vunpack.c.l.bf16 %v4336
    %v4506 = vunpack.c.l.bf16 %v4337
    %v4507 = vunpack.c.l.bf16 %v4338
    %v4508 = vunpack.c.l.bf16 %v4339
    %v4509 = vunpack.c.l.bf16 %v4340
    %v4510 = vunpack.c.l.bf16 %v4341
    %v4511 = vunpack.c.l.bf16 %v4342
    %v4512 = vunpack.c.l.bf16 %v4343
    %v4513 = vunpack.c.l.bf16 %v4344
    %v4514 = vunpack.c.l.bf16 %v4345
    %v4515 = vunpack.c.l.bf16 %v4346
    %v4516 = vunpack.c.l.bf16 %v4347
    %v4517 = vunpack.c.l.bf16 %v4348
    %v4518 = vunpack.c.l.bf16 %v4349
    %v4519 = vunpack.c.l.bf16 %v4350
    %v4520 = vunpack.c.l.bf16 %v4351
    %v4521 = vunpack.c.l.bf16 %v4352
    %v4522 = vunpack.c.l.bf16 %v4353
    %v4523 = vunpack.c.l.bf16 %v4354
    %v4524 = vunpack.c.l.bf16 %v4355
    %v4525 = vunpack.c.l.bf16 %v4356
    %v4526 = vunpack.c.l.bf16 %v4357
    %v4527 = vunpack.c.l.bf16 %v4358
    %v4528 = vunpack.c.l.bf16 %v4359
    %v4529 = vunpack.c.l.bf16 %v4360
    %v4530 = vunpack.c.l.bf16 %v4361
    %v4531 = vunpack.c.l.bf16 %v4362
    %v4532 = vunpack.c.l.bf16 %v4363
    %v4533 = vunpack.c.l.bf16 %v4364
    %v4534 = vunpack.c.l.bf16 %v4365
    %v4535 = vunpack.c.l.bf16 %v4366
    %v4536 = vunpack.c.l.bf16 %v4367
    %v4537 = vunpack.c.l.bf16 %v4368
    %v4538 = vunpack.c.l.bf16 %v4369
    %v4539 = vunpack.c.l.bf16 %v4370
    %v4540 = vunpack.c.l.bf16 %v4371
    %v4541 = vunpack.c.l.bf16 %v4372
    %v4542 = vunpack.c.l.bf16 %v4373
    %v4543 = vunpack.c.l.bf16 %v4374
    %v4544 = vunpack.c.l.bf16 %v4375
    %v4545 = vunpack.c.l.bf16 %v4376
    %v4546 = vunpack.c.l.bf16 %v4377
    %v4547 = vunpack.c.l.bf16 %v4378
    %v4548 = vunpack.c.l.bf16 %v4379
    %v4549 = vunpack.c.l.bf16 %v4380
    %v4550 = vunpack.c.l.bf16 %v4381
    %v4551 = vunpack.c.l.bf16 %v4382
    %v4552 = vunpack.c.l.bf16 %v4383
    %v4553 = vunpack.c.l.bf16 %v4384
    %v4554 = vunpack.c.l.bf16 %v4385
    %v4555 = vunpack.c.l.bf16 %v4386
    %v4556 = vunpack.c.l.bf16 %v4387
    %v4557 = vunpack.c.l.bf16 %v4388
    %v4558 = vunpack.c.l.bf16 %v4389
    %v4559 = vunpack.c.l.bf16 %v4390
    %v4560 = vunpack.c.l.bf16 %v4391
    %v4561 = vunpack.c.l.bf16 %v4392
    %v4562 = vunpack.c.l.bf16 %v4393
    %v4563 = vunpack.c.l.bf16 %v4394
    %v4564 = vunpack.c.l.bf16 %v4395
    %v4565 = vunpack.c.l.bf16 %v4396
    %v4566 = vunpack.c.l.bf16 %v4397
    %v4567 = vunpack.c.l.bf16 %v4398
    %v4568 = vunpack.c.l.bf16 %v4399
    %v4569 = vunpack.c.l.bf16 %v4400
    %v4570 = vunpack.c.l.bf16 %v4401
    %v4571 = vunpack.c.l.bf16 %v4402
    %v4572 = vunpack.c.l.bf16 %v4403
    %v4573 = vunpack.c.l.bf16 %v4404
    %v4574 = vunpack.c.l.bf16 %v4405
    %v4575 = vunpack.c.l.bf16 %v4406
    %v4576 = vunpack.c.l.bf16 %v4407
    %v4577 = vunpack.c.l.bf16 %v4408
    %v4578 = vunpack.c.l.bf16 %v4409
    %v4579 = vunpack.c.l.bf16 %v4410
    %v4580 = vunpack.c.l.bf16 %v4411
    %v4581 = vunpack.c.l.bf16 %v4412
    %v4582 = vunpack.c.l.bf16 %v4413
    %v4583 = vunpack.c.l.bf16 %v4414
    %v4584 = vunpack.c.l.bf16 %v4415
    %v4585 = vunpack.c.l.bf16 %v4416
    %v4586 = vunpack.c.l.bf16 %v4417
    %v4587 = vunpack.c.l.bf16 %v4418
    %v4588 = vunpack.c.l.bf16 %v4419
    %v4589 = vunpack.c.l.bf16 %v4420
    %v4590 = vunpack.c.l.bf16 %v4421
    %v4591 = vunpack.c.l.bf16 %v4422
    %v4592 = vunpack.c.l.bf16 %v4423
    %v4593 = vunpack.c.l.bf16 %v4424
    %v4594 = vunpack.c.l.bf16 %v4425
    %4596 = vset.pattern.permute.xlu0 0
    %4597 = vperm.xlu0 %4596, %v4426
    %v4598 = vpop.permute.xlu0 %4597
    %4601 = vset.pattern.permute.xlu0 0
    %4602 = vperm.xlu0 %4601, %v4427
    %v4603 = vpop.permute.xlu0 %4602
    %4606 = vset.pattern.permute.xlu0 0
    %4607 = vperm.xlu0 %4606, %v4428
    %v4608 = vpop.permute.xlu0 %4607
    %4611 = vset.pattern.permute.xlu0 0
    %4612 = vperm.xlu0 %4611, %v4429
    %v4613 = vpop.permute.xlu0 %4612
    %4616 = vset.pattern.permute.xlu0 0
    %4617 = vperm.xlu0 %4616, %v4430
    %v4618 = vpop.permute.xlu0 %4617
    %4621 = vset.pattern.permute.xlu0 0
    %4622 = vperm.xlu0 %4621, %v4431
    %v4623 = vpop.permute.xlu0 %4622
    %4626 = vset.pattern.permute.xlu0 0
    %4627 = vperm.xlu0 %4626, %v4432
    %v4628 = vpop.permute.xlu0 %4627
    %4631 = vset.pattern.permute.xlu0 0
    %4632 = vperm.xlu0 %4631, %v4433
    %v4633 = vpop.permute.xlu0 %4632
    %4636 = vset.pattern.permute.xlu0 0
    %4637 = vperm.xlu0 %4636, %v4434
    %v4638 = vpop.permute.xlu0 %4637
    %4641 = vset.pattern.permute.xlu0 0
    %4642 = vperm.xlu0 %4641, %v4435
    %v4643 = vpop.permute.xlu0 %4642
    %4646 = vset.pattern.permute.xlu0 0
    %4647 = vperm.xlu0 %4646, %v4436
    %v4648 = vpop.permute.xlu0 %4647
    %4651 = vset.pattern.permute.xlu0 0
    %4652 = vperm.xlu0 %4651, %v4437
    %v4653 = vpop.permute.xlu0 %4652
    %4656 = vset.pattern.permute.xlu0 0
    %4657 = vperm.xlu0 %4656, %v4438
    %v4658 = vpop.permute.xlu0 %4657
    %4661 = vset.pattern.permute.xlu0 0
    %4662 = vperm.xlu0 %4661, %v4439
    %v4663 = vpop.permute.xlu0 %4662
    %4666 = vset.pattern.permute.xlu0 0
    %4667 = vperm.xlu0 %4666, %v4440
    %v4668 = vpop.permute.xlu0 %4667
    %4671 = vset.pattern.permute.xlu0 0
    %4672 = vperm.xlu0 %4671, %v4441
    %v4673 = vpop.permute.xlu0 %4672
    %4676 = vset.pattern.permute.xlu0 0
    %4677 = vperm.xlu0 %4676, %v4442
    %v4678 = vpop.permute.xlu0 %4677
    %4681 = vset.pattern.permute.xlu0 0
    %4682 = vperm.xlu0 %4681, %v4443
    %v4683 = vpop.permute.xlu0 %4682
    %4686 = vset.pattern.permute.xlu0 0
    %4687 = vperm.xlu0 %4686, %v4444
    %v4688 = vpop.permute.xlu0 %4687
    %4691 = vset.pattern.permute.xlu0 0
    %4692 = vperm.xlu0 %4691, %v4445
    %v4693 = vpop.permute.xlu0 %4692
    %4696 = vset.pattern.permute.xlu0 0
    %4697 = vperm.xlu0 %4696, %v4446
    %v4698 = vpop.permute.xlu0 %4697
    %4701 = vset.pattern.permute.xlu0 0
    %4702 = vperm.xlu0 %4701, %v4447
    %v4703 = vpop.permute.xlu0 %4702
    %4706 = vset.pattern.permute.xlu0 0
    %4707 = vperm.xlu0 %4706, %v4448
    %v4708 = vpop.permute.xlu0 %4707
    %4711 = vset.pattern.permute.xlu0 0
    %4712 = vperm.xlu0 %4711, %v4449
    %v4713 = vpop.permute.xlu0 %4712
    %4716 = vset.pattern.permute.xlu0 0
    %4717 = vperm.xlu0 %4716, %v4450
    %v4718 = vpop.permute.xlu0 %4717
    %4721 = vset.pattern.permute.xlu0 0
    %4722 = vperm.xlu0 %4721, %v4451
    %v4723 = vpop.permute.xlu0 %4722
    %4726 = vset.pattern.permute.xlu0 0
    %4727 = vperm.xlu0 %4726, %v4452
    %v4728 = vpop.permute.xlu0 %4727
    %4731 = vset.pattern.permute.xlu0 0
    %4732 = vperm.xlu0 %4731, %v4453
    %v4733 = vpop.permute.xlu0 %4732
    %4736 = vset.pattern.permute.xlu0 0
    %4737 = vperm.xlu0 %4736, %v4454
    %v4738 = vpop.permute.xlu0 %4737
    %4741 = vset.pattern.permute.xlu0 0
    %4742 = vperm.xlu0 %4741, %v4455
    %v4743 = vpop.permute.xlu0 %4742
    %4746 = vset.pattern.permute.xlu0 0
    %4747 = vperm.xlu0 %4746, %v4456
    %v4748 = vpop.permute.xlu0 %4747
    %4751 = vset.pattern.permute.xlu0 0
    %4752 = vperm.xlu0 %4751, %v4457
    %v4753 = vpop.permute.xlu0 %4752
    %4756 = vset.pattern.permute.xlu0 0
    %4757 = vperm.xlu0 %4756, %v4458
    %v4758 = vpop.permute.xlu0 %4757
    %4761 = vset.pattern.permute.xlu0 0
    %4762 = vperm.xlu0 %4761, %v4459
    %v4763 = vpop.permute.xlu0 %4762
    %4766 = vset.pattern.permute.xlu0 0
    %4767 = vperm.xlu0 %4766, %v4460
    %v4768 = vpop.permute.xlu0 %4767
    %4771 = vset.pattern.permute.xlu0 0
    %4772 = vperm.xlu0 %4771, %v4461
    %v4773 = vpop.permute.xlu0 %4772
    %4776 = vset.pattern.permute.xlu0 0
    %4777 = vperm.xlu0 %4776, %v4462
    %v4778 = vpop.permute.xlu0 %4777
    %4781 = vset.pattern.permute.xlu0 0
    %4782 = vperm.xlu0 %4781, %v4463
    %v4783 = vpop.permute.xlu0 %4782
    %4786 = vset.pattern.permute.xlu0 0
    %4787 = vperm.xlu0 %4786, %v4464
    %v4788 = vpop.permute.xlu0 %4787
    %4791 = vset.pattern.permute.xlu0 0
    %4792 = vperm.xlu0 %4791, %v4465
    %v4793 = vpop.permute.xlu0 %4792
    %4796 = vset.pattern.permute.xlu0 0
    %4797 = vperm.xlu0 %4796, %v4466
    %v4798 = vpop.permute.xlu0 %4797
    %4801 = vset.pattern.permute.xlu0 0
    %4802 = vperm.xlu0 %4801, %v4467
    %v4803 = vpop.permute.xlu0 %4802
    %4806 = vset.pattern.permute.xlu0 0
    %4807 = vperm.xlu0 %4806, %v4468
    %v4808 = vpop.permute.xlu0 %4807
    %4811 = vset.pattern.permute.xlu0 0
    %4812 = vperm.xlu0 %4811, %v4469
    %v4813 = vpop.permute.xlu0 %4812
    %4816 = vset.pattern.permute.xlu0 0
    %4817 = vperm.xlu0 %4816, %v4470
    %v4818 = vpop.permute.xlu0 %4817
    %4821 = vset.pattern.permute.xlu0 0
    %4822 = vperm.xlu0 %4821, %v4471
    %v4823 = vpop.permute.xlu0 %4822
    %4826 = vset.pattern.permute.xlu0 0
    %4827 = vperm.xlu0 %4826, %v4472
    %v4828 = vpop.permute.xlu0 %4827
    %4831 = vset.pattern.permute.xlu0 0
    %4832 = vperm.xlu0 %4831, %v4473
    %v4833 = vpop.permute.xlu0 %4832
    %4836 = vset.pattern.permute.xlu0 0
    %4837 = vperm.xlu0 %4836, %v4474
    %v4838 = vpop.permute.xlu0 %4837
    %4841 = vset.pattern.permute.xlu0 0
    %4842 = vperm.xlu0 %4841, %v4475
    %v4843 = vpop.permute.xlu0 %4842
    %4846 = vset.pattern.permute.xlu0 0
    %4847 = vperm.xlu0 %4846, %v4476
    %v4848 = vpop.permute.xlu0 %4847
    %4851 = vset.pattern.permute.xlu0 0
    %4852 = vperm.xlu0 %4851, %v4477
    %v4853 = vpop.permute.xlu0 %4852
    %4856 = vset.pattern.permute.xlu0 0
    %4857 = vperm.xlu0 %4856, %v4478
    %v4858 = vpop.permute.xlu0 %4857
    %4861 = vset.pattern.permute.xlu0 0
    %4862 = vperm.xlu0 %4861, %v4479
    %v4863 = vpop.permute.xlu0 %4862
    %4866 = vset.pattern.permute.xlu0 0
    %4867 = vperm.xlu0 %4866, %v4480
    %v4868 = vpop.permute.xlu0 %4867
    %4871 = vset.pattern.permute.xlu0 0
    %4872 = vperm.xlu0 %4871, %v4481
    %v4873 = vpop.permute.xlu0 %4872
    %4876 = vset.pattern.permute.xlu0 0
    %4877 = vperm.xlu0 %4876, %v4482
    %v4878 = vpop.permute.xlu0 %4877
    %4881 = vset.pattern.permute.xlu0 0
    %4882 = vperm.xlu0 %4881, %v4483
    %v4883 = vpop.permute.xlu0 %4882
    %4886 = vset.pattern.permute.xlu0 0
    %4887 = vperm.xlu0 %4886, %v4484
    %v4888 = vpop.permute.xlu0 %4887
    %4891 = vset.pattern.permute.xlu0 0
    %4892 = vperm.xlu0 %4891, %v4485
    %v4893 = vpop.permute.xlu0 %4892
    %4896 = vset.pattern.permute.xlu0 0
    %4897 = vperm.xlu0 %4896, %v4486
    %v4898 = vpop.permute.xlu0 %4897
    %4901 = vset.pattern.permute.xlu0 0
    %4902 = vperm.xlu0 %4901, %v4487
    %v4903 = vpop.permute.xlu0 %4902
    %4906 = vset.pattern.permute.xlu0 0
    %4907 = vperm.xlu0 %4906, %v4488
    %v4908 = vpop.permute.xlu0 %4907
    %4911 = vset.pattern.permute.xlu0 0
    %4912 = vperm.xlu0 %4911, %v4489
    %v4913 = vpop.permute.xlu0 %4912
    %4916 = vset.pattern.permute.xlu0 0
    %4917 = vperm.xlu0 %4916, %v4490
    %v4918 = vpop.permute.xlu0 %4917
    %4921 = vset.pattern.permute.xlu0 0
    %4922 = vperm.xlu0 %4921, %v4491
    %v4923 = vpop.permute.xlu0 %4922
    %4926 = vset.pattern.permute.xlu0 0
    %4927 = vperm.xlu0 %4926, %v4492
    %v4928 = vpop.permute.xlu0 %4927
    %4931 = vset.pattern.permute.xlu0 0
    %4932 = vperm.xlu0 %4931, %v4493
    %v4933 = vpop.permute.xlu0 %4932
    %4936 = vset.pattern.permute.xlu0 0
    %4937 = vperm.xlu0 %4936, %v4494
    %v4938 = vpop.permute.xlu0 %4937
    %4941 = vset.pattern.permute.xlu0 0
    %4942 = vperm.xlu0 %4941, %v4495
    %v4943 = vpop.permute.xlu0 %4942
    %4946 = vset.pattern.permute.xlu0 0
    %4947 = vperm.xlu0 %4946, %v4496
    %v4948 = vpop.permute.xlu0 %4947
    %4951 = vset.pattern.permute.xlu0 0
    %4952 = vperm.xlu0 %4951, %v4497
    %v4953 = vpop.permute.xlu0 %4952
    %4956 = vset.pattern.permute.xlu0 0
    %4957 = vperm.xlu0 %4956, %v4498
    %v4958 = vpop.permute.xlu0 %4957
    %4961 = vset.pattern.permute.xlu0 0
    %4962 = vperm.xlu0 %4961, %v4499
    %v4963 = vpop.permute.xlu0 %4962
    %4966 = vset.pattern.permute.xlu0 0
    %4967 = vperm.xlu0 %4966, %v4500
    %v4968 = vpop.permute.xlu0 %4967
    %4971 = vset.pattern.permute.xlu0 0
    %4972 = vperm.xlu0 %4971, %v4501
    %v4973 = vpop.permute.xlu0 %4972
    %4976 = vset.pattern.permute.xlu0 0
    %4977 = vperm.xlu0 %4976, %v4502
    %v4978 = vpop.permute.xlu0 %4977
    %4981 = vset.pattern.permute.xlu0 0
    %4982 = vperm.xlu0 %4981, %v4503
    %v4983 = vpop.permute.xlu0 %4982
    %4986 = vset.pattern.permute.xlu0 0
    %4987 = vperm.xlu0 %4986, %v4504
    %v4988 = vpop.permute.xlu0 %4987
    %4991 = vset.pattern.permute.xlu0 0
    %4992 = vperm.xlu0 %4991, %v4505
    %v4993 = vpop.permute.xlu0 %4992
    %4996 = vset.pattern.permute.xlu0 0
    %4997 = vperm.xlu0 %4996, %v4506
    %v4998 = vpop.permute.xlu0 %4997
    %5001 = vset.pattern.permute.xlu0 0
    %5002 = vperm.xlu0 %5001, %v4507
    %v5003 = vpop.permute.xlu0 %5002
    %5006 = vset.pattern.permute.xlu0 0
    %5007 = vperm.xlu0 %5006, %v4508
    %v5008 = vpop.permute.xlu0 %5007
    %5011 = vset.pattern.permute.xlu0 0
    %5012 = vperm.xlu0 %5011, %v4509
    %v5013 = vpop.permute.xlu0 %5012
    %5016 = vset.pattern.permute.xlu0 0
    %5017 = vperm.xlu0 %5016, %v4510
    %v5018 = vpop.permute.xlu0 %5017
    %5021 = vset.pattern.permute.xlu0 0
    %5022 = vperm.xlu0 %5021, %v4511
    %v5023 = vpop.permute.xlu0 %5022
    %5026 = vset.pattern.permute.xlu0 0
    %5027 = vperm.xlu0 %5026, %v4512
    %v5028 = vpop.permute.xlu0 %5027
    %5031 = vset.pattern.permute.xlu0 0
    %5032 = vperm.xlu0 %5031, %v4513
    %v5033 = vpop.permute.xlu0 %5032
    %5036 = vset.pattern.permute.xlu0 0
    %5037 = vperm.xlu0 %5036, %v4514
    %v5038 = vpop.permute.xlu0 %5037
    %5041 = vset.pattern.permute.xlu0 0
    %5042 = vperm.xlu0 %5041, %v4515
    %v5043 = vpop.permute.xlu0 %5042
    %5046 = vset.pattern.permute.xlu0 0
    %5047 = vperm.xlu0 %5046, %v4516
    %v5048 = vpop.permute.xlu0 %5047
    %5051 = vset.pattern.permute.xlu0 0
    %5052 = vperm.xlu0 %5051, %v4517
    %v5053 = vpop.permute.xlu0 %5052
    %5056 = vset.pattern.permute.xlu0 0
    %5057 = vperm.xlu0 %5056, %v4518
    %v5058 = vpop.permute.xlu0 %5057
    %5061 = vset.pattern.permute.xlu0 0
    %5062 = vperm.xlu0 %5061, %v4519
    %v5063 = vpop.permute.xlu0 %5062
    %5066 = vset.pattern.permute.xlu0 0
    %5067 = vperm.xlu0 %5066, %v4520
    %v5068 = vpop.permute.xlu0 %5067
    %5071 = vset.pattern.permute.xlu0 0
    %5072 = vperm.xlu0 %5071, %v4521
    %v5073 = vpop.permute.xlu0 %5072
    %5076 = vset.pattern.permute.xlu0 0
    %5077 = vperm.xlu0 %5076, %v4522
    %v5078 = vpop.permute.xlu0 %5077
    %5081 = vset.pattern.permute.xlu0 0
    %5082 = vperm.xlu0 %5081, %v4523
    %v5083 = vpop.permute.xlu0 %5082
    %5086 = vset.pattern.permute.xlu0 0
    %5087 = vperm.xlu0 %5086, %v4524
    %v5088 = vpop.permute.xlu0 %5087
    %5091 = vset.pattern.permute.xlu0 0
    %5092 = vperm.xlu0 %5091, %v4525
    %v5093 = vpop.permute.xlu0 %5092
    %5096 = vset.pattern.permute.xlu0 0
    %5097 = vperm.xlu0 %5096, %v4526
    %v5098 = vpop.permute.xlu0 %5097
    %5101 = vset.pattern.permute.xlu0 0
    %5102 = vperm.xlu0 %5101, %v4527
    %v5103 = vpop.permute.xlu0 %5102
    %5106 = vset.pattern.permute.xlu0 0
    %5107 = vperm.xlu0 %5106, %v4528
    %v5108 = vpop.permute.xlu0 %5107
    %5111 = vset.pattern.permute.xlu0 0
    %5112 = vperm.xlu0 %5111, %v4529
    %v5113 = vpop.permute.xlu0 %5112
    %5116 = vset.pattern.permute.xlu0 0
    %5117 = vperm.xlu0 %5116, %v4530
    %v5118 = vpop.permute.xlu0 %5117
    %5121 = vset.pattern.permute.xlu0 0
    %5122 = vperm.xlu0 %5121, %v4531
    %v5123 = vpop.permute.xlu0 %5122
    %5126 = vset.pattern.permute.xlu0 0
    %5127 = vperm.xlu0 %5126, %v4532
    %v5128 = vpop.permute.xlu0 %5127
    %5131 = vset.pattern.permute.xlu0 0
    %5132 = vperm.xlu0 %5131, %v4533
    %v5133 = vpop.permute.xlu0 %5132
    %5136 = vset.pattern.permute.xlu0 0
    %5137 = vperm.xlu0 %5136, %v4534
    %v5138 = vpop.permute.xlu0 %5137
    %5141 = vset.pattern.permute.xlu0 0
    %5142 = vperm.xlu0 %5141, %v4535
    %v5143 = vpop.permute.xlu0 %5142
    %5146 = vset.pattern.permute.xlu0 0
    %5147 = vperm.xlu0 %5146, %v4536
    %v5148 = vpop.permute.xlu0 %5147
    %5151 = vset.pattern.permute.xlu0 0
    %5152 = vperm.xlu0 %5151, %v4537
    %v5153 = vpop.permute.xlu0 %5152
    %5156 = vset.pattern.permute.xlu0 0
    %5157 = vperm.xlu0 %5156, %v4538
    %v5158 = vpop.permute.xlu0 %5157
    %5161 = vset.pattern.permute.xlu0 0
    %5162 = vperm.xlu0 %5161, %v4539
    %v5163 = vpop.permute.xlu0 %5162
    %5166 = vset.pattern.permute.xlu0 0
    %5167 = vperm.xlu0 %5166, %v4540
    %v5168 = vpop.permute.xlu0 %5167
    %5171 = vset.pattern.permute.xlu0 0
    %5172 = vperm.xlu0 %5171, %v4541
    %v5173 = vpop.permute.xlu0 %5172
    %5176 = vset.pattern.permute.xlu0 0
    %5177 = vperm.xlu0 %5176, %v4542
    %v5178 = vpop.permute.xlu0 %5177
    %5181 = vset.pattern.permute.xlu0 0
    %5182 = vperm.xlu0 %5181, %v4543
    %v5183 = vpop.permute.xlu0 %5182
    %5186 = vset.pattern.permute.xlu0 0
    %5187 = vperm.xlu0 %5186, %v4544
    %v5188 = vpop.permute.xlu0 %5187
    %5191 = vset.pattern.permute.xlu0 0
    %5192 = vperm.xlu0 %5191, %v4545
    %v5193 = vpop.permute.xlu0 %5192
    %5196 = vset.pattern.permute.xlu0 0
    %5197 = vperm.xlu0 %5196, %v4546
    %v5198 = vpop.permute.xlu0 %5197
    %5201 = vset.pattern.permute.xlu0 0
    %5202 = vperm.xlu0 %5201, %v4547
    %v5203 = vpop.permute.xlu0 %5202
    %5206 = vset.pattern.permute.xlu0 0
    %5207 = vperm.xlu0 %5206, %v4548
    %v5208 = vpop.permute.xlu0 %5207
    %5211 = vset.pattern.permute.xlu0 0
    %5212 = vperm.xlu0 %5211, %v4549
    %v5213 = vpop.permute.xlu0 %5212
    %5216 = vset.pattern.permute.xlu0 0
    %5217 = vperm.xlu0 %5216, %v4550
    %v5218 = vpop.permute.xlu0 %5217
    %5221 = vset.pattern.permute.xlu0 0
    %5222 = vperm.xlu0 %5221, %v4551
    %v5223 = vpop.permute.xlu0 %5222
    %5226 = vset.pattern.permute.xlu0 0
    %5227 = vperm.xlu0 %5226, %v4552
    %v5228 = vpop.permute.xlu0 %5227
    %5231 = vset.pattern.permute.xlu0 0
    %5232 = vperm.xlu0 %5231, %v4553
    %v5233 = vpop.permute.xlu0 %5232
    %5236 = vset.pattern.permute.xlu0 0
    %5237 = vperm.xlu0 %5236, %v4554
    %v5238 = vpop.permute.xlu0 %5237
    %5241 = vset.pattern.permute.xlu0 0
    %5242 = vperm.xlu0 %5241, %v4555
    %v5243 = vpop.permute.xlu0 %5242
    %5246 = vset.pattern.permute.xlu0 0
    %5247 = vperm.xlu0 %5246, %v4556
    %v5248 = vpop.permute.xlu0 %5247
    %5251 = vset.pattern.permute.xlu0 0
    %5252 = vperm.xlu0 %5251, %v4557
    %v5253 = vpop.permute.xlu0 %5252
    %5256 = vset.pattern.permute.xlu0 0
    %5257 = vperm.xlu0 %5256, %v4558
    %v5258 = vpop.permute.xlu0 %5257
    %5261 = vset.pattern.permute.xlu0 0
    %5262 = vperm.xlu0 %5261, %v4559
    %v5263 = vpop.permute.xlu0 %5262
    %5266 = vset.pattern.permute.xlu0 0
    %5267 = vperm.xlu0 %5266, %v4560
    %v5268 = vpop.permute.xlu0 %5267
    %5271 = vset.pattern.permute.xlu0 0
    %5272 = vperm.xlu0 %5271, %v4561
    %v5273 = vpop.permute.xlu0 %5272
    %5276 = vset.pattern.permute.xlu0 0
    %5277 = vperm.xlu0 %5276, %v4562
    %v5278 = vpop.permute.xlu0 %5277
    %5281 = vset.pattern.permute.xlu0 0
    %5282 = vperm.xlu0 %5281, %v4563
    %v5283 = vpop.permute.xlu0 %5282
    %5286 = vset.pattern.permute.xlu0 0
    %5287 = vperm.xlu0 %5286, %v4564
    %v5288 = vpop.permute.xlu0 %5287
    %5291 = vset.pattern.permute.xlu0 0
    %5292 = vperm.xlu0 %5291, %v4565
    %v5293 = vpop.permute.xlu0 %5292
    %5296 = vset.pattern.permute.xlu0 0
    %5297 = vperm.xlu0 %5296, %v4566
    %v5298 = vpop.permute.xlu0 %5297
    %5301 = vset.pattern.permute.xlu0 0
    %5302 = vperm.xlu0 %5301, %v4567
    %v5303 = vpop.permute.xlu0 %5302
    %5306 = vset.pattern.permute.xlu0 0
    %5307 = vperm.xlu0 %5306, %v4568
    %v5308 = vpop.permute.xlu0 %5307
    %5311 = vset.pattern.permute.xlu0 0
    %5312 = vperm.xlu0 %5311, %v4569
    %v5313 = vpop.permute.xlu0 %5312
    %5316 = vset.pattern.permute.xlu0 0
    %5317 = vperm.xlu0 %5316, %v4570
    %v5318 = vpop.permute.xlu0 %5317
    %5321 = vset.pattern.permute.xlu0 0
    %5322 = vperm.xlu0 %5321, %v4571
    %v5323 = vpop.permute.xlu0 %5322
    %5326 = vset.pattern.permute.xlu0 0
    %5327 = vperm.xlu0 %5326, %v4572
    %v5328 = vpop.permute.xlu0 %5327
    %5331 = vset.pattern.permute.xlu0 0
    %5332 = vperm.xlu0 %5331, %v4573
    %v5333 = vpop.permute.xlu0 %5332
    %5336 = vset.pattern.permute.xlu0 0
    %5337 = vperm.xlu0 %5336, %v4574
    %v5338 = vpop.permute.xlu0 %5337
    %5341 = vset.pattern.permute.xlu0 0
    %5342 = vperm.xlu0 %5341, %v4575
    %v5343 = vpop.permute.xlu0 %5342
    %5346 = vset.pattern.permute.xlu0 0
    %5347 = vperm.xlu0 %5346, %v4576
    %v5348 = vpop.permute.xlu0 %5347
    %5351 = vset.pattern.permute.xlu0 0
    %5352 = vperm.xlu0 %5351, %v4577
    %v5353 = vpop.permute.xlu0 %5352
    %5356 = vset.pattern.permute.xlu0 0
    %5357 = vperm.xlu0 %5356, %v4578
    %v5358 = vpop.permute.xlu0 %5357
    %5361 = vset.pattern.permute.xlu0 0
    %5362 = vperm.xlu0 %5361, %v4579
    %v5363 = vpop.permute.xlu0 %5362
    %5366 = vset.pattern.permute.xlu0 0
    %5367 = vperm.xlu0 %5366, %v4580
    %v5368 = vpop.permute.xlu0 %5367
    %5371 = vset.pattern.permute.xlu0 0
    %5372 = vperm.xlu0 %5371, %v4581
    %v5373 = vpop.permute.xlu0 %5372
    %5376 = vset.pattern.permute.xlu0 0
    %5377 = vperm.xlu0 %5376, %v4582
    %v5378 = vpop.permute.xlu0 %5377
    %5381 = vset.pattern.permute.xlu0 0
    %5382 = vperm.xlu0 %5381, %v4583
    %v5383 = vpop.permute.xlu0 %5382
    %5386 = vset.pattern.permute.xlu0 0
    %5387 = vperm.xlu0 %5386, %v4584
    %v5388 = vpop.permute.xlu0 %5387
    %5391 = vset.pattern.permute.xlu0 0
    %5392 = vperm.xlu0 %5391, %v4585
    %v5393 = vpop.permute.xlu0 %5392
    %5396 = vset.pattern.permute.xlu0 0
    %5397 = vperm.xlu0 %5396, %v4586
    %v5398 = vpop.permute.xlu0 %5397
    %5401 = vset.pattern.permute.xlu0 0
    %5402 = vperm.xlu0 %5401, %v4587
    %v5403 = vpop.permute.xlu0 %5402
    %5406 = vset.pattern.permute.xlu0 0
    %5407 = vperm.xlu0 %5406, %v4588
    %v5408 = vpop.permute.xlu0 %5407
    %5411 = vset.pattern.permute.xlu0 0
    %5412 = vperm.xlu0 %5411, %v4589
    %v5413 = vpop.permute.xlu0 %5412
    %5416 = vset.pattern.permute.xlu0 0
    %5417 = vperm.xlu0 %5416, %v4590
    %v5418 = vpop.permute.xlu0 %5417
    %5421 = vset.pattern.permute.xlu0 0
    %5422 = vperm.xlu0 %5421, %v4591
    %v5423 = vpop.permute.xlu0 %5422
    %5426 = vset.pattern.permute.xlu0 0
    %5427 = vperm.xlu0 %5426, %v4592
    %v5428 = vpop.permute.xlu0 %5427
    %5431 = vset.pattern.permute.xlu0 0
    %5432 = vperm.xlu0 %5431, %v4593
    %v5433 = vpop.permute.xlu0 %5432
    %5436 = vset.pattern.permute.xlu0 0
    %5437 = vperm.xlu0 %5436, %v4594
    %v5438 = vpop.permute.xlu0 %5437
    %v5440 = vlaneseq
    %v5441 = vshrl.u32 %v5440, 7
    %v5442 = vsub.s32 3, %v5441
    %v5443 = vrot.slane %v772, %v5442
    %v5444 = vmul.f32 %v4598, %v5443
    %v5445 = vmul.f32 %v4603, %v5443
    %v5446 = vmul.f32 %v4608, %v5443
    %v5447 = vmul.f32 %v4613, %v5443
    %v5448 = vmul.f32 %v4618, %v5443
    %v5449 = vmul.f32 %v4623, %v5443
    %v5450 = vmul.f32 %v4628, %v5443
    %v5451 = vmul.f32 %v4633, %v5443
    %v5452 = vmul.f32 %v4638, %v5443
    %v5453 = vmul.f32 %v4643, %v5443
    %v5454 = vmul.f32 %v4648, %v5443
    %v5455 = vmul.f32 %v4653, %v5443
    %v5456 = vmul.f32 %v4658, %v5443
    %v5457 = vmul.f32 %v4663, %v5443
    %v5458 = vmul.f32 %v4668, %v5443
    %v5459 = vmul.f32 %v4673, %v5443
    %v5460 = vmul.f32 %v4678, %v5443
    %v5461 = vmul.f32 %v4683, %v5443
    %v5462 = vmul.f32 %v4688, %v5443
    %v5463 = vmul.f32 %v4693, %v5443
    %v5464 = vmul.f32 %v4698, %v5443
    %v5465 = vmul.f32 %v4703, %v5443
    %v5466 = vmul.f32 %v4708, %v5443
    %v5467 = vmul.f32 %v4713, %v5443
    %v5468 = vmul.f32 %v4718, %v5443
    %v5469 = vmul.f32 %v4723, %v5443
    %v5470 = vmul.f32 %v4728, %v5443
    %v5471 = vmul.f32 %v4733, %v5443
    %v5472 = vmul.f32 %v4738, %v5443
    %v5473 = vmul.f32 %v4743, %v5443
    %v5474 = vmul.f32 %v4748, %v5443
    %v5475 = vmul.f32 %v4753, %v5443
    %v5476 = vmul.f32 %v4758, %v5443
    %v5477 = vmul.f32 %v4763, %v5443
    %v5478 = vmul.f32 %v4768, %v5443
    %v5479 = vmul.f32 %v4773, %v5443
    %v5480 = vmul.f32 %v4778, %v5443
    %v5481 = vmul.f32 %v4783, %v5443
    %v5482 = vmul.f32 %v4788, %v5443
    %v5483 = vmul.f32 %v4793, %v5443
    %v5484 = vmul.f32 %v4798, %v5443
    %v5485 = vmul.f32 %v4803, %v5443
    %v5486 = vmul.f32 %v4808, %v5443
    %v5487 = vmul.f32 %v4813, %v5443
    %v5488 = vmul.f32 %v4818, %v5443
    %v5489 = vmul.f32 %v4823, %v5443
    %v5490 = vmul.f32 %v4828, %v5443
    %v5491 = vmul.f32 %v4833, %v5443
    %v5492 = vmul.f32 %v4838, %v5443
    %v5493 = vmul.f32 %v4843, %v5443
    %v5494 = vmul.f32 %v4848, %v5443
    %v5495 = vmul.f32 %v4853, %v5443
    %v5496 = vmul.f32 %v4858, %v5443
    %v5497 = vmul.f32 %v4863, %v5443
    %v5498 = vmul.f32 %v4868, %v5443
    %v5499 = vmul.f32 %v4873, %v5443
    %v5500 = vmul.f32 %v4878, %v5443
    %v5501 = vmul.f32 %v4883, %v5443
    %v5502 = vmul.f32 %v4888, %v5443
    %v5503 = vmul.f32 %v4893, %v5443
    %v5504 = vmul.f32 %v4898, %v5443
    %v5505 = vmul.f32 %v4903, %v5443
    %v5506 = vmul.f32 %v4908, %v5443
    %v5507 = vmul.f32 %v4913, %v5443
    %v5508 = vmul.f32 %v4918, %v5443
    %v5509 = vmul.f32 %v4923, %v5443
    %v5510 = vmul.f32 %v4928, %v5443
    %v5511 = vmul.f32 %v4933, %v5443
    %v5512 = vmul.f32 %v4938, %v5443
    %v5513 = vmul.f32 %v4943, %v5443
    %v5514 = vmul.f32 %v4948, %v5443
    %v5515 = vmul.f32 %v4953, %v5443
    %v5516 = vmul.f32 %v4958, %v5443
    %v5517 = vmul.f32 %v4963, %v5443
    %v5518 = vmul.f32 %v4968, %v5443
    %v5519 = vmul.f32 %v4973, %v5443
    %v5520 = vmul.f32 %v4978, %v5443
    %v5521 = vmul.f32 %v4983, %v5443
    %v5522 = vmul.f32 %v4988, %v5443
    %v5523 = vmul.f32 %v4993, %v5443
    %v5524 = vmul.f32 %v4998, %v5443
    %v5525 = vmul.f32 %v5003, %v5443
    %v5526 = vmul.f32 %v5008, %v5443
    %v5527 = vmul.f32 %v5013, %v5443
    %v5528 = vmul.f32 %v5018, %v5443
    %v5529 = vmul.f32 %v5023, %v5443
    %v5530 = vmul.f32 %v5028, %v5443
    %v5531 = vmul.f32 %v5033, %v5443
    %v5532 = vmul.f32 %v5038, %v5443
    %v5533 = vmul.f32 %v5043, %v5443
    %v5534 = vmul.f32 %v5048, %v5443
    %v5535 = vmul.f32 %v5053, %v5443
    %v5536 = vmul.f32 %v5058, %v5443
    %v5537 = vmul.f32 %v5063, %v5443
    %v5538 = vmul.f32 %v5068, %v5443
    %v5539 = vmul.f32 %v5073, %v5443
    %v5540 = vmul.f32 %v5078, %v5443
    %v5541 = vmul.f32 %v5083, %v5443
    %v5542 = vmul.f32 %v5088, %v5443
    %v5543 = vmul.f32 %v5093, %v5443
    %v5544 = vmul.f32 %v5098, %v5443
    %v5545 = vmul.f32 %v5103, %v5443
    %v5546 = vmul.f32 %v5108, %v5443
    %v5547 = vmul.f32 %v5113, %v5443
    %v5548 = vmul.f32 %v5118, %v5443
    %v5549 = vmul.f32 %v5123, %v5443
    %v5550 = vmul.f32 %v5128, %v5443
    %v5551 = vmul.f32 %v5133, %v5443
    %v5552 = vmul.f32 %v5138, %v5443
    %v5553 = vmul.f32 %v5143, %v5443
    %v5554 = vmul.f32 %v5148, %v5443
    %v5555 = vmul.f32 %v5153, %v5443
    %v5556 = vmul.f32 %v5158, %v5443
    %v5557 = vmul.f32 %v5163, %v5443
    %v5558 = vmul.f32 %v5168, %v5443
    %v5559 = vmul.f32 %v5173, %v5443
    %v5560 = vmul.f32 %v5178, %v5443
    %v5561 = vmul.f32 %v5183, %v5443
    %v5562 = vmul.f32 %v5188, %v5443
    %v5563 = vmul.f32 %v5193, %v5443
    %v5564 = vmul.f32 %v5198, %v5443
    %v5565 = vmul.f32 %v5203, %v5443
    %v5566 = vmul.f32 %v5208, %v5443
    %v5567 = vmul.f32 %v5213, %v5443
    %v5568 = vmul.f32 %v5218, %v5443
    %v5569 = vmul.f32 %v5223, %v5443
    %v5570 = vmul.f32 %v5228, %v5443
    %v5571 = vmul.f32 %v5233, %v5443
    %v5572 = vmul.f32 %v5238, %v5443
    %v5573 = vmul.f32 %v5243, %v5443
    %v5574 = vmul.f32 %v5248, %v5443
    %v5575 = vmul.f32 %v5253, %v5443
    %v5576 = vmul.f32 %v5258, %v5443
    %v5577 = vmul.f32 %v5263, %v5443
    %v5578 = vmul.f32 %v5268, %v5443
    %v5579 = vmul.f32 %v5273, %v5443
    %v5580 = vmul.f32 %v5278, %v5443
    %v5581 = vmul.f32 %v5283, %v5443
    %v5582 = vmul.f32 %v5288, %v5443
    %v5583 = vmul.f32 %v5293, %v5443
    %v5584 = vmul.f32 %v5298, %v5443
    %v5585 = vmul.f32 %v5303, %v5443
    %v5586 = vmul.f32 %v5308, %v5443
    %v5587 = vmul.f32 %v5313, %v5443
    %v5588 = vmul.f32 %v5318, %v5443
    %v5589 = vmul.f32 %v5323, %v5443
    %v5590 = vmul.f32 %v5328, %v5443
    %v5591 = vmul.f32 %v5333, %v5443
    %v5592 = vmul.f32 %v5338, %v5443
    %v5593 = vmul.f32 %v5343, %v5443
    %v5594 = vmul.f32 %v5348, %v5443
    %v5595 = vmul.f32 %v5353, %v5443
    %v5596 = vmul.f32 %v5358, %v5443
    %v5597 = vmul.f32 %v5363, %v5443
    %v5598 = vmul.f32 %v5368, %v5443
    %v5599 = vmul.f32 %v5373, %v5443
    %v5600 = vmul.f32 %v5378, %v5443
    %v5601 = vmul.f32 %v5383, %v5443
    %v5602 = vmul.f32 %v5388, %v5443
    %v5603 = vmul.f32 %v5393, %v5443
    %v5604 = vmul.f32 %v5398, %v5443
    %v5605 = vmul.f32 %v5403, %v5443
    %v5606 = vmul.f32 %v5408, %v5443
    %v5607 = vmul.f32 %v5413, %v5443
    %v5608 = vmul.f32 %v5418, %v5443
    %v5609 = vmul.f32 %v5423, %v5443
    %v5610 = vmul.f32 %v5428, %v5443
    %v5611 = vmul.f32 %v5433, %v5443
    %v5612 = vmul.f32 %v5438, %v5443
    %v5613 = vadd.f32 %v4088, %v5444
    %v5614 = vadd.f32 %v4089, %v5445
    %v5615 = vadd.f32 %v4090, %v5446
    %v5616 = vadd.f32 %v4091, %v5447
    %v5617 = vadd.f32 %v4092, %v5448
    %v5618 = vadd.f32 %v4093, %v5449
    %v5619 = vadd.f32 %v4094, %v5450
    %v5620 = vadd.f32 %v4095, %v5451
    %v5621 = vadd.f32 %v4096, %v5452
    %v5622 = vadd.f32 %v4097, %v5453
    %v5623 = vadd.f32 %v4098, %v5454
    %v5624 = vadd.f32 %v4099, %v5455
    %v5625 = vadd.f32 %v4100, %v5456
    %v5626 = vadd.f32 %v4101, %v5457
    %v5627 = vadd.f32 %v4102, %v5458
    %v5628 = vadd.f32 %v4103, %v5459
    %v5629 = vadd.f32 %v4104, %v5460
    %v5630 = vadd.f32 %v4105, %v5461
    %v5631 = vadd.f32 %v4106, %v5462
    %v5632 = vadd.f32 %v4107, %v5463
    %v5633 = vadd.f32 %v4108, %v5464
    %v5634 = vadd.f32 %v4109, %v5465
    %v5635 = vadd.f32 %v4110, %v5466
    %v5636 = vadd.f32 %v4111, %v5467
    %v5637 = vadd.f32 %v4112, %v5468
    %v5638 = vadd.f32 %v4113, %v5469
    %v5639 = vadd.f32 %v4114, %v5470
    %v5640 = vadd.f32 %v4115, %v5471
    %v5641 = vadd.f32 %v4116, %v5472
    %v5642 = vadd.f32 %v4117, %v5473
    %v5643 = vadd.f32 %v4118, %v5474
    %v5644 = vadd.f32 %v4119, %v5475
    %v5645 = vadd.f32 %v4120, %v5476
    %v5646 = vadd.f32 %v4121, %v5477
    %v5647 = vadd.f32 %v4122, %v5478
    %v5648 = vadd.f32 %v4123, %v5479
    %v5649 = vadd.f32 %v4124, %v5480
    %v5650 = vadd.f32 %v4125, %v5481
    %v5651 = vadd.f32 %v4126, %v5482
    %v5652 = vadd.f32 %v4127, %v5483
    %v5653 = vadd.f32 %v4128, %v5484
    %v5654 = vadd.f32 %v4129, %v5485
    %v5655 = vadd.f32 %v4130, %v5486
    %v5656 = vadd.f32 %v4131, %v5487
    %v5657 = vadd.f32 %v4132, %v5488
    %v5658 = vadd.f32 %v4133, %v5489
    %v5659 = vadd.f32 %v4134, %v5490
    %v5660 = vadd.f32 %v4135, %v5491
    %v5661 = vadd.f32 %v4136, %v5492
    %v5662 = vadd.f32 %v4137, %v5493
    %v5663 = vadd.f32 %v4138, %v5494
    %v5664 = vadd.f32 %v4139, %v5495
    %v5665 = vadd.f32 %v4140, %v5496
    %v5666 = vadd.f32 %v4141, %v5497
    %v5667 = vadd.f32 %v4142, %v5498
    %v5668 = vadd.f32 %v4143, %v5499
    %v5669 = vadd.f32 %v4144, %v5500
    %v5670 = vadd.f32 %v4145, %v5501
    %v5671 = vadd.f32 %v4146, %v5502
    %v5672 = vadd.f32 %v4147, %v5503
    %v5673 = vadd.f32 %v4148, %v5504
    %v5674 = vadd.f32 %v4149, %v5505
    %v5675 = vadd.f32 %v4150, %v5506
    %v5676 = vadd.f32 %v4151, %v5507
    %v5677 = vadd.f32 %v4152, %v5508
    %v5678 = vadd.f32 %v4153, %v5509
    %v5679 = vadd.f32 %v4154, %v5510
    %v5680 = vadd.f32 %v4155, %v5511
    %v5681 = vadd.f32 %v4156, %v5512
    %v5682 = vadd.f32 %v4157, %v5513
    %v5683 = vadd.f32 %v4158, %v5514
    %v5684 = vadd.f32 %v4159, %v5515
    %v5685 = vadd.f32 %v4160, %v5516
    %v5686 = vadd.f32 %v4161, %v5517
    %v5687 = vadd.f32 %v4162, %v5518
    %v5688 = vadd.f32 %v4163, %v5519
    %v5689 = vadd.f32 %v4164, %v5520
    %v5690 = vadd.f32 %v4165, %v5521
    %v5691 = vadd.f32 %v4166, %v5522
    %v5692 = vadd.f32 %v4167, %v5523
    %v5693 = vadd.f32 %v4168, %v5524
    %v5694 = vadd.f32 %v4169, %v5525
    %v5695 = vadd.f32 %v4170, %v5526
    %v5696 = vadd.f32 %v4171, %v5527
    %v5697 = vadd.f32 %v4172, %v5528
    %v5698 = vadd.f32 %v4173, %v5529
    %v5699 = vadd.f32 %v4174, %v5530
    %v5700 = vadd.f32 %v4175, %v5531
    %v5701 = vadd.f32 %v4176, %v5532
    %v5702 = vadd.f32 %v4177, %v5533
    %v5703 = vadd.f32 %v4178, %v5534
    %v5704 = vadd.f32 %v4179, %v5535
    %v5705 = vadd.f32 %v4180, %v5536
    %v5706 = vadd.f32 %v4181, %v5537
    %v5707 = vadd.f32 %v4182, %v5538
    %v5708 = vadd.f32 %v4183, %v5539
    %v5709 = vadd.f32 %v4184, %v5540
    %v5710 = vadd.f32 %v4185, %v5541
    %v5711 = vadd.f32 %v4186, %v5542
    %v5712 = vadd.f32 %v4187, %v5543
    %v5713 = vadd.f32 %v4188, %v5544
    %v5714 = vadd.f32 %v4189, %v5545
    %v5715 = vadd.f32 %v4190, %v5546
    %v5716 = vadd.f32 %v4191, %v5547
    %v5717 = vadd.f32 %v4192, %v5548
    %v5718 = vadd.f32 %v4193, %v5549
    %v5719 = vadd.f32 %v4194, %v5550
    %v5720 = vadd.f32 %v4195, %v5551
    %v5721 = vadd.f32 %v4196, %v5552
    %v5722 = vadd.f32 %v4197, %v5553
    %v5723 = vadd.f32 %v4198, %v5554
    %v5724 = vadd.f32 %v4199, %v5555
    %v5725 = vadd.f32 %v4200, %v5556
    %v5726 = vadd.f32 %v4201, %v5557
    %v5727 = vadd.f32 %v4202, %v5558
    %v5728 = vadd.f32 %v4203, %v5559
    %v5729 = vadd.f32 %v4204, %v5560
    %v5730 = vadd.f32 %v4205, %v5561
    %v5731 = vadd.f32 %v4206, %v5562
    %v5732 = vadd.f32 %v4207, %v5563
    %v5733 = vadd.f32 %v4208, %v5564
    %v5734 = vadd.f32 %v4209, %v5565
    %v5735 = vadd.f32 %v4210, %v5566
    %v5736 = vadd.f32 %v4211, %v5567
    %v5737 = vadd.f32 %v4212, %v5568
    %v5738 = vadd.f32 %v4213, %v5569
    %v5739 = vadd.f32 %v4214, %v5570
    %v5740 = vadd.f32 %v4215, %v5571
    %v5741 = vadd.f32 %v4216, %v5572
    %v5742 = vadd.f32 %v4217, %v5573
    %v5743 = vadd.f32 %v4218, %v5574
    %v5744 = vadd.f32 %v4219, %v5575
    %v5745 = vadd.f32 %v4220, %v5576
    %v5746 = vadd.f32 %v4221, %v5577
    %v5747 = vadd.f32 %v4222, %v5578
    %v5748 = vadd.f32 %v4223, %v5579
    %v5749 = vadd.f32 %v4224, %v5580
    %v5750 = vadd.f32 %v4225, %v5581
    %v5751 = vadd.f32 %v4226, %v5582
    %v5752 = vadd.f32 %v4227, %v5583
    %v5753 = vadd.f32 %v4228, %v5584
    %v5754 = vadd.f32 %v4229, %v5585
    %v5755 = vadd.f32 %v4230, %v5586
    %v5756 = vadd.f32 %v4231, %v5587
    %v5757 = vadd.f32 %v4232, %v5588
    %v5758 = vadd.f32 %v4233, %v5589
    %v5759 = vadd.f32 %v4234, %v5590
    %v5760 = vadd.f32 %v4235, %v5591
    %v5761 = vadd.f32 %v4236, %v5592
    %v5762 = vadd.f32 %v4237, %v5593
    %v5763 = vadd.f32 %v4238, %v5594
    %v5764 = vadd.f32 %v4239, %v5595
    %v5765 = vadd.f32 %v4240, %v5596
    %v5766 = vadd.f32 %v4241, %v5597
    %v5767 = vadd.f32 %v4242, %v5598
    %v5768 = vadd.f32 %v4243, %v5599
    %v5769 = vadd.f32 %v4244, %v5600
    %v5770 = vadd.f32 %v4245, %v5601
    %v5771 = vadd.f32 %v4246, %v5602
    %v5772 = vadd.f32 %v4247, %v5603
    %v5773 = vadd.f32 %v4248, %v5604
    %v5774 = vadd.f32 %v4249, %v5605
    %v5775 = vadd.f32 %v4250, %v5606
    %v5776 = vadd.f32 %v4251, %v5607
    %v5777 = vadd.f32 %v4252, %v5608
    %v5778 = vadd.f32 %v4253, %v5609
    %v5779 = vadd.f32 %v4254, %v5610
    %v5780 = vadd.f32 %v4255, %v5611
    %v5781 = vadd.f32 %v4256, %v5612
    %v5782 = vpack.c.bf16 %v68, %v68
    %v5783 = vpack.c.bf16 %v70, %v70
    %v5784 = vpack.c.bf16 %v72, %v72
    %v5785 = vpack.c.bf16 %v74, %v74
    %v5786 = vpack.c.bf16 %v76, %v76
    %v5787 = vpack.c.bf16 %v78, %v78
    %v5788 = vpack.c.bf16 %v80, %v80
    %v5789 = vpack.c.bf16 %v82, %v82
    %v5790 = vpack.c.bf16 %v84, %v84
    %v5791 = vpack.c.bf16 %v86, %v86
    %v5792 = vpack.c.bf16 %v88, %v88
    %v5793 = vpack.c.bf16 %v90, %v90
    %v5794 = vpack.c.bf16 %v92, %v92
    %v5795 = vpack.c.bf16 %v122, %v122
    %v5796 = vpack.c.bf16 %v124, %v124
    %v5797 = vpack.c.bf16 %v126, %v126
    %v5798 = vpack.c.bf16 %v128, %v128
    %v5799 = vpack.c.bf16 %v130, %v130
    %v5800 = vpack.c.bf16 %v132, %v132
    %v5801 = vpack.c.bf16 %v134, %v134
    %v5802 = vpack.c.bf16 %v136, %v136
    %v5803 = vpack.c.bf16 %v138, %v138
    %v5804 = vpack.c.bf16 %v140, %v140
    %v5805 = vpack.c.bf16 %v142, %v142
    %v5806 = vpack.c.bf16 %v144, %v144
    %v5807 = vpack.c.bf16 %v146, %v146
    %v5808 = vpack.c.bf16 %v176, %v176
    %v5809 = vpack.c.bf16 %v178, %v178
    %v5810 = vpack.c.bf16 %v180, %v180
    %v5811 = vpack.c.bf16 %v182, %v182
    %v5812 = vpack.c.bf16 %v184, %v184
    %v5813 = vpack.c.bf16 %v186, %v186
    %v5814 = vpack.c.bf16 %v188, %v188
    %v5815 = vpack.c.bf16 %v190, %v190
    %v5816 = vpack.c.bf16 %v192, %v192
    %v5817 = vpack.c.bf16 %v194, %v194
    %v5818 = vpack.c.bf16 %v196, %v196
    %v5819 = vpack.c.bf16 %v198, %v198
    %v5820 = vpack.c.bf16 %v200, %v200
    %v5821 = vpack.c.bf16 %v230, %v230
    %v5822 = vpack.c.bf16 %v232, %v232
    %v5823 = vpack.c.bf16 %v234, %v234
    %v5824 = vpack.c.bf16 %v236, %v236
    %v5825 = vpack.c.bf16 %v238, %v238
    %v5826 = vpack.c.bf16 %v240, %v240
    %v5827 = vpack.c.bf16 %v242, %v242
    %v5828 = vpack.c.bf16 %v244, %v244
    %v5829 = vpack.c.bf16 %v246, %v246
    %v5830 = vpack.c.bf16 %v248, %v248
    %v5831 = vpack.c.bf16 %v250, %v250
    %v5832 = vpack.c.bf16 %v252, %v252
    %v5833 = vpack.c.bf16 %v254, %v254
    %v5834 = vpack.c.bf16 %v284, %v284
    %v5835 = vpack.c.bf16 %v286, %v286
    %v5836 = vpack.c.bf16 %v288, %v288
    %v5837 = vpack.c.bf16 %v290, %v290
    %v5838 = vpack.c.bf16 %v292, %v292
    %v5839 = vpack.c.bf16 %v294, %v294
    %v5840 = vpack.c.bf16 %v296, %v296
    %v5841 = vpack.c.bf16 %v298, %v298
    %v5842 = vpack.c.bf16 %v300, %v300
    %v5843 = vpack.c.bf16 %v302, %v302
    %v5844 = vpack.c.bf16 %v304, %v304
    %v5845 = vpack.c.bf16 %v306, %v306
    %v5846 = vpack.c.bf16 %v308, %v308
    %v5847 = vpack.c.bf16 %v338, %v338
    %v5848 = vpack.c.bf16 %v340, %v340
    %v5849 = vpack.c.bf16 %v342, %v342
    %v5850 = vpack.c.bf16 %v344, %v344
    %v5851 = vpack.c.bf16 %v346, %v346
    %v5852 = vpack.c.bf16 %v348, %v348
    %v5853 = vpack.c.bf16 %v350, %v350
    %v5854 = vpack.c.bf16 %v352, %v352
    %v5855 = vpack.c.bf16 %v354, %v354
    %v5856 = vpack.c.bf16 %v356, %v356
    %v5857 = vpack.c.bf16 %v358, %v358
    %v5858 = vpack.c.bf16 %v360, %v360
    %v5859 = vpack.c.bf16 %v362, %v362
    %v5860 = vpack.c.bf16 %v392, %v392
    %v5861 = vpack.c.bf16 %v394, %v394
    %v5862 = vpack.c.bf16 %v396, %v396
    %v5863 = vpack.c.bf16 %v398, %v398
    %v5864 = vpack.c.bf16 %v400, %v400
    %v5865 = vpack.c.bf16 %v402, %v402
    %v5866 = vpack.c.bf16 %v404, %v404
    %v5867 = vpack.c.bf16 %v406, %v406
    %v5868 = vpack.c.bf16 %v408, %v408
    %v5869 = vpack.c.bf16 %v410, %v410
    %v5870 = vpack.c.bf16 %v412, %v412
    %v5871 = vpack.c.bf16 %v414, %v414
    %v5872 = vpack.c.bf16 %v416, %v416
    %v5873 = vpack.c.bf16 %v446, %v446
    %v5874 = vpack.c.bf16 %v448, %v448
    %v5875 = vpack.c.bf16 %v450, %v450
    %v5876 = vpack.c.bf16 %v452, %v452
    %v5877 = vpack.c.bf16 %v454, %v454
    %v5878 = vpack.c.bf16 %v456, %v456
    %v5879 = vpack.c.bf16 %v458, %v458
    %v5880 = vpack.c.bf16 %v460, %v460
    %v5881 = vpack.c.bf16 %v462, %v462
    %v5882 = vpack.c.bf16 %v464, %v464
    %v5883 = vpack.c.bf16 %v466, %v466
    %v5884 = vpack.c.bf16 %v468, %v468
    %v5885 = vpack.c.bf16 %v470, %v470
    %v5886 = vpack.c.bf16 %v500, %v500
    %v5887 = vpack.c.bf16 %v502, %v502
    %v5888 = vpack.c.bf16 %v504, %v504
    %v5889 = vpack.c.bf16 %v506, %v506
    %v5890 = vpack.c.bf16 %v508, %v508
    %v5891 = vpack.c.bf16 %v510, %v510
    %v5892 = vpack.c.bf16 %v512, %v512
    %v5893 = vpack.c.bf16 %v514, %v514
    %v5894 = vpack.c.bf16 %v516, %v516
    %v5895 = vpack.c.bf16 %v518, %v518
    %v5896 = vpack.c.bf16 %v520, %v520
    %v5897 = vpack.c.bf16 %v522, %v522
    %v5898 = vpack.c.bf16 %v524, %v524
    %v5899 = vpack.c.bf16 %v554, %v554
    %v5900 = vpack.c.bf16 %v556, %v556
    %v5901 = vpack.c.bf16 %v558, %v558
    %v5902 = vpack.c.bf16 %v560, %v560
    %v5903 = vpack.c.bf16 %v562, %v562
    %v5904 = vpack.c.bf16 %v564, %v564
    %v5905 = vpack.c.bf16 %v566, %v566
    %v5906 = vpack.c.bf16 %v568, %v568
    %v5907 = vpack.c.bf16 %v570, %v570
    %v5908 = vpack.c.bf16 %v572, %v572
    %v5909 = vpack.c.bf16 %v574, %v574
    %v5910 = vpack.c.bf16 %v576, %v576
    %v5911 = vpack.c.bf16 %v578, %v578
    %v5912 = vpack.c.bf16 %v608, %v608
    %v5913 = vpack.c.bf16 %v610, %v610
    %v5914 = vpack.c.bf16 %v612, %v612
    %v5915 = vpack.c.bf16 %v614, %v614
    %v5916 = vpack.c.bf16 %v616, %v616
    %v5917 = vpack.c.bf16 %v618, %v618
    %v5918 = vpack.c.bf16 %v620, %v620
    %v5919 = vpack.c.bf16 %v622, %v622
    %v5920 = vpack.c.bf16 %v624, %v624
    %v5921 = vpack.c.bf16 %v626, %v626
    %v5922 = vpack.c.bf16 %v628, %v628
    %v5923 = vpack.c.bf16 %v630, %v630
    %v5924 = vpack.c.bf16 %v632, %v632
    %v5925 = vpack.c.bf16 %v662, %v662
    %v5926 = vpack.c.bf16 %v664, %v664
    %v5927 = vpack.c.bf16 %v666, %v666
    %v5928 = vpack.c.bf16 %v668, %v668
    %v5929 = vpack.c.bf16 %v670, %v670
    %v5930 = vpack.c.bf16 %v672, %v672
    %v5931 = vpack.c.bf16 %v674, %v674
    %v5932 = vpack.c.bf16 %v676, %v676
    %v5933 = vpack.c.bf16 %v678, %v678
    %v5934 = vpack.c.bf16 %v680, %v680
    %v5935 = vpack.c.bf16 %v682, %v682
    %v5936 = vpack.c.bf16 %v684, %v684
    %v5937 = vpack.c.bf16 %v686, %v686
    %v5938 = vpack.c.bf16 %v716, %v716
    %v5939 = vpack.c.bf16 %v718, %v718
    %v5940 = vpack.c.bf16 %v720, %v720
    %v5941 = vpack.c.bf16 %v722, %v722
    %v5942 = vpack.c.bf16 %v724, %v724
    %v5943 = vpack.c.bf16 %v726, %v726
    %v5944 = vpack.c.bf16 %v728, %v728
    %v5945 = vpack.c.bf16 %v730, %v730
    %v5946 = vpack.c.bf16 %v732, %v732
    %v5947 = vpack.c.bf16 %v734, %v734
    %v5948 = vpack.c.bf16 %v736, %v736
    %v5949 = vpack.c.bf16 %v738, %v738
    %v5950 = vpack.c.bf16 %v740, %v740
    %v5951 = vunpack.c.l.bf16 %v5782
    %v5952 = vunpack.c.l.bf16 %v5783
    %v5953 = vunpack.c.l.bf16 %v5784
    %v5954 = vunpack.c.l.bf16 %v5785
    %v5955 = vunpack.c.l.bf16 %v5786
    %v5956 = vunpack.c.l.bf16 %v5787
    %v5957 = vunpack.c.l.bf16 %v5788
    %v5958 = vunpack.c.l.bf16 %v5789
    %v5959 = vunpack.c.l.bf16 %v5790
    %v5960 = vunpack.c.l.bf16 %v5791
    %v5961 = vunpack.c.l.bf16 %v5792
    %v5962 = vunpack.c.l.bf16 %v5793
    %v5963 = vunpack.c.l.bf16 %v5794
    %v5964 = vunpack.c.l.bf16 %v5795
    %v5965 = vunpack.c.l.bf16 %v5796
    %v5966 = vunpack.c.l.bf16 %v5797
    %v5967 = vunpack.c.l.bf16 %v5798
    %v5968 = vunpack.c.l.bf16 %v5799
    %v5969 = vunpack.c.l.bf16 %v5800
    %v5970 = vunpack.c.l.bf16 %v5801
    %v5971 = vunpack.c.l.bf16 %v5802
    %v5972 = vunpack.c.l.bf16 %v5803
    %v5973 = vunpack.c.l.bf16 %v5804
    %v5974 = vunpack.c.l.bf16 %v5805
    %v5975 = vunpack.c.l.bf16 %v5806
    %v5976 = vunpack.c.l.bf16 %v5807
    %v5977 = vunpack.c.l.bf16 %v5808
    %v5978 = vunpack.c.l.bf16 %v5809
    %v5979 = vunpack.c.l.bf16 %v5810
    %v5980 = vunpack.c.l.bf16 %v5811
    %v5981 = vunpack.c.l.bf16 %v5812
    %v5982 = vunpack.c.l.bf16 %v5813
    %v5983 = vunpack.c.l.bf16 %v5814
    %v5984 = vunpack.c.l.bf16 %v5815
    %v5985 = vunpack.c.l.bf16 %v5816
    %v5986 = vunpack.c.l.bf16 %v5817
    %v5987 = vunpack.c.l.bf16 %v5818
    %v5988 = vunpack.c.l.bf16 %v5819
    %v5989 = vunpack.c.l.bf16 %v5820
    %v5990 = vunpack.c.l.bf16 %v5821
    %v5991 = vunpack.c.l.bf16 %v5822
    %v5992 = vunpack.c.l.bf16 %v5823
    %v5993 = vunpack.c.l.bf16 %v5824
    %v5994 = vunpack.c.l.bf16 %v5825
    %v5995 = vunpack.c.l.bf16 %v5826
    %v5996 = vunpack.c.l.bf16 %v5827
    %v5997 = vunpack.c.l.bf16 %v5828
    %v5998 = vunpack.c.l.bf16 %v5829
    %v5999 = vunpack.c.l.bf16 %v5830
    %v6000 = vunpack.c.l.bf16 %v5831
    %v6001 = vunpack.c.l.bf16 %v5832
    %v6002 = vunpack.c.l.bf16 %v5833
    %v6003 = vunpack.c.l.bf16 %v5834
    %v6004 = vunpack.c.l.bf16 %v5835
    %v6005 = vunpack.c.l.bf16 %v5836
    %v6006 = vunpack.c.l.bf16 %v5837
    %v6007 = vunpack.c.l.bf16 %v5838
    %v6008 = vunpack.c.l.bf16 %v5839
    %v6009 = vunpack.c.l.bf16 %v5840
    %v6010 = vunpack.c.l.bf16 %v5841
    %v6011 = vunpack.c.l.bf16 %v5842
    %v6012 = vunpack.c.l.bf16 %v5843
    %v6013 = vunpack.c.l.bf16 %v5844
    %v6014 = vunpack.c.l.bf16 %v5845
    %v6015 = vunpack.c.l.bf16 %v5846
    %v6016 = vunpack.c.l.bf16 %v5847
    %v6017 = vunpack.c.l.bf16 %v5848
    %v6018 = vunpack.c.l.bf16 %v5849
    %v6019 = vunpack.c.l.bf16 %v5850
    %v6020 = vunpack.c.l.bf16 %v5851
    %v6021 = vunpack.c.l.bf16 %v5852
    %v6022 = vunpack.c.l.bf16 %v5853
    %v6023 = vunpack.c.l.bf16 %v5854
    %v6024 = vunpack.c.l.bf16 %v5855
    %v6025 = vunpack.c.l.bf16 %v5856
    %v6026 = vunpack.c.l.bf16 %v5857
    %v6027 = vunpack.c.l.bf16 %v5858
    %v6028 = vunpack.c.l.bf16 %v5859
    %v6029 = vunpack.c.l.bf16 %v5860
    %v6030 = vunpack.c.l.bf16 %v5861
    %v6031 = vunpack.c.l.bf16 %v5862
    %v6032 = vunpack.c.l.bf16 %v5863
    %v6033 = vunpack.c.l.bf16 %v5864
    %v6034 = vunpack.c.l.bf16 %v5865
    %v6035 = vunpack.c.l.bf16 %v5866
    %v6036 = vunpack.c.l.bf16 %v5867
    %v6037 = vunpack.c.l.bf16 %v5868
    %v6038 = vunpack.c.l.bf16 %v5869
    %v6039 = vunpack.c.l.bf16 %v5870
    %v6040 = vunpack.c.l.bf16 %v5871
    %v6041 = vunpack.c.l.bf16 %v5872
    %v6042 = vunpack.c.l.bf16 %v5873
    %v6043 = vunpack.c.l.bf16 %v5874
    %v6044 = vunpack.c.l.bf16 %v5875
    %v6045 = vunpack.c.l.bf16 %v5876
    %v6046 = vunpack.c.l.bf16 %v5877
    %v6047 = vunpack.c.l.bf16 %v5878
    %v6048 = vunpack.c.l.bf16 %v5879
    %v6049 = vunpack.c.l.bf16 %v5880
    %v6050 = vunpack.c.l.bf16 %v5881
    %v6051 = vunpack.c.l.bf16 %v5882
    %v6052 = vunpack.c.l.bf16 %v5883
    %v6053 = vunpack.c.l.bf16 %v5884
    %v6054 = vunpack.c.l.bf16 %v5885
    %v6055 = vunpack.c.l.bf16 %v5886
    %v6056 = vunpack.c.l.bf16 %v5887
    %v6057 = vunpack.c.l.bf16 %v5888
    %v6058 = vunpack.c.l.bf16 %v5889
    %v6059 = vunpack.c.l.bf16 %v5890
    %v6060 = vunpack.c.l.bf16 %v5891
    %v6061 = vunpack.c.l.bf16 %v5892
    %v6062 = vunpack.c.l.bf16 %v5893
    %v6063 = vunpack.c.l.bf16 %v5894
    %v6064 = vunpack.c.l.bf16 %v5895
    %v6065 = vunpack.c.l.bf16 %v5896
    %v6066 = vunpack.c.l.bf16 %v5897
    %v6067 = vunpack.c.l.bf16 %v5898
    %v6068 = vunpack.c.l.bf16 %v5899
    %v6069 = vunpack.c.l.bf16 %v5900
    %v6070 = vunpack.c.l.bf16 %v5901
    %v6071 = vunpack.c.l.bf16 %v5902
    %v6072 = vunpack.c.l.bf16 %v5903
    %v6073 = vunpack.c.l.bf16 %v5904
    %v6074 = vunpack.c.l.bf16 %v5905
    %v6075 = vunpack.c.l.bf16 %v5906
    %v6076 = vunpack.c.l.bf16 %v5907
    %v6077 = vunpack.c.l.bf16 %v5908
    %v6078 = vunpack.c.l.bf16 %v5909
    %v6079 = vunpack.c.l.bf16 %v5910
    %v6080 = vunpack.c.l.bf16 %v5911
    %v6081 = vunpack.c.l.bf16 %v5912
    %v6082 = vunpack.c.l.bf16 %v5913
    %v6083 = vunpack.c.l.bf16 %v5914
    %v6084 = vunpack.c.l.bf16 %v5915
    %v6085 = vunpack.c.l.bf16 %v5916
    %v6086 = vunpack.c.l.bf16 %v5917
    %v6087 = vunpack.c.l.bf16 %v5918
    %v6088 = vunpack.c.l.bf16 %v5919
    %v6089 = vunpack.c.l.bf16 %v5920
    %v6090 = vunpack.c.l.bf16 %v5921
    %v6091 = vunpack.c.l.bf16 %v5922
    %v6092 = vunpack.c.l.bf16 %v5923
    %v6093 = vunpack.c.l.bf16 %v5924
    %v6094 = vunpack.c.l.bf16 %v5925
    %v6095 = vunpack.c.l.bf16 %v5926
    %v6096 = vunpack.c.l.bf16 %v5927
    %v6097 = vunpack.c.l.bf16 %v5928
    %v6098 = vunpack.c.l.bf16 %v5929
    %v6099 = vunpack.c.l.bf16 %v5930
    %v6100 = vunpack.c.l.bf16 %v5931
    %v6101 = vunpack.c.l.bf16 %v5932
    %v6102 = vunpack.c.l.bf16 %v5933
    %v6103 = vunpack.c.l.bf16 %v5934
    %v6104 = vunpack.c.l.bf16 %v5935
    %v6105 = vunpack.c.l.bf16 %v5936
    %v6106 = vunpack.c.l.bf16 %v5937
    %v6107 = vunpack.c.l.bf16 %v5938
    %v6108 = vunpack.c.l.bf16 %v5939
    %v6109 = vunpack.c.l.bf16 %v5940
    %v6110 = vunpack.c.l.bf16 %v5941
    %v6111 = vunpack.c.l.bf16 %v5942
    %v6112 = vunpack.c.l.bf16 %v5943
    %v6113 = vunpack.c.l.bf16 %v5944
    %v6114 = vunpack.c.l.bf16 %v5945
    %v6115 = vunpack.c.l.bf16 %v5946
    %v6116 = vunpack.c.l.bf16 %v5947
    %v6117 = vunpack.c.l.bf16 %v5948
    %v6118 = vunpack.c.l.bf16 %v5949
    %v6119 = vunpack.c.l.bf16 %v5950
    %6121 = vset.pattern.permute.xlu0 0
    %6122 = vperm.xlu0 %6121, %v5951
    %v6123 = vpop.permute.xlu0 %6122
    %6126 = vset.pattern.permute.xlu0 0
    %6127 = vperm.xlu0 %6126, %v5952
    %v6128 = vpop.permute.xlu0 %6127
    %6131 = vset.pattern.permute.xlu0 0
    %6132 = vperm.xlu0 %6131, %v5953
    %v6133 = vpop.permute.xlu0 %6132
    %6136 = vset.pattern.permute.xlu0 0
    %6137 = vperm.xlu0 %6136, %v5954
    %v6138 = vpop.permute.xlu0 %6137
    %6141 = vset.pattern.permute.xlu0 0
    %6142 = vperm.xlu0 %6141, %v5955
    %v6143 = vpop.permute.xlu0 %6142
    %6146 = vset.pattern.permute.xlu0 0
    %6147 = vperm.xlu0 %6146, %v5956
    %v6148 = vpop.permute.xlu0 %6147
    %6151 = vset.pattern.permute.xlu0 0
    %6152 = vperm.xlu0 %6151, %v5957
    %v6153 = vpop.permute.xlu0 %6152
    %6156 = vset.pattern.permute.xlu0 0
    %6157 = vperm.xlu0 %6156, %v5958
    %v6158 = vpop.permute.xlu0 %6157
    %6161 = vset.pattern.permute.xlu0 0
    %6162 = vperm.xlu0 %6161, %v5959
    %v6163 = vpop.permute.xlu0 %6162
    %6166 = vset.pattern.permute.xlu0 0
    %6167 = vperm.xlu0 %6166, %v5960
    %v6168 = vpop.permute.xlu0 %6167
    %6171 = vset.pattern.permute.xlu0 0
    %6172 = vperm.xlu0 %6171, %v5961
    %v6173 = vpop.permute.xlu0 %6172
    %6176 = vset.pattern.permute.xlu0 0
    %6177 = vperm.xlu0 %6176, %v5962
    %v6178 = vpop.permute.xlu0 %6177
    %6181 = vset.pattern.permute.xlu0 0
    %6182 = vperm.xlu0 %6181, %v5963
    %v6183 = vpop.permute.xlu0 %6182
    %6186 = vset.pattern.permute.xlu0 0
    %6187 = vperm.xlu0 %6186, %v5964
    %v6188 = vpop.permute.xlu0 %6187
    %6191 = vset.pattern.permute.xlu0 0
    %6192 = vperm.xlu0 %6191, %v5965
    %v6193 = vpop.permute.xlu0 %6192
    %6196 = vset.pattern.permute.xlu0 0
    %6197 = vperm.xlu0 %6196, %v5966
    %v6198 = vpop.permute.xlu0 %6197
    %6201 = vset.pattern.permute.xlu0 0
    %6202 = vperm.xlu0 %6201, %v5967
    %v6203 = vpop.permute.xlu0 %6202
    %6206 = vset.pattern.permute.xlu0 0
    %6207 = vperm.xlu0 %6206, %v5968
    %v6208 = vpop.permute.xlu0 %6207
    %6211 = vset.pattern.permute.xlu0 0
    %6212 = vperm.xlu0 %6211, %v5969
    %v6213 = vpop.permute.xlu0 %6212
    %6216 = vset.pattern.permute.xlu0 0
    %6217 = vperm.xlu0 %6216, %v5970
    %v6218 = vpop.permute.xlu0 %6217
    %6221 = vset.pattern.permute.xlu0 0
    %6222 = vperm.xlu0 %6221, %v5971
    %v6223 = vpop.permute.xlu0 %6222
    %6226 = vset.pattern.permute.xlu0 0
    %6227 = vperm.xlu0 %6226, %v5972
    %v6228 = vpop.permute.xlu0 %6227
    %6231 = vset.pattern.permute.xlu0 0
    %6232 = vperm.xlu0 %6231, %v5973
    %v6233 = vpop.permute.xlu0 %6232
    %6236 = vset.pattern.permute.xlu0 0
    %6237 = vperm.xlu0 %6236, %v5974
    %v6238 = vpop.permute.xlu0 %6237
    %6241 = vset.pattern.permute.xlu0 0
    %6242 = vperm.xlu0 %6241, %v5975
    %v6243 = vpop.permute.xlu0 %6242
    %6246 = vset.pattern.permute.xlu0 0
    %6247 = vperm.xlu0 %6246, %v5976
    %v6248 = vpop.permute.xlu0 %6247
    %6251 = vset.pattern.permute.xlu0 0
    %6252 = vperm.xlu0 %6251, %v5977
    %v6253 = vpop.permute.xlu0 %6252
    %6256 = vset.pattern.permute.xlu0 0
    %6257 = vperm.xlu0 %6256, %v5978
    %v6258 = vpop.permute.xlu0 %6257
    %6261 = vset.pattern.permute.xlu0 0
    %6262 = vperm.xlu0 %6261, %v5979
    %v6263 = vpop.permute.xlu0 %6262
    %6266 = vset.pattern.permute.xlu0 0
    %6267 = vperm.xlu0 %6266, %v5980
    %v6268 = vpop.permute.xlu0 %6267
    %6271 = vset.pattern.permute.xlu0 0
    %6272 = vperm.xlu0 %6271, %v5981
    %v6273 = vpop.permute.xlu0 %6272
    %6276 = vset.pattern.permute.xlu0 0
    %6277 = vperm.xlu0 %6276, %v5982
    %v6278 = vpop.permute.xlu0 %6277
    %6281 = vset.pattern.permute.xlu0 0
    %6282 = vperm.xlu0 %6281, %v5983
    %v6283 = vpop.permute.xlu0 %6282
    %6286 = vset.pattern.permute.xlu0 0
    %6287 = vperm.xlu0 %6286, %v5984
    %v6288 = vpop.permute.xlu0 %6287
    %6291 = vset.pattern.permute.xlu0 0
    %6292 = vperm.xlu0 %6291, %v5985
    %v6293 = vpop.permute.xlu0 %6292
    %6296 = vset.pattern.permute.xlu0 0
    %6297 = vperm.xlu0 %6296, %v5986
    %v6298 = vpop.permute.xlu0 %6297
    %6301 = vset.pattern.permute.xlu0 0
    %6302 = vperm.xlu0 %6301, %v5987
    %v6303 = vpop.permute.xlu0 %6302
    %6306 = vset.pattern.permute.xlu0 0
    %6307 = vperm.xlu0 %6306, %v5988
    %v6308 = vpop.permute.xlu0 %6307
    %6311 = vset.pattern.permute.xlu0 0
    %6312 = vperm.xlu0 %6311, %v5989
    %v6313 = vpop.permute.xlu0 %6312
    %6316 = vset.pattern.permute.xlu0 0
    %6317 = vperm.xlu0 %6316, %v5990
    %v6318 = vpop.permute.xlu0 %6317
    %6321 = vset.pattern.permute.xlu0 0
    %6322 = vperm.xlu0 %6321, %v5991
    %v6323 = vpop.permute.xlu0 %6322
    %6326 = vset.pattern.permute.xlu0 0
    %6327 = vperm.xlu0 %6326, %v5992
    %v6328 = vpop.permute.xlu0 %6327
    %6331 = vset.pattern.permute.xlu0 0
    %6332 = vperm.xlu0 %6331, %v5993
    %v6333 = vpop.permute.xlu0 %6332
    %6336 = vset.pattern.permute.xlu0 0
    %6337 = vperm.xlu0 %6336, %v5994
    %v6338 = vpop.permute.xlu0 %6337
    %6341 = vset.pattern.permute.xlu0 0
    %6342 = vperm.xlu0 %6341, %v5995
    %v6343 = vpop.permute.xlu0 %6342
    %6346 = vset.pattern.permute.xlu0 0
    %6347 = vperm.xlu0 %6346, %v5996
    %v6348 = vpop.permute.xlu0 %6347
    %6351 = vset.pattern.permute.xlu0 0
    %6352 = vperm.xlu0 %6351, %v5997
    %v6353 = vpop.permute.xlu0 %6352
    %6356 = vset.pattern.permute.xlu0 0
    %6357 = vperm.xlu0 %6356, %v5998
    %v6358 = vpop.permute.xlu0 %6357
    %6361 = vset.pattern.permute.xlu0 0
    %6362 = vperm.xlu0 %6361, %v5999
    %v6363 = vpop.permute.xlu0 %6362
    %6366 = vset.pattern.permute.xlu0 0
    %6367 = vperm.xlu0 %6366, %v6000
    %v6368 = vpop.permute.xlu0 %6367
    %6371 = vset.pattern.permute.xlu0 0
    %6372 = vperm.xlu0 %6371, %v6001
    %v6373 = vpop.permute.xlu0 %6372
    %6376 = vset.pattern.permute.xlu0 0
    %6377 = vperm.xlu0 %6376, %v6002
    %v6378 = vpop.permute.xlu0 %6377
    %6381 = vset.pattern.permute.xlu0 0
    %6382 = vperm.xlu0 %6381, %v6003
    %v6383 = vpop.permute.xlu0 %6382
    %6386 = vset.pattern.permute.xlu0 0
    %6387 = vperm.xlu0 %6386, %v6004
    %v6388 = vpop.permute.xlu0 %6387
    %6391 = vset.pattern.permute.xlu0 0
    %6392 = vperm.xlu0 %6391, %v6005
    %v6393 = vpop.permute.xlu0 %6392
    %6396 = vset.pattern.permute.xlu0 0
    %6397 = vperm.xlu0 %6396, %v6006
    %v6398 = vpop.permute.xlu0 %6397
    %6401 = vset.pattern.permute.xlu0 0
    %6402 = vperm.xlu0 %6401, %v6007
    %v6403 = vpop.permute.xlu0 %6402
    %6406 = vset.pattern.permute.xlu0 0
    %6407 = vperm.xlu0 %6406, %v6008
    %v6408 = vpop.permute.xlu0 %6407
    %6411 = vset.pattern.permute.xlu0 0
    %6412 = vperm.xlu0 %6411, %v6009
    %v6413 = vpop.permute.xlu0 %6412
    %6416 = vset.pattern.permute.xlu0 0
    %6417 = vperm.xlu0 %6416, %v6010
    %v6418 = vpop.permute.xlu0 %6417
    %6421 = vset.pattern.permute.xlu0 0
    %6422 = vperm.xlu0 %6421, %v6011
    %v6423 = vpop.permute.xlu0 %6422
    %6426 = vset.pattern.permute.xlu0 0
    %6427 = vperm.xlu0 %6426, %v6012
    %v6428 = vpop.permute.xlu0 %6427
    %6431 = vset.pattern.permute.xlu0 0
    %6432 = vperm.xlu0 %6431, %v6013
    %v6433 = vpop.permute.xlu0 %6432
    %6436 = vset.pattern.permute.xlu0 0
    %6437 = vperm.xlu0 %6436, %v6014
    %v6438 = vpop.permute.xlu0 %6437
    %6441 = vset.pattern.permute.xlu0 0
    %6442 = vperm.xlu0 %6441, %v6015
    %v6443 = vpop.permute.xlu0 %6442
    %6446 = vset.pattern.permute.xlu0 0
    %6447 = vperm.xlu0 %6446, %v6016
    %v6448 = vpop.permute.xlu0 %6447
    %6451 = vset.pattern.permute.xlu0 0
    %6452 = vperm.xlu0 %6451, %v6017
    %v6453 = vpop.permute.xlu0 %6452
    %6456 = vset.pattern.permute.xlu0 0
    %6457 = vperm.xlu0 %6456, %v6018
    %v6458 = vpop.permute.xlu0 %6457
    %6461 = vset.pattern.permute.xlu0 0
    %6462 = vperm.xlu0 %6461, %v6019
    %v6463 = vpop.permute.xlu0 %6462
    %6466 = vset.pattern.permute.xlu0 0
    %6467 = vperm.xlu0 %6466, %v6020
    %v6468 = vpop.permute.xlu0 %6467
    %6471 = vset.pattern.permute.xlu0 0
    %6472 = vperm.xlu0 %6471, %v6021
    %v6473 = vpop.permute.xlu0 %6472
    %6476 = vset.pattern.permute.xlu0 0
    %6477 = vperm.xlu0 %6476, %v6022
    %v6478 = vpop.permute.xlu0 %6477
    %6481 = vset.pattern.permute.xlu0 0
    %6482 = vperm.xlu0 %6481, %v6023
    %v6483 = vpop.permute.xlu0 %6482
    %6486 = vset.pattern.permute.xlu0 0
    %6487 = vperm.xlu0 %6486, %v6024
    %v6488 = vpop.permute.xlu0 %6487
    %6491 = vset.pattern.permute.xlu0 0
    %6492 = vperm.xlu0 %6491, %v6025
    %v6493 = vpop.permute.xlu0 %6492
    %6496 = vset.pattern.permute.xlu0 0
    %6497 = vperm.xlu0 %6496, %v6026
    %v6498 = vpop.permute.xlu0 %6497
    %6501 = vset.pattern.permute.xlu0 0
    %6502 = vperm.xlu0 %6501, %v6027
    %v6503 = vpop.permute.xlu0 %6502
    %6506 = vset.pattern.permute.xlu0 0
    %6507 = vperm.xlu0 %6506, %v6028
    %v6508 = vpop.permute.xlu0 %6507
    %6511 = vset.pattern.permute.xlu0 0
    %6512 = vperm.xlu0 %6511, %v6029
    %v6513 = vpop.permute.xlu0 %6512
    %6516 = vset.pattern.permute.xlu0 0
    %6517 = vperm.xlu0 %6516, %v6030
    %v6518 = vpop.permute.xlu0 %6517
    %6521 = vset.pattern.permute.xlu0 0
    %6522 = vperm.xlu0 %6521, %v6031
    %v6523 = vpop.permute.xlu0 %6522
    %6526 = vset.pattern.permute.xlu0 0
    %6527 = vperm.xlu0 %6526, %v6032
    %v6528 = vpop.permute.xlu0 %6527
    %6531 = vset.pattern.permute.xlu0 0
    %6532 = vperm.xlu0 %6531, %v6033
    %v6533 = vpop.permute.xlu0 %6532
    %6536 = vset.pattern.permute.xlu0 0
    %6537 = vperm.xlu0 %6536, %v6034
    %v6538 = vpop.permute.xlu0 %6537
    %6541 = vset.pattern.permute.xlu0 0
    %6542 = vperm.xlu0 %6541, %v6035
    %v6543 = vpop.permute.xlu0 %6542
    %6546 = vset.pattern.permute.xlu0 0
    %6547 = vperm.xlu0 %6546, %v6036
    %v6548 = vpop.permute.xlu0 %6547
    %6551 = vset.pattern.permute.xlu0 0
    %6552 = vperm.xlu0 %6551, %v6037
    %v6553 = vpop.permute.xlu0 %6552
    %6556 = vset.pattern.permute.xlu0 0
    %6557 = vperm.xlu0 %6556, %v6038
    %v6558 = vpop.permute.xlu0 %6557
    %6561 = vset.pattern.permute.xlu0 0
    %6562 = vperm.xlu0 %6561, %v6039
    %v6563 = vpop.permute.xlu0 %6562
    %6566 = vset.pattern.permute.xlu0 0
    %6567 = vperm.xlu0 %6566, %v6040
    %v6568 = vpop.permute.xlu0 %6567
    %6571 = vset.pattern.permute.xlu0 0
    %6572 = vperm.xlu0 %6571, %v6041
    %v6573 = vpop.permute.xlu0 %6572
    %6576 = vset.pattern.permute.xlu0 0
    %6577 = vperm.xlu0 %6576, %v6042
    %v6578 = vpop.permute.xlu0 %6577
    %6581 = vset.pattern.permute.xlu0 0
    %6582 = vperm.xlu0 %6581, %v6043
    %v6583 = vpop.permute.xlu0 %6582
    %6586 = vset.pattern.permute.xlu0 0
    %6587 = vperm.xlu0 %6586, %v6044
    %v6588 = vpop.permute.xlu0 %6587
    %6591 = vset.pattern.permute.xlu0 0
    %6592 = vperm.xlu0 %6591, %v6045
    %v6593 = vpop.permute.xlu0 %6592
    %6596 = vset.pattern.permute.xlu0 0
    %6597 = vperm.xlu0 %6596, %v6046
    %v6598 = vpop.permute.xlu0 %6597
    %6601 = vset.pattern.permute.xlu0 0
    %6602 = vperm.xlu0 %6601, %v6047
    %v6603 = vpop.permute.xlu0 %6602
    %6606 = vset.pattern.permute.xlu0 0
    %6607 = vperm.xlu0 %6606, %v6048
    %v6608 = vpop.permute.xlu0 %6607
    %6611 = vset.pattern.permute.xlu0 0
    %6612 = vperm.xlu0 %6611, %v6049
    %v6613 = vpop.permute.xlu0 %6612
    %6616 = vset.pattern.permute.xlu0 0
    %6617 = vperm.xlu0 %6616, %v6050
    %v6618 = vpop.permute.xlu0 %6617
    %6621 = vset.pattern.permute.xlu0 0
    %6622 = vperm.xlu0 %6621, %v6051
    %v6623 = vpop.permute.xlu0 %6622
    %6626 = vset.pattern.permute.xlu0 0
    %6627 = vperm.xlu0 %6626, %v6052
    %v6628 = vpop.permute.xlu0 %6627
    %6631 = vset.pattern.permute.xlu0 0
    %6632 = vperm.xlu0 %6631, %v6053
    %v6633 = vpop.permute.xlu0 %6632
    %6636 = vset.pattern.permute.xlu0 0
    %6637 = vperm.xlu0 %6636, %v6054
    %v6638 = vpop.permute.xlu0 %6637
    %6641 = vset.pattern.permute.xlu0 0
    %6642 = vperm.xlu0 %6641, %v6055
    %v6643 = vpop.permute.xlu0 %6642
    %6646 = vset.pattern.permute.xlu0 0
    %6647 = vperm.xlu0 %6646, %v6056
    %v6648 = vpop.permute.xlu0 %6647
    %6651 = vset.pattern.permute.xlu0 0
    %6652 = vperm.xlu0 %6651, %v6057
    %v6653 = vpop.permute.xlu0 %6652
    %6656 = vset.pattern.permute.xlu0 0
    %6657 = vperm.xlu0 %6656, %v6058
    %v6658 = vpop.permute.xlu0 %6657
    %6661 = vset.pattern.permute.xlu0 0
    %6662 = vperm.xlu0 %6661, %v6059
    %v6663 = vpop.permute.xlu0 %6662
    %6666 = vset.pattern.permute.xlu0 0
    %6667 = vperm.xlu0 %6666, %v6060
    %v6668 = vpop.permute.xlu0 %6667
    %6671 = vset.pattern.permute.xlu0 0
    %6672 = vperm.xlu0 %6671, %v6061
    %v6673 = vpop.permute.xlu0 %6672
    %6676 = vset.pattern.permute.xlu0 0
    %6677 = vperm.xlu0 %6676, %v6062
    %v6678 = vpop.permute.xlu0 %6677
    %6681 = vset.pattern.permute.xlu0 0
    %6682 = vperm.xlu0 %6681, %v6063
    %v6683 = vpop.permute.xlu0 %6682
    %6686 = vset.pattern.permute.xlu0 0
    %6687 = vperm.xlu0 %6686, %v6064
    %v6688 = vpop.permute.xlu0 %6687
    %6691 = vset.pattern.permute.xlu0 0
    %6692 = vperm.xlu0 %6691, %v6065
    %v6693 = vpop.permute.xlu0 %6692
    %6696 = vset.pattern.permute.xlu0 0
    %6697 = vperm.xlu0 %6696, %v6066
    %v6698 = vpop.permute.xlu0 %6697
    %6701 = vset.pattern.permute.xlu0 0
    %6702 = vperm.xlu0 %6701, %v6067
    %v6703 = vpop.permute.xlu0 %6702
    %6706 = vset.pattern.permute.xlu0 0
    %6707 = vperm.xlu0 %6706, %v6068
    %v6708 = vpop.permute.xlu0 %6707
    %6711 = vset.pattern.permute.xlu0 0
    %6712 = vperm.xlu0 %6711, %v6069
    %v6713 = vpop.permute.xlu0 %6712
    %6716 = vset.pattern.permute.xlu0 0
    %6717 = vperm.xlu0 %6716, %v6070
    %v6718 = vpop.permute.xlu0 %6717
    %6721 = vset.pattern.permute.xlu0 0
    %6722 = vperm.xlu0 %6721, %v6071
    %v6723 = vpop.permute.xlu0 %6722
    %6726 = vset.pattern.permute.xlu0 0
    %6727 = vperm.xlu0 %6726, %v6072
    %v6728 = vpop.permute.xlu0 %6727
    %6731 = vset.pattern.permute.xlu0 0
    %6732 = vperm.xlu0 %6731, %v6073
    %v6733 = vpop.permute.xlu0 %6732
    %6736 = vset.pattern.permute.xlu0 0
    %6737 = vperm.xlu0 %6736, %v6074
    %v6738 = vpop.permute.xlu0 %6737
    %6741 = vset.pattern.permute.xlu0 0
    %6742 = vperm.xlu0 %6741, %v6075
    %v6743 = vpop.permute.xlu0 %6742
    %6746 = vset.pattern.permute.xlu0 0
    %6747 = vperm.xlu0 %6746, %v6076
    %v6748 = vpop.permute.xlu0 %6747
    %6751 = vset.pattern.permute.xlu0 0
    %6752 = vperm.xlu0 %6751, %v6077
    %v6753 = vpop.permute.xlu0 %6752
    %6756 = vset.pattern.permute.xlu0 0
    %6757 = vperm.xlu0 %6756, %v6078
    %v6758 = vpop.permute.xlu0 %6757
    %6761 = vset.pattern.permute.xlu0 0
    %6762 = vperm.xlu0 %6761, %v6079
    %v6763 = vpop.permute.xlu0 %6762
    %6766 = vset.pattern.permute.xlu0 0
    %6767 = vperm.xlu0 %6766, %v6080
    %v6768 = vpop.permute.xlu0 %6767
    %6771 = vset.pattern.permute.xlu0 0
    %6772 = vperm.xlu0 %6771, %v6081
    %v6773 = vpop.permute.xlu0 %6772
    %6776 = vset.pattern.permute.xlu0 0
    %6777 = vperm.xlu0 %6776, %v6082
    %v6778 = vpop.permute.xlu0 %6777
    %6781 = vset.pattern.permute.xlu0 0
    %6782 = vperm.xlu0 %6781, %v6083
    %v6783 = vpop.permute.xlu0 %6782
    %6786 = vset.pattern.permute.xlu0 0
    %6787 = vperm.xlu0 %6786, %v6084
    %v6788 = vpop.permute.xlu0 %6787
    %6791 = vset.pattern.permute.xlu0 0
    %6792 = vperm.xlu0 %6791, %v6085
    %v6793 = vpop.permute.xlu0 %6792
    %6796 = vset.pattern.permute.xlu0 0
    %6797 = vperm.xlu0 %6796, %v6086
    %v6798 = vpop.permute.xlu0 %6797
    %6801 = vset.pattern.permute.xlu0 0
    %6802 = vperm.xlu0 %6801, %v6087
    %v6803 = vpop.permute.xlu0 %6802
    %6806 = vset.pattern.permute.xlu0 0
    %6807 = vperm.xlu0 %6806, %v6088
    %v6808 = vpop.permute.xlu0 %6807
    %6811 = vset.pattern.permute.xlu0 0
    %6812 = vperm.xlu0 %6811, %v6089
    %v6813 = vpop.permute.xlu0 %6812
    %6816 = vset.pattern.permute.xlu0 0
    %6817 = vperm.xlu0 %6816, %v6090
    %v6818 = vpop.permute.xlu0 %6817
    %6821 = vset.pattern.permute.xlu0 0
    %6822 = vperm.xlu0 %6821, %v6091
    %v6823 = vpop.permute.xlu0 %6822
    %6826 = vset.pattern.permute.xlu0 0
    %6827 = vperm.xlu0 %6826, %v6092
    %v6828 = vpop.permute.xlu0 %6827
    %6831 = vset.pattern.permute.xlu0 0
    %6832 = vperm.xlu0 %6831, %v6093
    %v6833 = vpop.permute.xlu0 %6832
    %6836 = vset.pattern.permute.xlu0 0
    %6837 = vperm.xlu0 %6836, %v6094
    %v6838 = vpop.permute.xlu0 %6837
    %6841 = vset.pattern.permute.xlu0 0
    %6842 = vperm.xlu0 %6841, %v6095
    %v6843 = vpop.permute.xlu0 %6842
    %6846 = vset.pattern.permute.xlu0 0
    %6847 = vperm.xlu0 %6846, %v6096
    %v6848 = vpop.permute.xlu0 %6847
    %6851 = vset.pattern.permute.xlu0 0
    %6852 = vperm.xlu0 %6851, %v6097
    %v6853 = vpop.permute.xlu0 %6852
    %6856 = vset.pattern.permute.xlu0 0
    %6857 = vperm.xlu0 %6856, %v6098
    %v6858 = vpop.permute.xlu0 %6857
    %6861 = vset.pattern.permute.xlu0 0
    %6862 = vperm.xlu0 %6861, %v6099
    %v6863 = vpop.permute.xlu0 %6862
    %6866 = vset.pattern.permute.xlu0 0
    %6867 = vperm.xlu0 %6866, %v6100
    %v6868 = vpop.permute.xlu0 %6867
    %6871 = vset.pattern.permute.xlu0 0
    %6872 = vperm.xlu0 %6871, %v6101
    %v6873 = vpop.permute.xlu0 %6872
    %6876 = vset.pattern.permute.xlu0 0
    %6877 = vperm.xlu0 %6876, %v6102
    %v6878 = vpop.permute.xlu0 %6877
    %6881 = vset.pattern.permute.xlu0 0
    %6882 = vperm.xlu0 %6881, %v6103
    %v6883 = vpop.permute.xlu0 %6882
    %6886 = vset.pattern.permute.xlu0 0
    %6887 = vperm.xlu0 %6886, %v6104
    %v6888 = vpop.permute.xlu0 %6887
    %6891 = vset.pattern.permute.xlu0 0
    %6892 = vperm.xlu0 %6891, %v6105
    %v6893 = vpop.permute.xlu0 %6892
    %6896 = vset.pattern.permute.xlu0 0
    %6897 = vperm.xlu0 %6896, %v6106
    %v6898 = vpop.permute.xlu0 %6897
    %6901 = vset.pattern.permute.xlu0 0
    %6902 = vperm.xlu0 %6901, %v6107
    %v6903 = vpop.permute.xlu0 %6902
    %6906 = vset.pattern.permute.xlu0 0
    %6907 = vperm.xlu0 %6906, %v6108
    %v6908 = vpop.permute.xlu0 %6907
    %6911 = vset.pattern.permute.xlu0 0
    %6912 = vperm.xlu0 %6911, %v6109
    %v6913 = vpop.permute.xlu0 %6912
    %6916 = vset.pattern.permute.xlu0 0
    %6917 = vperm.xlu0 %6916, %v6110
    %v6918 = vpop.permute.xlu0 %6917
    %6921 = vset.pattern.permute.xlu0 0
    %6922 = vperm.xlu0 %6921, %v6111
    %v6923 = vpop.permute.xlu0 %6922
    %6926 = vset.pattern.permute.xlu0 0
    %6927 = vperm.xlu0 %6926, %v6112
    %v6928 = vpop.permute.xlu0 %6927
    %6931 = vset.pattern.permute.xlu0 0
    %6932 = vperm.xlu0 %6931, %v6113
    %v6933 = vpop.permute.xlu0 %6932
    %6936 = vset.pattern.permute.xlu0 0
    %6937 = vperm.xlu0 %6936, %v6114
    %v6938 = vpop.permute.xlu0 %6937
    %6941 = vset.pattern.permute.xlu0 0
    %6942 = vperm.xlu0 %6941, %v6115
    %v6943 = vpop.permute.xlu0 %6942
    %6946 = vset.pattern.permute.xlu0 0
    %6947 = vperm.xlu0 %6946, %v6116
    %v6948 = vpop.permute.xlu0 %6947
    %6951 = vset.pattern.permute.xlu0 0
    %6952 = vperm.xlu0 %6951, %v6117
    %v6953 = vpop.permute.xlu0 %6952
    %6956 = vset.pattern.permute.xlu0 0
    %6957 = vperm.xlu0 %6956, %v6118
    %v6958 = vpop.permute.xlu0 %6957
    %6961 = vset.pattern.permute.xlu0 0
    %6962 = vperm.xlu0 %6961, %v6119
    %v6963 = vpop.permute.xlu0 %6962
    %v6965 = vlaneseq
    %v6966 = vshrl.u32 %v6965, 7
    %v6967 = vsub.s32 4, %v6966
    %v6968 = vrot.slane %v772, %v6967
    %v6969 = vmul.f32 %v6123, %v6968
    %v6970 = vmul.f32 %v6128, %v6968
    %v6971 = vmul.f32 %v6133, %v6968
    %v6972 = vmul.f32 %v6138, %v6968
    %v6973 = vmul.f32 %v6143, %v6968
    %v6974 = vmul.f32 %v6148, %v6968
    %v6975 = vmul.f32 %v6153, %v6968
    %v6976 = vmul.f32 %v6158, %v6968
    %v6977 = vmul.f32 %v6163, %v6968
    %v6978 = vmul.f32 %v6168, %v6968
    %v6979 = vmul.f32 %v6173, %v6968
    %v6980 = vmul.f32 %v6178, %v6968
    %v6981 = vmul.f32 %v6183, %v6968
    %v6982 = vmul.f32 %v6188, %v6968
    %v6983 = vmul.f32 %v6193, %v6968
    %v6984 = vmul.f32 %v6198, %v6968
    %v6985 = vmul.f32 %v6203, %v6968
    %v6986 = vmul.f32 %v6208, %v6968
    %v6987 = vmul.f32 %v6213, %v6968
    %v6988 = vmul.f32 %v6218, %v6968
    %v6989 = vmul.f32 %v6223, %v6968
    %v6990 = vmul.f32 %v6228, %v6968
    %v6991 = vmul.f32 %v6233, %v6968
    %v6992 = vmul.f32 %v6238, %v6968
    %v6993 = vmul.f32 %v6243, %v6968
    %v6994 = vmul.f32 %v6248, %v6968
    %v6995 = vmul.f32 %v6253, %v6968
    %v6996 = vmul.f32 %v6258, %v6968
    %v6997 = vmul.f32 %v6263, %v6968
    %v6998 = vmul.f32 %v6268, %v6968
    %v6999 = vmul.f32 %v6273, %v6968
    %v7000 = vmul.f32 %v6278, %v6968
    %v7001 = vmul.f32 %v6283, %v6968
    %v7002 = vmul.f32 %v6288, %v6968
    %v7003 = vmul.f32 %v6293, %v6968
    %v7004 = vmul.f32 %v6298, %v6968
    %v7005 = vmul.f32 %v6303, %v6968
    %v7006 = vmul.f32 %v6308, %v6968
    %v7007 = vmul.f32 %v6313, %v6968
    %v7008 = vmul.f32 %v6318, %v6968
    %v7009 = vmul.f32 %v6323, %v6968
    %v7010 = vmul.f32 %v6328, %v6968
    %v7011 = vmul.f32 %v6333, %v6968
    %v7012 = vmul.f32 %v6338, %v6968
    %v7013 = vmul.f32 %v6343, %v6968
    %v7014 = vmul.f32 %v6348, %v6968
    %v7015 = vmul.f32 %v6353, %v6968
    %v7016 = vmul.f32 %v6358, %v6968
    %v7017 = vmul.f32 %v6363, %v6968
    %v7018 = vmul.f32 %v6368, %v6968
    %v7019 = vmul.f32 %v6373, %v6968
    %v7020 = vmul.f32 %v6378, %v6968
    %v7021 = vmul.f32 %v6383, %v6968
    %v7022 = vmul.f32 %v6388, %v6968
    %v7023 = vmul.f32 %v6393, %v6968
    %v7024 = vmul.f32 %v6398, %v6968
    %v7025 = vmul.f32 %v6403, %v6968
    %v7026 = vmul.f32 %v6408, %v6968
    %v7027 = vmul.f32 %v6413, %v6968
    %v7028 = vmul.f32 %v6418, %v6968
    %v7029 = vmul.f32 %v6423, %v6968
    %v7030 = vmul.f32 %v6428, %v6968
    %v7031 = vmul.f32 %v6433, %v6968
    %v7032 = vmul.f32 %v6438, %v6968
    %v7033 = vmul.f32 %v6443, %v6968
    %v7034 = vmul.f32 %v6448, %v6968
    %v7035 = vmul.f32 %v6453, %v6968
    %v7036 = vmul.f32 %v6458, %v6968
    %v7037 = vmul.f32 %v6463, %v6968
    %v7038 = vmul.f32 %v6468, %v6968
    %v7039 = vmul.f32 %v6473, %v6968
    %v7040 = vmul.f32 %v6478, %v6968
    %v7041 = vmul.f32 %v6483, %v6968
    %v7042 = vmul.f32 %v6488, %v6968
    %v7043 = vmul.f32 %v6493, %v6968
    %v7044 = vmul.f32 %v6498, %v6968
    %v7045 = vmul.f32 %v6503, %v6968
    %v7046 = vmul.f32 %v6508, %v6968
    %v7047 = vmul.f32 %v6513, %v6968
    %v7048 = vmul.f32 %v6518, %v6968
    %v7049 = vmul.f32 %v6523, %v6968
    %v7050 = vmul.f32 %v6528, %v6968
    %v7051 = vmul.f32 %v6533, %v6968
    %v7052 = vmul.f32 %v6538, %v6968
    %v7053 = vmul.f32 %v6543, %v6968
    %v7054 = vmul.f32 %v6548, %v6968
    %v7055 = vmul.f32 %v6553, %v6968
    %v7056 = vmul.f32 %v6558, %v6968
    %v7057 = vmul.f32 %v6563, %v6968
    %v7058 = vmul.f32 %v6568, %v6968
    %v7059 = vmul.f32 %v6573, %v6968
    %v7060 = vmul.f32 %v6578, %v6968
    %v7061 = vmul.f32 %v6583, %v6968
    %v7062 = vmul.f32 %v6588, %v6968
    %v7063 = vmul.f32 %v6593, %v6968
    %v7064 = vmul.f32 %v6598, %v6968
    %v7065 = vmul.f32 %v6603, %v6968
    %v7066 = vmul.f32 %v6608, %v6968
    %v7067 = vmul.f32 %v6613, %v6968
    %v7068 = vmul.f32 %v6618, %v6968
    %v7069 = vmul.f32 %v6623, %v6968
    %v7070 = vmul.f32 %v6628, %v6968
    %v7071 = vmul.f32 %v6633, %v6968
    %v7072 = vmul.f32 %v6638, %v6968
    %v7073 = vmul.f32 %v6643, %v6968
    %v7074 = vmul.f32 %v6648, %v6968
    %v7075 = vmul.f32 %v6653, %v6968
    %v7076 = vmul.f32 %v6658, %v6968
    %v7077 = vmul.f32 %v6663, %v6968
    %v7078 = vmul.f32 %v6668, %v6968
    %v7079 = vmul.f32 %v6673, %v6968
    %v7080 = vmul.f32 %v6678, %v6968
    %v7081 = vmul.f32 %v6683, %v6968
    %v7082 = vmul.f32 %v6688, %v6968
    %v7083 = vmul.f32 %v6693, %v6968
    %v7084 = vmul.f32 %v6698, %v6968
    %v7085 = vmul.f32 %v6703, %v6968
    %v7086 = vmul.f32 %v6708, %v6968
    %v7087 = vmul.f32 %v6713, %v6968
    %v7088 = vmul.f32 %v6718, %v6968
    %v7089 = vmul.f32 %v6723, %v6968
    %v7090 = vmul.f32 %v6728, %v6968
    %v7091 = vmul.f32 %v6733, %v6968
    %v7092 = vmul.f32 %v6738, %v6968
    %v7093 = vmul.f32 %v6743, %v6968
    %v7094 = vmul.f32 %v6748, %v6968
    %v7095 = vmul.f32 %v6753, %v6968
    %v7096 = vmul.f32 %v6758, %v6968
    %v7097 = vmul.f32 %v6763, %v6968
    %v7098 = vmul.f32 %v6768, %v6968
    %v7099 = vmul.f32 %v6773, %v6968
    %v7100 = vmul.f32 %v6778, %v6968
    %v7101 = vmul.f32 %v6783, %v6968
    %v7102 = vmul.f32 %v6788, %v6968
    %v7103 = vmul.f32 %v6793, %v6968
    %v7104 = vmul.f32 %v6798, %v6968
    %v7105 = vmul.f32 %v6803, %v6968
    %v7106 = vmul.f32 %v6808, %v6968
    %v7107 = vmul.f32 %v6813, %v6968
    %v7108 = vmul.f32 %v6818, %v6968
    %v7109 = vmul.f32 %v6823, %v6968
    %v7110 = vmul.f32 %v6828, %v6968
    %v7111 = vmul.f32 %v6833, %v6968
    %v7112 = vmul.f32 %v6838, %v6968
    %v7113 = vmul.f32 %v6843, %v6968
    %v7114 = vmul.f32 %v6848, %v6968
    %v7115 = vmul.f32 %v6853, %v6968
    %v7116 = vmul.f32 %v6858, %v6968
    %v7117 = vmul.f32 %v6863, %v6968
    %v7118 = vmul.f32 %v6868, %v6968
    %v7119 = vmul.f32 %v6873, %v6968
    %v7120 = vmul.f32 %v6878, %v6968
    %v7121 = vmul.f32 %v6883, %v6968
    %v7122 = vmul.f32 %v6888, %v6968
    %v7123 = vmul.f32 %v6893, %v6968
    %v7124 = vmul.f32 %v6898, %v6968
    %v7125 = vmul.f32 %v6903, %v6968
    %v7126 = vmul.f32 %v6908, %v6968
    %v7127 = vmul.f32 %v6913, %v6968
    %v7128 = vmul.f32 %v6918, %v6968
    %v7129 = vmul.f32 %v6923, %v6968
    %v7130 = vmul.f32 %v6928, %v6968
    %v7131 = vmul.f32 %v6933, %v6968
    %v7132 = vmul.f32 %v6938, %v6968
    %v7133 = vmul.f32 %v6943, %v6968
    %v7134 = vmul.f32 %v6948, %v6968
    %v7135 = vmul.f32 %v6953, %v6968
    %v7136 = vmul.f32 %v6958, %v6968
    %v7137 = vmul.f32 %v6963, %v6968
    %v7138 = vadd.f32 %v5613, %v6969
    %v7139 = vadd.f32 %v5614, %v6970
    %v7140 = vadd.f32 %v5615, %v6971
    %v7141 = vadd.f32 %v5616, %v6972
    %v7142 = vadd.f32 %v5617, %v6973
    %v7143 = vadd.f32 %v5618, %v6974
    %v7144 = vadd.f32 %v5619, %v6975
    %v7145 = vadd.f32 %v5620, %v6976
    %v7146 = vadd.f32 %v5621, %v6977
    %v7147 = vadd.f32 %v5622, %v6978
    %v7148 = vadd.f32 %v5623, %v6979
    %v7149 = vadd.f32 %v5624, %v6980
    %v7150 = vadd.f32 %v5625, %v6981
    %v7151 = vadd.f32 %v5626, %v6982
    %v7152 = vadd.f32 %v5627, %v6983
    %v7153 = vadd.f32 %v5628, %v6984
    %v7154 = vadd.f32 %v5629, %v6985
    %v7155 = vadd.f32 %v5630, %v6986
    %v7156 = vadd.f32 %v5631, %v6987
    %v7157 = vadd.f32 %v5632, %v6988
    %v7158 = vadd.f32 %v5633, %v6989
    %v7159 = vadd.f32 %v5634, %v6990
    %v7160 = vadd.f32 %v5635, %v6991
    %v7161 = vadd.f32 %v5636, %v6992
    %v7162 = vadd.f32 %v5637, %v6993
    %v7163 = vadd.f32 %v5638, %v6994
    %v7164 = vadd.f32 %v5639, %v6995
    %v7165 = vadd.f32 %v5640, %v6996
    %v7166 = vadd.f32 %v5641, %v6997
    %v7167 = vadd.f32 %v5642, %v6998
    %v7168 = vadd.f32 %v5643, %v6999
    %v7169 = vadd.f32 %v5644, %v7000
    %v7170 = vadd.f32 %v5645, %v7001
    %v7171 = vadd.f32 %v5646, %v7002
    %v7172 = vadd.f32 %v5647, %v7003
    %v7173 = vadd.f32 %v5648, %v7004
    %v7174 = vadd.f32 %v5649, %v7005
    %v7175 = vadd.f32 %v5650, %v7006
    %v7176 = vadd.f32 %v5651, %v7007
    %v7177 = vadd.f32 %v5652, %v7008
    %v7178 = vadd.f32 %v5653, %v7009
    %v7179 = vadd.f32 %v5654, %v7010
    %v7180 = vadd.f32 %v5655, %v7011
    %v7181 = vadd.f32 %v5656, %v7012
    %v7182 = vadd.f32 %v5657, %v7013
    %v7183 = vadd.f32 %v5658, %v7014
    %v7184 = vadd.f32 %v5659, %v7015
    %v7185 = vadd.f32 %v5660, %v7016
    %v7186 = vadd.f32 %v5661, %v7017
    %v7187 = vadd.f32 %v5662, %v7018
    %v7188 = vadd.f32 %v5663, %v7019
    %v7189 = vadd.f32 %v5664, %v7020
    %v7190 = vadd.f32 %v5665, %v7021
    %v7191 = vadd.f32 %v5666, %v7022
    %v7192 = vadd.f32 %v5667, %v7023
    %v7193 = vadd.f32 %v5668, %v7024
    %v7194 = vadd.f32 %v5669, %v7025
    %v7195 = vadd.f32 %v5670, %v7026
    %v7196 = vadd.f32 %v5671, %v7027
    %v7197 = vadd.f32 %v5672, %v7028
    %v7198 = vadd.f32 %v5673, %v7029
    %v7199 = vadd.f32 %v5674, %v7030
    %v7200 = vadd.f32 %v5675, %v7031
    %v7201 = vadd.f32 %v5676, %v7032
    %v7202 = vadd.f32 %v5677, %v7033
    %v7203 = vadd.f32 %v5678, %v7034
    %v7204 = vadd.f32 %v5679, %v7035
    %v7205 = vadd.f32 %v5680, %v7036
    %v7206 = vadd.f32 %v5681, %v7037
    %v7207 = vadd.f32 %v5682, %v7038
    %v7208 = vadd.f32 %v5683, %v7039
    %v7209 = vadd.f32 %v5684, %v7040
    %v7210 = vadd.f32 %v5685, %v7041
    %v7211 = vadd.f32 %v5686, %v7042
    %v7212 = vadd.f32 %v5687, %v7043
    %v7213 = vadd.f32 %v5688, %v7044
    %v7214 = vadd.f32 %v5689, %v7045
    %v7215 = vadd.f32 %v5690, %v7046
    %v7216 = vadd.f32 %v5691, %v7047
    %v7217 = vadd.f32 %v5692, %v7048
    %v7218 = vadd.f32 %v5693, %v7049
    %v7219 = vadd.f32 %v5694, %v7050
    %v7220 = vadd.f32 %v5695, %v7051
    %v7221 = vadd.f32 %v5696, %v7052
    %v7222 = vadd.f32 %v5697, %v7053
    %v7223 = vadd.f32 %v5698, %v7054
    %v7224 = vadd.f32 %v5699, %v7055
    %v7225 = vadd.f32 %v5700, %v7056
    %v7226 = vadd.f32 %v5701, %v7057
    %v7227 = vadd.f32 %v5702, %v7058
    %v7228 = vadd.f32 %v5703, %v7059
    %v7229 = vadd.f32 %v5704, %v7060
    %v7230 = vadd.f32 %v5705, %v7061
    %v7231 = vadd.f32 %v5706, %v7062
    %v7232 = vadd.f32 %v5707, %v7063
    %v7233 = vadd.f32 %v5708, %v7064
    %v7234 = vadd.f32 %v5709, %v7065
    %v7235 = vadd.f32 %v5710, %v7066
    %v7236 = vadd.f32 %v5711, %v7067
    %v7237 = vadd.f32 %v5712, %v7068
    %v7238 = vadd.f32 %v5713, %v7069
    %v7239 = vadd.f32 %v5714, %v7070
    %v7240 = vadd.f32 %v5715, %v7071
    %v7241 = vadd.f32 %v5716, %v7072
    %v7242 = vadd.f32 %v5717, %v7073
    %v7243 = vadd.f32 %v5718, %v7074
    %v7244 = vadd.f32 %v5719, %v7075
    %v7245 = vadd.f32 %v5720, %v7076
    %v7246 = vadd.f32 %v5721, %v7077
    %v7247 = vadd.f32 %v5722, %v7078
    %v7248 = vadd.f32 %v5723, %v7079
    %v7249 = vadd.f32 %v5724, %v7080
    %v7250 = vadd.f32 %v5725, %v7081
    %v7251 = vadd.f32 %v5726, %v7082
    %v7252 = vadd.f32 %v5727, %v7083
    %v7253 = vadd.f32 %v5728, %v7084
    %v7254 = vadd.f32 %v5729, %v7085
    %v7255 = vadd.f32 %v5730, %v7086
    %v7256 = vadd.f32 %v5731, %v7087
    %v7257 = vadd.f32 %v5732, %v7088
    %v7258 = vadd.f32 %v5733, %v7089
    %v7259 = vadd.f32 %v5734, %v7090
    %v7260 = vadd.f32 %v5735, %v7091
    %v7261 = vadd.f32 %v5736, %v7092
    %v7262 = vadd.f32 %v5737, %v7093
    %v7263 = vadd.f32 %v5738, %v7094
    %v7264 = vadd.f32 %v5739, %v7095
    %v7265 = vadd.f32 %v5740, %v7096
    %v7266 = vadd.f32 %v5741, %v7097
    %v7267 = vadd.f32 %v5742, %v7098
    %v7268 = vadd.f32 %v5743, %v7099
    %v7269 = vadd.f32 %v5744, %v7100
    %v7270 = vadd.f32 %v5745, %v7101
    %v7271 = vadd.f32 %v5746, %v7102
    %v7272 = vadd.f32 %v5747, %v7103
    %v7273 = vadd.f32 %v5748, %v7104
    %v7274 = vadd.f32 %v5749, %v7105
    %v7275 = vadd.f32 %v5750, %v7106
    %v7276 = vadd.f32 %v5751, %v7107
    %v7277 = vadd.f32 %v5752, %v7108
    %v7278 = vadd.f32 %v5753, %v7109
    %v7279 = vadd.f32 %v5754, %v7110
    %v7280 = vadd.f32 %v5755, %v7111
    %v7281 = vadd.f32 %v5756, %v7112
    %v7282 = vadd.f32 %v5757, %v7113
    %v7283 = vadd.f32 %v5758, %v7114
    %v7284 = vadd.f32 %v5759, %v7115
    %v7285 = vadd.f32 %v5760, %v7116
    %v7286 = vadd.f32 %v5761, %v7117
    %v7287 = vadd.f32 %v5762, %v7118
    %v7288 = vadd.f32 %v5763, %v7119
    %v7289 = vadd.f32 %v5764, %v7120
    %v7290 = vadd.f32 %v5765, %v7121
    %v7291 = vadd.f32 %v5766, %v7122
    %v7292 = vadd.f32 %v5767, %v7123
    %v7293 = vadd.f32 %v5768, %v7124
    %v7294 = vadd.f32 %v5769, %v7125
    %v7295 = vadd.f32 %v5770, %v7126
    %v7296 = vadd.f32 %v5771, %v7127
    %v7297 = vadd.f32 %v5772, %v7128
    %v7298 = vadd.f32 %v5773, %v7129
    %v7299 = vadd.f32 %v5774, %v7130
    %v7300 = vadd.f32 %v5775, %v7131
    %v7301 = vadd.f32 %v5776, %v7132
    %v7302 = vadd.f32 %v5777, %v7133
    %v7303 = vadd.f32 %v5778, %v7134
    %v7304 = vadd.f32 %v5779, %v7135
    %v7305 = vadd.f32 %v5780, %v7136
    %v7306 = vadd.f32 %v5781, %v7137
    %v7307 = vpack.c.bf16 %v93, %v93
    %v7308 = vpack.c.bf16 %v147, %v147
    %v7309 = vpack.c.bf16 %v201, %v201
    %v7310 = vpack.c.bf16 %v255, %v255
    %v7311 = vpack.c.bf16 %v309, %v309
    %v7312 = vpack.c.bf16 %v363, %v363
    %v7313 = vpack.c.bf16 %v417, %v417
    %v7314 = vpack.c.bf16 %v471, %v471
    %v7315 = vpack.c.bf16 %v525, %v525
    %v7316 = vpack.c.bf16 %v579, %v579
    %v7317 = vpack.c.bf16 %v633, %v633
    %v7318 = vpack.c.bf16 %v687, %v687
    %v7319 = vpack.c.bf16 %v741, %v741
    %v7320 = vunpack.c.l.bf16 %v7307
    %v7321 = vunpack.c.l.bf16 %v7308
    %v7322 = vunpack.c.l.bf16 %v7309
    %v7323 = vunpack.c.l.bf16 %v7310
    %v7324 = vunpack.c.l.bf16 %v7311
    %v7325 = vunpack.c.l.bf16 %v7312
    %v7326 = vunpack.c.l.bf16 %v7313
    %v7327 = vunpack.c.l.bf16 %v7314
    %v7328 = vunpack.c.l.bf16 %v7315
    %v7329 = vunpack.c.l.bf16 %v7316
    %v7330 = vunpack.c.l.bf16 %v7317
    %v7331 = vunpack.c.l.bf16 %v7318
    %v7332 = vunpack.c.l.bf16 %v7319
    %7334 = vset.pattern.permute.xlu0 0
    %7335 = vperm.xlu0 %7334, %v7320
    %v7336 = vpop.permute.xlu0 %7335
    %7339 = vset.pattern.permute.xlu0 0
    %7340 = vperm.xlu0 %7339, %v7321
    %v7341 = vpop.permute.xlu0 %7340
    %7344 = vset.pattern.permute.xlu0 0
    %7345 = vperm.xlu0 %7344, %v7322
    %v7346 = vpop.permute.xlu0 %7345
    %7349 = vset.pattern.permute.xlu0 0
    %7350 = vperm.xlu0 %7349, %v7323
    %v7351 = vpop.permute.xlu0 %7350
    %7354 = vset.pattern.permute.xlu0 0
    %7355 = vperm.xlu0 %7354, %v7324
    %v7356 = vpop.permute.xlu0 %7355
    %7359 = vset.pattern.permute.xlu0 0
    %7360 = vperm.xlu0 %7359, %v7325
    %v7361 = vpop.permute.xlu0 %7360
    %7364 = vset.pattern.permute.xlu0 0
    %7365 = vperm.xlu0 %7364, %v7326
    %v7366 = vpop.permute.xlu0 %7365
    %7369 = vset.pattern.permute.xlu0 0
    %7370 = vperm.xlu0 %7369, %v7327
    %v7371 = vpop.permute.xlu0 %7370
    %7374 = vset.pattern.permute.xlu0 0
    %7375 = vperm.xlu0 %7374, %v7328
    %v7376 = vpop.permute.xlu0 %7375
    %7379 = vset.pattern.permute.xlu0 0
    %7380 = vperm.xlu0 %7379, %v7329
    %v7381 = vpop.permute.xlu0 %7380
    %7384 = vset.pattern.permute.xlu0 0
    %7385 = vperm.xlu0 %7384, %v7330
    %v7386 = vpop.permute.xlu0 %7385
    %7389 = vset.pattern.permute.xlu0 0
    %7390 = vperm.xlu0 %7389, %v7331
    %v7391 = vpop.permute.xlu0 %7390
    %7394 = vset.pattern.permute.xlu0 0
    %7395 = vperm.xlu0 %7394, %v7332
    %v7396 = vpop.permute.xlu0 %7395
    %v7398 = vlaneseq
    %v7399 = vshrl.u32 %v7398, 7
    %v7400 = vsub.s32 5, %v7399
    %v7401 = vrot.slane %v772, %v7400
    %v7402 = vmul.f32 %v4603, %v7401
    %v7403 = vmul.f32 %v4608, %v7401
    %v7404 = vmul.f32 %v4613, %v7401
    %v7405 = vmul.f32 %v4618, %v7401
    %v7406 = vmul.f32 %v4623, %v7401
    %v7407 = vmul.f32 %v4628, %v7401
    %v7408 = vmul.f32 %v4633, %v7401
    %v7409 = vmul.f32 %v4638, %v7401
    %v7410 = vmul.f32 %v4643, %v7401
    %v7411 = vmul.f32 %v4648, %v7401
    %v7412 = vmul.f32 %v4653, %v7401
    %v7413 = vmul.f32 %v4658, %v7401
    %v7414 = vmul.f32 %v7336, %v7401
    %v7415 = vmul.f32 %v4668, %v7401
    %v7416 = vmul.f32 %v4673, %v7401
    %v7417 = vmul.f32 %v4678, %v7401
    %v7418 = vmul.f32 %v4683, %v7401
    %v7419 = vmul.f32 %v4688, %v7401
    %v7420 = vmul.f32 %v4693, %v7401
    %v7421 = vmul.f32 %v4698, %v7401
    %v7422 = vmul.f32 %v4703, %v7401
    %v7423 = vmul.f32 %v4708, %v7401
    %v7424 = vmul.f32 %v4713, %v7401
    %v7425 = vmul.f32 %v4718, %v7401
    %v7426 = vmul.f32 %v4723, %v7401
    %v7427 = vmul.f32 %v7341, %v7401
    %v7428 = vmul.f32 %v4733, %v7401
    %v7429 = vmul.f32 %v4738, %v7401
    %v7430 = vmul.f32 %v4743, %v7401
    %v7431 = vmul.f32 %v4748, %v7401
    %v7432 = vmul.f32 %v4753, %v7401
    %v7433 = vmul.f32 %v4758, %v7401
    %v7434 = vmul.f32 %v4763, %v7401
    %v7435 = vmul.f32 %v4768, %v7401
    %v7436 = vmul.f32 %v4773, %v7401
    %v7437 = vmul.f32 %v4778, %v7401
    %v7438 = vmul.f32 %v4783, %v7401
    %v7439 = vmul.f32 %v4788, %v7401
    %v7440 = vmul.f32 %v7346, %v7401
    %v7441 = vmul.f32 %v4798, %v7401
    %v7442 = vmul.f32 %v4803, %v7401
    %v7443 = vmul.f32 %v4808, %v7401
    %v7444 = vmul.f32 %v4813, %v7401
    %v7445 = vmul.f32 %v4818, %v7401
    %v7446 = vmul.f32 %v4823, %v7401
    %v7447 = vmul.f32 %v4828, %v7401
    %v7448 = vmul.f32 %v4833, %v7401
    %v7449 = vmul.f32 %v4838, %v7401
    %v7450 = vmul.f32 %v4843, %v7401
    %v7451 = vmul.f32 %v4848, %v7401
    %v7452 = vmul.f32 %v4853, %v7401
    %v7453 = vmul.f32 %v7351, %v7401
    %v7454 = vmul.f32 %v4863, %v7401
    %v7455 = vmul.f32 %v4868, %v7401
    %v7456 = vmul.f32 %v4873, %v7401
    %v7457 = vmul.f32 %v4878, %v7401
    %v7458 = vmul.f32 %v4883, %v7401
    %v7459 = vmul.f32 %v4888, %v7401
    %v7460 = vmul.f32 %v4893, %v7401
    %v7461 = vmul.f32 %v4898, %v7401
    %v7462 = vmul.f32 %v4903, %v7401
    %v7463 = vmul.f32 %v4908, %v7401
    %v7464 = vmul.f32 %v4913, %v7401
    %v7465 = vmul.f32 %v4918, %v7401
    %v7466 = vmul.f32 %v7356, %v7401
    %v7467 = vmul.f32 %v4928, %v7401
    %v7468 = vmul.f32 %v4933, %v7401
    %v7469 = vmul.f32 %v4938, %v7401
    %v7470 = vmul.f32 %v4943, %v7401
    %v7471 = vmul.f32 %v4948, %v7401
    %v7472 = vmul.f32 %v4953, %v7401
    %v7473 = vmul.f32 %v4958, %v7401
    %v7474 = vmul.f32 %v4963, %v7401
    %v7475 = vmul.f32 %v4968, %v7401
    %v7476 = vmul.f32 %v4973, %v7401
    %v7477 = vmul.f32 %v4978, %v7401
    %v7478 = vmul.f32 %v4983, %v7401
    %v7479 = vmul.f32 %v7361, %v7401
    %v7480 = vmul.f32 %v4993, %v7401
    %v7481 = vmul.f32 %v4998, %v7401
    %v7482 = vmul.f32 %v5003, %v7401
    %v7483 = vmul.f32 %v5008, %v7401
    %v7484 = vmul.f32 %v5013, %v7401
    %v7485 = vmul.f32 %v5018, %v7401
    %v7486 = vmul.f32 %v5023, %v7401
    %v7487 = vmul.f32 %v5028, %v7401
    %v7488 = vmul.f32 %v5033, %v7401
    %v7489 = vmul.f32 %v5038, %v7401
    %v7490 = vmul.f32 %v5043, %v7401
    %v7491 = vmul.f32 %v5048, %v7401
    %v7492 = vmul.f32 %v7366, %v7401
    %v7493 = vmul.f32 %v5058, %v7401
    %v7494 = vmul.f32 %v5063, %v7401
    %v7495 = vmul.f32 %v5068, %v7401
    %v7496 = vmul.f32 %v5073, %v7401
    %v7497 = vmul.f32 %v5078, %v7401
    %v7498 = vmul.f32 %v5083, %v7401
    %v7499 = vmul.f32 %v5088, %v7401
    %v7500 = vmul.f32 %v5093, %v7401
    %v7501 = vmul.f32 %v5098, %v7401
    %v7502 = vmul.f32 %v5103, %v7401
    %v7503 = vmul.f32 %v5108, %v7401
    %v7504 = vmul.f32 %v5113, %v7401
    %v7505 = vmul.f32 %v7371, %v7401
    %v7506 = vmul.f32 %v5123, %v7401
    %v7507 = vmul.f32 %v5128, %v7401
    %v7508 = vmul.f32 %v5133, %v7401
    %v7509 = vmul.f32 %v5138, %v7401
    %v7510 = vmul.f32 %v5143, %v7401
    %v7511 = vmul.f32 %v5148, %v7401
    %v7512 = vmul.f32 %v5153, %v7401
    %v7513 = vmul.f32 %v5158, %v7401
    %v7514 = vmul.f32 %v5163, %v7401
    %v7515 = vmul.f32 %v5168, %v7401
    %v7516 = vmul.f32 %v5173, %v7401
    %v7517 = vmul.f32 %v5178, %v7401
    %v7518 = vmul.f32 %v7376, %v7401
    %v7519 = vmul.f32 %v5188, %v7401
    %v7520 = vmul.f32 %v5193, %v7401
    %v7521 = vmul.f32 %v5198, %v7401
    %v7522 = vmul.f32 %v5203, %v7401
    %v7523 = vmul.f32 %v5208, %v7401
    %v7524 = vmul.f32 %v5213, %v7401
    %v7525 = vmul.f32 %v5218, %v7401
    %v7526 = vmul.f32 %v5223, %v7401
    %v7527 = vmul.f32 %v5228, %v7401
    %v7528 = vmul.f32 %v5233, %v7401
    %v7529 = vmul.f32 %v5238, %v7401
    %v7530 = vmul.f32 %v5243, %v7401
    %v7531 = vmul.f32 %v7381, %v7401
    %v7532 = vmul.f32 %v5253, %v7401
    %v7533 = vmul.f32 %v5258, %v7401
    %v7534 = vmul.f32 %v5263, %v7401
    %v7535 = vmul.f32 %v5268, %v7401
    %v7536 = vmul.f32 %v5273, %v7401
    %v7537 = vmul.f32 %v5278, %v7401
    %v7538 = vmul.f32 %v5283, %v7401
    %v7539 = vmul.f32 %v5288, %v7401
    %v7540 = vmul.f32 %v5293, %v7401
    %v7541 = vmul.f32 %v5298, %v7401
    %v7542 = vmul.f32 %v5303, %v7401
    %v7543 = vmul.f32 %v5308, %v7401
    %v7544 = vmul.f32 %v7386, %v7401
    %v7545 = vmul.f32 %v5318, %v7401
    %v7546 = vmul.f32 %v5323, %v7401
    %v7547 = vmul.f32 %v5328, %v7401
    %v7548 = vmul.f32 %v5333, %v7401
    %v7549 = vmul.f32 %v5338, %v7401
    %v7550 = vmul.f32 %v5343, %v7401
    %v7551 = vmul.f32 %v5348, %v7401
    %v7552 = vmul.f32 %v5353, %v7401
    %v7553 = vmul.f32 %v5358, %v7401
    %v7554 = vmul.f32 %v5363, %v7401
    %v7555 = vmul.f32 %v5368, %v7401
    %v7556 = vmul.f32 %v5373, %v7401
    %v7557 = vmul.f32 %v7391, %v7401
    %v7558 = vmul.f32 %v5383, %v7401
    %v7559 = vmul.f32 %v5388, %v7401
    %v7560 = vmul.f32 %v5393, %v7401
    %v7561 = vmul.f32 %v5398, %v7401
    %v7562 = vmul.f32 %v5403, %v7401
    %v7563 = vmul.f32 %v5408, %v7401
    %v7564 = vmul.f32 %v5413, %v7401
    %v7565 = vmul.f32 %v5418, %v7401
    %v7566 = vmul.f32 %v5423, %v7401
    %v7567 = vmul.f32 %v5428, %v7401
    %v7568 = vmul.f32 %v5433, %v7401
    %v7569 = vmul.f32 %v5438, %v7401
    %v7570 = vmul.f32 %v7396, %v7401
    %v7571 = vadd.f32 %v7138, %v7402
    %v7572 = vadd.f32 %v7139, %v7403
    %v7573 = vadd.f32 %v7140, %v7404
    %v7574 = vadd.f32 %v7141, %v7405
    %v7575 = vadd.f32 %v7142, %v7406
    %v7576 = vadd.f32 %v7143, %v7407
    %v7577 = vadd.f32 %v7144, %v7408
    %v7578 = vadd.f32 %v7145, %v7409
    %v7579 = vadd.f32 %v7146, %v7410
    %v7580 = vadd.f32 %v7147, %v7411
    %v7581 = vadd.f32 %v7148, %v7412
    %v7582 = vadd.f32 %v7149, %v7413
    %v7583 = vadd.f32 %v7150, %v7414
    %v7584 = vadd.f32 %v7151, %v7415
    %v7585 = vadd.f32 %v7152, %v7416
    %v7586 = vadd.f32 %v7153, %v7417
    %v7587 = vadd.f32 %v7154, %v7418
    %v7588 = vadd.f32 %v7155, %v7419
    %v7589 = vadd.f32 %v7156, %v7420
    %v7590 = vadd.f32 %v7157, %v7421
    %v7591 = vadd.f32 %v7158, %v7422
    %v7592 = vadd.f32 %v7159, %v7423
    %v7593 = vadd.f32 %v7160, %v7424
    %v7594 = vadd.f32 %v7161, %v7425
    %v7595 = vadd.f32 %v7162, %v7426
    %v7596 = vadd.f32 %v7163, %v7427
    %v7597 = vadd.f32 %v7164, %v7428
    %v7598 = vadd.f32 %v7165, %v7429
    %v7599 = vadd.f32 %v7166, %v7430
    %v7600 = vadd.f32 %v7167, %v7431
    %v7601 = vadd.f32 %v7168, %v7432
    %v7602 = vadd.f32 %v7169, %v7433
    %v7603 = vadd.f32 %v7170, %v7434
    %v7604 = vadd.f32 %v7171, %v7435
    %v7605 = vadd.f32 %v7172, %v7436
    %v7606 = vadd.f32 %v7173, %v7437
    %v7607 = vadd.f32 %v7174, %v7438
    %v7608 = vadd.f32 %v7175, %v7439
    %v7609 = vadd.f32 %v7176, %v7440
    %v7610 = vadd.f32 %v7177, %v7441
    %v7611 = vadd.f32 %v7178, %v7442
    %v7612 = vadd.f32 %v7179, %v7443
    %v7613 = vadd.f32 %v7180, %v7444
    %v7614 = vadd.f32 %v7181, %v7445
    %v7615 = vadd.f32 %v7182, %v7446
    %v7616 = vadd.f32 %v7183, %v7447
    %v7617 = vadd.f32 %v7184, %v7448
    %v7618 = vadd.f32 %v7185, %v7449
    %v7619 = vadd.f32 %v7186, %v7450
    %v7620 = vadd.f32 %v7187, %v7451
    %v7621 = vadd.f32 %v7188, %v7452
    %v7622 = vadd.f32 %v7189, %v7453
    %v7623 = vadd.f32 %v7190, %v7454
    %v7624 = vadd.f32 %v7191, %v7455
    %v7625 = vadd.f32 %v7192, %v7456
    %v7626 = vadd.f32 %v7193, %v7457
    %v7627 = vadd.f32 %v7194, %v7458
    %v7628 = vadd.f32 %v7195, %v7459
    %v7629 = vadd.f32 %v7196, %v7460
    %v7630 = vadd.f32 %v7197, %v7461
    %v7631 = vadd.f32 %v7198, %v7462
    %v7632 = vadd.f32 %v7199, %v7463
    %v7633 = vadd.f32 %v7200, %v7464
    %v7634 = vadd.f32 %v7201, %v7465
    %v7635 = vadd.f32 %v7202, %v7466
    %v7636 = vadd.f32 %v7203, %v7467
    %v7637 = vadd.f32 %v7204, %v7468
    %v7638 = vadd.f32 %v7205, %v7469
    %v7639 = vadd.f32 %v7206, %v7470
    %v7640 = vadd.f32 %v7207, %v7471
    %v7641 = vadd.f32 %v7208, %v7472
    %v7642 = vadd.f32 %v7209, %v7473
    %v7643 = vadd.f32 %v7210, %v7474
    %v7644 = vadd.f32 %v7211, %v7475
    %v7645 = vadd.f32 %v7212, %v7476
    %v7646 = vadd.f32 %v7213, %v7477
    %v7647 = vadd.f32 %v7214, %v7478
    %v7648 = vadd.f32 %v7215, %v7479
    %v7649 = vadd.f32 %v7216, %v7480
    %v7650 = vadd.f32 %v7217, %v7481
    %v7651 = vadd.f32 %v7218, %v7482
    %v7652 = vadd.f32 %v7219, %v7483
    %v7653 = vadd.f32 %v7220, %v7484
    %v7654 = vadd.f32 %v7221, %v7485
    %v7655 = vadd.f32 %v7222, %v7486
    %v7656 = vadd.f32 %v7223, %v7487
    %v7657 = vadd.f32 %v7224, %v7488
    %v7658 = vadd.f32 %v7225, %v7489
    %v7659 = vadd.f32 %v7226, %v7490
    %v7660 = vadd.f32 %v7227, %v7491
    %v7661 = vadd.f32 %v7228, %v7492
    %v7662 = vadd.f32 %v7229, %v7493
    %v7663 = vadd.f32 %v7230, %v7494
    %v7664 = vadd.f32 %v7231, %v7495
    %v7665 = vadd.f32 %v7232, %v7496
    %v7666 = vadd.f32 %v7233, %v7497
    %v7667 = vadd.f32 %v7234, %v7498
    %v7668 = vadd.f32 %v7235, %v7499
    %v7669 = vadd.f32 %v7236, %v7500
    %v7670 = vadd.f32 %v7237, %v7501
    %v7671 = vadd.f32 %v7238, %v7502
    %v7672 = vadd.f32 %v7239, %v7503
    %v7673 = vadd.f32 %v7240, %v7504
    %v7674 = vadd.f32 %v7241, %v7505
    %v7675 = vadd.f32 %v7242, %v7506
    %v7676 = vadd.f32 %v7243, %v7507
    %v7677 = vadd.f32 %v7244, %v7508
    %v7678 = vadd.f32 %v7245, %v7509
    %v7679 = vadd.f32 %v7246, %v7510
    %v7680 = vadd.f32 %v7247, %v7511
    %v7681 = vadd.f32 %v7248, %v7512
    %v7682 = vadd.f32 %v7249, %v7513
    %v7683 = vadd.f32 %v7250, %v7514
    %v7684 = vadd.f32 %v7251, %v7515
    %v7685 = vadd.f32 %v7252, %v7516
    %v7686 = vadd.f32 %v7253, %v7517
    %v7687 = vadd.f32 %v7254, %v7518
    %v7688 = vadd.f32 %v7255, %v7519
    %v7689 = vadd.f32 %v7256, %v7520
    %v7690 = vadd.f32 %v7257, %v7521
    %v7691 = vadd.f32 %v7258, %v7522
    %v7692 = vadd.f32 %v7259, %v7523
    %v7693 = vadd.f32 %v7260, %v7524
    %v7694 = vadd.f32 %v7261, %v7525
    %v7695 = vadd.f32 %v7262, %v7526
    %v7696 = vadd.f32 %v7263, %v7527
    %v7697 = vadd.f32 %v7264, %v7528
    %v7698 = vadd.f32 %v7265, %v7529
    %v7699 = vadd.f32 %v7266, %v7530
    %v7700 = vadd.f32 %v7267, %v7531
    %v7701 = vadd.f32 %v7268, %v7532
    %v7702 = vadd.f32 %v7269, %v7533
    %v7703 = vadd.f32 %v7270, %v7534
    %v7704 = vadd.f32 %v7271, %v7535
    %v7705 = vadd.f32 %v7272, %v7536
    %v7706 = vadd.f32 %v7273, %v7537
    %v7707 = vadd.f32 %v7274, %v7538
    %v7708 = vadd.f32 %v7275, %v7539
    %v7709 = vadd.f32 %v7276, %v7540
    %v7710 = vadd.f32 %v7277, %v7541
    %v7711 = vadd.f32 %v7278, %v7542
    %v7712 = vadd.f32 %v7279, %v7543
    %v7713 = vadd.f32 %v7280, %v7544
    %v7714 = vadd.f32 %v7281, %v7545
    %v7715 = vadd.f32 %v7282, %v7546
    %v7716 = vadd.f32 %v7283, %v7547
    %v7717 = vadd.f32 %v7284, %v7548
    %v7718 = vadd.f32 %v7285, %v7549
    %v7719 = vadd.f32 %v7286, %v7550
    %v7720 = vadd.f32 %v7287, %v7551
    %v7721 = vadd.f32 %v7288, %v7552
    %v7722 = vadd.f32 %v7289, %v7553
    %v7723 = vadd.f32 %v7290, %v7554
    %v7724 = vadd.f32 %v7291, %v7555
    %v7725 = vadd.f32 %v7292, %v7556
    %v7726 = vadd.f32 %v7293, %v7557
    %v7727 = vadd.f32 %v7294, %v7558
    %v7728 = vadd.f32 %v7295, %v7559
    %v7729 = vadd.f32 %v7296, %v7560
    %v7730 = vadd.f32 %v7297, %v7561
    %v7731 = vadd.f32 %v7298, %v7562
    %v7732 = vadd.f32 %v7299, %v7563
    %v7733 = vadd.f32 %v7300, %v7564
    %v7734 = vadd.f32 %v7301, %v7565
    %v7735 = vadd.f32 %v7302, %v7566
    %v7736 = vadd.f32 %v7303, %v7567
    %v7737 = vadd.f32 %v7304, %v7568
    %v7738 = vadd.f32 %v7305, %v7569
    %v7739 = vadd.f32 %v7306, %v7570
    %v7740 = vpack.c.bf16 %v742, %v742
    %v7741 = vpack.c.bf16 %v744, %v744
    %v7742 = vpack.c.bf16 %v746, %v746
    %v7743 = vpack.c.bf16 %v748, %v748
    %v7744 = vpack.c.bf16 %v750, %v750
    %v7745 = vpack.c.bf16 %v752, %v752
    %v7746 = vpack.c.bf16 %v754, %v754
    %v7747 = vpack.c.bf16 %v756, %v756
    %v7748 = vpack.c.bf16 %v758, %v758
    %v7749 = vpack.c.bf16 %v760, %v760
    %v7750 = vpack.c.bf16 %v762, %v762
    %v7751 = vpack.c.bf16 %v764, %v764
    %v7752 = vpack.c.bf16 %v766, %v766
    %v7753 = vunpack.c.l.bf16 %v7740
    %v7754 = vunpack.c.l.bf16 %v7741
    %v7755 = vunpack.c.l.bf16 %v7742
    %v7756 = vunpack.c.l.bf16 %v7743
    %v7757 = vunpack.c.l.bf16 %v7744
    %v7758 = vunpack.c.l.bf16 %v7745
    %v7759 = vunpack.c.l.bf16 %v7746
    %v7760 = vunpack.c.l.bf16 %v7747
    %v7761 = vunpack.c.l.bf16 %v7748
    %v7762 = vunpack.c.l.bf16 %v7749
    %v7763 = vunpack.c.l.bf16 %v7750
    %v7764 = vunpack.c.l.bf16 %v7751
    %v7765 = vunpack.c.l.bf16 %v7752
    %7767 = vset.pattern.permute.xlu0 0
    %7768 = vperm.xlu0 %7767, %v7753
    %v7769 = vpop.permute.xlu0 %7768
    %7772 = vset.pattern.permute.xlu0 0
    %7773 = vperm.xlu0 %7772, %v7754
    %v7774 = vpop.permute.xlu0 %7773
    %7777 = vset.pattern.permute.xlu0 0
    %7778 = vperm.xlu0 %7777, %v7755
    %v7779 = vpop.permute.xlu0 %7778
    %7782 = vset.pattern.permute.xlu0 0
    %7783 = vperm.xlu0 %7782, %v7756
    %v7784 = vpop.permute.xlu0 %7783
    %7787 = vset.pattern.permute.xlu0 0
    %7788 = vperm.xlu0 %7787, %v7757
    %v7789 = vpop.permute.xlu0 %7788
    %7792 = vset.pattern.permute.xlu0 0
    %7793 = vperm.xlu0 %7792, %v7758
    %v7794 = vpop.permute.xlu0 %7793
    %7797 = vset.pattern.permute.xlu0 0
    %7798 = vperm.xlu0 %7797, %v7759
    %v7799 = vpop.permute.xlu0 %7798
    %7802 = vset.pattern.permute.xlu0 0
    %7803 = vperm.xlu0 %7802, %v7760
    %v7804 = vpop.permute.xlu0 %7803
    %7807 = vset.pattern.permute.xlu0 0
    %7808 = vperm.xlu0 %7807, %v7761
    %v7809 = vpop.permute.xlu0 %7808
    %7812 = vset.pattern.permute.xlu0 0
    %7813 = vperm.xlu0 %7812, %v7762
    %v7814 = vpop.permute.xlu0 %7813
    %7817 = vset.pattern.permute.xlu0 0
    %7818 = vperm.xlu0 %7817, %v7763
    %v7819 = vpop.permute.xlu0 %7818
    %7822 = vset.pattern.permute.xlu0 0
    %7823 = vperm.xlu0 %7822, %v7764
    %v7824 = vpop.permute.xlu0 %7823
    %7827 = vset.pattern.permute.xlu0 0
    %7828 = vperm.xlu0 %7827, %v7765
    %v7829 = vpop.permute.xlu0 %7828
    %v7831 = vlaneseq
    %v7832 = vshrl.u32 %v7831, 7
    %v7833 = vsub.s32 6, %v7832
    %v7834 = vrot.slane %v772, %v7833
    %v7835 = vmul.f32 %v1180, %v7834
    %v7836 = vmul.f32 %v1185, %v7834
    %v7837 = vmul.f32 %v1190, %v7834
    %v7838 = vmul.f32 %v1195, %v7834
    %v7839 = vmul.f32 %v1200, %v7834
    %v7840 = vmul.f32 %v1205, %v7834
    %v7841 = vmul.f32 %v1210, %v7834
    %v7842 = vmul.f32 %v1215, %v7834
    %v7843 = vmul.f32 %v1220, %v7834
    %v7844 = vmul.f32 %v1225, %v7834
    %v7845 = vmul.f32 %v1230, %v7834
    %v7846 = vmul.f32 %v1235, %v7834
    %v7847 = vmul.f32 %v1240, %v7834
    %v7848 = vmul.f32 %v1245, %v7834
    %v7849 = vmul.f32 %v1250, %v7834
    %v7850 = vmul.f32 %v1255, %v7834
    %v7851 = vmul.f32 %v1260, %v7834
    %v7852 = vmul.f32 %v1265, %v7834
    %v7853 = vmul.f32 %v1270, %v7834
    %v7854 = vmul.f32 %v1275, %v7834
    %v7855 = vmul.f32 %v1280, %v7834
    %v7856 = vmul.f32 %v1285, %v7834
    %v7857 = vmul.f32 %v1290, %v7834
    %v7858 = vmul.f32 %v1295, %v7834
    %v7859 = vmul.f32 %v1300, %v7834
    %v7860 = vmul.f32 %v1305, %v7834
    %v7861 = vmul.f32 %v1310, %v7834
    %v7862 = vmul.f32 %v1315, %v7834
    %v7863 = vmul.f32 %v1320, %v7834
    %v7864 = vmul.f32 %v1325, %v7834
    %v7865 = vmul.f32 %v1330, %v7834
    %v7866 = vmul.f32 %v1335, %v7834
    %v7867 = vmul.f32 %v1340, %v7834
    %v7868 = vmul.f32 %v1345, %v7834
    %v7869 = vmul.f32 %v1350, %v7834
    %v7870 = vmul.f32 %v1355, %v7834
    %v7871 = vmul.f32 %v1360, %v7834
    %v7872 = vmul.f32 %v1365, %v7834
    %v7873 = vmul.f32 %v1370, %v7834
    %v7874 = vmul.f32 %v1375, %v7834
    %v7875 = vmul.f32 %v1380, %v7834
    %v7876 = vmul.f32 %v1385, %v7834
    %v7877 = vmul.f32 %v1390, %v7834
    %v7878 = vmul.f32 %v1395, %v7834
    %v7879 = vmul.f32 %v1400, %v7834
    %v7880 = vmul.f32 %v1405, %v7834
    %v7881 = vmul.f32 %v1410, %v7834
    %v7882 = vmul.f32 %v1415, %v7834
    %v7883 = vmul.f32 %v1420, %v7834
    %v7884 = vmul.f32 %v1425, %v7834
    %v7885 = vmul.f32 %v1430, %v7834
    %v7886 = vmul.f32 %v1435, %v7834
    %v7887 = vmul.f32 %v1440, %v7834
    %v7888 = vmul.f32 %v1445, %v7834
    %v7889 = vmul.f32 %v1450, %v7834
    %v7890 = vmul.f32 %v1455, %v7834
    %v7891 = vmul.f32 %v1460, %v7834
    %v7892 = vmul.f32 %v1465, %v7834
    %v7893 = vmul.f32 %v1470, %v7834
    %v7894 = vmul.f32 %v1475, %v7834
    %v7895 = vmul.f32 %v1480, %v7834
    %v7896 = vmul.f32 %v1485, %v7834
    %v7897 = vmul.f32 %v1490, %v7834
    %v7898 = vmul.f32 %v1495, %v7834
    %v7899 = vmul.f32 %v1500, %v7834
    %v7900 = vmul.f32 %v1505, %v7834
    %v7901 = vmul.f32 %v1510, %v7834
    %v7902 = vmul.f32 %v1515, %v7834
    %v7903 = vmul.f32 %v1520, %v7834
    %v7904 = vmul.f32 %v1525, %v7834
    %v7905 = vmul.f32 %v1530, %v7834
    %v7906 = vmul.f32 %v1535, %v7834
    %v7907 = vmul.f32 %v1540, %v7834
    %v7908 = vmul.f32 %v1545, %v7834
    %v7909 = vmul.f32 %v1550, %v7834
    %v7910 = vmul.f32 %v1555, %v7834
    %v7911 = vmul.f32 %v1560, %v7834
    %v7912 = vmul.f32 %v1565, %v7834
    %v7913 = vmul.f32 %v1570, %v7834
    %v7914 = vmul.f32 %v1575, %v7834
    %v7915 = vmul.f32 %v1580, %v7834
    %v7916 = vmul.f32 %v1585, %v7834
    %v7917 = vmul.f32 %v1590, %v7834
    %v7918 = vmul.f32 %v1595, %v7834
    %v7919 = vmul.f32 %v1600, %v7834
    %v7920 = vmul.f32 %v1605, %v7834
    %v7921 = vmul.f32 %v1610, %v7834
    %v7922 = vmul.f32 %v1615, %v7834
    %v7923 = vmul.f32 %v1620, %v7834
    %v7924 = vmul.f32 %v1625, %v7834
    %v7925 = vmul.f32 %v1630, %v7834
    %v7926 = vmul.f32 %v1635, %v7834
    %v7927 = vmul.f32 %v1640, %v7834
    %v7928 = vmul.f32 %v1645, %v7834
    %v7929 = vmul.f32 %v1650, %v7834
    %v7930 = vmul.f32 %v1655, %v7834
    %v7931 = vmul.f32 %v1660, %v7834
    %v7932 = vmul.f32 %v1665, %v7834
    %v7933 = vmul.f32 %v1670, %v7834
    %v7934 = vmul.f32 %v1675, %v7834
    %v7935 = vmul.f32 %v1680, %v7834
    %v7936 = vmul.f32 %v1685, %v7834
    %v7937 = vmul.f32 %v1690, %v7834
    %v7938 = vmul.f32 %v1695, %v7834
    %v7939 = vmul.f32 %v1700, %v7834
    %v7940 = vmul.f32 %v1705, %v7834
    %v7941 = vmul.f32 %v1710, %v7834
    %v7942 = vmul.f32 %v1715, %v7834
    %v7943 = vmul.f32 %v1720, %v7834
    %v7944 = vmul.f32 %v1725, %v7834
    %v7945 = vmul.f32 %v1730, %v7834
    %v7946 = vmul.f32 %v1735, %v7834
    %v7947 = vmul.f32 %v1740, %v7834
    %v7948 = vmul.f32 %v1745, %v7834
    %v7949 = vmul.f32 %v1750, %v7834
    %v7950 = vmul.f32 %v1755, %v7834
    %v7951 = vmul.f32 %v1760, %v7834
    %v7952 = vmul.f32 %v1765, %v7834
    %v7953 = vmul.f32 %v1770, %v7834
    %v7954 = vmul.f32 %v1775, %v7834
    %v7955 = vmul.f32 %v1780, %v7834
    %v7956 = vmul.f32 %v1785, %v7834
    %v7957 = vmul.f32 %v1790, %v7834
    %v7958 = vmul.f32 %v1795, %v7834
    %v7959 = vmul.f32 %v1800, %v7834
    %v7960 = vmul.f32 %v1805, %v7834
    %v7961 = vmul.f32 %v1810, %v7834
    %v7962 = vmul.f32 %v1815, %v7834
    %v7963 = vmul.f32 %v1820, %v7834
    %v7964 = vmul.f32 %v1825, %v7834
    %v7965 = vmul.f32 %v1830, %v7834
    %v7966 = vmul.f32 %v1835, %v7834
    %v7967 = vmul.f32 %v1840, %v7834
    %v7968 = vmul.f32 %v1845, %v7834
    %v7969 = vmul.f32 %v1850, %v7834
    %v7970 = vmul.f32 %v1855, %v7834
    %v7971 = vmul.f32 %v1860, %v7834
    %v7972 = vmul.f32 %v1865, %v7834
    %v7973 = vmul.f32 %v1870, %v7834
    %v7974 = vmul.f32 %v1875, %v7834
    %v7975 = vmul.f32 %v1880, %v7834
    %v7976 = vmul.f32 %v1885, %v7834
    %v7977 = vmul.f32 %v1890, %v7834
    %v7978 = vmul.f32 %v1895, %v7834
    %v7979 = vmul.f32 %v1900, %v7834
    %v7980 = vmul.f32 %v1905, %v7834
    %v7981 = vmul.f32 %v1910, %v7834
    %v7982 = vmul.f32 %v1915, %v7834
    %v7983 = vmul.f32 %v1920, %v7834
    %v7984 = vmul.f32 %v1925, %v7834
    %v7985 = vmul.f32 %v1930, %v7834
    %v7986 = vmul.f32 %v1935, %v7834
    %v7987 = vmul.f32 %v1940, %v7834
    %v7988 = vmul.f32 %v1945, %v7834
    %v7989 = vmul.f32 %v1950, %v7834
    %v7990 = vmul.f32 %v1955, %v7834
    %v7991 = vmul.f32 %v7769, %v7834
    %v7992 = vmul.f32 %v7774, %v7834
    %v7993 = vmul.f32 %v7779, %v7834
    %v7994 = vmul.f32 %v7784, %v7834
    %v7995 = vmul.f32 %v7789, %v7834
    %v7996 = vmul.f32 %v7794, %v7834
    %v7997 = vmul.f32 %v7799, %v7834
    %v7998 = vmul.f32 %v7804, %v7834
    %v7999 = vmul.f32 %v7809, %v7834
    %v8000 = vmul.f32 %v7814, %v7834
    %v8001 = vmul.f32 %v7819, %v7834
    %v8002 = vmul.f32 %v7824, %v7834
    %v8003 = vmul.f32 %v7829, %v7834
    %v8004 = vadd.f32 %v7571, %v7835
    %v8005 = vadd.f32 %v7572, %v7836
    %v8006 = vadd.f32 %v7573, %v7837
    %v8007 = vadd.f32 %v7574, %v7838
    %v8008 = vadd.f32 %v7575, %v7839
    %v8009 = vadd.f32 %v7576, %v7840
    %v8010 = vadd.f32 %v7577, %v7841
    %v8011 = vadd.f32 %v7578, %v7842
    %v8012 = vadd.f32 %v7579, %v7843
    %v8013 = vadd.f32 %v7580, %v7844
    %v8014 = vadd.f32 %v7581, %v7845
    %v8015 = vadd.f32 %v7582, %v7846
    %v8016 = vadd.f32 %v7583, %v7847
    %v8017 = vadd.f32 %v7584, %v7848
    %v8018 = vadd.f32 %v7585, %v7849
    %v8019 = vadd.f32 %v7586, %v7850
    %v8020 = vadd.f32 %v7587, %v7851
    %v8021 = vadd.f32 %v7588, %v7852
    %v8022 = vadd.f32 %v7589, %v7853
    %v8023 = vadd.f32 %v7590, %v7854
    %v8024 = vadd.f32 %v7591, %v7855
    %v8025 = vadd.f32 %v7592, %v7856
    %v8026 = vadd.f32 %v7593, %v7857
    %v8027 = vadd.f32 %v7594, %v7858
    %v8028 = vadd.f32 %v7595, %v7859
    %v8029 = vadd.f32 %v7596, %v7860
    %v8030 = vadd.f32 %v7597, %v7861
    %v8031 = vadd.f32 %v7598, %v7862
    %v8032 = vadd.f32 %v7599, %v7863
    %v8033 = vadd.f32 %v7600, %v7864
    %v8034 = vadd.f32 %v7601, %v7865
    %v8035 = vadd.f32 %v7602, %v7866
    %v8036 = vadd.f32 %v7603, %v7867
    %v8037 = vadd.f32 %v7604, %v7868
    %v8038 = vadd.f32 %v7605, %v7869
    %v8039 = vadd.f32 %v7606, %v7870
    %v8040 = vadd.f32 %v7607, %v7871
    %v8041 = vadd.f32 %v7608, %v7872
    %v8042 = vadd.f32 %v7609, %v7873
    %v8043 = vadd.f32 %v7610, %v7874
    %v8044 = vadd.f32 %v7611, %v7875
    %v8045 = vadd.f32 %v7612, %v7876
    %v8046 = vadd.f32 %v7613, %v7877
    %v8047 = vadd.f32 %v7614, %v7878
    %v8048 = vadd.f32 %v7615, %v7879
    %v8049 = vadd.f32 %v7616, %v7880
    %v8050 = vadd.f32 %v7617, %v7881
    %v8051 = vadd.f32 %v7618, %v7882
    %v8052 = vadd.f32 %v7619, %v7883
    %v8053 = vadd.f32 %v7620, %v7884
    %v8054 = vadd.f32 %v7621, %v7885
    %v8055 = vadd.f32 %v7622, %v7886
    %v8056 = vadd.f32 %v7623, %v7887
    %v8057 = vadd.f32 %v7624, %v7888
    %v8058 = vadd.f32 %v7625, %v7889
    %v8059 = vadd.f32 %v7626, %v7890
    %v8060 = vadd.f32 %v7627, %v7891
    %v8061 = vadd.f32 %v7628, %v7892
    %v8062 = vadd.f32 %v7629, %v7893
    %v8063 = vadd.f32 %v7630, %v7894
    %v8064 = vadd.f32 %v7631, %v7895
    %v8065 = vadd.f32 %v7632, %v7896
    %v8066 = vadd.f32 %v7633, %v7897
    %v8067 = vadd.f32 %v7634, %v7898
    %v8068 = vadd.f32 %v7635, %v7899
    %v8069 = vadd.f32 %v7636, %v7900
    %v8070 = vadd.f32 %v7637, %v7901
    %v8071 = vadd.f32 %v7638, %v7902
    %v8072 = vadd.f32 %v7639, %v7903
    %v8073 = vadd.f32 %v7640, %v7904
    %v8074 = vadd.f32 %v7641, %v7905
    %v8075 = vadd.f32 %v7642, %v7906
    %v8076 = vadd.f32 %v7643, %v7907
    %v8077 = vadd.f32 %v7644, %v7908
    %v8078 = vadd.f32 %v7645, %v7909
    %v8079 = vadd.f32 %v7646, %v7910
    %v8080 = vadd.f32 %v7647, %v7911
    %v8081 = vadd.f32 %v7648, %v7912
    %v8082 = vadd.f32 %v7649, %v7913
    %v8083 = vadd.f32 %v7650, %v7914
    %v8084 = vadd.f32 %v7651, %v7915
    %v8085 = vadd.f32 %v7652, %v7916
    %v8086 = vadd.f32 %v7653, %v7917
    %v8087 = vadd.f32 %v7654, %v7918
    %v8088 = vadd.f32 %v7655, %v7919
    %v8089 = vadd.f32 %v7656, %v7920
    %v8090 = vadd.f32 %v7657, %v7921
    %v8091 = vadd.f32 %v7658, %v7922
    %v8092 = vadd.f32 %v7659, %v7923
    %v8093 = vadd.f32 %v7660, %v7924
    %v8094 = vadd.f32 %v7661, %v7925
    %v8095 = vadd.f32 %v7662, %v7926
    %v8096 = vadd.f32 %v7663, %v7927
    %v8097 = vadd.f32 %v7664, %v7928
    %v8098 = vadd.f32 %v7665, %v7929
    %v8099 = vadd.f32 %v7666, %v7930
    %v8100 = vadd.f32 %v7667, %v7931
    %v8101 = vadd.f32 %v7668, %v7932
    %v8102 = vadd.f32 %v7669, %v7933
    %v8103 = vadd.f32 %v7670, %v7934
    %v8104 = vadd.f32 %v7671, %v7935
    %v8105 = vadd.f32 %v7672, %v7936
    %v8106 = vadd.f32 %v7673, %v7937
    %v8107 = vadd.f32 %v7674, %v7938
    %v8108 = vadd.f32 %v7675, %v7939
    %v8109 = vadd.f32 %v7676, %v7940
    %v8110 = vadd.f32 %v7677, %v7941
    %v8111 = vadd.f32 %v7678, %v7942
    %v8112 = vadd.f32 %v7679, %v7943
    %v8113 = vadd.f32 %v7680, %v7944
    %v8114 = vadd.f32 %v7681, %v7945
    %v8115 = vadd.f32 %v7682, %v7946
    %v8116 = vadd.f32 %v7683, %v7947
    %v8117 = vadd.f32 %v7684, %v7948
    %v8118 = vadd.f32 %v7685, %v7949
    %v8119 = vadd.f32 %v7686, %v7950
    %v8120 = vadd.f32 %v7687, %v7951
    %v8121 = vadd.f32 %v7688, %v7952
    %v8122 = vadd.f32 %v7689, %v7953
    %v8123 = vadd.f32 %v7690, %v7954
    %v8124 = vadd.f32 %v7691, %v7955
    %v8125 = vadd.f32 %v7692, %v7956
    %v8126 = vadd.f32 %v7693, %v7957
    %v8127 = vadd.f32 %v7694, %v7958
    %v8128 = vadd.f32 %v7695, %v7959
    %v8129 = vadd.f32 %v7696, %v7960
    %v8130 = vadd.f32 %v7697, %v7961
    %v8131 = vadd.f32 %v7698, %v7962
    %v8132 = vadd.f32 %v7699, %v7963
    %v8133 = vadd.f32 %v7700, %v7964
    %v8134 = vadd.f32 %v7701, %v7965
    %v8135 = vadd.f32 %v7702, %v7966
    %v8136 = vadd.f32 %v7703, %v7967
    %v8137 = vadd.f32 %v7704, %v7968
    %v8138 = vadd.f32 %v7705, %v7969
    %v8139 = vadd.f32 %v7706, %v7970
    %v8140 = vadd.f32 %v7707, %v7971
    %v8141 = vadd.f32 %v7708, %v7972
    %v8142 = vadd.f32 %v7709, %v7973
    %v8143 = vadd.f32 %v7710, %v7974
    %v8144 = vadd.f32 %v7711, %v7975
    %v8145 = vadd.f32 %v7712, %v7976
    %v8146 = vadd.f32 %v7713, %v7977
    %v8147 = vadd.f32 %v7714, %v7978
    %v8148 = vadd.f32 %v7715, %v7979
    %v8149 = vadd.f32 %v7716, %v7980
    %v8150 = vadd.f32 %v7717, %v7981
    %v8151 = vadd.f32 %v7718, %v7982
    %v8152 = vadd.f32 %v7719, %v7983
    %v8153 = vadd.f32 %v7720, %v7984
    %v8154 = vadd.f32 %v7721, %v7985
    %v8155 = vadd.f32 %v7722, %v7986
    %v8156 = vadd.f32 %v7723, %v7987
    %v8157 = vadd.f32 %v7724, %v7988
    %v8158 = vadd.f32 %v7725, %v7989
    %v8159 = vadd.f32 %v7726, %v7990
    %v8160 = vadd.f32 %v7727, %v7991
    %v8161 = vadd.f32 %v7728, %v7992
    %v8162 = vadd.f32 %v7729, %v7993
    %v8163 = vadd.f32 %v7730, %v7994
    %v8164 = vadd.f32 %v7731, %v7995
    %v8165 = vadd.f32 %v7732, %v7996
    %v8166 = vadd.f32 %v7733, %v7997
    %v8167 = vadd.f32 %v7734, %v7998
    %v8168 = vadd.f32 %v7735, %v7999
    %v8169 = vadd.f32 %v7736, %v8000
    %v8170 = vadd.f32 %v7737, %v8001
    %v8171 = vadd.f32 %v7738, %v8002
    %v8172 = vadd.f32 %v7739, %v8003
    %v8173 = vpack.c.bf16 %v743, %v743
    %v8174 = vpack.c.bf16 %v745, %v745
    %v8175 = vpack.c.bf16 %v747, %v747
    %v8176 = vpack.c.bf16 %v749, %v749
    %v8177 = vpack.c.bf16 %v751, %v751
    %v8178 = vpack.c.bf16 %v753, %v753
    %v8179 = vpack.c.bf16 %v755, %v755
    %v8180 = vpack.c.bf16 %v757, %v757
    %v8181 = vpack.c.bf16 %v759, %v759
    %v8182 = vpack.c.bf16 %v761, %v761
    %v8183 = vpack.c.bf16 %v763, %v763
    %v8184 = vpack.c.bf16 %v765, %v765
    %v8185 = vpack.c.bf16 %v767, %v767
    %v8186 = vunpack.c.l.bf16 %v8173
    %v8187 = vunpack.c.l.bf16 %v8174
    %v8188 = vunpack.c.l.bf16 %v8175
    %v8189 = vunpack.c.l.bf16 %v8176
    %v8190 = vunpack.c.l.bf16 %v8177
    %v8191 = vunpack.c.l.bf16 %v8178
    %v8192 = vunpack.c.l.bf16 %v8179
    %v8193 = vunpack.c.l.bf16 %v8180
    %v8194 = vunpack.c.l.bf16 %v8181
    %v8195 = vunpack.c.l.bf16 %v8182
    %v8196 = vunpack.c.l.bf16 %v8183
    %v8197 = vunpack.c.l.bf16 %v8184
    %v8198 = vunpack.c.l.bf16 %v8185
    %8200 = vset.pattern.permute.xlu0 0
    %8201 = vperm.xlu0 %8200, %v8186
    %v8202 = vpop.permute.xlu0 %8201
    %8205 = vset.pattern.permute.xlu0 0
    %8206 = vperm.xlu0 %8205, %v8187
    %v8207 = vpop.permute.xlu0 %8206
    %8210 = vset.pattern.permute.xlu0 0
    %8211 = vperm.xlu0 %8210, %v8188
    %v8212 = vpop.permute.xlu0 %8211
    %8215 = vset.pattern.permute.xlu0 0
    %8216 = vperm.xlu0 %8215, %v8189
    %v8217 = vpop.permute.xlu0 %8216
    %8220 = vset.pattern.permute.xlu0 0
    %8221 = vperm.xlu0 %8220, %v8190
    %v8222 = vpop.permute.xlu0 %8221
    %8225 = vset.pattern.permute.xlu0 0
    %8226 = vperm.xlu0 %8225, %v8191
    %v8227 = vpop.permute.xlu0 %8226
    %8230 = vset.pattern.permute.xlu0 0
    %8231 = vperm.xlu0 %8230, %v8192
    %v8232 = vpop.permute.xlu0 %8231
    %8235 = vset.pattern.permute.xlu0 0
    %8236 = vperm.xlu0 %8235, %v8193
    %v8237 = vpop.permute.xlu0 %8236
    %8240 = vset.pattern.permute.xlu0 0
    %8241 = vperm.xlu0 %8240, %v8194
    %v8242 = vpop.permute.xlu0 %8241
    %8245 = vset.pattern.permute.xlu0 0
    %8246 = vperm.xlu0 %8245, %v8195
    %v8247 = vpop.permute.xlu0 %8246
    %8250 = vset.pattern.permute.xlu0 0
    %8251 = vperm.xlu0 %8250, %v8196
    %v8252 = vpop.permute.xlu0 %8251
    %8255 = vset.pattern.permute.xlu0 0
    %8256 = vperm.xlu0 %8255, %v8197
    %v8257 = vpop.permute.xlu0 %8256
    %8260 = vset.pattern.permute.xlu0 0
    %8261 = vperm.xlu0 %8260, %v8198
    %v8262 = vpop.permute.xlu0 %8261
    %v8264 = vlaneseq
    %v8265 = vshrl.u32 %v8264, 7
    %v8266 = vsub.s32 7, %v8265
    %v8267 = vrot.slane %v772, %v8266
    %v8268 = vmul.f32 %v2705, %v8267
    %v8269 = vmul.f32 %v2710, %v8267
    %v8270 = vmul.f32 %v2715, %v8267
    %v8271 = vmul.f32 %v2720, %v8267
    %v8272 = vmul.f32 %v2725, %v8267
    %v8273 = vmul.f32 %v2730, %v8267
    %v8274 = vmul.f32 %v2735, %v8267
    %v8275 = vmul.f32 %v2740, %v8267
    %v8276 = vmul.f32 %v2745, %v8267
    %v8277 = vmul.f32 %v2750, %v8267
    %v8278 = vmul.f32 %v2755, %v8267
    %v8279 = vmul.f32 %v2760, %v8267
    %v8280 = vmul.f32 %v2765, %v8267
    %v8281 = vmul.f32 %v2770, %v8267
    %v8282 = vmul.f32 %v2775, %v8267
    %v8283 = vmul.f32 %v2780, %v8267
    %v8284 = vmul.f32 %v2785, %v8267
    %v8285 = vmul.f32 %v2790, %v8267
    %v8286 = vmul.f32 %v2795, %v8267
    %v8287 = vmul.f32 %v2800, %v8267
    %v8288 = vmul.f32 %v2805, %v8267
    %v8289 = vmul.f32 %v2810, %v8267
    %v8290 = vmul.f32 %v2815, %v8267
    %v8291 = vmul.f32 %v2820, %v8267
    %v8292 = vmul.f32 %v2825, %v8267
    %v8293 = vmul.f32 %v2830, %v8267
    %v8294 = vmul.f32 %v2835, %v8267
    %v8295 = vmul.f32 %v2840, %v8267
    %v8296 = vmul.f32 %v2845, %v8267
    %v8297 = vmul.f32 %v2850, %v8267
    %v8298 = vmul.f32 %v2855, %v8267
    %v8299 = vmul.f32 %v2860, %v8267
    %v8300 = vmul.f32 %v2865, %v8267
    %v8301 = vmul.f32 %v2870, %v8267
    %v8302 = vmul.f32 %v2875, %v8267
    %v8303 = vmul.f32 %v2880, %v8267
    %v8304 = vmul.f32 %v2885, %v8267
    %v8305 = vmul.f32 %v2890, %v8267
    %v8306 = vmul.f32 %v2895, %v8267
    %v8307 = vmul.f32 %v2900, %v8267
    %v8308 = vmul.f32 %v2905, %v8267
    %v8309 = vmul.f32 %v2910, %v8267
    %v8310 = vmul.f32 %v2915, %v8267
    %v8311 = vmul.f32 %v2920, %v8267
    %v8312 = vmul.f32 %v2925, %v8267
    %v8313 = vmul.f32 %v2930, %v8267
    %v8314 = vmul.f32 %v2935, %v8267
    %v8315 = vmul.f32 %v2940, %v8267
    %v8316 = vmul.f32 %v2945, %v8267
    %v8317 = vmul.f32 %v2950, %v8267
    %v8318 = vmul.f32 %v2955, %v8267
    %v8319 = vmul.f32 %v2960, %v8267
    %v8320 = vmul.f32 %v2965, %v8267
    %v8321 = vmul.f32 %v2970, %v8267
    %v8322 = vmul.f32 %v2975, %v8267
    %v8323 = vmul.f32 %v2980, %v8267
    %v8324 = vmul.f32 %v2985, %v8267
    %v8325 = vmul.f32 %v2990, %v8267
    %v8326 = vmul.f32 %v2995, %v8267
    %v8327 = vmul.f32 %v3000, %v8267
    %v8328 = vmul.f32 %v3005, %v8267
    %v8329 = vmul.f32 %v3010, %v8267
    %v8330 = vmul.f32 %v3015, %v8267
    %v8331 = vmul.f32 %v3020, %v8267
    %v8332 = vmul.f32 %v3025, %v8267
    %v8333 = vmul.f32 %v3030, %v8267
    %v8334 = vmul.f32 %v3035, %v8267
    %v8335 = vmul.f32 %v3040, %v8267
    %v8336 = vmul.f32 %v3045, %v8267
    %v8337 = vmul.f32 %v3050, %v8267
    %v8338 = vmul.f32 %v3055, %v8267
    %v8339 = vmul.f32 %v3060, %v8267
    %v8340 = vmul.f32 %v3065, %v8267
    %v8341 = vmul.f32 %v3070, %v8267
    %v8342 = vmul.f32 %v3075, %v8267
    %v8343 = vmul.f32 %v3080, %v8267
    %v8344 = vmul.f32 %v3085, %v8267
    %v8345 = vmul.f32 %v3090, %v8267
    %v8346 = vmul.f32 %v3095, %v8267
    %v8347 = vmul.f32 %v3100, %v8267
    %v8348 = vmul.f32 %v3105, %v8267
    %v8349 = vmul.f32 %v3110, %v8267
    %v8350 = vmul.f32 %v3115, %v8267
    %v8351 = vmul.f32 %v3120, %v8267
    %v8352 = vmul.f32 %v3125, %v8267
    %v8353 = vmul.f32 %v3130, %v8267
    %v8354 = vmul.f32 %v3135, %v8267
    %v8355 = vmul.f32 %v3140, %v8267
    %v8356 = vmul.f32 %v3145, %v8267
    %v8357 = vmul.f32 %v3150, %v8267
    %v8358 = vmul.f32 %v3155, %v8267
    %v8359 = vmul.f32 %v3160, %v8267
    %v8360 = vmul.f32 %v3165, %v8267
    %v8361 = vmul.f32 %v3170, %v8267
    %v8362 = vmul.f32 %v3175, %v8267
    %v8363 = vmul.f32 %v3180, %v8267
    %v8364 = vmul.f32 %v3185, %v8267
    %v8365 = vmul.f32 %v3190, %v8267
    %v8366 = vmul.f32 %v3195, %v8267
    %v8367 = vmul.f32 %v3200, %v8267
    %v8368 = vmul.f32 %v3205, %v8267
    %v8369 = vmul.f32 %v3210, %v8267
    %v8370 = vmul.f32 %v3215, %v8267
    %v8371 = vmul.f32 %v3220, %v8267
    %v8372 = vmul.f32 %v3225, %v8267
    %v8373 = vmul.f32 %v3230, %v8267
    %v8374 = vmul.f32 %v3235, %v8267
    %v8375 = vmul.f32 %v3240, %v8267
    %v8376 = vmul.f32 %v3245, %v8267
    %v8377 = vmul.f32 %v3250, %v8267
    %v8378 = vmul.f32 %v3255, %v8267
    %v8379 = vmul.f32 %v3260, %v8267
    %v8380 = vmul.f32 %v3265, %v8267
    %v8381 = vmul.f32 %v3270, %v8267
    %v8382 = vmul.f32 %v3275, %v8267
    %v8383 = vmul.f32 %v3280, %v8267
    %v8384 = vmul.f32 %v3285, %v8267
    %v8385 = vmul.f32 %v3290, %v8267
    %v8386 = vmul.f32 %v3295, %v8267
    %v8387 = vmul.f32 %v3300, %v8267
    %v8388 = vmul.f32 %v3305, %v8267
    %v8389 = vmul.f32 %v3310, %v8267
    %v8390 = vmul.f32 %v3315, %v8267
    %v8391 = vmul.f32 %v3320, %v8267
    %v8392 = vmul.f32 %v3325, %v8267
    %v8393 = vmul.f32 %v3330, %v8267
    %v8394 = vmul.f32 %v3335, %v8267
    %v8395 = vmul.f32 %v3340, %v8267
    %v8396 = vmul.f32 %v3345, %v8267
    %v8397 = vmul.f32 %v3350, %v8267
    %v8398 = vmul.f32 %v3355, %v8267
    %v8399 = vmul.f32 %v3360, %v8267
    %v8400 = vmul.f32 %v3365, %v8267
    %v8401 = vmul.f32 %v3370, %v8267
    %v8402 = vmul.f32 %v3375, %v8267
    %v8403 = vmul.f32 %v3380, %v8267
    %v8404 = vmul.f32 %v3385, %v8267
    %v8405 = vmul.f32 %v3390, %v8267
    %v8406 = vmul.f32 %v3395, %v8267
    %v8407 = vmul.f32 %v3400, %v8267
    %v8408 = vmul.f32 %v3405, %v8267
    %v8409 = vmul.f32 %v3410, %v8267
    %v8410 = vmul.f32 %v3415, %v8267
    %v8411 = vmul.f32 %v3420, %v8267
    %v8412 = vmul.f32 %v3425, %v8267
    %v8413 = vmul.f32 %v3430, %v8267
    %v8414 = vmul.f32 %v3435, %v8267
    %v8415 = vmul.f32 %v3440, %v8267
    %v8416 = vmul.f32 %v3445, %v8267
    %v8417 = vmul.f32 %v3450, %v8267
    %v8418 = vmul.f32 %v3455, %v8267
    %v8419 = vmul.f32 %v3460, %v8267
    %v8420 = vmul.f32 %v3465, %v8267
    %v8421 = vmul.f32 %v3470, %v8267
    %v8422 = vmul.f32 %v3475, %v8267
    %v8423 = vmul.f32 %v3480, %v8267
    %v8424 = vmul.f32 %v8202, %v8267
    %v8425 = vmul.f32 %v8207, %v8267
    %v8426 = vmul.f32 %v8212, %v8267
    %v8427 = vmul.f32 %v8217, %v8267
    %v8428 = vmul.f32 %v8222, %v8267
    %v8429 = vmul.f32 %v8227, %v8267
    %v8430 = vmul.f32 %v8232, %v8267
    %v8431 = vmul.f32 %v8237, %v8267
    %v8432 = vmul.f32 %v8242, %v8267
    %v8433 = vmul.f32 %v8247, %v8267
    %v8434 = vmul.f32 %v8252, %v8267
    %v8435 = vmul.f32 %v8257, %v8267
    %v8436 = vmul.f32 %v8262, %v8267
    %v8437 = vadd.f32 %v8004, %v8268
    %v8438 = vadd.f32 %v8005, %v8269
    %v8439 = vadd.f32 %v8006, %v8270
    %v8440 = vadd.f32 %v8007, %v8271
    %v8441 = vadd.f32 %v8008, %v8272
    %v8442 = vadd.f32 %v8009, %v8273
    %v8443 = vadd.f32 %v8010, %v8274
    %v8444 = vadd.f32 %v8011, %v8275
    %v8445 = vadd.f32 %v8012, %v8276
    %v8446 = vadd.f32 %v8013, %v8277
    %v8447 = vadd.f32 %v8014, %v8278
    %v8448 = vadd.f32 %v8015, %v8279
    %v8449 = vadd.f32 %v8016, %v8280
    %v8450 = vadd.f32 %v8017, %v8281
    %v8451 = vadd.f32 %v8018, %v8282
    %v8452 = vadd.f32 %v8019, %v8283
    %v8453 = vadd.f32 %v8020, %v8284
    %v8454 = vadd.f32 %v8021, %v8285
    %v8455 = vadd.f32 %v8022, %v8286
    %v8456 = vadd.f32 %v8023, %v8287
    %v8457 = vadd.f32 %v8024, %v8288
    %v8458 = vadd.f32 %v8025, %v8289
    %v8459 = vadd.f32 %v8026, %v8290
    %v8460 = vadd.f32 %v8027, %v8291
    %v8461 = vadd.f32 %v8028, %v8292
    %v8462 = vadd.f32 %v8029, %v8293
    %v8463 = vadd.f32 %v8030, %v8294
    %v8464 = vadd.f32 %v8031, %v8295
    %v8465 = vadd.f32 %v8032, %v8296
    %v8466 = vadd.f32 %v8033, %v8297
    %v8467 = vadd.f32 %v8034, %v8298
    %v8468 = vadd.f32 %v8035, %v8299
    %v8469 = vadd.f32 %v8036, %v8300
    %v8470 = vadd.f32 %v8037, %v8301
    %v8471 = vadd.f32 %v8038, %v8302
    %v8472 = vadd.f32 %v8039, %v8303
    %v8473 = vadd.f32 %v8040, %v8304
    %v8474 = vadd.f32 %v8041, %v8305
    %v8475 = vadd.f32 %v8042, %v8306
    %v8476 = vadd.f32 %v8043, %v8307
    %v8477 = vadd.f32 %v8044, %v8308
    %v8478 = vadd.f32 %v8045, %v8309
    %v8479 = vadd.f32 %v8046, %v8310
    %v8480 = vadd.f32 %v8047, %v8311
    %v8481 = vadd.f32 %v8048, %v8312
    %v8482 = vadd.f32 %v8049, %v8313
    %v8483 = vadd.f32 %v8050, %v8314
    %v8484 = vadd.f32 %v8051, %v8315
    %v8485 = vadd.f32 %v8052, %v8316
    %v8486 = vadd.f32 %v8053, %v8317
    %v8487 = vadd.f32 %v8054, %v8318
    %v8488 = vadd.f32 %v8055, %v8319
    %v8489 = vadd.f32 %v8056, %v8320
    %v8490 = vadd.f32 %v8057, %v8321
    %v8491 = vadd.f32 %v8058, %v8322
    %v8492 = vadd.f32 %v8059, %v8323
    %v8493 = vadd.f32 %v8060, %v8324
    %v8494 = vadd.f32 %v8061, %v8325
    %v8495 = vadd.f32 %v8062, %v8326
    %v8496 = vadd.f32 %v8063, %v8327
    %v8497 = vadd.f32 %v8064, %v8328
    %v8498 = vadd.f32 %v8065, %v8329
    %v8499 = vadd.f32 %v8066, %v8330
    %v8500 = vadd.f32 %v8067, %v8331
    %v8501 = vadd.f32 %v8068, %v8332
    %v8502 = vadd.f32 %v8069, %v8333
    %v8503 = vadd.f32 %v8070, %v8334
    %v8504 = vadd.f32 %v8071, %v8335
    %v8505 = vadd.f32 %v8072, %v8336
    %v8506 = vadd.f32 %v8073, %v8337
    %v8507 = vadd.f32 %v8074, %v8338
    %v8508 = vadd.f32 %v8075, %v8339
    %v8509 = vadd.f32 %v8076, %v8340
    %v8510 = vadd.f32 %v8077, %v8341
    %v8511 = vadd.f32 %v8078, %v8342
    %v8512 = vadd.f32 %v8079, %v8343
    %v8513 = vadd.f32 %v8080, %v8344
    %v8514 = vadd.f32 %v8081, %v8345
    %v8515 = vadd.f32 %v8082, %v8346
    %v8516 = vadd.f32 %v8083, %v8347
    %v8517 = vadd.f32 %v8084, %v8348
    %v8518 = vadd.f32 %v8085, %v8349
    %v8519 = vadd.f32 %v8086, %v8350
    %v8520 = vadd.f32 %v8087, %v8351
    %v8521 = vadd.f32 %v8088, %v8352
    %v8522 = vadd.f32 %v8089, %v8353
    %v8523 = vadd.f32 %v8090, %v8354
    %v8524 = vadd.f32 %v8091, %v8355
    %v8525 = vadd.f32 %v8092, %v8356
    %v8526 = vadd.f32 %v8093, %v8357
    %v8527 = vadd.f32 %v8094, %v8358
    %v8528 = vadd.f32 %v8095, %v8359
    %v8529 = vadd.f32 %v8096, %v8360
    %v8530 = vadd.f32 %v8097, %v8361
    %v8531 = vadd.f32 %v8098, %v8362
    %v8532 = vadd.f32 %v8099, %v8363
    %v8533 = vadd.f32 %v8100, %v8364
    %v8534 = vadd.f32 %v8101, %v8365
    %v8535 = vadd.f32 %v8102, %v8366
    %v8536 = vadd.f32 %v8103, %v8367
    %v8537 = vadd.f32 %v8104, %v8368
    %v8538 = vadd.f32 %v8105, %v8369
    %v8539 = vadd.f32 %v8106, %v8370
    %v8540 = vadd.f32 %v8107, %v8371
    %v8541 = vadd.f32 %v8108, %v8372
    %v8542 = vadd.f32 %v8109, %v8373
    %v8543 = vadd.f32 %v8110, %v8374
    %v8544 = vadd.f32 %v8111, %v8375
    %v8545 = vadd.f32 %v8112, %v8376
    %v8546 = vadd.f32 %v8113, %v8377
    %v8547 = vadd.f32 %v8114, %v8378
    %v8548 = vadd.f32 %v8115, %v8379
    %v8549 = vadd.f32 %v8116, %v8380
    %v8550 = vadd.f32 %v8117, %v8381
    %v8551 = vadd.f32 %v8118, %v8382
    %v8552 = vadd.f32 %v8119, %v8383
    %v8553 = vadd.f32 %v8120, %v8384
    %v8554 = vadd.f32 %v8121, %v8385
    %v8555 = vadd.f32 %v8122, %v8386
    %v8556 = vadd.f32 %v8123, %v8387
    %v8557 = vadd.f32 %v8124, %v8388
    %v8558 = vadd.f32 %v8125, %v8389
    %v8559 = vadd.f32 %v8126, %v8390
    %v8560 = vadd.f32 %v8127, %v8391
    %v8561 = vadd.f32 %v8128, %v8392
    %v8562 = vadd.f32 %v8129, %v8393
    %v8563 = vadd.f32 %v8130, %v8394
    %v8564 = vadd.f32 %v8131, %v8395
    %v8565 = vadd.f32 %v8132, %v8396
    %v8566 = vadd.f32 %v8133, %v8397
    %v8567 = vadd.f32 %v8134, %v8398
    %v8568 = vadd.f32 %v8135, %v8399
    %v8569 = vadd.f32 %v8136, %v8400
    %v8570 = vadd.f32 %v8137, %v8401
    %v8571 = vadd.f32 %v8138, %v8402
    %v8572 = vadd.f32 %v8139, %v8403
    %v8573 = vadd.f32 %v8140, %v8404
    %v8574 = vadd.f32 %v8141, %v8405
    %v8575 = vadd.f32 %v8142, %v8406
    %v8576 = vadd.f32 %v8143, %v8407
    %v8577 = vadd.f32 %v8144, %v8408
    %v8578 = vadd.f32 %v8145, %v8409
    %v8579 = vadd.f32 %v8146, %v8410
    %v8580 = vadd.f32 %v8147, %v8411
    %v8581 = vadd.f32 %v8148, %v8412
    %v8582 = vadd.f32 %v8149, %v8413
    %v8583 = vadd.f32 %v8150, %v8414
    %v8584 = vadd.f32 %v8151, %v8415
    %v8585 = vadd.f32 %v8152, %v8416
    %v8586 = vadd.f32 %v8153, %v8417
    %v8587 = vadd.f32 %v8154, %v8418
    %v8588 = vadd.f32 %v8155, %v8419
    %v8589 = vadd.f32 %v8156, %v8420
    %v8590 = vadd.f32 %v8157, %v8421
    %v8591 = vadd.f32 %v8158, %v8422
    %v8592 = vadd.f32 %v8159, %v8423
    %v8593 = vadd.f32 %v8160, %v8424
    %v8594 = vadd.f32 %v8161, %v8425
    %v8595 = vadd.f32 %v8162, %v8426
    %v8596 = vadd.f32 %v8163, %v8427
    %v8597 = vadd.f32 %v8164, %v8428
    %v8598 = vadd.f32 %v8165, %v8429
    %v8599 = vadd.f32 %v8166, %v8430
    %v8600 = vadd.f32 %v8167, %v8431
    %v8601 = vadd.f32 %v8168, %v8432
    %v8602 = vadd.f32 %v8169, %v8433
    %v8603 = vadd.f32 %v8170, %v8434
    %v8604 = vadd.f32 %v8171, %v8435
    %v8605 = vadd.f32 %v8172, %v8436
    %v8606 = vpack.c.bf16 %v768, %v768
    %v8607 = vunpack.c.l.bf16 %v8606
    %8609 = vset.pattern.permute.xlu0 0
    %8610 = vperm.xlu0 %8609, %v8607
    %v8611 = vpop.permute.xlu0 %8610
    %v8613 = vlaneseq
    %v8614 = vshrl.u32 %v8613, 7
    %v8615 = vsub.s32 0, %v8614
    %v8616 = vrot.slane %v773, %v8615
    %v8617 = vmul.f32 %v1185, %v8616
    %v8618 = vmul.f32 %v1190, %v8616
    %v8619 = vmul.f32 %v1195, %v8616
    %v8620 = vmul.f32 %v1200, %v8616
    %v8621 = vmul.f32 %v1205, %v8616
    %v8622 = vmul.f32 %v1210, %v8616
    %v8623 = vmul.f32 %v1215, %v8616
    %v8624 = vmul.f32 %v1220, %v8616
    %v8625 = vmul.f32 %v1225, %v8616
    %v8626 = vmul.f32 %v1230, %v8616
    %v8627 = vmul.f32 %v1235, %v8616
    %v8628 = vmul.f32 %v1240, %v8616
    %v8629 = vmul.f32 %v3858, %v8616
    %v8630 = vmul.f32 %v1250, %v8616
    %v8631 = vmul.f32 %v1255, %v8616
    %v8632 = vmul.f32 %v1260, %v8616
    %v8633 = vmul.f32 %v1265, %v8616
    %v8634 = vmul.f32 %v1270, %v8616
    %v8635 = vmul.f32 %v1275, %v8616
    %v8636 = vmul.f32 %v1280, %v8616
    %v8637 = vmul.f32 %v1285, %v8616
    %v8638 = vmul.f32 %v1290, %v8616
    %v8639 = vmul.f32 %v1295, %v8616
    %v8640 = vmul.f32 %v1300, %v8616
    %v8641 = vmul.f32 %v1305, %v8616
    %v8642 = vmul.f32 %v3863, %v8616
    %v8643 = vmul.f32 %v1315, %v8616
    %v8644 = vmul.f32 %v1320, %v8616
    %v8645 = vmul.f32 %v1325, %v8616
    %v8646 = vmul.f32 %v1330, %v8616
    %v8647 = vmul.f32 %v1335, %v8616
    %v8648 = vmul.f32 %v1340, %v8616
    %v8649 = vmul.f32 %v1345, %v8616
    %v8650 = vmul.f32 %v1350, %v8616
    %v8651 = vmul.f32 %v1355, %v8616
    %v8652 = vmul.f32 %v1360, %v8616
    %v8653 = vmul.f32 %v1365, %v8616
    %v8654 = vmul.f32 %v1370, %v8616
    %v8655 = vmul.f32 %v3868, %v8616
    %v8656 = vmul.f32 %v1380, %v8616
    %v8657 = vmul.f32 %v1385, %v8616
    %v8658 = vmul.f32 %v1390, %v8616
    %v8659 = vmul.f32 %v1395, %v8616
    %v8660 = vmul.f32 %v1400, %v8616
    %v8661 = vmul.f32 %v1405, %v8616
    %v8662 = vmul.f32 %v1410, %v8616
    %v8663 = vmul.f32 %v1415, %v8616
    %v8664 = vmul.f32 %v1420, %v8616
    %v8665 = vmul.f32 %v1425, %v8616
    %v8666 = vmul.f32 %v1430, %v8616
    %v8667 = vmul.f32 %v1435, %v8616
    %v8668 = vmul.f32 %v3873, %v8616
    %v8669 = vmul.f32 %v1445, %v8616
    %v8670 = vmul.f32 %v1450, %v8616
    %v8671 = vmul.f32 %v1455, %v8616
    %v8672 = vmul.f32 %v1460, %v8616
    %v8673 = vmul.f32 %v1465, %v8616
    %v8674 = vmul.f32 %v1470, %v8616
    %v8675 = vmul.f32 %v1475, %v8616
    %v8676 = vmul.f32 %v1480, %v8616
    %v8677 = vmul.f32 %v1485, %v8616
    %v8678 = vmul.f32 %v1490, %v8616
    %v8679 = vmul.f32 %v1495, %v8616
    %v8680 = vmul.f32 %v1500, %v8616
    %v8681 = vmul.f32 %v3878, %v8616
    %v8682 = vmul.f32 %v1510, %v8616
    %v8683 = vmul.f32 %v1515, %v8616
    %v8684 = vmul.f32 %v1520, %v8616
    %v8685 = vmul.f32 %v1525, %v8616
    %v8686 = vmul.f32 %v1530, %v8616
    %v8687 = vmul.f32 %v1535, %v8616
    %v8688 = vmul.f32 %v1540, %v8616
    %v8689 = vmul.f32 %v1545, %v8616
    %v8690 = vmul.f32 %v1550, %v8616
    %v8691 = vmul.f32 %v1555, %v8616
    %v8692 = vmul.f32 %v1560, %v8616
    %v8693 = vmul.f32 %v1565, %v8616
    %v8694 = vmul.f32 %v3883, %v8616
    %v8695 = vmul.f32 %v1575, %v8616
    %v8696 = vmul.f32 %v1580, %v8616
    %v8697 = vmul.f32 %v1585, %v8616
    %v8698 = vmul.f32 %v1590, %v8616
    %v8699 = vmul.f32 %v1595, %v8616
    %v8700 = vmul.f32 %v1600, %v8616
    %v8701 = vmul.f32 %v1605, %v8616
    %v8702 = vmul.f32 %v1610, %v8616
    %v8703 = vmul.f32 %v1615, %v8616
    %v8704 = vmul.f32 %v1620, %v8616
    %v8705 = vmul.f32 %v1625, %v8616
    %v8706 = vmul.f32 %v1630, %v8616
    %v8707 = vmul.f32 %v3888, %v8616
    %v8708 = vmul.f32 %v1640, %v8616
    %v8709 = vmul.f32 %v1645, %v8616
    %v8710 = vmul.f32 %v1650, %v8616
    %v8711 = vmul.f32 %v1655, %v8616
    %v8712 = vmul.f32 %v1660, %v8616
    %v8713 = vmul.f32 %v1665, %v8616
    %v8714 = vmul.f32 %v1670, %v8616
    %v8715 = vmul.f32 %v1675, %v8616
    %v8716 = vmul.f32 %v1680, %v8616
    %v8717 = vmul.f32 %v1685, %v8616
    %v8718 = vmul.f32 %v1690, %v8616
    %v8719 = vmul.f32 %v1695, %v8616
    %v8720 = vmul.f32 %v3893, %v8616
    %v8721 = vmul.f32 %v1705, %v8616
    %v8722 = vmul.f32 %v1710, %v8616
    %v8723 = vmul.f32 %v1715, %v8616
    %v8724 = vmul.f32 %v1720, %v8616
    %v8725 = vmul.f32 %v1725, %v8616
    %v8726 = vmul.f32 %v1730, %v8616
    %v8727 = vmul.f32 %v1735, %v8616
    %v8728 = vmul.f32 %v1740, %v8616
    %v8729 = vmul.f32 %v1745, %v8616
    %v8730 = vmul.f32 %v1750, %v8616
    %v8731 = vmul.f32 %v1755, %v8616
    %v8732 = vmul.f32 %v1760, %v8616
    %v8733 = vmul.f32 %v3898, %v8616
    %v8734 = vmul.f32 %v1770, %v8616
    %v8735 = vmul.f32 %v1775, %v8616
    %v8736 = vmul.f32 %v1780, %v8616
    %v8737 = vmul.f32 %v1785, %v8616
    %v8738 = vmul.f32 %v1790, %v8616
    %v8739 = vmul.f32 %v1795, %v8616
    %v8740 = vmul.f32 %v1800, %v8616
    %v8741 = vmul.f32 %v1805, %v8616
    %v8742 = vmul.f32 %v1810, %v8616
    %v8743 = vmul.f32 %v1815, %v8616
    %v8744 = vmul.f32 %v1820, %v8616
    %v8745 = vmul.f32 %v1825, %v8616
    %v8746 = vmul.f32 %v3903, %v8616
    %v8747 = vmul.f32 %v1835, %v8616
    %v8748 = vmul.f32 %v1840, %v8616
    %v8749 = vmul.f32 %v1845, %v8616
    %v8750 = vmul.f32 %v1850, %v8616
    %v8751 = vmul.f32 %v1855, %v8616
    %v8752 = vmul.f32 %v1860, %v8616
    %v8753 = vmul.f32 %v1865, %v8616
    %v8754 = vmul.f32 %v1870, %v8616
    %v8755 = vmul.f32 %v1875, %v8616
    %v8756 = vmul.f32 %v1880, %v8616
    %v8757 = vmul.f32 %v1885, %v8616
    %v8758 = vmul.f32 %v1890, %v8616
    %v8759 = vmul.f32 %v3908, %v8616
    %v8760 = vmul.f32 %v1900, %v8616
    %v8761 = vmul.f32 %v1905, %v8616
    %v8762 = vmul.f32 %v1910, %v8616
    %v8763 = vmul.f32 %v1915, %v8616
    %v8764 = vmul.f32 %v1920, %v8616
    %v8765 = vmul.f32 %v1925, %v8616
    %v8766 = vmul.f32 %v1930, %v8616
    %v8767 = vmul.f32 %v1935, %v8616
    %v8768 = vmul.f32 %v1940, %v8616
    %v8769 = vmul.f32 %v1945, %v8616
    %v8770 = vmul.f32 %v1950, %v8616
    %v8771 = vmul.f32 %v1955, %v8616
    %v8772 = vmul.f32 %v3913, %v8616
    %v8773 = vmul.f32 %v7774, %v8616
    %v8774 = vmul.f32 %v7779, %v8616
    %v8775 = vmul.f32 %v7784, %v8616
    %v8776 = vmul.f32 %v7789, %v8616
    %v8777 = vmul.f32 %v7794, %v8616
    %v8778 = vmul.f32 %v7799, %v8616
    %v8779 = vmul.f32 %v7804, %v8616
    %v8780 = vmul.f32 %v7809, %v8616
    %v8781 = vmul.f32 %v7814, %v8616
    %v8782 = vmul.f32 %v7819, %v8616
    %v8783 = vmul.f32 %v7824, %v8616
    %v8784 = vmul.f32 %v7829, %v8616
    %v8785 = vmul.f32 %v8611, %v8616
    %v8786 = vadd.f32 %v8437, %v8617
    %v8787 = vadd.f32 %v8438, %v8618
    %v8788 = vadd.f32 %v8439, %v8619
    %v8789 = vadd.f32 %v8440, %v8620
    %v8790 = vadd.f32 %v8441, %v8621
    %v8791 = vadd.f32 %v8442, %v8622
    %v8792 = vadd.f32 %v8443, %v8623
    %v8793 = vadd.f32 %v8444, %v8624
    %v8794 = vadd.f32 %v8445, %v8625
    %v8795 = vadd.f32 %v8446, %v8626
    %v8796 = vadd.f32 %v8447, %v8627
    %v8797 = vadd.f32 %v8448, %v8628
    %v8798 = vadd.f32 %v8449, %v8629
    %v8799 = vadd.f32 %v8450, %v8630
    %v8800 = vadd.f32 %v8451, %v8631
    %v8801 = vadd.f32 %v8452, %v8632
    %v8802 = vadd.f32 %v8453, %v8633
    %v8803 = vadd.f32 %v8454, %v8634
    %v8804 = vadd.f32 %v8455, %v8635
    %v8805 = vadd.f32 %v8456, %v8636
    %v8806 = vadd.f32 %v8457, %v8637
    %v8807 = vadd.f32 %v8458, %v8638
    %v8808 = vadd.f32 %v8459, %v8639
    %v8809 = vadd.f32 %v8460, %v8640
    %v8810 = vadd.f32 %v8461, %v8641
    %v8811 = vadd.f32 %v8462, %v8642
    %v8812 = vadd.f32 %v8463, %v8643
    %v8813 = vadd.f32 %v8464, %v8644
    %v8814 = vadd.f32 %v8465, %v8645
    %v8815 = vadd.f32 %v8466, %v8646
    %v8816 = vadd.f32 %v8467, %v8647
    %v8817 = vadd.f32 %v8468, %v8648
    %v8818 = vadd.f32 %v8469, %v8649
    %v8819 = vadd.f32 %v8470, %v8650
    %v8820 = vadd.f32 %v8471, %v8651
    %v8821 = vadd.f32 %v8472, %v8652
    %v8822 = vadd.f32 %v8473, %v8653
    %v8823 = vadd.f32 %v8474, %v8654
    %v8824 = vadd.f32 %v8475, %v8655
    %v8825 = vadd.f32 %v8476, %v8656
    %v8826 = vadd.f32 %v8477, %v8657
    %v8827 = vadd.f32 %v8478, %v8658
    %v8828 = vadd.f32 %v8479, %v8659
    %v8829 = vadd.f32 %v8480, %v8660
    %v8830 = vadd.f32 %v8481, %v8661
    %v8831 = vadd.f32 %v8482, %v8662
    %v8832 = vadd.f32 %v8483, %v8663
    %v8833 = vadd.f32 %v8484, %v8664
    %v8834 = vadd.f32 %v8485, %v8665
    %v8835 = vadd.f32 %v8486, %v8666
    %v8836 = vadd.f32 %v8487, %v8667
    %v8837 = vadd.f32 %v8488, %v8668
    %v8838 = vadd.f32 %v8489, %v8669
    %v8839 = vadd.f32 %v8490, %v8670
    %v8840 = vadd.f32 %v8491, %v8671
    %v8841 = vadd.f32 %v8492, %v8672
    %v8842 = vadd.f32 %v8493, %v8673
    %v8843 = vadd.f32 %v8494, %v8674
    %v8844 = vadd.f32 %v8495, %v8675
    %v8845 = vadd.f32 %v8496, %v8676
    %v8846 = vadd.f32 %v8497, %v8677
    %v8847 = vadd.f32 %v8498, %v8678
    %v8848 = vadd.f32 %v8499, %v8679
    %v8849 = vadd.f32 %v8500, %v8680
    %v8850 = vadd.f32 %v8501, %v8681
    %v8851 = vadd.f32 %v8502, %v8682
    %v8852 = vadd.f32 %v8503, %v8683
    %v8853 = vadd.f32 %v8504, %v8684
    %v8854 = vadd.f32 %v8505, %v8685
    %v8855 = vadd.f32 %v8506, %v8686
    %v8856 = vadd.f32 %v8507, %v8687
    %v8857 = vadd.f32 %v8508, %v8688
    %v8858 = vadd.f32 %v8509, %v8689
    %v8859 = vadd.f32 %v8510, %v8690
    %v8860 = vadd.f32 %v8511, %v8691
    %v8861 = vadd.f32 %v8512, %v8692
    %v8862 = vadd.f32 %v8513, %v8693
    %v8863 = vadd.f32 %v8514, %v8694
    %v8864 = vadd.f32 %v8515, %v8695
    %v8865 = vadd.f32 %v8516, %v8696
    %v8866 = vadd.f32 %v8517, %v8697
    %v8867 = vadd.f32 %v8518, %v8698
    %v8868 = vadd.f32 %v8519, %v8699
    %v8869 = vadd.f32 %v8520, %v8700
    %v8870 = vadd.f32 %v8521, %v8701
    %v8871 = vadd.f32 %v8522, %v8702
    %v8872 = vadd.f32 %v8523, %v8703
    %v8873 = vadd.f32 %v8524, %v8704
    %v8874 = vadd.f32 %v8525, %v8705
    %v8875 = vadd.f32 %v8526, %v8706
    %v8876 = vadd.f32 %v8527, %v8707
    %v8877 = vadd.f32 %v8528, %v8708
    %v8878 = vadd.f32 %v8529, %v8709
    %v8879 = vadd.f32 %v8530, %v8710
    %v8880 = vadd.f32 %v8531, %v8711
    %v8881 = vadd.f32 %v8532, %v8712
    %v8882 = vadd.f32 %v8533, %v8713
    %v8883 = vadd.f32 %v8534, %v8714
    %v8884 = vadd.f32 %v8535, %v8715
    %v8885 = vadd.f32 %v8536, %v8716
    %v8886 = vadd.f32 %v8537, %v8717
    %v8887 = vadd.f32 %v8538, %v8718
    %v8888 = vadd.f32 %v8539, %v8719
    %v8889 = vadd.f32 %v8540, %v8720
    %v8890 = vadd.f32 %v8541, %v8721
    %v8891 = vadd.f32 %v8542, %v8722
    %v8892 = vadd.f32 %v8543, %v8723
    %v8893 = vadd.f32 %v8544, %v8724
    %v8894 = vadd.f32 %v8545, %v8725
    %v8895 = vadd.f32 %v8546, %v8726
    %v8896 = vadd.f32 %v8547, %v8727
    %v8897 = vadd.f32 %v8548, %v8728
    %v8898 = vadd.f32 %v8549, %v8729
    %v8899 = vadd.f32 %v8550, %v8730
    %v8900 = vadd.f32 %v8551, %v8731
    %v8901 = vadd.f32 %v8552, %v8732
    %v8902 = vadd.f32 %v8553, %v8733
    %v8903 = vadd.f32 %v8554, %v8734
    %v8904 = vadd.f32 %v8555, %v8735
    %v8905 = vadd.f32 %v8556, %v8736
    %v8906 = vadd.f32 %v8557, %v8737
    %v8907 = vadd.f32 %v8558, %v8738
    %v8908 = vadd.f32 %v8559, %v8739
    %v8909 = vadd.f32 %v8560, %v8740
    %v8910 = vadd.f32 %v8561, %v8741
    %v8911 = vadd.f32 %v8562, %v8742
    %v8912 = vadd.f32 %v8563, %v8743
    %v8913 = vadd.f32 %v8564, %v8744
    %v8914 = vadd.f32 %v8565, %v8745
    %v8915 = vadd.f32 %v8566, %v8746
    %v8916 = vadd.f32 %v8567, %v8747
    %v8917 = vadd.f32 %v8568, %v8748
    %v8918 = vadd.f32 %v8569, %v8749
    %v8919 = vadd.f32 %v8570, %v8750
    %v8920 = vadd.f32 %v8571, %v8751
    %v8921 = vadd.f32 %v8572, %v8752
    %v8922 = vadd.f32 %v8573, %v8753
    %v8923 = vadd.f32 %v8574, %v8754
    %v8924 = vadd.f32 %v8575, %v8755
    %v8925 = vadd.f32 %v8576, %v8756
    %v8926 = vadd.f32 %v8577, %v8757
    %v8927 = vadd.f32 %v8578, %v8758
    %v8928 = vadd.f32 %v8579, %v8759
    %v8929 = vadd.f32 %v8580, %v8760
    %v8930 = vadd.f32 %v8581, %v8761
    %v8931 = vadd.f32 %v8582, %v8762
    %v8932 = vadd.f32 %v8583, %v8763
    %v8933 = vadd.f32 %v8584, %v8764
    %v8934 = vadd.f32 %v8585, %v8765
    %v8935 = vadd.f32 %v8586, %v8766
    %v8936 = vadd.f32 %v8587, %v8767
    %v8937 = vadd.f32 %v8588, %v8768
    %v8938 = vadd.f32 %v8589, %v8769
    %v8939 = vadd.f32 %v8590, %v8770
    %v8940 = vadd.f32 %v8591, %v8771
    %v8941 = vadd.f32 %v8592, %v8772
    %v8942 = vadd.f32 %v8593, %v8773
    %v8943 = vadd.f32 %v8594, %v8774
    %v8944 = vadd.f32 %v8595, %v8775
    %v8945 = vadd.f32 %v8596, %v8776
    %v8946 = vadd.f32 %v8597, %v8777
    %v8947 = vadd.f32 %v8598, %v8778
    %v8948 = vadd.f32 %v8599, %v8779
    %v8949 = vadd.f32 %v8600, %v8780
    %v8950 = vadd.f32 %v8601, %v8781
    %v8951 = vadd.f32 %v8602, %v8782
    %v8952 = vadd.f32 %v8603, %v8783
    %v8953 = vadd.f32 %v8604, %v8784
    %v8954 = vadd.f32 %v8605, %v8785
    %v8956 = vlaneseq
    %v8957 = vshrl.u32 %v8956, 7
    %v8958 = vsub.s32 0, %v8957
    %v8959 = vrot.slane %v771, %v8958
    %v8961 = vadd.f32 %v8786, %v8959
    %v8962 = vadd.f32 %v8787, %v8959
    %v8963 = vadd.f32 %v8788, %v8959
    %v8964 = vadd.f32 %v8789, %v8959
    %v8965 = vadd.f32 %v8790, %v8959
    %v8966 = vadd.f32 %v8791, %v8959
    %v8967 = vadd.f32 %v8792, %v8959
    %v8968 = vadd.f32 %v8793, %v8959
    %v8969 = vadd.f32 %v8794, %v8959
    %v8970 = vadd.f32 %v8795, %v8959
    %v8971 = vadd.f32 %v8796, %v8959
    %v8972 = vadd.f32 %v8797, %v8959
    %v8973 = vadd.f32 %v8798, %v8959
    %v8974 = vadd.f32 %v8799, %v8959
    %v8975 = vadd.f32 %v8800, %v8959
    %v8976 = vadd.f32 %v8801, %v8959
    %v8977 = vadd.f32 %v8802, %v8959
    %v8978 = vadd.f32 %v8803, %v8959
    %v8979 = vadd.f32 %v8804, %v8959
    %v8980 = vadd.f32 %v8805, %v8959
    %v8981 = vadd.f32 %v8806, %v8959
    %v8982 = vadd.f32 %v8807, %v8959
    %v8983 = vadd.f32 %v8808, %v8959
    %v8984 = vadd.f32 %v8809, %v8959
    %v8985 = vadd.f32 %v8810, %v8959
    %v8986 = vadd.f32 %v8811, %v8959
    %v8987 = vadd.f32 %v8812, %v8959
    %v8988 = vadd.f32 %v8813, %v8959
    %v8989 = vadd.f32 %v8814, %v8959
    %v8990 = vadd.f32 %v8815, %v8959
    %v8991 = vadd.f32 %v8816, %v8959
    %v8992 = vadd.f32 %v8817, %v8959
    %v8993 = vadd.f32 %v8818, %v8959
    %v8994 = vadd.f32 %v8819, %v8959
    %v8995 = vadd.f32 %v8820, %v8959
    %v8996 = vadd.f32 %v8821, %v8959
    %v8997 = vadd.f32 %v8822, %v8959
    %v8998 = vadd.f32 %v8823, %v8959
    %v8999 = vadd.f32 %v8824, %v8959
    %v9000 = vadd.f32 %v8825, %v8959
    %v9001 = vadd.f32 %v8826, %v8959
    %v9002 = vadd.f32 %v8827, %v8959
    %v9003 = vadd.f32 %v8828, %v8959
    %v9004 = vadd.f32 %v8829, %v8959
    %v9005 = vadd.f32 %v8830, %v8959
    %v9006 = vadd.f32 %v8831, %v8959
    %v9007 = vadd.f32 %v8832, %v8959
    %v9008 = vadd.f32 %v8833, %v8959
    %v9009 = vadd.f32 %v8834, %v8959
    %v9010 = vadd.f32 %v8835, %v8959
    %v9011 = vadd.f32 %v8836, %v8959
    %v9012 = vadd.f32 %v8837, %v8959
    %v9013 = vadd.f32 %v8838, %v8959
    %v9014 = vadd.f32 %v8839, %v8959
    %v9015 = vadd.f32 %v8840, %v8959
    %v9016 = vadd.f32 %v8841, %v8959
    %v9017 = vadd.f32 %v8842, %v8959
    %v9018 = vadd.f32 %v8843, %v8959
    %v9019 = vadd.f32 %v8844, %v8959
    %v9020 = vadd.f32 %v8845, %v8959
    %v9021 = vadd.f32 %v8846, %v8959
    %v9022 = vadd.f32 %v8847, %v8959
    %v9023 = vadd.f32 %v8848, %v8959
    %v9024 = vadd.f32 %v8849, %v8959
    %v9025 = vadd.f32 %v8850, %v8959
    %v9026 = vadd.f32 %v8851, %v8959
    %v9027 = vadd.f32 %v8852, %v8959
    %v9028 = vadd.f32 %v8853, %v8959
    %v9029 = vadd.f32 %v8854, %v8959
    %v9030 = vadd.f32 %v8855, %v8959
    %v9031 = vadd.f32 %v8856, %v8959
    %v9032 = vadd.f32 %v8857, %v8959
    %v9033 = vadd.f32 %v8858, %v8959
    %v9034 = vadd.f32 %v8859, %v8959
    %v9035 = vadd.f32 %v8860, %v8959
    %v9036 = vadd.f32 %v8861, %v8959
    %v9037 = vadd.f32 %v8862, %v8959
    %v9038 = vadd.f32 %v8863, %v8959
    %v9039 = vadd.f32 %v8864, %v8959
    %v9040 = vadd.f32 %v8865, %v8959
    %v9041 = vadd.f32 %v8866, %v8959
    %v9042 = vadd.f32 %v8867, %v8959
    %v9043 = vadd.f32 %v8868, %v8959
    %v9044 = vadd.f32 %v8869, %v8959
    %v9045 = vadd.f32 %v8870, %v8959
    %v9046 = vadd.f32 %v8871, %v8959
    %v9047 = vadd.f32 %v8872, %v8959
    %v9048 = vadd.f32 %v8873, %v8959
    %v9049 = vadd.f32 %v8874, %v8959
    %v9050 = vadd.f32 %v8875, %v8959
    %v9051 = vadd.f32 %v8876, %v8959
    %v9052 = vadd.f32 %v8877, %v8959
    %v9053 = vadd.f32 %v8878, %v8959
    %v9054 = vadd.f32 %v8879, %v8959
    %v9055 = vadd.f32 %v8880, %v8959
    %v9056 = vadd.f32 %v8881, %v8959
    %v9057 = vadd.f32 %v8882, %v8959
    %v9058 = vadd.f32 %v8883, %v8959
    %v9059 = vadd.f32 %v8884, %v8959
    %v9060 = vadd.f32 %v8885, %v8959
    %v9061 = vadd.f32 %v8886, %v8959
    %v9062 = vadd.f32 %v8887, %v8959
    %v9063 = vadd.f32 %v8888, %v8959
    %v9064 = vadd.f32 %v8889, %v8959
    %v9065 = vadd.f32 %v8890, %v8959
    %v9066 = vadd.f32 %v8891, %v8959
    %v9067 = vadd.f32 %v8892, %v8959
    %v9068 = vadd.f32 %v8893, %v8959
    %v9069 = vadd.f32 %v8894, %v8959
    %v9070 = vadd.f32 %v8895, %v8959
    %v9071 = vadd.f32 %v8896, %v8959
    %v9072 = vadd.f32 %v8897, %v8959
    %v9073 = vadd.f32 %v8898, %v8959
    %v9074 = vadd.f32 %v8899, %v8959
    %v9075 = vadd.f32 %v8900, %v8959
    %v9076 = vadd.f32 %v8901, %v8959
    %v9077 = vadd.f32 %v8902, %v8959
    %v9078 = vadd.f32 %v8903, %v8959
    %v9079 = vadd.f32 %v8904, %v8959
    %v9080 = vadd.f32 %v8905, %v8959
    %v9081 = vadd.f32 %v8906, %v8959
    %v9082 = vadd.f32 %v8907, %v8959
    %v9083 = vadd.f32 %v8908, %v8959
    %v9084 = vadd.f32 %v8909, %v8959
    %v9085 = vadd.f32 %v8910, %v8959
    %v9086 = vadd.f32 %v8911, %v8959
    %v9087 = vadd.f32 %v8912, %v8959
    %v9088 = vadd.f32 %v8913, %v8959
    %v9089 = vadd.f32 %v8914, %v8959
    %v9090 = vadd.f32 %v8915, %v8959
    %v9091 = vadd.f32 %v8916, %v8959
    %v9092 = vadd.f32 %v8917, %v8959
    %v9093 = vadd.f32 %v8918, %v8959
    %v9094 = vadd.f32 %v8919, %v8959
    %v9095 = vadd.f32 %v8920, %v8959
    %v9096 = vadd.f32 %v8921, %v8959
    %v9097 = vadd.f32 %v8922, %v8959
    %v9098 = vadd.f32 %v8923, %v8959
    %v9099 = vadd.f32 %v8924, %v8959
    %v9100 = vadd.f32 %v8925, %v8959
    %v9101 = vadd.f32 %v8926, %v8959
    %v9102 = vadd.f32 %v8927, %v8959
    %v9103 = vadd.f32 %v8928, %v8959
    %v9104 = vadd.f32 %v8929, %v8959
    %v9105 = vadd.f32 %v8930, %v8959
    %v9106 = vadd.f32 %v8931, %v8959
    %v9107 = vadd.f32 %v8932, %v8959
    %v9108 = vadd.f32 %v8933, %v8959
    %v9109 = vadd.f32 %v8934, %v8959
    %v9110 = vadd.f32 %v8935, %v8959
    %v9111 = vadd.f32 %v8936, %v8959
    %v9112 = vadd.f32 %v8937, %v8959
    %v9113 = vadd.f32 %v8938, %v8959
    %v9114 = vadd.f32 %v8939, %v8959
    %v9115 = vadd.f32 %v8940, %v8959
    %v9116 = vadd.f32 %v8941, %v8959
    %v9117 = vadd.f32 %v8942, %v8959
    %v9118 = vadd.f32 %v8943, %v8959
    %v9119 = vadd.f32 %v8944, %v8959
    %v9120 = vadd.f32 %v8945, %v8959
    %v9121 = vadd.f32 %v8946, %v8959
    %v9122 = vadd.f32 %v8947, %v8959
    %v9123 = vadd.f32 %v8948, %v8959
    %v9124 = vadd.f32 %v8949, %v8959
    %v9125 = vadd.f32 %v8950, %v8959
    %v9126 = vadd.f32 %v8951, %v8959
    %v9127 = vadd.f32 %v8952, %v8959
    %v9128 = vadd.f32 %v8953, %v8959
    %v9129 = vadd.f32 %v8954, %v8959
    %v9130 = vmax.f32 %v8961, 0.0
    %v9131 = vmax.f32 %v8962, 0.0
    %v9132 = vmax.f32 %v8963, 0.0
    %v9133 = vmax.f32 %v8964, 0.0
    %v9134 = vmax.f32 %v8965, 0.0
    %v9135 = vmax.f32 %v8966, 0.0
    %v9136 = vmax.f32 %v8967, 0.0
    %v9137 = vmax.f32 %v8968, 0.0
    %v9138 = vmax.f32 %v8969, 0.0
    %v9139 = vmax.f32 %v8970, 0.0
    %v9140 = vmax.f32 %v8971, 0.0
    %v9141 = vmax.f32 %v8972, 0.0
    %v9142 = vmax.f32 %v8973, 0.0
    %v9143 = vmax.f32 %v8974, 0.0
    %v9144 = vmax.f32 %v8975, 0.0
    %v9145 = vmax.f32 %v8976, 0.0
    %v9146 = vmax.f32 %v8977, 0.0
    %v9147 = vmax.f32 %v8978, 0.0
    %v9148 = vmax.f32 %v8979, 0.0
    %v9149 = vmax.f32 %v8980, 0.0
    %v9150 = vmax.f32 %v8981, 0.0
    %v9151 = vmax.f32 %v8982, 0.0
    %v9152 = vmax.f32 %v8983, 0.0
    %v9153 = vmax.f32 %v8984, 0.0
    %v9154 = vmax.f32 %v8985, 0.0
    %v9155 = vmax.f32 %v8986, 0.0
    %v9156 = vmax.f32 %v8987, 0.0
    %v9157 = vmax.f32 %v8988, 0.0
    %v9158 = vmax.f32 %v8989, 0.0
    %v9159 = vmax.f32 %v8990, 0.0
    %v9160 = vmax.f32 %v8991, 0.0
    %v9161 = vmax.f32 %v8992, 0.0
    %v9162 = vmax.f32 %v8993, 0.0
    %v9163 = vmax.f32 %v8994, 0.0
    %v9164 = vmax.f32 %v8995, 0.0
    %v9165 = vmax.f32 %v8996, 0.0
    %v9166 = vmax.f32 %v8997, 0.0
    %v9167 = vmax.f32 %v8998, 0.0
    %v9168 = vmax.f32 %v8999, 0.0
    %v9169 = vmax.f32 %v9000, 0.0
    %v9170 = vmax.f32 %v9001, 0.0
    %v9171 = vmax.f32 %v9002, 0.0
    %v9172 = vmax.f32 %v9003, 0.0
    %v9173 = vmax.f32 %v9004, 0.0
    %v9174 = vmax.f32 %v9005, 0.0
    %v9175 = vmax.f32 %v9006, 0.0
    %v9176 = vmax.f32 %v9007, 0.0
    %v9177 = vmax.f32 %v9008, 0.0
    %v9178 = vmax.f32 %v9009, 0.0
    %v9179 = vmax.f32 %v9010, 0.0
    %v9180 = vmax.f32 %v9011, 0.0
    %v9181 = vmax.f32 %v9012, 0.0
    %v9182 = vmax.f32 %v9013, 0.0
    %v9183 = vmax.f32 %v9014, 0.0
    %v9184 = vmax.f32 %v9015, 0.0
    %v9185 = vmax.f32 %v9016, 0.0
    %v9186 = vmax.f32 %v9017, 0.0
    %v9187 = vmax.f32 %v9018, 0.0
    %v9188 = vmax.f32 %v9019, 0.0
    %v9189 = vmax.f32 %v9020, 0.0
    %v9190 = vmax.f32 %v9021, 0.0
    %v9191 = vmax.f32 %v9022, 0.0
    %v9192 = vmax.f32 %v9023, 0.0
    %v9193 = vmax.f32 %v9024, 0.0
    %v9194 = vmax.f32 %v9025, 0.0
    %v9195 = vmax.f32 %v9026, 0.0
    %v9196 = vmax.f32 %v9027, 0.0
    %v9197 = vmax.f32 %v9028, 0.0
    %v9198 = vmax.f32 %v9029, 0.0
    %v9199 = vmax.f32 %v9030, 0.0
    %v9200 = vmax.f32 %v9031, 0.0
    %v9201 = vmax.f32 %v9032, 0.0
    %v9202 = vmax.f32 %v9033, 0.0
    %v9203 = vmax.f32 %v9034, 0.0
    %v9204 = vmax.f32 %v9035, 0.0
    %v9205 = vmax.f32 %v9036, 0.0
    %v9206 = vmax.f32 %v9037, 0.0
    %v9207 = vmax.f32 %v9038, 0.0
    %v9208 = vmax.f32 %v9039, 0.0
    %v9209 = vmax.f32 %v9040, 0.0
    %v9210 = vmax.f32 %v9041, 0.0
    %v9211 = vmax.f32 %v9042, 0.0
    %v9212 = vmax.f32 %v9043, 0.0
    %v9213 = vmax.f32 %v9044, 0.0
    %v9214 = vmax.f32 %v9045, 0.0
    %v9215 = vmax.f32 %v9046, 0.0
    %v9216 = vmax.f32 %v9047, 0.0
    %v9217 = vmax.f32 %v9048, 0.0
    %v9218 = vmax.f32 %v9049, 0.0
    %v9219 = vmax.f32 %v9050, 0.0
    %v9220 = vmax.f32 %v9051, 0.0
    %v9221 = vmax.f32 %v9052, 0.0
    %v9222 = vmax.f32 %v9053, 0.0
    %v9223 = vmax.f32 %v9054, 0.0
    %v9224 = vmax.f32 %v9055, 0.0
    %v9225 = vmax.f32 %v9056, 0.0
    %v9226 = vmax.f32 %v9057, 0.0
    %v9227 = vmax.f32 %v9058, 0.0
    %v9228 = vmax.f32 %v9059, 0.0
    %v9229 = vmax.f32 %v9060, 0.0
    %v9230 = vmax.f32 %v9061, 0.0
    %v9231 = vmax.f32 %v9062, 0.0
    %v9232 = vmax.f32 %v9063, 0.0
    %v9233 = vmax.f32 %v9064, 0.0
    %v9234 = vmax.f32 %v9065, 0.0
    %v9235 = vmax.f32 %v9066, 0.0
    %v9236 = vmax.f32 %v9067, 0.0
    %v9237 = vmax.f32 %v9068, 0.0
    %v9238 = vmax.f32 %v9069, 0.0
    %v9239 = vmax.f32 %v9070, 0.0
    %v9240 = vmax.f32 %v9071, 0.0
    %v9241 = vmax.f32 %v9072, 0.0
    %v9242 = vmax.f32 %v9073, 0.0
    %v9243 = vmax.f32 %v9074, 0.0
    %v9244 = vmax.f32 %v9075, 0.0
    %v9245 = vmax.f32 %v9076, 0.0
    %v9246 = vmax.f32 %v9077, 0.0
    %v9247 = vmax.f32 %v9078, 0.0
    %v9248 = vmax.f32 %v9079, 0.0
    %v9249 = vmax.f32 %v9080, 0.0
    %v9250 = vmax.f32 %v9081, 0.0
    %v9251 = vmax.f32 %v9082, 0.0
    %v9252 = vmax.f32 %v9083, 0.0
    %v9253 = vmax.f32 %v9084, 0.0
    %v9254 = vmax.f32 %v9085, 0.0
    %v9255 = vmax.f32 %v9086, 0.0
    %v9256 = vmax.f32 %v9087, 0.0
    %v9257 = vmax.f32 %v9088, 0.0
    %v9258 = vmax.f32 %v9089, 0.0
    %v9259 = vmax.f32 %v9090, 0.0
    %v9260 = vmax.f32 %v9091, 0.0
    %v9261 = vmax.f32 %v9092, 0.0
    %v9262 = vmax.f32 %v9093, 0.0
    %v9263 = vmax.f32 %v9094, 0.0
    %v9264 = vmax.f32 %v9095, 0.0
    %v9265 = vmax.f32 %v9096, 0.0
    %v9266 = vmax.f32 %v9097, 0.0
    %v9267 = vmax.f32 %v9098, 0.0
    %v9268 = vmax.f32 %v9099, 0.0
    %v9269 = vmax.f32 %v9100, 0.0
    %v9270 = vmax.f32 %v9101, 0.0
    %v9271 = vmax.f32 %v9102, 0.0
    %v9272 = vmax.f32 %v9103, 0.0
    %v9273 = vmax.f32 %v9104, 0.0
    %v9274 = vmax.f32 %v9105, 0.0
    %v9275 = vmax.f32 %v9106, 0.0
    %v9276 = vmax.f32 %v9107, 0.0
    %v9277 = vmax.f32 %v9108, 0.0
    %v9278 = vmax.f32 %v9109, 0.0
    %v9279 = vmax.f32 %v9110, 0.0
    %v9280 = vmax.f32 %v9111, 0.0
    %v9281 = vmax.f32 %v9112, 0.0
    %v9282 = vmax.f32 %v9113, 0.0
    %v9283 = vmax.f32 %v9114, 0.0
    %v9284 = vmax.f32 %v9115, 0.0
    %v9285 = vmax.f32 %v9116, 0.0
    %v9286 = vmax.f32 %v9117, 0.0
    %v9287 = vmax.f32 %v9118, 0.0
    %v9288 = vmax.f32 %v9119, 0.0
    %v9289 = vmax.f32 %v9120, 0.0
    %v9290 = vmax.f32 %v9121, 0.0
    %v9291 = vmax.f32 %v9122, 0.0
    %v9292 = vmax.f32 %v9123, 0.0
    %v9293 = vmax.f32 %v9124, 0.0
    %v9294 = vmax.f32 %v9125, 0.0
    %v9295 = vmax.f32 %v9126, 0.0
    %v9296 = vmax.f32 %v9127, 0.0
    %v9297 = vmax.f32 %v9128, 0.0
    %v9298 = vmax.f32 %v9129, 0.0
    %v9299 = vld [vmem:[%s3] sm:$0xf]
    %v9300 = vld [vmem:[%s3 + $0x4] sm:$0xf]
    %v9301 = vld [vmem:[%s3 + $0x8] sm:$0xf]
    %v9302 = vld [vmem:[%s3 + $0xc] sm:$0xf]
    %v9303 = vld [vmem:[%s3 + $0x10] sm:$0xf]
    %v9304 = vld [vmem:[%s3 + $0x14] sm:$0xf]
    %v9305 = vld [vmem:[%s3 + $0x18] sm:$0xf]
    %v9306 = vld [vmem:[%s3 + $0x1c] sm:$0xf]
    %v9307 = vld [vmem:[%s3 + $0x20] sm:$0xf]
    %v9308 = vld [vmem:[%s3 + $0x24] sm:$0xf]
    %v9309 = vld [vmem:[%s3 + $0x28] sm:$0xf]
    %v9310 = vld [vmem:[%s3 + $0x2c] sm:$0xf]
    %v9311 = vld [vmem:[%s3 + $0x30] sm:$0xf]
    %v9312 = vld [vmem:[%s3 + $0x34] sm:$0xf]
    %v9313 = vld [vmem:[%s3 + $0x38] sm:$0xf]
    %v9314 = vld [vmem:[%s3 + $0x3c] sm:$0xf]
    %v9315 = vld [vmem:[%s3 + $0x40] sm:$0xf]
    %v9316 = vld [vmem:[%s3 + $0x44] sm:$0xf]
    %v9317 = vld [vmem:[%s3 + $0x48] sm:$0xf]
    %v9318 = vld [vmem:[%s3 + $0x4c] sm:$0xf]
    %v9319 = vld [vmem:[%s3 + $0x50] sm:$0xf]
    %v9320 = vld [vmem:[%s3 + $0x54] sm:$0xf]
    %v9321 = vld [vmem:[%s3 + $0x58] sm:$0xf]
    %v9322 = vld [vmem:[%s3 + $0x5c] sm:$0xf]
    %v9323 = vld [vmem:[%s3 + $0x60] sm:$0xf]
    %v9324 = vld [vmem:[%s3 + $0x64] sm:$0xf]
    %v9325 = vld [vmem:[%s3 + $0x68] sm:$0xf]
    %v9326 = vld [vmem:[%s3 + $0x6c] sm:$0xf]
    %v9327 = vld [vmem:[%s3 + $0x70] sm:$0xf]
    %v9328 = vld [vmem:[%s3 + $0x74] sm:$0xf]
    %v9329 = vld [vmem:[%s3 + $0x78] sm:$0xf]
    %v9330 = vld [vmem:[%s3 + $0x7c] sm:$0xf]
    %v9331 = vld [vmem:[%s3 + $0x80] sm:$0xf]
    %v9332 = vld [vmem:[%s3 + $0x84] sm:$0xf]
    %v9333 = vld [vmem:[%s3 + $0x88] sm:$0xf]
    %v9334 = vld [vmem:[%s3 + $0x8c] sm:$0xf]
    %v9335 = vld [vmem:[%s3 + $0x90] sm:$0xf]
    %v9336 = vld [vmem:[%s3 + $0x94] sm:$0xf]
    %v9337 = vld [vmem:[%s3 + $0x98] sm:$0xf]
    %v9338 = vld [vmem:[%s3 + $0x9c] sm:$0xf]
    %v9339 = vld [vmem:[%s3 + $0xa0] sm:$0xf]
    %v9340 = vld [vmem:[%s3 + $0xa4] sm:$0xf]
    %v9341 = vld [vmem:[%s3 + $0xa8] sm:$0xf]
    %v9342 = vld [vmem:[%s3 + $0xac] sm:$0xf]
    %v9343 = vld [vmem:[%s3 + $0xb0] sm:$0xf]
    %v9344 = vld [vmem:[%s3 + $0xb4] sm:$0xf]
    %v9345 = vld [vmem:[%s3 + $0xb8] sm:$0xf]
    %v9346 = vld [vmem:[%s3 + $0xbc] sm:$0xf]
    %v9347 = vld [vmem:[%s4] sm:$0x1]
    %9384 = vrot.lane.b32.xlu0 %v9131, 32
    %v9385 = vpop.permute.xlu0 %9384
    %9386 = vrot.lane.b32.xlu0 %v9133, 32
    %v9387 = vpop.permute.xlu0 %9386
    %9388 = vrot.lane.b32.xlu0 %v9135, 32
    %v9389 = vpop.permute.xlu0 %9388
    %9390 = vrot.lane.b32.xlu0 %v9137, 32
    %v9391 = vpop.permute.xlu0 %9390
    %9392 = vrot.lane.b32.xlu0 %v9139, 32
    %v9393 = vpop.permute.xlu0 %9392
    %9394 = vrot.lane.b32.xlu0 %v9141, 32
    %v9395 = vpop.permute.xlu0 %9394
    %9396 = vrot.lane.b32.xlu0 %v9157, 32
    %v9397 = vpop.permute.xlu0 %9396
    %9398 = vrot.lane.b32.xlu0 %v9159, 32
    %v9399 = vpop.permute.xlu0 %9398
    %9400 = vrot.lane.b32.xlu0 %v9161, 32
    %v9401 = vpop.permute.xlu0 %9400
    %9402 = vrot.lane.b32.xlu0 %v9163, 32
    %v9403 = vpop.permute.xlu0 %9402
    %9404 = vrot.lane.b32.xlu0 %v9165, 32
    %v9405 = vpop.permute.xlu0 %9404
    %9406 = vrot.lane.b32.xlu0 %v9167, 32
    %v9407 = vpop.permute.xlu0 %9406
    %9408 = vrot.lane.b32.xlu0 %v9183, 32
    %v9409 = vpop.permute.xlu0 %9408
    %9410 = vrot.lane.b32.xlu0 %v9185, 32
    %v9411 = vpop.permute.xlu0 %9410
    %9412 = vrot.lane.b32.xlu0 %v9187, 32
    %v9413 = vpop.permute.xlu0 %9412
    %9414 = vrot.lane.b32.xlu0 %v9189, 32
    %v9415 = vpop.permute.xlu0 %9414
    %9416 = vrot.lane.b32.xlu0 %v9191, 32
    %v9417 = vpop.permute.xlu0 %9416
    %9418 = vrot.lane.b32.xlu0 %v9193, 32
    %v9419 = vpop.permute.xlu0 %9418
    %9420 = vrot.lane.b32.xlu0 %v9209, 32
    %v9421 = vpop.permute.xlu0 %9420
    %9422 = vrot.lane.b32.xlu0 %v9211, 32
    %v9423 = vpop.permute.xlu0 %9422
    %9424 = vrot.lane.b32.xlu0 %v9213, 32
    %v9425 = vpop.permute.xlu0 %9424
    %9426 = vrot.lane.b32.xlu0 %v9215, 32
    %v9427 = vpop.permute.xlu0 %9426
    %9428 = vrot.lane.b32.xlu0 %v9217, 32
    %v9429 = vpop.permute.xlu0 %9428
    %9430 = vrot.lane.b32.xlu0 %v9219, 32
    %v9431 = vpop.permute.xlu0 %9430
    %9432 = vrot.lane.b32.xlu0 %v9235, 32
    %v9433 = vpop.permute.xlu0 %9432
    %9434 = vrot.lane.b32.xlu0 %v9237, 32
    %v9435 = vpop.permute.xlu0 %9434
    %9436 = vrot.lane.b32.xlu0 %v9239, 32
    %v9437 = vpop.permute.xlu0 %9436
    %9438 = vrot.lane.b32.xlu0 %v9241, 32
    %v9439 = vpop.permute.xlu0 %9438
    %9440 = vrot.lane.b32.xlu0 %v9243, 32
    %v9441 = vpop.permute.xlu0 %9440
    %9442 = vrot.lane.b32.xlu0 %v9245, 32
    %v9443 = vpop.permute.xlu0 %9442
    %9444 = vrot.lane.b32.xlu0 %v9261, 32
    %v9445 = vpop.permute.xlu0 %9444
    %9446 = vrot.lane.b32.xlu0 %v9263, 32
    %v9447 = vpop.permute.xlu0 %9446
    %9448 = vrot.lane.b32.xlu0 %v9265, 32
    %v9449 = vpop.permute.xlu0 %9448
    %9450 = vrot.lane.b32.xlu0 %v9267, 32
    %v9451 = vpop.permute.xlu0 %9450
    %9452 = vrot.lane.b32.xlu0 %v9269, 32
    %v9453 = vpop.permute.xlu0 %9452
    %9454 = vrot.lane.b32.xlu0 %v9271, 32
    %v9455 = vpop.permute.xlu0 %9454
    %9528 = vrot.lane.b32.xlu0 %v9132, 64
    %v9529 = vpop.permute.xlu0 %9528
    %9530 = vrot.lane.b32.xlu0 %v9134, 64
    %v9531 = vpop.permute.xlu0 %9530
    %9532 = vrot.lane.b32.xlu0 %v9136, 64
    %v9533 = vpop.permute.xlu0 %9532
    %9534 = vrot.lane.b32.xlu0 %v9138, 64
    %v9535 = vpop.permute.xlu0 %9534
    %9536 = vrot.lane.b32.xlu0 %v9140, 64
    %v9537 = vpop.permute.xlu0 %9536
    %9538 = vrot.lane.b32.xlu0 %v9142, 64
    %v9539 = vpop.permute.xlu0 %9538
    %9540 = vrot.lane.b32.xlu0 %v9158, 64
    %v9541 = vpop.permute.xlu0 %9540
    %9542 = vrot.lane.b32.xlu0 %v9160, 64
    %v9543 = vpop.permute.xlu0 %9542
    %9544 = vrot.lane.b32.xlu0 %v9162, 64
    %v9545 = vpop.permute.xlu0 %9544
    %9546 = vrot.lane.b32.xlu0 %v9164, 64
    %v9547 = vpop.permute.xlu0 %9546
    %9548 = vrot.lane.b32.xlu0 %v9166, 64
    %v9549 = vpop.permute.xlu0 %9548
    %9550 = vrot.lane.b32.xlu0 %v9168, 64
    %v9551 = vpop.permute.xlu0 %9550
    %9552 = vrot.lane.b32.xlu0 %v9184, 64
    %v9553 = vpop.permute.xlu0 %9552
    %9554 = vrot.lane.b32.xlu0 %v9186, 64
    %v9555 = vpop.permute.xlu0 %9554
    %9556 = vrot.lane.b32.xlu0 %v9188, 64
    %v9557 = vpop.permute.xlu0 %9556
    %9558 = vrot.lane.b32.xlu0 %v9190, 64
    %v9559 = vpop.permute.xlu0 %9558
    %9560 = vrot.lane.b32.xlu0 %v9192, 64
    %v9561 = vpop.permute.xlu0 %9560
    %9562 = vrot.lane.b32.xlu0 %v9194, 64
    %v9563 = vpop.permute.xlu0 %9562
    %9564 = vrot.lane.b32.xlu0 %v9210, 64
    %v9565 = vpop.permute.xlu0 %9564
    %9566 = vrot.lane.b32.xlu0 %v9212, 64
    %v9567 = vpop.permute.xlu0 %9566
    %9568 = vrot.lane.b32.xlu0 %v9214, 64
    %v9569 = vpop.permute.xlu0 %9568
    %9570 = vrot.lane.b32.xlu0 %v9216, 64
    %v9571 = vpop.permute.xlu0 %9570
    %9572 = vrot.lane.b32.xlu0 %v9218, 64
    %v9573 = vpop.permute.xlu0 %9572
    %9574 = vrot.lane.b32.xlu0 %v9220, 64
    %v9575 = vpop.permute.xlu0 %9574
    %9576 = vrot.lane.b32.xlu0 %v9236, 64
    %v9577 = vpop.permute.xlu0 %9576
    %9578 = vrot.lane.b32.xlu0 %v9238, 64
    %v9579 = vpop.permute.xlu0 %9578
    %9580 = vrot.lane.b32.xlu0 %v9240, 64
    %v9581 = vpop.permute.xlu0 %9580
    %9582 = vrot.lane.b32.xlu0 %v9242, 64
    %v9583 = vpop.permute.xlu0 %9582
    %9584 = vrot.lane.b32.xlu0 %v9244, 64
    %v9585 = vpop.permute.xlu0 %9584
    %9586 = vrot.lane.b32.xlu0 %v9246, 64
    %v9587 = vpop.permute.xlu0 %9586
    %9588 = vrot.lane.b32.xlu0 %v9262, 64
    %v9589 = vpop.permute.xlu0 %9588
    %9590 = vrot.lane.b32.xlu0 %v9264, 64
    %v9591 = vpop.permute.xlu0 %9590
    %9592 = vrot.lane.b32.xlu0 %v9266, 64
    %v9593 = vpop.permute.xlu0 %9592
    %9594 = vrot.lane.b32.xlu0 %v9268, 64
    %v9595 = vpop.permute.xlu0 %9594
    %9596 = vrot.lane.b32.xlu0 %v9270, 64
    %v9597 = vpop.permute.xlu0 %9596
    %9598 = vrot.lane.b32.xlu0 %v9272, 64
    %v9599 = vpop.permute.xlu0 %9598
    %9672 = vrot.lane.b32.xlu0 %v9143, 96
    %v9673 = vpop.permute.xlu0 %9672
    %9674 = vrot.lane.b32.xlu0 %v9145, 96
    %v9675 = vpop.permute.xlu0 %9674
    %9676 = vrot.lane.b32.xlu0 %v9147, 96
    %v9677 = vpop.permute.xlu0 %9676
    %9678 = vrot.lane.b32.xlu0 %v9149, 96
    %v9679 = vpop.permute.xlu0 %9678
    %9680 = vrot.lane.b32.xlu0 %v9151, 96
    %v9681 = vpop.permute.xlu0 %9680
    %9682 = vrot.lane.b32.xlu0 %v9153, 96
    %v9683 = vpop.permute.xlu0 %9682
    %9684 = vrot.lane.b32.xlu0 %v9169, 96
    %v9685 = vpop.permute.xlu0 %9684
    %9686 = vrot.lane.b32.xlu0 %v9171, 96
    %v9687 = vpop.permute.xlu0 %9686
    %9688 = vrot.lane.b32.xlu0 %v9173, 96
    %v9689 = vpop.permute.xlu0 %9688
    %9690 = vrot.lane.b32.xlu0 %v9175, 96
    %v9691 = vpop.permute.xlu0 %9690
    %9692 = vrot.lane.b32.xlu0 %v9177, 96
    %v9693 = vpop.permute.xlu0 %9692
    %9694 = vrot.lane.b32.xlu0 %v9179, 96
    %v9695 = vpop.permute.xlu0 %9694
    %9696 = vrot.lane.b32.xlu0 %v9195, 96
    %v9697 = vpop.permute.xlu0 %9696
    %9698 = vrot.lane.b32.xlu0 %v9197, 96
    %v9699 = vpop.permute.xlu0 %9698
    %9700 = vrot.lane.b32.xlu0 %v9199, 96
    %v9701 = vpop.permute.xlu0 %9700
    %9702 = vrot.lane.b32.xlu0 %v9201, 96
    %v9703 = vpop.permute.xlu0 %9702
    %9704 = vrot.lane.b32.xlu0 %v9203, 96
    %v9705 = vpop.permute.xlu0 %9704
    %9706 = vrot.lane.b32.xlu0 %v9205, 96
    %v9707 = vpop.permute.xlu0 %9706
    %9708 = vrot.lane.b32.xlu0 %v9221, 96
    %v9709 = vpop.permute.xlu0 %9708
    %9710 = vrot.lane.b32.xlu0 %v9223, 96
    %v9711 = vpop.permute.xlu0 %9710
    %9712 = vrot.lane.b32.xlu0 %v9225, 96
    %v9713 = vpop.permute.xlu0 %9712
    %9714 = vrot.lane.b32.xlu0 %v9227, 96
    %v9715 = vpop.permute.xlu0 %9714
    %9716 = vrot.lane.b32.xlu0 %v9229, 96
    %v9717 = vpop.permute.xlu0 %9716
    %9718 = vrot.lane.b32.xlu0 %v9231, 96
    %v9719 = vpop.permute.xlu0 %9718
    %9720 = vrot.lane.b32.xlu0 %v9247, 96
    %v9721 = vpop.permute.xlu0 %9720
    %9722 = vrot.lane.b32.xlu0 %v9249, 96
    %v9723 = vpop.permute.xlu0 %9722
    %9724 = vrot.lane.b32.xlu0 %v9251, 96
    %v9725 = vpop.permute.xlu0 %9724
    %9726 = vrot.lane.b32.xlu0 %v9253, 96
    %v9727 = vpop.permute.xlu0 %9726
    %9728 = vrot.lane.b32.xlu0 %v9255, 96
    %v9729 = vpop.permute.xlu0 %9728
    %9730 = vrot.lane.b32.xlu0 %v9257, 96
    %v9731 = vpop.permute.xlu0 %9730
    %9732 = vrot.lane.b32.xlu0 %v9273, 96
    %v9733 = vpop.permute.xlu0 %9732
    %9734 = vrot.lane.b32.xlu0 %v9275, 96
    %v9735 = vpop.permute.xlu0 %9734
    %9736 = vrot.lane.b32.xlu0 %v9277, 96
    %v9737 = vpop.permute.xlu0 %9736
    %9738 = vrot.lane.b32.xlu0 %v9279, 96
    %v9739 = vpop.permute.xlu0 %9738
    %9740 = vrot.lane.b32.xlu0 %v9281, 96
    %v9741 = vpop.permute.xlu0 %9740
    %9742 = vrot.lane.b32.xlu0 %v9283, 96
    %v9743 = vpop.permute.xlu0 %9742
    %9786 = vrot.lane.b32.xlu0 %v9145, 32
    %v9787 = vpop.permute.xlu0 %9786
    %9788 = vrot.lane.b32.xlu0 %v9147, 32
    %v9789 = vpop.permute.xlu0 %9788
    %9790 = vrot.lane.b32.xlu0 %v9149, 32
    %v9791 = vpop.permute.xlu0 %9790
    %9792 = vrot.lane.b32.xlu0 %v9151, 32
    %v9793 = vpop.permute.xlu0 %9792
    %9794 = vrot.lane.b32.xlu0 %v9153, 32
    %v9795 = vpop.permute.xlu0 %9794
    %9796 = vrot.lane.b32.xlu0 %v9155, 32
    %v9797 = vpop.permute.xlu0 %9796
    %9798 = vrot.lane.b32.xlu0 %v9171, 32
    %v9799 = vpop.permute.xlu0 %9798
    %9800 = vrot.lane.b32.xlu0 %v9173, 32
    %v9801 = vpop.permute.xlu0 %9800
    %9802 = vrot.lane.b32.xlu0 %v9175, 32
    %v9803 = vpop.permute.xlu0 %9802
    %9804 = vrot.lane.b32.xlu0 %v9177, 32
    %v9805 = vpop.permute.xlu0 %9804
    %9806 = vrot.lane.b32.xlu0 %v9179, 32
    %v9807 = vpop.permute.xlu0 %9806
    %9808 = vrot.lane.b32.xlu0 %v9181, 32
    %v9809 = vpop.permute.xlu0 %9808
    %9810 = vrot.lane.b32.xlu0 %v9197, 32
    %v9811 = vpop.permute.xlu0 %9810
    %9812 = vrot.lane.b32.xlu0 %v9199, 32
    %v9813 = vpop.permute.xlu0 %9812
    %9814 = vrot.lane.b32.xlu0 %v9201, 32
    %v9815 = vpop.permute.xlu0 %9814
    %9816 = vrot.lane.b32.xlu0 %v9203, 32
    %v9817 = vpop.permute.xlu0 %9816
    %9818 = vrot.lane.b32.xlu0 %v9205, 32
    %v9819 = vpop.permute.xlu0 %9818
    %9820 = vrot.lane.b32.xlu0 %v9207, 32
    %v9821 = vpop.permute.xlu0 %9820
    %9822 = vrot.lane.b32.xlu0 %v9223, 32
    %v9823 = vpop.permute.xlu0 %9822
    %9824 = vrot.lane.b32.xlu0 %v9225, 32
    %v9825 = vpop.permute.xlu0 %9824
    %9826 = vrot.lane.b32.xlu0 %v9227, 32
    %v9827 = vpop.permute.xlu0 %9826
    %9828 = vrot.lane.b32.xlu0 %v9229, 32
    %v9829 = vpop.permute.xlu0 %9828
    %9830 = vrot.lane.b32.xlu0 %v9231, 32
    %v9831 = vpop.permute.xlu0 %9830
    %9832 = vrot.lane.b32.xlu0 %v9233, 32
    %v9833 = vpop.permute.xlu0 %9832
    %9834 = vrot.lane.b32.xlu0 %v9249, 32
    %v9835 = vpop.permute.xlu0 %9834
    %9836 = vrot.lane.b32.xlu0 %v9251, 32
    %v9837 = vpop.permute.xlu0 %9836
    %9838 = vrot.lane.b32.xlu0 %v9253, 32
    %v9839 = vpop.permute.xlu0 %9838
    %9840 = vrot.lane.b32.xlu0 %v9255, 32
    %v9841 = vpop.permute.xlu0 %9840
    %9842 = vrot.lane.b32.xlu0 %v9257, 32
    %v9843 = vpop.permute.xlu0 %9842
    %9844 = vrot.lane.b32.xlu0 %v9259, 32
    %v9845 = vpop.permute.xlu0 %9844
    %9846 = vrot.lane.b32.xlu0 %v9275, 32
    %v9847 = vpop.permute.xlu0 %9846
    %9848 = vrot.lane.b32.xlu0 %v9277, 32
    %v9849 = vpop.permute.xlu0 %9848
    %9850 = vrot.lane.b32.xlu0 %v9279, 32
    %v9851 = vpop.permute.xlu0 %9850
    %9852 = vrot.lane.b32.xlu0 %v9281, 32
    %v9853 = vpop.permute.xlu0 %9852
    %9854 = vrot.lane.b32.xlu0 %v9283, 32
    %v9855 = vpop.permute.xlu0 %9854
    %9856 = vrot.lane.b32.xlu0 %v9285, 32
    %v9857 = vpop.permute.xlu0 %9856
    %9905 = vrot.lane.b32.xlu0 %v9156, 64
    %v9906 = vpop.permute.xlu0 %9905
    %9907 = vrot.lane.b32.xlu0 %v9182, 64
    %v9908 = vpop.permute.xlu0 %9907
    %9909 = vrot.lane.b32.xlu0 %v9208, 64
    %v9910 = vpop.permute.xlu0 %9909
    %9911 = vrot.lane.b32.xlu0 %v9234, 64
    %v9912 = vpop.permute.xlu0 %9911
    %9913 = vrot.lane.b32.xlu0 %v9260, 64
    %v9914 = vpop.permute.xlu0 %9913
    %9915 = vrot.lane.b32.xlu0 %v9286, 64
    %v9916 = vpop.permute.xlu0 %9915
    %9917 = vrot.lane.b32.xlu0 %v9288, 64
    %v9918 = vpop.permute.xlu0 %9917
    %9919 = vrot.lane.b32.xlu0 %v9290, 64
    %v9920 = vpop.permute.xlu0 %9919
    %9921 = vrot.lane.b32.xlu0 %v9292, 64
    %v9922 = vpop.permute.xlu0 %9921
    %9923 = vrot.lane.b32.xlu0 %v9294, 64
    %v9924 = vpop.permute.xlu0 %9923
    %9925 = vrot.lane.b32.xlu0 %v9296, 64
    %v9926 = vpop.permute.xlu0 %9925
    %9944 = vrot.lane.b32.xlu0 %v9157, 96
    %v9945 = vpop.permute.xlu0 %9944
    %9946 = vrot.lane.b32.xlu0 %v9159, 96
    %v9947 = vpop.permute.xlu0 %9946
    %9948 = vrot.lane.b32.xlu0 %v9161, 96
    %v9949 = vpop.permute.xlu0 %9948
    %9950 = vrot.lane.b32.xlu0 %v9163, 96
    %v9951 = vpop.permute.xlu0 %9950
    %9952 = vrot.lane.b32.xlu0 %v9165, 96
    %v9953 = vpop.permute.xlu0 %9952
    %9954 = vrot.lane.b32.xlu0 %v9167, 96
    %v9955 = vpop.permute.xlu0 %9954
    %9956 = vrot.lane.b32.xlu0 %v9183, 96
    %v9957 = vpop.permute.xlu0 %9956
    %9958 = vrot.lane.b32.xlu0 %v9185, 96
    %v9959 = vpop.permute.xlu0 %9958
    %9960 = vrot.lane.b32.xlu0 %v9187, 96
    %v9961 = vpop.permute.xlu0 %9960
    %9962 = vrot.lane.b32.xlu0 %v9189, 96
    %v9963 = vpop.permute.xlu0 %9962
    %9964 = vrot.lane.b32.xlu0 %v9191, 96
    %v9965 = vpop.permute.xlu0 %9964
    %9966 = vrot.lane.b32.xlu0 %v9193, 96
    %v9967 = vpop.permute.xlu0 %9966
    %9968 = vrot.lane.b32.xlu0 %v9209, 96
    %v9969 = vpop.permute.xlu0 %9968
    %9970 = vrot.lane.b32.xlu0 %v9211, 96
    %v9971 = vpop.permute.xlu0 %9970
    %9972 = vrot.lane.b32.xlu0 %v9213, 96
    %v9973 = vpop.permute.xlu0 %9972
    %9974 = vrot.lane.b32.xlu0 %v9215, 96
    %v9975 = vpop.permute.xlu0 %9974
    %9976 = vrot.lane.b32.xlu0 %v9217, 96
    %v9977 = vpop.permute.xlu0 %9976
    %9978 = vrot.lane.b32.xlu0 %v9219, 96
    %v9979 = vpop.permute.xlu0 %9978
    %9980 = vrot.lane.b32.xlu0 %v9235, 96
    %v9981 = vpop.permute.xlu0 %9980
    %9982 = vrot.lane.b32.xlu0 %v9237, 96
    %v9983 = vpop.permute.xlu0 %9982
    %9984 = vrot.lane.b32.xlu0 %v9239, 96
    %v9985 = vpop.permute.xlu0 %9984
    %9986 = vrot.lane.b32.xlu0 %v9241, 96
    %v9987 = vpop.permute.xlu0 %9986
    %9988 = vrot.lane.b32.xlu0 %v9243, 96
    %v9989 = vpop.permute.xlu0 %9988
    %9990 = vrot.lane.b32.xlu0 %v9245, 96
    %v9991 = vpop.permute.xlu0 %9990
    %9992 = vrot.lane.b32.xlu0 %v9261, 96
    %v9993 = vpop.permute.xlu0 %9992
    %9994 = vrot.lane.b32.xlu0 %v9263, 96
    %v9995 = vpop.permute.xlu0 %9994
    %9996 = vrot.lane.b32.xlu0 %v9265, 96
    %v9997 = vpop.permute.xlu0 %9996
    %9998 = vrot.lane.b32.xlu0 %v9267, 96
    %v9999 = vpop.permute.xlu0 %9998
    %10000 = vrot.lane.b32.xlu0 %v9269, 96
    %v10001 = vpop.permute.xlu0 %10000
    %10002 = vrot.lane.b32.xlu0 %v9271, 96
    %v10003 = vpop.permute.xlu0 %10002
    %10004 = vrot.lane.b32.xlu0 %v9287, 96
    %v10005 = vpop.permute.xlu0 %10004
    %10006 = vrot.lane.b32.xlu0 %v9289, 96
    %v10007 = vpop.permute.xlu0 %10006
    %10008 = vrot.lane.b32.xlu0 %v9291, 96
    %v10009 = vpop.permute.xlu0 %10008
    %10010 = vrot.lane.b32.xlu0 %v9293, 96
    %v10011 = vpop.permute.xlu0 %10010
    %10012 = vrot.lane.b32.xlu0 %v9295, 96
    %v10013 = vpop.permute.xlu0 %10012
    %10014 = vrot.lane.b32.xlu0 %v9297, 96
    %v10015 = vpop.permute.xlu0 %10014
    %vm10052 = vcmask 261120
    %v10053 = vsel %vm10052, %v9130, %v9385
    %v10054 = vsel %vm10052, %v9132, %v9387
    %v10055 = vsel %vm10052, %v9134, %v9389
    %v10056 = vsel %vm10052, %v9136, %v9391
    %v10057 = vsel %vm10052, %v9138, %v9393
    %v10058 = vsel %vm10052, %v9140, %v9395
    %v10059 = vsel %vm10052, %v9156, %v9397
    %v10060 = vsel %vm10052, %v9158, %v9399
    %v10061 = vsel %vm10052, %v9160, %v9401
    %v10062 = vsel %vm10052, %v9162, %v9403
    %v10063 = vsel %vm10052, %v9164, %v9405
    %v10064 = vsel %vm10052, %v9166, %v9407
    %v10065 = vsel %vm10052, %v9182, %v9409
    %v10066 = vsel %vm10052, %v9184, %v9411
    %v10067 = vsel %vm10052, %v9186, %v9413
    %v10068 = vsel %vm10052, %v9188, %v9415
    %v10069 = vsel %vm10052, %v9190, %v9417
    %v10070 = vsel %vm10052, %v9192, %v9419
    %v10071 = vsel %vm10052, %v9208, %v9421
    %v10072 = vsel %vm10052, %v9210, %v9423
    %v10073 = vsel %vm10052, %v9212, %v9425
    %v10074 = vsel %vm10052, %v9214, %v9427
    %v10075 = vsel %vm10052, %v9216, %v9429
    %v10076 = vsel %vm10052, %v9218, %v9431
    %v10077 = vsel %vm10052, %v9234, %v9433
    %v10078 = vsel %vm10052, %v9236, %v9435
    %v10079 = vsel %vm10052, %v9238, %v9437
    %v10080 = vsel %vm10052, %v9240, %v9439
    %v10081 = vsel %vm10052, %v9242, %v9441
    %v10082 = vsel %vm10052, %v9244, %v9443
    %v10083 = vsel %vm10052, %v9260, %v9445
    %v10084 = vsel %vm10052, %v9262, %v9447
    %v10085 = vsel %vm10052, %v9264, %v9449
    %v10086 = vsel %vm10052, %v9266, %v9451
    %v10087 = vsel %vm10052, %v9268, %v9453
    %v10088 = vsel %vm10052, %v9270, %v9455
    %vm10089 = vcmask 523264
    %v10090 = vsel %vm10089, %v10053, %v9529
    %v10091 = vsel %vm10089, %v10054, %v9531
    %v10092 = vsel %vm10089, %v10055, %v9533
    %v10093 = vsel %vm10089, %v10056, %v9535
    %v10094 = vsel %vm10089, %v10057, %v9537
    %v10095 = vsel %vm10089, %v10058, %v9539
    %v10096 = vsel %vm10089, %v10059, %v9541
    %v10097 = vsel %vm10089, %v10060, %v9543
    %v10098 = vsel %vm10089, %v10061, %v9545
    %v10099 = vsel %vm10089, %v10062, %v9547
    %v10100 = vsel %vm10089, %v10063, %v9549
    %v10101 = vsel %vm10089, %v10064, %v9551
    %v10102 = vsel %vm10089, %v10065, %v9553
    %v10103 = vsel %vm10089, %v10066, %v9555
    %v10104 = vsel %vm10089, %v10067, %v9557
    %v10105 = vsel %vm10089, %v10068, %v9559
    %v10106 = vsel %vm10089, %v10069, %v9561
    %v10107 = vsel %vm10089, %v10070, %v9563
    %v10108 = vsel %vm10089, %v10071, %v9565
    %v10109 = vsel %vm10089, %v10072, %v9567
    %v10110 = vsel %vm10089, %v10073, %v9569
    %v10111 = vsel %vm10089, %v10074, %v9571
    %v10112 = vsel %vm10089, %v10075, %v9573
    %v10113 = vsel %vm10089, %v10076, %v9575
    %v10114 = vsel %vm10089, %v10077, %v9577
    %v10115 = vsel %vm10089, %v10078, %v9579
    %v10116 = vsel %vm10089, %v10079, %v9581
    %v10117 = vsel %vm10089, %v10080, %v9583
    %v10118 = vsel %vm10089, %v10081, %v9585
    %v10119 = vsel %vm10089, %v10082, %v9587
    %v10120 = vsel %vm10089, %v10083, %v9589
    %v10121 = vsel %vm10089, %v10084, %v9591
    %v10122 = vsel %vm10089, %v10085, %v9593
    %v10123 = vsel %vm10089, %v10086, %v9595
    %v10124 = vsel %vm10089, %v10087, %v9597
    %v10125 = vsel %vm10089, %v10088, %v9599
    %vm10126 = vcmask 785408
    %v10127 = vsel %vm10126, %v10090, %v9673
    %v10128 = vsel %vm10126, %v10091, %v9675
    %v10129 = vsel %vm10126, %v10092, %v9677
    %v10130 = vsel %vm10126, %v10093, %v9679
    %v10131 = vsel %vm10126, %v10094, %v9681
    %v10132 = vsel %vm10126, %v10095, %v9683
    %v10133 = vsel %vm10126, %v10096, %v9685
    %v10134 = vsel %vm10126, %v10097, %v9687
    %v10135 = vsel %vm10126, %v10098, %v9689
    %v10136 = vsel %vm10126, %v10099, %v9691
    %v10137 = vsel %vm10126, %v10100, %v9693
    %v10138 = vsel %vm10126, %v10101, %v9695
    %v10139 = vsel %vm10126, %v10102, %v9697
    %v10140 = vsel %vm10126, %v10103, %v9699
    %v10141 = vsel %vm10126, %v10104, %v9701
    %v10142 = vsel %vm10126, %v10105, %v9703
    %v10143 = vsel %vm10126, %v10106, %v9705
    %v10144 = vsel %vm10126, %v10107, %v9707
    %v10145 = vsel %vm10126, %v10108, %v9709
    %v10146 = vsel %vm10126, %v10109, %v9711
    %v10147 = vsel %vm10126, %v10110, %v9713
    %v10148 = vsel %vm10126, %v10111, %v9715
    %v10149 = vsel %vm10126, %v10112, %v9717
    %v10150 = vsel %vm10126, %v10113, %v9719
    %v10151 = vsel %vm10126, %v10114, %v9721
    %v10152 = vsel %vm10126, %v10115, %v9723
    %v10153 = vsel %vm10126, %v10116, %v9725
    %v10154 = vsel %vm10126, %v10117, %v9727
    %v10155 = vsel %vm10126, %v10118, %v9729
    %v10156 = vsel %vm10126, %v10119, %v9731
    %v10157 = vsel %vm10126, %v10120, %v9733
    %v10158 = vsel %vm10126, %v10121, %v9735
    %v10159 = vsel %vm10126, %v10122, %v9737
    %v10160 = vsel %vm10126, %v10123, %v9739
    %v10161 = vsel %vm10126, %v10124, %v9741
    %v10162 = vsel %vm10126, %v10125, %v9743
    %v10163 = vsel %vm10052, %v9144, %v9787
    %v10164 = vsel %vm10052, %v9146, %v9789
    %v10165 = vsel %vm10052, %v9148, %v9791
    %v10166 = vsel %vm10052, %v9150, %v9793
    %v10167 = vsel %vm10052, %v9152, %v9795
    %v10168 = vsel %vm10052, %v9154, %v9797
    %v10169 = vsel %vm10052, %v9170, %v9799
    %v10170 = vsel %vm10052, %v9172, %v9801
    %v10171 = vsel %vm10052, %v9174, %v9803
    %v10172 = vsel %vm10052, %v9176, %v9805
    %v10173 = vsel %vm10052, %v9178, %v9807
    %v10174 = vsel %vm10052, %v9180, %v9809
    %v10175 = vsel %vm10052, %v9196, %v9811
    %v10176 = vsel %vm10052, %v9198, %v9813
    %v10177 = vsel %vm10052, %v9200, %v9815
    %v10178 = vsel %vm10052, %v9202, %v9817
    %v10179 = vsel %vm10052, %v9204, %v9819
    %v10180 = vsel %vm10052, %v9206, %v9821
    %v10181 = vsel %vm10052, %v9222, %v9823
    %v10182 = vsel %vm10052, %v9224, %v9825
    %v10183 = vsel %vm10052, %v9226, %v9827
    %v10184 = vsel %vm10052, %v9228, %v9829
    %v10185 = vsel %vm10052, %v9230, %v9831
    %v10186 = vsel %vm10052, %v9232, %v9833
    %v10187 = vsel %vm10052, %v9248, %v9835
    %v10188 = vsel %vm10052, %v9250, %v9837
    %v10189 = vsel %vm10052, %v9252, %v9839
    %v10190 = vsel %vm10052, %v9254, %v9841
    %v10191 = vsel %vm10052, %v9256, %v9843
    %v10192 = vsel %vm10052, %v9258, %v9845
    %v10193 = vsel %vm10052, %v9274, %v9847
    %v10194 = vsel %vm10052, %v9276, %v9849
    %v10195 = vsel %vm10052, %v9278, %v9851
    %v10196 = vsel %vm10052, %v9280, %v9853
    %v10197 = vsel %vm10052, %v9282, %v9855
    %v10198 = vsel %vm10052, %v9284, %v9857
    %v10199 = vsel %vm10089, %v10163, %v9906
    %v10200 = vsel %vm10089, %v10164, %v9541
    %v10201 = vsel %vm10089, %v10165, %v9543
    %v10202 = vsel %vm10089, %v10166, %v9545
    %v10203 = vsel %vm10089, %v10167, %v9547
    %v10204 = vsel %vm10089, %v10168, %v9549
    %v10205 = vsel %vm10089, %v10169, %v9908
    %v10206 = vsel %vm10089, %v10170, %v9553
    %v10207 = vsel %vm10089, %v10171, %v9555
    %v10208 = vsel %vm10089, %v10172, %v9557
    %v10209 = vsel %vm10089, %v10173, %v9559
    %v10210 = vsel %vm10089, %v10174, %v9561
    %v10211 = vsel %vm10089, %v10175, %v9910
    %v10212 = vsel %vm10089, %v10176, %v9565
    %v10213 = vsel %vm10089, %v10177, %v9567
    %v10214 = vsel %vm10089, %v10178, %v9569
    %v10215 = vsel %vm10089, %v10179, %v9571
    %v10216 = vsel %vm10089, %v10180, %v9573
    %v10217 = vsel %vm10089, %v10181, %v9912
    %v10218 = vsel %vm10089, %v10182, %v9577
    %v10219 = vsel %vm10089, %v10183, %v9579
    %v10220 = vsel %vm10089, %v10184, %v9581
    %v10221 = vsel %vm10089, %v10185, %v9583
    %v10222 = vsel %vm10089, %v10186, %v9585
    %v10223 = vsel %vm10089, %v10187, %v9914
    %v10224 = vsel %vm10089, %v10188, %v9589
    %v10225 = vsel %vm10089, %v10189, %v9591
    %v10226 = vsel %vm10089, %v10190, %v9593
    %v10227 = vsel %vm10089, %v10191, %v9595
    %v10228 = vsel %vm10089, %v10192, %v9597
    %v10229 = vsel %vm10089, %v10193, %v9916
    %v10230 = vsel %vm10089, %v10194, %v9918
    %v10231 = vsel %vm10089, %v10195, %v9920
    %v10232 = vsel %vm10089, %v10196, %v9922
    %v10233 = vsel %vm10089, %v10197, %v9924
    %v10234 = vsel %vm10089, %v10198, %v9926
    %v10235 = vsel %vm10126, %v10199, %v9945
    %v10236 = vsel %vm10126, %v10200, %v9947
    %v10237 = vsel %vm10126, %v10201, %v9949
    %v10238 = vsel %vm10126, %v10202, %v9951
    %v10239 = vsel %vm10126, %v10203, %v9953
    %v10240 = vsel %vm10126, %v10204, %v9955
    %v10241 = vsel %vm10126, %v10205, %v9957
    %v10242 = vsel %vm10126, %v10206, %v9959
    %v10243 = vsel %vm10126, %v10207, %v9961
    %v10244 = vsel %vm10126, %v10208, %v9963
    %v10245 = vsel %vm10126, %v10209, %v9965
    %v10246 = vsel %vm10126, %v10210, %v9967
    %v10247 = vsel %vm10126, %v10211, %v9969
    %v10248 = vsel %vm10126, %v10212, %v9971
    %v10249 = vsel %vm10126, %v10213, %v9973
    %v10250 = vsel %vm10126, %v10214, %v9975
    %v10251 = vsel %vm10126, %v10215, %v9977
    %v10252 = vsel %vm10126, %v10216, %v9979
    %v10253 = vsel %vm10126, %v10217, %v9981
    %v10254 = vsel %vm10126, %v10218, %v9983
    %v10255 = vsel %vm10126, %v10219, %v9985
    %v10256 = vsel %vm10126, %v10220, %v9987
    %v10257 = vsel %vm10126, %v10221, %v9989
    %v10258 = vsel %vm10126, %v10222, %v9991
    %v10259 = vsel %vm10126, %v10223, %v9993
    %v10260 = vsel %vm10126, %v10224, %v9995
    %v10261 = vsel %vm10126, %v10225, %v9997
    %v10262 = vsel %vm10126, %v10226, %v9999
    %v10263 = vsel %vm10126, %v10227, %v10001
    %v10264 = vsel %vm10126, %v10228, %v10003
    %v10265 = vsel %vm10126, %v10229, %v10005
    %v10266 = vsel %vm10126, %v10230, %v10007
    %v10267 = vsel %vm10126, %v10231, %v10009
    %v10268 = vsel %vm10126, %v10232, %v10011
    %v10269 = vsel %vm10126, %v10233, %v10013
    %v10270 = vsel %vm10126, %v10234, %v10015
    %v10344 = vcombine.low %v10127, %v10235
    %v10346 = vunpack.c.l.s4 1983009808
    %v10347 = vunpack.c.0.s8 %v10346
    %v10348 = vlaneseq
    %v10349 = vshrl.u32 %v10348, 7
    %v10350 = vsub.s32 %v10347, %v10349
    %v10351 = vrot.slane %v10344, %v10350
    %v10353 = vunpack.c.l.s4 1983009808
    %v10354 = vunpack.c.0.s8 %v10353
    %v10355 = vlaneseq
    %v10356 = vshrl.u32 %v10355, 7
    %v10357 = vsub.s32 %v10354, %v10356
    %v10358 = vrot.slane %v9158, %v10357
    %v10359 = vcombine.low %v10351, %v10358
    %v10360 = vcombine.low %v10128, %v10236
    %v10362 = vunpack.c.l.s4 1983009808
    %v10363 = vunpack.c.0.s8 %v10362
    %v10364 = vlaneseq
    %v10365 = vshrl.u32 %v10364, 7
    %v10366 = vsub.s32 %v10363, %v10365
    %v10367 = vrot.slane %v10360, %v10366
    %v10369 = vunpack.c.l.s4 1983009808
    %v10370 = vunpack.c.0.s8 %v10369
    %v10371 = vlaneseq
    %v10372 = vshrl.u32 %v10371, 7
    %v10373 = vsub.s32 %v10370, %v10372
    %v10374 = vrot.slane %v9160, %v10373
    %v10375 = vcombine.low %v10367, %v10374
    %v10376 = vcombine.low %v10129, %v10237
    %v10378 = vunpack.c.l.s4 1983009808
    %v10379 = vunpack.c.0.s8 %v10378
    %v10380 = vlaneseq
    %v10381 = vshrl.u32 %v10380, 7
    %v10382 = vsub.s32 %v10379, %v10381
    %v10383 = vrot.slane %v10376, %v10382
    %v10385 = vunpack.c.l.s4 1983009808
    %v10386 = vunpack.c.0.s8 %v10385
    %v10387 = vlaneseq
    %v10388 = vshrl.u32 %v10387, 7
    %v10389 = vsub.s32 %v10386, %v10388
    %v10390 = vrot.slane %v9162, %v10389
    %v10391 = vcombine.low %v10383, %v10390
    %v10392 = vcombine.low %v10130, %v10238
    %v10394 = vunpack.c.l.s4 1983009808
    %v10395 = vunpack.c.0.s8 %v10394
    %v10396 = vlaneseq
    %v10397 = vshrl.u32 %v10396, 7
    %v10398 = vsub.s32 %v10395, %v10397
    %v10399 = vrot.slane %v10392, %v10398
    %v10401 = vunpack.c.l.s4 1983009808
    %v10402 = vunpack.c.0.s8 %v10401
    %v10403 = vlaneseq
    %v10404 = vshrl.u32 %v10403, 7
    %v10405 = vsub.s32 %v10402, %v10404
    %v10406 = vrot.slane %v9164, %v10405
    %v10407 = vcombine.low %v10399, %v10406
    %v10408 = vcombine.low %v10131, %v10239
    %v10410 = vunpack.c.l.s4 1983009808
    %v10411 = vunpack.c.0.s8 %v10410
    %v10412 = vlaneseq
    %v10413 = vshrl.u32 %v10412, 7
    %v10414 = vsub.s32 %v10411, %v10413
    %v10415 = vrot.slane %v10408, %v10414
    %v10417 = vunpack.c.l.s4 1983009808
    %v10418 = vunpack.c.0.s8 %v10417
    %v10419 = vlaneseq
    %v10420 = vshrl.u32 %v10419, 7
    %v10421 = vsub.s32 %v10418, %v10420
    %v10422 = vrot.slane %v9166, %v10421
    %v10423 = vcombine.low %v10415, %v10422
    %v10424 = vcombine.low %v10132, %v10240
    %v10426 = vunpack.c.l.s4 1983009808
    %v10427 = vunpack.c.0.s8 %v10426
    %v10428 = vlaneseq
    %v10429 = vshrl.u32 %v10428, 7
    %v10430 = vsub.s32 %v10427, %v10429
    %v10431 = vrot.slane %v10424, %v10430
    %v10433 = vunpack.c.l.s4 1983009808
    %v10434 = vunpack.c.0.s8 %v10433
    %v10435 = vlaneseq
    %v10436 = vshrl.u32 %v10435, 7
    %v10437 = vsub.s32 %v10434, %v10436
    %v10438 = vrot.slane %v9168, %v10437
    %v10439 = vcombine.low %v10431, %v10438
    %v10440 = vcombine.low %v10133, %v10241
    %v10442 = vunpack.c.l.s4 1983009808
    %v10443 = vunpack.c.0.s8 %v10442
    %v10444 = vlaneseq
    %v10445 = vshrl.u32 %v10444, 7
    %v10446 = vsub.s32 %v10443, %v10445
    %v10447 = vrot.slane %v10440, %v10446
    %v10449 = vunpack.c.l.s4 1983009808
    %v10450 = vunpack.c.0.s8 %v10449
    %v10451 = vlaneseq
    %v10452 = vshrl.u32 %v10451, 7
    %v10453 = vsub.s32 %v10450, %v10452
    %v10454 = vrot.slane %v9184, %v10453
    %v10455 = vcombine.low %v10447, %v10454
    %v10456 = vcombine.low %v10134, %v10242
    %v10458 = vunpack.c.l.s4 1983009808
    %v10459 = vunpack.c.0.s8 %v10458
    %v10460 = vlaneseq
    %v10461 = vshrl.u32 %v10460, 7
    %v10462 = vsub.s32 %v10459, %v10461
    %v10463 = vrot.slane %v10456, %v10462
    %v10465 = vunpack.c.l.s4 1983009808
    %v10466 = vunpack.c.0.s8 %v10465
    %v10467 = vlaneseq
    %v10468 = vshrl.u32 %v10467, 7
    %v10469 = vsub.s32 %v10466, %v10468
    %v10470 = vrot.slane %v9186, %v10469
    %v10471 = vcombine.low %v10463, %v10470
    %v10472 = vcombine.low %v10135, %v10243
    %v10474 = vunpack.c.l.s4 1983009808
    %v10475 = vunpack.c.0.s8 %v10474
    %v10476 = vlaneseq
    %v10477 = vshrl.u32 %v10476, 7
    %v10478 = vsub.s32 %v10475, %v10477
    %v10479 = vrot.slane %v10472, %v10478
    %v10481 = vunpack.c.l.s4 1983009808
    %v10482 = vunpack.c.0.s8 %v10481
    %v10483 = vlaneseq
    %v10484 = vshrl.u32 %v10483, 7
    %v10485 = vsub.s32 %v10482, %v10484
    %v10486 = vrot.slane %v9188, %v10485
    %v10487 = vcombine.low %v10479, %v10486
    %v10488 = vcombine.low %v10136, %v10244
    %v10490 = vunpack.c.l.s4 1983009808
    %v10491 = vunpack.c.0.s8 %v10490
    %v10492 = vlaneseq
    %v10493 = vshrl.u32 %v10492, 7
    %v10494 = vsub.s32 %v10491, %v10493
    %v10495 = vrot.slane %v10488, %v10494
    %v10497 = vunpack.c.l.s4 1983009808
    %v10498 = vunpack.c.0.s8 %v10497
    %v10499 = vlaneseq
    %v10500 = vshrl.u32 %v10499, 7
    %v10501 = vsub.s32 %v10498, %v10500
    %v10502 = vrot.slane %v9190, %v10501
    %v10503 = vcombine.low %v10495, %v10502
    %v10504 = vcombine.low %v10137, %v10245
    %v10506 = vunpack.c.l.s4 1983009808
    %v10507 = vunpack.c.0.s8 %v10506
    %v10508 = vlaneseq
    %v10509 = vshrl.u32 %v10508, 7
    %v10510 = vsub.s32 %v10507, %v10509
    %v10511 = vrot.slane %v10504, %v10510
    %v10513 = vunpack.c.l.s4 1983009808
    %v10514 = vunpack.c.0.s8 %v10513
    %v10515 = vlaneseq
    %v10516 = vshrl.u32 %v10515, 7
    %v10517 = vsub.s32 %v10514, %v10516
    %v10518 = vrot.slane %v9192, %v10517
    %v10519 = vcombine.low %v10511, %v10518
    %v10520 = vcombine.low %v10138, %v10246
    %v10522 = vunpack.c.l.s4 1983009808
    %v10523 = vunpack.c.0.s8 %v10522
    %v10524 = vlaneseq
    %v10525 = vshrl.u32 %v10524, 7
    %v10526 = vsub.s32 %v10523, %v10525
    %v10527 = vrot.slane %v10520, %v10526
    %v10529 = vunpack.c.l.s4 1983009808
    %v10530 = vunpack.c.0.s8 %v10529
    %v10531 = vlaneseq
    %v10532 = vshrl.u32 %v10531, 7
    %v10533 = vsub.s32 %v10530, %v10532
    %v10534 = vrot.slane %v9194, %v10533
    %v10535 = vcombine.low %v10527, %v10534
    %v10536 = vcombine.low %v10139, %v10247
    %v10538 = vunpack.c.l.s4 1983009808
    %v10539 = vunpack.c.0.s8 %v10538
    %v10540 = vlaneseq
    %v10541 = vshrl.u32 %v10540, 7
    %v10542 = vsub.s32 %v10539, %v10541
    %v10543 = vrot.slane %v10536, %v10542
    %v10545 = vunpack.c.l.s4 1983009808
    %v10546 = vunpack.c.0.s8 %v10545
    %v10547 = vlaneseq
    %v10548 = vshrl.u32 %v10547, 7
    %v10549 = vsub.s32 %v10546, %v10548
    %v10550 = vrot.slane %v9210, %v10549
    %v10551 = vcombine.low %v10543, %v10550
    %v10552 = vcombine.low %v10140, %v10248
    %v10554 = vunpack.c.l.s4 1983009808
    %v10555 = vunpack.c.0.s8 %v10554
    %v10556 = vlaneseq
    %v10557 = vshrl.u32 %v10556, 7
    %v10558 = vsub.s32 %v10555, %v10557
    %v10559 = vrot.slane %v10552, %v10558
    %v10561 = vunpack.c.l.s4 1983009808
    %v10562 = vunpack.c.0.s8 %v10561
    %v10563 = vlaneseq
    %v10564 = vshrl.u32 %v10563, 7
    %v10565 = vsub.s32 %v10562, %v10564
    %v10566 = vrot.slane %v9212, %v10565
    %v10567 = vcombine.low %v10559, %v10566
    %v10568 = vcombine.low %v10141, %v10249
    %v10570 = vunpack.c.l.s4 1983009808
    %v10571 = vunpack.c.0.s8 %v10570
    %v10572 = vlaneseq
    %v10573 = vshrl.u32 %v10572, 7
    %v10574 = vsub.s32 %v10571, %v10573
    %v10575 = vrot.slane %v10568, %v10574
    %v10577 = vunpack.c.l.s4 1983009808
    %v10578 = vunpack.c.0.s8 %v10577
    %v10579 = vlaneseq
    %v10580 = vshrl.u32 %v10579, 7
    %v10581 = vsub.s32 %v10578, %v10580
    %v10582 = vrot.slane %v9214, %v10581
    %v10583 = vcombine.low %v10575, %v10582
    %v10584 = vcombine.low %v10142, %v10250
    %v10586 = vunpack.c.l.s4 1983009808
    %v10587 = vunpack.c.0.s8 %v10586
    %v10588 = vlaneseq
    %v10589 = vshrl.u32 %v10588, 7
    %v10590 = vsub.s32 %v10587, %v10589
    %v10591 = vrot.slane %v10584, %v10590
    %v10593 = vunpack.c.l.s4 1983009808
    %v10594 = vunpack.c.0.s8 %v10593
    %v10595 = vlaneseq
    %v10596 = vshrl.u32 %v10595, 7
    %v10597 = vsub.s32 %v10594, %v10596
    %v10598 = vrot.slane %v9216, %v10597
    %v10599 = vcombine.low %v10591, %v10598
    %v10600 = vcombine.low %v10143, %v10251
    %v10602 = vunpack.c.l.s4 1983009808
    %v10603 = vunpack.c.0.s8 %v10602
    %v10604 = vlaneseq
    %v10605 = vshrl.u32 %v10604, 7
    %v10606 = vsub.s32 %v10603, %v10605
    %v10607 = vrot.slane %v10600, %v10606
    %v10609 = vunpack.c.l.s4 1983009808
    %v10610 = vunpack.c.0.s8 %v10609
    %v10611 = vlaneseq
    %v10612 = vshrl.u32 %v10611, 7
    %v10613 = vsub.s32 %v10610, %v10612
    %v10614 = vrot.slane %v9218, %v10613
    %v10615 = vcombine.low %v10607, %v10614
    %v10616 = vcombine.low %v10144, %v10252
    %v10618 = vunpack.c.l.s4 1983009808
    %v10619 = vunpack.c.0.s8 %v10618
    %v10620 = vlaneseq
    %v10621 = vshrl.u32 %v10620, 7
    %v10622 = vsub.s32 %v10619, %v10621
    %v10623 = vrot.slane %v10616, %v10622
    %v10625 = vunpack.c.l.s4 1983009808
    %v10626 = vunpack.c.0.s8 %v10625
    %v10627 = vlaneseq
    %v10628 = vshrl.u32 %v10627, 7
    %v10629 = vsub.s32 %v10626, %v10628
    %v10630 = vrot.slane %v9220, %v10629
    %v10631 = vcombine.low %v10623, %v10630
    %v10632 = vcombine.low %v10145, %v10253
    %v10634 = vunpack.c.l.s4 1983009808
    %v10635 = vunpack.c.0.s8 %v10634
    %v10636 = vlaneseq
    %v10637 = vshrl.u32 %v10636, 7
    %v10638 = vsub.s32 %v10635, %v10637
    %v10639 = vrot.slane %v10632, %v10638
    %v10641 = vunpack.c.l.s4 1983009808
    %v10642 = vunpack.c.0.s8 %v10641
    %v10643 = vlaneseq
    %v10644 = vshrl.u32 %v10643, 7
    %v10645 = vsub.s32 %v10642, %v10644
    %v10646 = vrot.slane %v9236, %v10645
    %v10647 = vcombine.low %v10639, %v10646
    %v10648 = vcombine.low %v10146, %v10254
    %v10650 = vunpack.c.l.s4 1983009808
    %v10651 = vunpack.c.0.s8 %v10650
    %v10652 = vlaneseq
    %v10653 = vshrl.u32 %v10652, 7
    %v10654 = vsub.s32 %v10651, %v10653
    %v10655 = vrot.slane %v10648, %v10654
    %v10657 = vunpack.c.l.s4 1983009808
    %v10658 = vunpack.c.0.s8 %v10657
    %v10659 = vlaneseq
    %v10660 = vshrl.u32 %v10659, 7
    %v10661 = vsub.s32 %v10658, %v10660
    %v10662 = vrot.slane %v9238, %v10661
    %v10663 = vcombine.low %v10655, %v10662
    %v10664 = vcombine.low %v10147, %v10255
    %v10666 = vunpack.c.l.s4 1983009808
    %v10667 = vunpack.c.0.s8 %v10666
    %v10668 = vlaneseq
    %v10669 = vshrl.u32 %v10668, 7
    %v10670 = vsub.s32 %v10667, %v10669
    %v10671 = vrot.slane %v10664, %v10670
    %v10673 = vunpack.c.l.s4 1983009808
    %v10674 = vunpack.c.0.s8 %v10673
    %v10675 = vlaneseq
    %v10676 = vshrl.u32 %v10675, 7
    %v10677 = vsub.s32 %v10674, %v10676
    %v10678 = vrot.slane %v9240, %v10677
    %v10679 = vcombine.low %v10671, %v10678
    %v10680 = vcombine.low %v10148, %v10256
    %v10682 = vunpack.c.l.s4 1983009808
    %v10683 = vunpack.c.0.s8 %v10682
    %v10684 = vlaneseq
    %v10685 = vshrl.u32 %v10684, 7
    %v10686 = vsub.s32 %v10683, %v10685
    %v10687 = vrot.slane %v10680, %v10686
    %v10689 = vunpack.c.l.s4 1983009808
    %v10690 = vunpack.c.0.s8 %v10689
    %v10691 = vlaneseq
    %v10692 = vshrl.u32 %v10691, 7
    %v10693 = vsub.s32 %v10690, %v10692
    %v10694 = vrot.slane %v9242, %v10693
    %v10695 = vcombine.low %v10687, %v10694
    %v10696 = vcombine.low %v10149, %v10257
    %v10698 = vunpack.c.l.s4 1983009808
    %v10699 = vunpack.c.0.s8 %v10698
    %v10700 = vlaneseq
    %v10701 = vshrl.u32 %v10700, 7
    %v10702 = vsub.s32 %v10699, %v10701
    %v10703 = vrot.slane %v10696, %v10702
    %v10705 = vunpack.c.l.s4 1983009808
    %v10706 = vunpack.c.0.s8 %v10705
    %v10707 = vlaneseq
    %v10708 = vshrl.u32 %v10707, 7
    %v10709 = vsub.s32 %v10706, %v10708
    %v10710 = vrot.slane %v9244, %v10709
    %v10711 = vcombine.low %v10703, %v10710
    %v10712 = vcombine.low %v10150, %v10258
    %v10714 = vunpack.c.l.s4 1983009808
    %v10715 = vunpack.c.0.s8 %v10714
    %v10716 = vlaneseq
    %v10717 = vshrl.u32 %v10716, 7
    %v10718 = vsub.s32 %v10715, %v10717
    %v10719 = vrot.slane %v10712, %v10718
    %v10721 = vunpack.c.l.s4 1983009808
    %v10722 = vunpack.c.0.s8 %v10721
    %v10723 = vlaneseq
    %v10724 = vshrl.u32 %v10723, 7
    %v10725 = vsub.s32 %v10722, %v10724
    %v10726 = vrot.slane %v9246, %v10725
    %v10727 = vcombine.low %v10719, %v10726
    %v10728 = vcombine.low %v10151, %v10259
    %v10730 = vunpack.c.l.s4 1983009808
    %v10731 = vunpack.c.0.s8 %v10730
    %v10732 = vlaneseq
    %v10733 = vshrl.u32 %v10732, 7
    %v10734 = vsub.s32 %v10731, %v10733
    %v10735 = vrot.slane %v10728, %v10734
    %v10737 = vunpack.c.l.s4 1983009808
    %v10738 = vunpack.c.0.s8 %v10737
    %v10739 = vlaneseq
    %v10740 = vshrl.u32 %v10739, 7
    %v10741 = vsub.s32 %v10738, %v10740
    %v10742 = vrot.slane %v9262, %v10741
    %v10743 = vcombine.low %v10735, %v10742
    %v10744 = vcombine.low %v10152, %v10260
    %v10746 = vunpack.c.l.s4 1983009808
    %v10747 = vunpack.c.0.s8 %v10746
    %v10748 = vlaneseq
    %v10749 = vshrl.u32 %v10748, 7
    %v10750 = vsub.s32 %v10747, %v10749
    %v10751 = vrot.slane %v10744, %v10750
    %v10753 = vunpack.c.l.s4 1983009808
    %v10754 = vunpack.c.0.s8 %v10753
    %v10755 = vlaneseq
    %v10756 = vshrl.u32 %v10755, 7
    %v10757 = vsub.s32 %v10754, %v10756
    %v10758 = vrot.slane %v9264, %v10757
    %v10759 = vcombine.low %v10751, %v10758
    %v10760 = vcombine.low %v10153, %v10261
    %v10762 = vunpack.c.l.s4 1983009808
    %v10763 = vunpack.c.0.s8 %v10762
    %v10764 = vlaneseq
    %v10765 = vshrl.u32 %v10764, 7
    %v10766 = vsub.s32 %v10763, %v10765
    %v10767 = vrot.slane %v10760, %v10766
    %v10769 = vunpack.c.l.s4 1983009808
    %v10770 = vunpack.c.0.s8 %v10769
    %v10771 = vlaneseq
    %v10772 = vshrl.u32 %v10771, 7
    %v10773 = vsub.s32 %v10770, %v10772
    %v10774 = vrot.slane %v9266, %v10773
    %v10775 = vcombine.low %v10767, %v10774
    %v10776 = vcombine.low %v10154, %v10262
    %v10778 = vunpack.c.l.s4 1983009808
    %v10779 = vunpack.c.0.s8 %v10778
    %v10780 = vlaneseq
    %v10781 = vshrl.u32 %v10780, 7
    %v10782 = vsub.s32 %v10779, %v10781
    %v10783 = vrot.slane %v10776, %v10782
    %v10785 = vunpack.c.l.s4 1983009808
    %v10786 = vunpack.c.0.s8 %v10785
    %v10787 = vlaneseq
    %v10788 = vshrl.u32 %v10787, 7
    %v10789 = vsub.s32 %v10786, %v10788
    %v10790 = vrot.slane %v9268, %v10789
    %v10791 = vcombine.low %v10783, %v10790
    %v10792 = vcombine.low %v10155, %v10263
    %v10794 = vunpack.c.l.s4 1983009808
    %v10795 = vunpack.c.0.s8 %v10794
    %v10796 = vlaneseq
    %v10797 = vshrl.u32 %v10796, 7
    %v10798 = vsub.s32 %v10795, %v10797
    %v10799 = vrot.slane %v10792, %v10798
    %v10801 = vunpack.c.l.s4 1983009808
    %v10802 = vunpack.c.0.s8 %v10801
    %v10803 = vlaneseq
    %v10804 = vshrl.u32 %v10803, 7
    %v10805 = vsub.s32 %v10802, %v10804
    %v10806 = vrot.slane %v9270, %v10805
    %v10807 = vcombine.low %v10799, %v10806
    %v10808 = vcombine.low %v10156, %v10264
    %v10810 = vunpack.c.l.s4 1983009808
    %v10811 = vunpack.c.0.s8 %v10810
    %v10812 = vlaneseq
    %v10813 = vshrl.u32 %v10812, 7
    %v10814 = vsub.s32 %v10811, %v10813
    %v10815 = vrot.slane %v10808, %v10814
    %v10817 = vunpack.c.l.s4 1983009808
    %v10818 = vunpack.c.0.s8 %v10817
    %v10819 = vlaneseq
    %v10820 = vshrl.u32 %v10819, 7
    %v10821 = vsub.s32 %v10818, %v10820
    %v10822 = vrot.slane %v9272, %v10821
    %v10823 = vcombine.low %v10815, %v10822
    %v10824 = vcombine.low %v10157, %v10265
    %v10826 = vunpack.c.l.s4 1983009808
    %v10827 = vunpack.c.0.s8 %v10826
    %v10828 = vlaneseq
    %v10829 = vshrl.u32 %v10828, 7
    %v10830 = vsub.s32 %v10827, %v10829
    %v10831 = vrot.slane %v10824, %v10830
    %v10833 = vunpack.c.l.s4 1983009808
    %v10834 = vunpack.c.0.s8 %v10833
    %v10835 = vlaneseq
    %v10836 = vshrl.u32 %v10835, 7
    %v10837 = vsub.s32 %v10834, %v10836
    %v10838 = vrot.slane %v9288, %v10837
    %v10839 = vcombine.low %v10831, %v10838
    %v10840 = vcombine.low %v10158, %v10266
    %v10842 = vunpack.c.l.s4 1983009808
    %v10843 = vunpack.c.0.s8 %v10842
    %v10844 = vlaneseq
    %v10845 = vshrl.u32 %v10844, 7
    %v10846 = vsub.s32 %v10843, %v10845
    %v10847 = vrot.slane %v10840, %v10846
    %v10849 = vunpack.c.l.s4 1983009808
    %v10850 = vunpack.c.0.s8 %v10849
    %v10851 = vlaneseq
    %v10852 = vshrl.u32 %v10851, 7
    %v10853 = vsub.s32 %v10850, %v10852
    %v10854 = vrot.slane %v9290, %v10853
    %v10855 = vcombine.low %v10847, %v10854
    %v10856 = vcombine.low %v10159, %v10267
    %v10858 = vunpack.c.l.s4 1983009808
    %v10859 = vunpack.c.0.s8 %v10858
    %v10860 = vlaneseq
    %v10861 = vshrl.u32 %v10860, 7
    %v10862 = vsub.s32 %v10859, %v10861
    %v10863 = vrot.slane %v10856, %v10862
    %v10865 = vunpack.c.l.s4 1983009808
    %v10866 = vunpack.c.0.s8 %v10865
    %v10867 = vlaneseq
    %v10868 = vshrl.u32 %v10867, 7
    %v10869 = vsub.s32 %v10866, %v10868
    %v10870 = vrot.slane %v9292, %v10869
    %v10871 = vcombine.low %v10863, %v10870
    %v10872 = vcombine.low %v10160, %v10268
    %v10874 = vunpack.c.l.s4 1983009808
    %v10875 = vunpack.c.0.s8 %v10874
    %v10876 = vlaneseq
    %v10877 = vshrl.u32 %v10876, 7
    %v10878 = vsub.s32 %v10875, %v10877
    %v10879 = vrot.slane %v10872, %v10878
    %v10881 = vunpack.c.l.s4 1983009808
    %v10882 = vunpack.c.0.s8 %v10881
    %v10883 = vlaneseq
    %v10884 = vshrl.u32 %v10883, 7
    %v10885 = vsub.s32 %v10882, %v10884
    %v10886 = vrot.slane %v9294, %v10885
    %v10887 = vcombine.low %v10879, %v10886
    %v10888 = vcombine.low %v10161, %v10269
    %v10890 = vunpack.c.l.s4 1983009808
    %v10891 = vunpack.c.0.s8 %v10890
    %v10892 = vlaneseq
    %v10893 = vshrl.u32 %v10892, 7
    %v10894 = vsub.s32 %v10891, %v10893
    %v10895 = vrot.slane %v10888, %v10894
    %v10897 = vunpack.c.l.s4 1983009808
    %v10898 = vunpack.c.0.s8 %v10897
    %v10899 = vlaneseq
    %v10900 = vshrl.u32 %v10899, 7
    %v10901 = vsub.s32 %v10898, %v10900
    %v10902 = vrot.slane %v9296, %v10901
    %v10903 = vcombine.low %v10895, %v10902
    %v10904 = vcombine.low %v10162, %v10270
    %v10906 = vunpack.c.l.s4 1983009808
    %v10907 = vunpack.c.0.s8 %v10906
    %v10908 = vlaneseq
    %v10909 = vshrl.u32 %v10908, 7
    %v10910 = vsub.s32 %v10907, %v10909
    %v10911 = vrot.slane %v10904, %v10910
    %v10913 = vunpack.c.l.s4 1983009808
    %v10914 = vunpack.c.0.s8 %v10913
    %v10915 = vlaneseq
    %v10916 = vshrl.u32 %v10915, 7
    %v10917 = vsub.s32 %v10914, %v10916
    %v10918 = vrot.slane %v9298, %v10917
    %v10919 = vcombine.low %v10911, %v10918
    %v10920 = vcombine.low %v10359, %v10375
    %v10921 = vcombine.high %v10359, %v10375
    %v10922 = vcombine.low %v10391, %v10407
    %v10923 = vcombine.high %v10391, %v10407
    %v10925 = vunpack.c.l.s4 1983009808
    %v10926 = vunpack.c.0.s8 %v10925
    %v10927 = vlaneseq
    %v10928 = vshrl.u32 %v10927, 7
    %v10929 = vsub.s32 %v10926, %v10928
    %v10930 = vrot.slane %v10920, %v10929
    %v10932 = vunpack.c.l.s4 1983009808
    %v10933 = vunpack.c.0.s8 %v10932
    %v10934 = vlaneseq
    %v10935 = vshrl.u32 %v10934, 7
    %v10936 = vsub.s32 %v10933, %v10935
    %v10937 = vrot.slane %v10921, %v10936
    %v10939 = vunpack.c.l.s4 1983009808
    %v10940 = vunpack.c.0.s8 %v10939
    %v10941 = vlaneseq
    %v10942 = vshrl.u32 %v10941, 7
    %v10943 = vsub.s32 %v10940, %v10942
    %v10944 = vrot.slane %v10922, %v10943
    %v10946 = vunpack.c.l.s4 1983009808
    %v10947 = vunpack.c.0.s8 %v10946
    %v10948 = vlaneseq
    %v10949 = vshrl.u32 %v10948, 7
    %v10950 = vsub.s32 %v10947, %v10949
    %v10951 = vrot.slane %v10923, %v10950
    %v10952 = vcombine.low %v10930, %v10944
    %v10953 = vcombine.high %v10930, %v10944
    %v10954 = vcombine.low %v10937, %v10951
    %v10955 = vcombine.low %v10423, %v10439
    %v10956 = vcombine.high %v10423, %v10439
    %v10957 = vcombine.low %v10455, %v10471
    %v10958 = vcombine.high %v10455, %v10471
    %v10960 = vunpack.c.l.s4 1983009808
    %v10961 = vunpack.c.0.s8 %v10960
    %v10962 = vlaneseq
    %v10963 = vshrl.u32 %v10962, 7
    %v10964 = vsub.s32 %v10961, %v10963
    %v10965 = vrot.slane %v10955, %v10964
    %v10967 = vunpack.c.l.s4 1983009808
    %v10968 = vunpack.c.0.s8 %v10967
    %v10969 = vlaneseq
    %v10970 = vshrl.u32 %v10969, 7
    %v10971 = vsub.s32 %v10968, %v10970
    %v10972 = vrot.slane %v10956, %v10971
    %v10974 = vunpack.c.l.s4 1983009808
    %v10975 = vunpack.c.0.s8 %v10974
    %v10976 = vlaneseq
    %v10977 = vshrl.u32 %v10976, 7
    %v10978 = vsub.s32 %v10975, %v10977
    %v10979 = vrot.slane %v10957, %v10978
    %v10981 = vunpack.c.l.s4 1983009808
    %v10982 = vunpack.c.0.s8 %v10981
    %v10983 = vlaneseq
    %v10984 = vshrl.u32 %v10983, 7
    %v10985 = vsub.s32 %v10982, %v10984
    %v10986 = vrot.slane %v10958, %v10985
    %v10987 = vcombine.low %v10965, %v10979
    %v10988 = vcombine.high %v10965, %v10979
    %v10989 = vcombine.low %v10972, %v10986
    %v10990 = vcombine.low %v10487, %v10503
    %v10991 = vcombine.high %v10487, %v10503
    %v10992 = vcombine.low %v10519, %v10535
    %v10993 = vcombine.high %v10519, %v10535
    %v10995 = vunpack.c.l.s4 1983009808
    %v10996 = vunpack.c.0.s8 %v10995
    %v10997 = vlaneseq
    %v10998 = vshrl.u32 %v10997, 7
    %v10999 = vsub.s32 %v10996, %v10998
    %v11000 = vrot.slane %v10990, %v10999
    %v11002 = vunpack.c.l.s4 1983009808
    %v11003 = vunpack.c.0.s8 %v11002
    %v11004 = vlaneseq
    %v11005 = vshrl.u32 %v11004, 7
    %v11006 = vsub.s32 %v11003, %v11005
    %v11007 = vrot.slane %v10991, %v11006
    %v11009 = vunpack.c.l.s4 1983009808
    %v11010 = vunpack.c.0.s8 %v11009
    %v11011 = vlaneseq
    %v11012 = vshrl.u32 %v11011, 7
    %v11013 = vsub.s32 %v11010, %v11012
    %v11014 = vrot.slane %v10992, %v11013
    %v11016 = vunpack.c.l.s4 1983009808
    %v11017 = vunpack.c.0.s8 %v11016
    %v11018 = vlaneseq
    %v11019 = vshrl.u32 %v11018, 7
    %v11020 = vsub.s32 %v11017, %v11019
    %v11021 = vrot.slane %v10993, %v11020
    %v11022 = vcombine.low %v11000, %v11014
    %v11023 = vcombine.high %v11000, %v11014
    %v11024 = vcombine.low %v11007, %v11021
    %v11025 = vcombine.low %v10551, %v10567
    %v11026 = vcombine.high %v10551, %v10567
    %v11027 = vcombine.low %v10583, %v10599
    %v11028 = vcombine.high %v10583, %v10599
    %v11030 = vunpack.c.l.s4 1983009808
    %v11031 = vunpack.c.0.s8 %v11030
    %v11032 = vlaneseq
    %v11033 = vshrl.u32 %v11032, 7
    %v11034 = vsub.s32 %v11031, %v11033
    %v11035 = vrot.slane %v11025, %v11034
    %v11037 = vunpack.c.l.s4 1983009808
    %v11038 = vunpack.c.0.s8 %v11037
    %v11039 = vlaneseq
    %v11040 = vshrl.u32 %v11039, 7
    %v11041 = vsub.s32 %v11038, %v11040
    %v11042 = vrot.slane %v11026, %v11041
    %v11044 = vunpack.c.l.s4 1983009808
    %v11045 = vunpack.c.0.s8 %v11044
    %v11046 = vlaneseq
    %v11047 = vshrl.u32 %v11046, 7
    %v11048 = vsub.s32 %v11045, %v11047
    %v11049 = vrot.slane %v11027, %v11048
    %v11051 = vunpack.c.l.s4 1983009808
    %v11052 = vunpack.c.0.s8 %v11051
    %v11053 = vlaneseq
    %v11054 = vshrl.u32 %v11053, 7
    %v11055 = vsub.s32 %v11052, %v11054
    %v11056 = vrot.slane %v11028, %v11055
    %v11057 = vcombine.low %v11035, %v11049
    %v11058 = vcombine.high %v11035, %v11049
    %v11059 = vcombine.low %v11042, %v11056
    %v11060 = vcombine.low %v10615, %v10631
    %v11061 = vcombine.high %v10615, %v10631
    %v11062 = vcombine.low %v10647, %v10663
    %v11063 = vcombine.high %v10647, %v10663
    %v11065 = vunpack.c.l.s4 1983009808
    %v11066 = vunpack.c.0.s8 %v11065
    %v11067 = vlaneseq
    %v11068 = vshrl.u32 %v11067, 7
    %v11069 = vsub.s32 %v11066, %v11068
    %v11070 = vrot.slane %v11060, %v11069
    %v11072 = vunpack.c.l.s4 1983009808
    %v11073 = vunpack.c.0.s8 %v11072
    %v11074 = vlaneseq
    %v11075 = vshrl.u32 %v11074, 7
    %v11076 = vsub.s32 %v11073, %v11075
    %v11077 = vrot.slane %v11061, %v11076
    %v11079 = vunpack.c.l.s4 1983009808
    %v11080 = vunpack.c.0.s8 %v11079
    %v11081 = vlaneseq
    %v11082 = vshrl.u32 %v11081, 7
    %v11083 = vsub.s32 %v11080, %v11082
    %v11084 = vrot.slane %v11062, %v11083
    %v11086 = vunpack.c.l.s4 1983009808
    %v11087 = vunpack.c.0.s8 %v11086
    %v11088 = vlaneseq
    %v11089 = vshrl.u32 %v11088, 7
    %v11090 = vsub.s32 %v11087, %v11089
    %v11091 = vrot.slane %v11063, %v11090
    %v11092 = vcombine.low %v11070, %v11084
    %v11093 = vcombine.high %v11070, %v11084
    %v11094 = vcombine.low %v11077, %v11091
    %v11095 = vcombine.low %v10679, %v10695
    %v11096 = vcombine.high %v10679, %v10695
    %v11097 = vcombine.low %v10711, %v10727
    %v11098 = vcombine.high %v10711, %v10727
    %v11100 = vunpack.c.l.s4 1983009808
    %v11101 = vunpack.c.0.s8 %v11100
    %v11102 = vlaneseq
    %v11103 = vshrl.u32 %v11102, 7
    %v11104 = vsub.s32 %v11101, %v11103
    %v11105 = vrot.slane %v11095, %v11104
    %v11107 = vunpack.c.l.s4 1983009808
    %v11108 = vunpack.c.0.s8 %v11107
    %v11109 = vlaneseq
    %v11110 = vshrl.u32 %v11109, 7
    %v11111 = vsub.s32 %v11108, %v11110
    %v11112 = vrot.slane %v11096, %v11111
    %v11114 = vunpack.c.l.s4 1983009808
    %v11115 = vunpack.c.0.s8 %v11114
    %v11116 = vlaneseq
    %v11117 = vshrl.u32 %v11116, 7
    %v11118 = vsub.s32 %v11115, %v11117
    %v11119 = vrot.slane %v11097, %v11118
    %v11121 = vunpack.c.l.s4 1983009808
    %v11122 = vunpack.c.0.s8 %v11121
    %v11123 = vlaneseq
    %v11124 = vshrl.u32 %v11123, 7
    %v11125 = vsub.s32 %v11122, %v11124
    %v11126 = vrot.slane %v11098, %v11125
    %v11127 = vcombine.low %v11105, %v11119
    %v11128 = vcombine.high %v11105, %v11119
    %v11129 = vcombine.low %v11112, %v11126
    %v11130 = vcombine.low %v10743, %v10759
    %v11131 = vcombine.high %v10743, %v10759
    %v11132 = vcombine.low %v10775, %v10791
    %v11133 = vcombine.high %v10775, %v10791
    %v11135 = vunpack.c.l.s4 1983009808
    %v11136 = vunpack.c.0.s8 %v11135
    %v11137 = vlaneseq
    %v11138 = vshrl.u32 %v11137, 7
    %v11139 = vsub.s32 %v11136, %v11138
    %v11140 = vrot.slane %v11130, %v11139
    %v11142 = vunpack.c.l.s4 1983009808
    %v11143 = vunpack.c.0.s8 %v11142
    %v11144 = vlaneseq
    %v11145 = vshrl.u32 %v11144, 7
    %v11146 = vsub.s32 %v11143, %v11145
    %v11147 = vrot.slane %v11131, %v11146
    %v11149 = vunpack.c.l.s4 1983009808
    %v11150 = vunpack.c.0.s8 %v11149
    %v11151 = vlaneseq
    %v11152 = vshrl.u32 %v11151, 7
    %v11153 = vsub.s32 %v11150, %v11152
    %v11154 = vrot.slane %v11132, %v11153
    %v11156 = vunpack.c.l.s4 1983009808
    %v11157 = vunpack.c.0.s8 %v11156
    %v11158 = vlaneseq
    %v11159 = vshrl.u32 %v11158, 7
    %v11160 = vsub.s32 %v11157, %v11159
    %v11161 = vrot.slane %v11133, %v11160
    %v11162 = vcombine.low %v11140, %v11154
    %v11163 = vcombine.high %v11140, %v11154
    %v11164 = vcombine.low %v11147, %v11161
    %v11165 = vcombine.low %v10807, %v10823
    %v11166 = vcombine.high %v10807, %v10823
    %v11167 = vcombine.low %v10839, %v10855
    %v11168 = vcombine.high %v10839, %v10855
    %v11170 = vunpack.c.l.s4 1983009808
    %v11171 = vunpack.c.0.s8 %v11170
    %v11172 = vlaneseq
    %v11173 = vshrl.u32 %v11172, 7
    %v11174 = vsub.s32 %v11171, %v11173
    %v11175 = vrot.slane %v11165, %v11174
    %v11177 = vunpack.c.l.s4 1983009808
    %v11178 = vunpack.c.0.s8 %v11177
    %v11179 = vlaneseq
    %v11180 = vshrl.u32 %v11179, 7
    %v11181 = vsub.s32 %v11178, %v11180
    %v11182 = vrot.slane %v11166, %v11181
    %v11184 = vunpack.c.l.s4 1983009808
    %v11185 = vunpack.c.0.s8 %v11184
    %v11186 = vlaneseq
    %v11187 = vshrl.u32 %v11186, 7
    %v11188 = vsub.s32 %v11185, %v11187
    %v11189 = vrot.slane %v11167, %v11188
    %v11191 = vunpack.c.l.s4 1983009808
    %v11192 = vunpack.c.0.s8 %v11191
    %v11193 = vlaneseq
    %v11194 = vshrl.u32 %v11193, 7
    %v11195 = vsub.s32 %v11192, %v11194
    %v11196 = vrot.slane %v11168, %v11195
    %v11197 = vcombine.low %v11175, %v11189
    %v11198 = vcombine.high %v11175, %v11189
    %v11199 = vcombine.low %v11182, %v11196
    %v11200 = vcombine.low %v10871, %v10887
    %v11201 = vcombine.high %v10871, %v10887
    %v11202 = vcombine.low %v10903, %v10919
    %v11203 = vcombine.high %v10903, %v10919
    %v11205 = vunpack.c.l.s4 1983009808
    %v11206 = vunpack.c.0.s8 %v11205
    %v11207 = vlaneseq
    %v11208 = vshrl.u32 %v11207, 7
    %v11209 = vsub.s32 %v11206, %v11208
    %v11210 = vrot.slane %v11200, %v11209
    %v11212 = vunpack.c.l.s4 1983009808
    %v11213 = vunpack.c.0.s8 %v11212
    %v11214 = vlaneseq
    %v11215 = vshrl.u32 %v11214, 7
    %v11216 = vsub.s32 %v11213, %v11215
    %v11217 = vrot.slane %v11201, %v11216
    %v11219 = vunpack.c.l.s4 1983009808
    %v11220 = vunpack.c.0.s8 %v11219
    %v11221 = vlaneseq
    %v11222 = vshrl.u32 %v11221, 7
    %v11223 = vsub.s32 %v11220, %v11222
    %v11224 = vrot.slane %v11202, %v11223
    %v11226 = vunpack.c.l.s4 1983009808
    %v11227 = vunpack.c.0.s8 %v11226
    %v11228 = vlaneseq
    %v11229 = vshrl.u32 %v11228, 7
    %v11230 = vsub.s32 %v11227, %v11229
    %v11231 = vrot.slane %v11203, %v11230
    %v11232 = vcombine.low %v11210, %v11224
    %v11233 = vcombine.high %v11210, %v11224
    %v11234 = vcombine.low %v11217, %v11231
    %v11262 = vpack.c.bf16 %v10987, %v10952
    %v11263 = vpack.c.bf16 %v10988, %v10953
    %v11264 = vpack.c.bf16 %v10989, %v10954
    %v11265 = vpack.c.bf16 %v11057, %v11022
    %v11266 = vpack.c.bf16 %v11058, %v11023
    %v11267 = vpack.c.bf16 %v11059, %v11024
    %v11268 = vpack.c.bf16 %v11127, %v11092
    %v11269 = vpack.c.bf16 %v11128, %v11093
    %v11270 = vpack.c.bf16 %v11129, %v11094
    %v11271 = vpack.c.bf16 %v11197, %v11162
    %v11272 = vpack.c.bf16 %v11198, %v11163
    %v11273 = vpack.c.bf16 %v11199, %v11164
    %v11274 = vpack.c.bf16 %v11232, %v11232
    %v11275 = vpack.c.bf16 %v11233, %v11233
    %v11276 = vpack.c.bf16 %v11234, %v11234
    %v11279 = vsel %vm10052, %v11264, 0
    %v11282 = vsel %vm10052, %v11267, 0
    %v11285 = vsel %vm10052, %v11270, 0
    %v11288 = vsel %vm10052, %v11273, 0
    %v11291 = vsel %vm10052, %v11276, 0
    %v11341 = vunpack.c.l.b16 %v9299
    %v11342 = vunpack.c.l.b16 %v9300
    %v11343 = vunpack.c.l.b16 %v9301
    %v11344 = vunpack.c.l.b16 %v9302
    %v11345 = vunpack.c.l.b16 %v9303
    %v11346 = vunpack.c.l.b16 %v9304
    %v11347 = vunpack.c.l.b16 %v9305
    %v11348 = vunpack.c.l.b16 %v9306
    %v11349 = vunpack.c.l.b16 %v9307
    %v11350 = vunpack.c.l.b16 %v9308
    %v11351 = vunpack.c.l.b16 %v9309
    %v11352 = vunpack.c.l.b16 %v9310
    %v11353 = vunpack.c.l.b16 %v9311
    %v11354 = vunpack.c.l.b16 %v9312
    %v11355 = vunpack.c.l.b16 %v9313
    %v11356 = vunpack.c.l.b16 %v9314
    %v11357 = vunpack.c.l.b16 %v9315
    %v11358 = vunpack.c.l.b16 %v9316
    %v11359 = vunpack.c.l.b16 %v9317
    %v11360 = vunpack.c.l.b16 %v9318
    %v11361 = vunpack.c.l.b16 %v9319
    %v11362 = vunpack.c.l.b16 %v9320
    %v11363 = vunpack.c.l.b16 %v9321
    %v11364 = vunpack.c.l.b16 %v9322
    %v11365 = vunpack.c.l.b16 %v9323
    %v11366 = vunpack.c.l.b16 %v9324
    %v11367 = vunpack.c.l.b16 %v9325
    %v11368 = vunpack.c.l.b16 %v9326
    %v11369 = vunpack.c.l.b16 %v9327
    %v11370 = vunpack.c.l.b16 %v9328
    %v11371 = vunpack.c.l.b16 %v9329
    %v11372 = vunpack.c.l.b16 %v9330
    %v11373 = vunpack.c.l.b16 %v9331
    %v11374 = vunpack.c.l.b16 %v9332
    %v11375 = vunpack.c.l.b16 %v9333
    %v11376 = vunpack.c.l.b16 %v9334
    %v11377 = vunpack.c.l.b16 %v9335
    %v11378 = vunpack.c.l.b16 %v9336
    %v11379 = vunpack.c.l.b16 %v9337
    %v11380 = vunpack.c.l.b16 %v9338
    %v11381 = vunpack.c.l.b16 %v9339
    %v11382 = vunpack.c.l.b16 %v9340
    %v11383 = vunpack.c.l.b16 %v9341
    %v11384 = vunpack.c.l.b16 %v9342
    %v11385 = vunpack.c.l.b16 %v9343
    %v11386 = vunpack.c.l.b16 %v9344
    %v11387 = vunpack.c.l.b16 %v9345
    %v11388 = vunpack.c.l.b16 %v9346
    %v11389 = vpack.c.b16 %v11342, %v11341
    %v11390 = vpack.c.b16 %v11344, %v11343
    %v11391 = vpack.c.b16 %v11346, %v11345
    %v11392 = vpack.c.b16 %v11348, %v11347
    %v11393 = vpack.c.b16 %v11350, %v11349
    %v11394 = vpack.c.b16 %v11352, %v11351
    %v11395 = vpack.c.b16 %v11354, %v11353
    %v11396 = vpack.c.b16 %v11356, %v11355
    %v11397 = vpack.c.b16 %v11358, %v11357
    %v11398 = vpack.c.b16 %v11360, %v11359
    %v11399 = vpack.c.b16 %v11362, %v11361
    %v11400 = vpack.c.b16 %v11364, %v11363
    %v11401 = vpack.c.b16 %v11366, %v11365
    %v11402 = vpack.c.b16 %v11368, %v11367
    %v11403 = vpack.c.b16 %v11370, %v11369
    %v11404 = vpack.c.b16 %v11372, %v11371
    %v11405 = vpack.c.b16 %v11374, %v11373
    %v11406 = vpack.c.b16 %v11376, %v11375
    %v11407 = vpack.c.b16 %v11378, %v11377
    %v11408 = vpack.c.b16 %v11380, %v11379
    %v11409 = vpack.c.b16 %v11382, %v11381
    %v11410 = vpack.c.b16 %v11384, %v11383
    %v11411 = vpack.c.b16 %v11386, %v11385
    %v11412 = vpack.c.b16 %v11388, %v11387
    %11437 = vmatprep.subr.bf16.mxu0 0
    %11438 = vmatpush1.bf16.msra.mxu0 %v11389
    %11439 = vmatprep.subr.bf16.mxu0 0
    %11440 = vmatpush1.bf16.msra.mxu0 %v11390
    %11441 = vmatprep.subr.bf16.mxu0 0
    %11442 = vmatpush1.bf16.msra.mxu0 %v11391
    %11443 = vmatprep.subr.bf16.mxu0 0
    %11444 = vmatpush1.bf16.msra.mxu0 %v11392
    %11445 = vmatprep.subr.bf16.mxu0 0
    %11446 = vmatpush1.bf16.msra.mxu0 %v11393
    %11447 = vmatprep.subr.bf16.mxu0 0
    %11448 = vmatpush1.bf16.msra.mxu0 %v11394
    %11449 = vmatprep.subr.bf16.mxu0 0
    %11450 = vmatpush1.bf16.msra.mxu0 %v11395
    %11451 = vmatprep.subr.bf16.mxu0 0
    %11452 = vmatpush1.bf16.msra.mxu0 %v11396
    %11453 = vmatprep.subr.bf16.mxu0 0
    %11454 = vmatpush1.bf16.msra.mxu0 %v11397
    %11455 = vmatprep.subr.bf16.mxu0 0
    %11456 = vmatpush1.bf16.msra.mxu0 %v11398
    %11457 = vmatprep.subr.bf16.mxu0 0
    %11458 = vmatpush1.bf16.msra.mxu0 %v11399
    %11459 = vmatprep.subr.bf16.mxu0 0
    %11460 = vmatpush1.bf16.msra.mxu0 %v11400
    %11461 = vmatprep.subr.bf16.mxu0 0
    %11462 = vmatpush1.bf16.msra.mxu0 %v11401
    %11463 = vmatprep.subr.bf16.mxu0 0
    %11464 = vmatpush1.bf16.msra.mxu0 %v11402
    %11465 = vmatprep.subr.bf16.mxu0 0
    %11466 = vmatpush1.bf16.msra.mxu0 %v11403
    %11467 = vmatprep.subr.bf16.mxu0 0
    %11468 = vmatpush1.bf16.msra.mxu0 %v11404
    %11469 = vmatprep.mubr.bf16.mxu0 %v11263
    %11470 = vmatmul.mubr.bf16.gmra.mrb[0].mxu0 %v11262
    %v11471 = vpop.f32.mrb[0].mxu0
    %v11472 = vadd.f32 0.0, %v11471
    %v11473 = vpop.f32.mrb[0].mxu0
    %v11474 = vpop.f32.mrb[0].mxu0
    %v11475 = vadd.f32 0.0, %v11474
    %v11476 = vpop.f32.mrb[0].mxu0
    %11477 = vmatprep.mubr.bf16.mxu0 %v11266
    %11478 = vmatmul.mubr.bf16.gmra.mrb[0].mxu0 %v11265
    %v11479 = vpop.f32.mrb[0].mxu0
    %v11480 = vadd.f32 0.0, %v11479
    %v11481 = vpop.f32.mrb[0].mxu0
    %v11482 = vpop.f32.mrb[0].mxu0
    %v11483 = vadd.f32 0.0, %v11482
    %v11484 = vpop.f32.mrb[0].mxu0
    %11485 = vmatprep.mubr.bf16.mxu0 %v11269
    %11486 = vmatmul.mubr.bf16.gmra.mrb[0].mxu0 %v11268
    %v11487 = vpop.f32.mrb[0].mxu0
    %v11488 = vadd.f32 0.0, %v11487
    %v11489 = vpop.f32.mrb[0].mxu0
    %v11490 = vpop.f32.mrb[0].mxu0
    %v11491 = vadd.f32 0.0, %v11490
    %v11492 = vpop.f32.mrb[0].mxu0
    %11493 = vmatprep.mubr.bf16.mxu0 %v11272
    %11494 = vmatmul.mubr.bf16.gmra.mrb[0].mxu0 %v11271
    %v11495 = vpop.f32.mrb[0].mxu0
    %v11496 = vadd.f32 0.0, %v11495
    %v11497 = vpop.f32.mrb[0].mxu0
    %v11498 = vpop.f32.mrb[0].mxu0
    %v11499 = vadd.f32 0.0, %v11498
    %v11500 = vpop.f32.mrb[0].mxu0
    %11501 = vmatprep.mubr.bf16.mxu0 %v11275
    %11502 = vmatmul.mubr.bf16.gmra.mrb[0].mxu0 %v11274
    %v11503 = vpop.f32.mrb[0].mxu0
    %v11504 = vpop.f32.mrb[0].mxu0
    %v11505 = vpop.f32.mrb[0].mxu0
    %v11506 = vpop.f32.mrb[0].mxu0
    %11507 = vdwg.mxu0
    %11508 = vmatprep.subr.bf16.mxu0 0
    %11509 = vmatpush1.bf16.msra.mxu0 %v11405
    %11510 = vmatprep.subr.bf16.mxu0 0
    %11511 = vmatpush1.bf16.msra.mxu0 %v11406
    %11512 = vmatprep.subr.bf16.mxu0 0
    %11513 = vmatpush1.bf16.msra.mxu0 %v11407
    %11514 = vmatprep.subr.bf16.mxu0 0
    %11515 = vmatpush1.bf16.msra.mxu0 %v11408
    %11516 = vmatprep.subr.bf16.mxu0 0
    %11517 = vmatpush1.bf16.msra.mxu0 %v11409
    %11518 = vmatprep.subr.bf16.mxu0 0
    %11519 = vmatpush1.bf16.msra.mxu0 %v11410
    %11520 = vmatprep.subr.bf16.mxu0 0
    %11521 = vmatpush1.bf16.msra.mxu0 %v11411
    %11522 = vmatprep.subr.bf16.mxu0 0
    %11523 = vmatpush1.bf16.msra.mxu0 %v11412
    %11524 = vmatprep.subr.bf16.mxu0 0
    %11525 = vmatpush1.bf16.msra.mxu0 0
    %11526 = vmatprep.subr.bf16.mxu0 0
    %11527 = vmatpush1.bf16.msra.mxu0 0
    %11528 = vmatprep.subr.bf16.mxu0 0
    %11529 = vmatpush1.bf16.msra.mxu0 0
    %11530 = vmatprep.subr.bf16.mxu0 0
    %11531 = vmatpush1.bf16.msra.mxu0 0
    %11532 = vmatprep.subr.bf16.mxu0 0
    %11533 = vmatpush1.bf16.msra.mxu0 0
    %11534 = vmatprep.subr.bf16.mxu0 0
    %11535 = vmatpush1.bf16.msra.mxu0 0
    %11536 = vmatprep.subr.bf16.mxu0 0
    %11537 = vmatpush1.bf16.msra.mxu0 0
    %11538 = vmatprep.subr.bf16.mxu0 0
    %11539 = vmatpush1.bf16.msra.mxu0 0
    %11540 = vmatprep.mubr.bf16.mxu0 0
    %11541 = vmatmul.mubr.bf16.gmra.mrb[0].mxu0 %v11279
    %v11542 = vpop.f32.mrb[0].mxu0
    %v11543 = vadd.f32 %v11472, %v11542
    %v11544 = vpop.f32.mrb[0].mxu0
    %v11545 = vpop.f32.mrb[0].mxu0
    %v11546 = vadd.f32 %v11475, %v11545
    %v11547 = vpop.f32.mrb[0].mxu0
    %11548 = vmatprep.mubr.bf16.mxu0 0
    %11549 = vmatmul.mubr.bf16.gmra.mrb[0].mxu0 %v11282
    %v11550 = vpop.f32.mrb[0].mxu0
    %v11551 = vadd.f32 %v11480, %v11550
    %v11552 = vpop.f32.mrb[0].mxu0
    %v11553 = vpop.f32.mrb[0].mxu0
    %v11554 = vadd.f32 %v11483, %v11553
    %v11555 = vpop.f32.mrb[0].mxu0
    %11556 = vmatprep.mubr.bf16.mxu0 0
    %11557 = vmatmul.mubr.bf16.gmra.mrb[0].mxu0 %v11285
    %v11558 = vpop.f32.mrb[0].mxu0
    %v11559 = vadd.f32 %v11488, %v11558
    %v11560 = vpop.f32.mrb[0].mxu0
    %v11561 = vpop.f32.mrb[0].mxu0
    %v11562 = vadd.f32 %v11491, %v11561
    %v11563 = vpop.f32.mrb[0].mxu0
    %11564 = vmatprep.mubr.bf16.mxu0 0
    %11565 = vmatmul.mubr.bf16.gmra.mrb[0].mxu0 %v11288
    %v11566 = vpop.f32.mrb[0].mxu0
    %v11567 = vadd.f32 %v11496, %v11566
    %v11568 = vpop.f32.mrb[0].mxu0
    %v11569 = vpop.f32.mrb[0].mxu0
    %v11570 = vadd.f32 %v11499, %v11569
    %v11571 = vpop.f32.mrb[0].mxu0
    %11572 = vmatprep.mubr.bf16.mxu0 0
    %11573 = vmatmul.mubr.bf16.gmra.mrb[0].mxu0 %v11291
    %v11574 = vpop.f32.mrb[0].mxu0
    %v11575 = vpop.f32.mrb[0].mxu0
    %v11576 = vpop.f32.mrb[0].mxu0
    %v11577 = vpop.f32.mrb[0].mxu0
    %11578 = vdwg.mxu0
    %v11587 = vcombine.high %v11543, %v11543
    %v11589 = vunpack.c.l.s4 1983009808
    %v11590 = vunpack.c.0.s8 %v11589
    %v11591 = vlaneseq
    %v11592 = vshrl.u32 %v11591, 7
    %v11593 = vsub.s32 %v11590, %v11592
    %v11594 = vrot.slane %v11543, %v11593
    %v11596 = vunpack.c.l.s4 1983009808
    %v11597 = vunpack.c.0.s8 %v11596
    %v11598 = vlaneseq
    %v11599 = vshrl.u32 %v11598, 7
    %v11600 = vsub.s32 %v11597, %v11599
    %v11601 = vrot.slane %v11587, %v11600
    %v11602 = vcombine.high %v11594, %v11594
    %v11603 = vcombine.high %v11601, %v11601
    %v11604 = vcombine.high %v11546, %v11546
    %v11606 = vunpack.c.l.s4 1983009808
    %v11607 = vunpack.c.0.s8 %v11606
    %v11608 = vlaneseq
    %v11609 = vshrl.u32 %v11608, 7
    %v11610 = vsub.s32 %v11607, %v11609
    %v11611 = vrot.slane %v11546, %v11610
    %v11613 = vunpack.c.l.s4 1983009808
    %v11614 = vunpack.c.0.s8 %v11613
    %v11615 = vlaneseq
    %v11616 = vshrl.u32 %v11615, 7
    %v11617 = vsub.s32 %v11614, %v11616
    %v11618 = vrot.slane %v11604, %v11617
    %v11619 = vcombine.high %v11618, %v11618
    %v11620 = vcombine.high %v11551, %v11551
    %v11622 = vunpack.c.l.s4 1983009808
    %v11623 = vunpack.c.0.s8 %v11622
    %v11624 = vlaneseq
    %v11625 = vshrl.u32 %v11624, 7
    %v11626 = vsub.s32 %v11623, %v11625
    %v11627 = vrot.slane %v11551, %v11626
    %v11629 = vunpack.c.l.s4 1983009808
    %v11630 = vunpack.c.0.s8 %v11629
    %v11631 = vlaneseq
    %v11632 = vshrl.u32 %v11631, 7
    %v11633 = vsub.s32 %v11630, %v11632
    %v11634 = vrot.slane %v11620, %v11633
    %v11635 = vcombine.high %v11627, %v11627
    %v11636 = vcombine.high %v11554, %v11554
    %v11638 = vunpack.c.l.s4 1983009808
    %v11639 = vunpack.c.0.s8 %v11638
    %v11640 = vlaneseq
    %v11641 = vshrl.u32 %v11640, 7
    %v11642 = vsub.s32 %v11639, %v11641
    %v11643 = vrot.slane %v11554, %v11642
    %v11645 = vunpack.c.l.s4 1983009808
    %v11646 = vunpack.c.0.s8 %v11645
    %v11647 = vlaneseq
    %v11648 = vshrl.u32 %v11647, 7
    %v11649 = vsub.s32 %v11646, %v11648
    %v11650 = vrot.slane %v11636, %v11649
    %v11651 = vcombine.high %v11643, %v11643
    %v11652 = vcombine.high %v11650, %v11650
    %v11653 = vcombine.high %v11559, %v11559
    %v11655 = vunpack.c.l.s4 1983009808
    %v11656 = vunpack.c.0.s8 %v11655
    %v11657 = vlaneseq
    %v11658 = vshrl.u32 %v11657, 7
    %v11659 = vsub.s32 %v11656, %v11658
    %v11660 = vrot.slane %v11559, %v11659
    %v11662 = vunpack.c.l.s4 1983009808
    %v11663 = vunpack.c.0.s8 %v11662
    %v11664 = vlaneseq
    %v11665 = vshrl.u32 %v11664, 7
    %v11666 = vsub.s32 %v11663, %v11665
    %v11667 = vrot.slane %v11653, %v11666
    %v11668 = vcombine.high %v11667, %v11667
    %v11669 = vcombine.high %v11562, %v11562
    %v11671 = vunpack.c.l.s4 1983009808
    %v11672 = vunpack.c.0.s8 %v11671
    %v11673 = vlaneseq
    %v11674 = vshrl.u32 %v11673, 7
    %v11675 = vsub.s32 %v11672, %v11674
    %v11676 = vrot.slane %v11562, %v11675
    %v11678 = vunpack.c.l.s4 1983009808
    %v11679 = vunpack.c.0.s8 %v11678
    %v11680 = vlaneseq
    %v11681 = vshrl.u32 %v11680, 7
    %v11682 = vsub.s32 %v11679, %v11681
    %v11683 = vrot.slane %v11669, %v11682
    %v11684 = vcombine.high %v11676, %v11676
    %v11685 = vcombine.high %v11567, %v11567
    %v11687 = vunpack.c.l.s4 1983009808
    %v11688 = vunpack.c.0.s8 %v11687
    %v11689 = vlaneseq
    %v11690 = vshrl.u32 %v11689, 7
    %v11691 = vsub.s32 %v11688, %v11690
    %v11692 = vrot.slane %v11567, %v11691
    %v11694 = vunpack.c.l.s4 1983009808
    %v11695 = vunpack.c.0.s8 %v11694
    %v11696 = vlaneseq
    %v11697 = vshrl.u32 %v11696, 7
    %v11698 = vsub.s32 %v11695, %v11697
    %v11699 = vrot.slane %v11685, %v11698
    %v11700 = vcombine.high %v11692, %v11692
    %v11701 = vcombine.high %v11699, %v11699
    %v11703 = vunpack.c.l.s4 1983009808
    %v11704 = vunpack.c.0.s8 %v11703
    %v11705 = vlaneseq
    %v11706 = vshrl.u32 %v11705, 7
    %v11707 = vsub.s32 %v11704, %v11706
    %v11708 = vrot.slane %v11570, %v11707
    %v11735 = vlaneseq
    %v11736 = vshrl.u32 %v11735, 7
    %v11737 = vsub.s32 0, %v11736
    %v11738 = vrot.slane %v9347, %v11737
    %v11740 = vadd.f32 %v11594, %v11738
    %v11741 = vadd.f32 %v11602, %v11738
    %v11742 = vadd.f32 %v11601, %v11738
    %v11743 = vadd.f32 %v11603, %v11738
    %v11744 = vadd.f32 %v11611, %v11738
    %v11745 = vadd.f32 %v11618, %v11738
    %v11746 = vadd.f32 %v11619, %v11738
    %v11747 = vadd.f32 %v11627, %v11738
    %v11748 = vadd.f32 %v11635, %v11738
    %v11749 = vadd.f32 %v11634, %v11738
    %v11750 = vadd.f32 %v11643, %v11738
    %v11751 = vadd.f32 %v11651, %v11738
    %v11752 = vadd.f32 %v11650, %v11738
    %v11753 = vadd.f32 %v11652, %v11738
    %v11754 = vadd.f32 %v11660, %v11738
    %v11755 = vadd.f32 %v11667, %v11738
    %v11756 = vadd.f32 %v11668, %v11738
    %v11757 = vadd.f32 %v11676, %v11738
    %v11758 = vadd.f32 %v11684, %v11738
    %v11759 = vadd.f32 %v11683, %v11738
    %v11760 = vadd.f32 %v11692, %v11738
    %v11761 = vadd.f32 %v11700, %v11738
    %v11762 = vadd.f32 %v11699, %v11738
    %v11763 = vadd.f32 %v11701, %v11738
    %v11764 = vadd.f32 %v11708, %v11738
    %v11765 = vmax.f32 %v11740, 0.0
    %v11766 = vmax.f32 %v11741, 0.0
    %v11767 = vmax.f32 %v11742, 0.0
    %v11768 = vmax.f32 %v11743, 0.0
    %v11769 = vmax.f32 %v11744, 0.0
    %v11770 = vmax.f32 %v11745, 0.0
    %v11771 = vmax.f32 %v11746, 0.0
    %v11772 = vmax.f32 %v11747, 0.0
    %v11773 = vmax.f32 %v11748, 0.0
    %v11774 = vmax.f32 %v11749, 0.0
    %v11775 = vmax.f32 %v11750, 0.0
    %v11776 = vmax.f32 %v11751, 0.0
    %v11777 = vmax.f32 %v11752, 0.0
    %v11778 = vmax.f32 %v11753, 0.0
    %v11779 = vmax.f32 %v11754, 0.0
    %v11780 = vmax.f32 %v11755, 0.0
    %v11781 = vmax.f32 %v11756, 0.0
    %v11782 = vmax.f32 %v11757, 0.0
    %v11783 = vmax.f32 %v11758, 0.0
    %v11784 = vmax.f32 %v11759, 0.0
    %v11785 = vmax.f32 %v11760, 0.0
    %v11786 = vmax.f32 %v11761, 0.0
    %v11787 = vmax.f32 %v11762, 0.0
    %v11788 = vmax.f32 %v11763, 0.0
    %v11789 = vmax.f32 %v11764, 0.0
    %v11790 = vld [vmem:[%s5] sm:$0xf]
    %v11791 = vld [vmem:[%s5 + $0x4] sm:$0xf]
    %v11792 = vld [vmem:[%s5 + $0x8] sm:$0xf]
    %v11793 = vld [vmem:[%s5 + $0xc] sm:$0xf]
    %v11794 = vld [vmem:[%s5 + $0x10] sm:$0xf]
    %v11795 = vld [vmem:[%s5 + $0x14] sm:$0xf]
    %v11796 = vld [vmem:[%s5 + $0x18] sm:$0xf]
    %v11797 = vld [vmem:[%s5 + $0x1c] sm:$0xf]
    %v11798 = vld [vmem:[%s5 + $0x20] sm:$0xf]
    %v11799 = vld [vmem:[%s5 + $0x24] sm:$0xf]
    %v11800 = vld [vmem:[%s5 + $0x28] sm:$0xf]
    %v11801 = vld [vmem:[%s5 + $0x2c] sm:$0xf]
    %v11802 = vld [vmem:[%s5 + $0x30] sm:$0xf]
    %v11803 = vld [vmem:[%s5 + $0x34] sm:$0xf]
    %v11804 = vld [vmem:[%s5 + $0x38] sm:$0xf]
    %v11805 = vld [vmem:[%s5 + $0x3c] sm:$0xf]
    %v11806 = vld [vmem:[%s5 + $0x40] sm:$0xf]
    %v11807 = vld [vmem:[%s5 + $0x44] sm:$0xf]
    %v11808 = vld [vmem:[%s5 + $0x48] sm:$0xf]
    %v11809 = vld [vmem:[%s5 + $0x4c] sm:$0xf]
    %v11810 = vld [vmem:[%s5 + $0x50] sm:$0xf]
    %v11811 = vld [vmem:[%s5 + $0x54] sm:$0xf]
    %v11812 = vld [vmem:[%s5 + $0x58] sm:$0xf]
    %v11813 = vld [vmem:[%s5 + $0x5c] sm:$0xf]
    %v11814 = vld [vmem:[%s5 + $0x60] sm:$0xf]
    %v11815 = vld [vmem:[%s5 + $0x64] sm:$0xf]
    %v11816 = vld [vmem:[%s5 + $0x68] sm:$0xf]
    %v11817 = vld [vmem:[%s5 + $0x6c] sm:$0xf]
    %v11818 = vld [vmem:[%s5 + $0x70] sm:$0xf]
    %v11819 = vld [vmem:[%s5 + $0x74] sm:$0xf]
    %v11820 = vld [vmem:[%s5 + $0x78] sm:$0xf]
    %v11821 = vld [vmem:[%s5 + $0x7c] sm:$0xf]
    %v11822 = vld [vmem:[%s5 + $0x80] sm:$0xf]
    %v11823 = vld [vmem:[%s5 + $0x84] sm:$0xf]
    %v11824 = vld [vmem:[%s5 + $0x88] sm:$0xf]
    %v11825 = vld [vmem:[%s5 + $0x8c] sm:$0xf]
    %v11826 = vld [vmem:[%s5 + $0x90] sm:$0xf]
    %v11827 = vld [vmem:[%s5 + $0x94] sm:$0xf]
    %v11828 = vld [vmem:[%s5 + $0x98] sm:$0xf]
    %v11829 = vld [vmem:[%s5 + $0x9c] sm:$0xf]
    %v11830 = vld [vmem:[%s5 + $0xa0] sm:$0xf]
    %v11831 = vld [vmem:[%s5 + $0xa4] sm:$0xf]
    %v11832 = vld [vmem:[%s5 + $0xa8] sm:$0xf]
    %v11833 = vld [vmem:[%s5 + $0xac] sm:$0xf]
    %v11834 = vld [vmem:[%s5 + $0xb0] sm:$0xf]
    %v11835 = vld [vmem:[%s5 + $0xb4] sm:$0xf]
    %v11836 = vld [vmem:[%s5 + $0xb8] sm:$0xf]
    %v11837 = vld [vmem:[%s5 + $0xbc] sm:$0xf]
    %v11838 = vld [vmem:[%s5 + $0xc0] sm:$0xf]
    %v11839 = vld [vmem:[%s5 + $0xc4] sm:$0xf]
    %v11840 = vld [vmem:[%s5 + $0xc8] sm:$0xf]
    %v11841 = vld [vmem:[%s5 + $0xcc] sm:$0xf]
    %v11842 = vld [vmem:[%s5 + $0xd0] sm:$0xf]
    %v11843 = vld [vmem:[%s5 + $0xd4] sm:$0xf]
    %v11844 = vld [vmem:[%s5 + $0xd8] sm:$0xf]
    %v11845 = vld [vmem:[%s5 + $0xdc] sm:$0xf]
    %v11846 = vld [vmem:[%s5 + $0xe0] sm:$0xf]
    %v11847 = vld [vmem:[%s5 + $0xe4] sm:$0xf]
    %v11848 = vld [vmem:[%s5 + $0xe8] sm:$0xf]
    %v11849 = vld [vmem:[%s5 + $0xec] sm:$0xf]
    %v11850 = vld [vmem:[%s5 + $0xf0] sm:$0xf]
    %v11851 = vld [vmem:[%s5 + $0xf4] sm:$0xf]
    %v11852 = vld [vmem:[%s5 + $0xf8] sm:$0xf]
    %v11853 = vld [vmem:[%s5 + $0xfc] sm:$0xf]
    %v11854 = vld [vmem:[%s5 + $0x100] sm:$0xf]
    %v11855 = vld [vmem:[%s5 + $0x104] sm:$0xf]
    %v11856 = vld [vmem:[%s5 + $0x108] sm:$0xf]
    %v11857 = vld [vmem:[%s5 + $0x10c] sm:$0xf]
    %v11858 = vld [vmem:[%s5 + $0x110] sm:$0xf]
    %v11859 = vld [vmem:[%s5 + $0x114] sm:$0xf]
    %v11860 = vld [vmem:[%s5 + $0x118] sm:$0xf]
    %v11861 = vld [vmem:[%s5 + $0x11c] sm:$0xf]
    %v11862 = vld [vmem:[%s5 + $0x120] sm:$0xf]
    %v11863 = vld [vmem:[%s5 + $0x124] sm:$0xf]
    %v11864 = vld [vmem:[%s5 + $0x128] sm:$0xf]
    %v11865 = vld [vmem:[%s5 + $0x12c] sm:$0xf]
    %v11866 = vld [vmem:[%s5 + $0x130] sm:$0xf]
    %v11867 = vld [vmem:[%s5 + $0x134] sm:$0xf]
    %v11868 = vld [vmem:[%s5 + $0x138] sm:$0xf]
    %v11869 = vld [vmem:[%s5 + $0x13c] sm:$0xf]
    %v11870 = vld [vmem:[%s6] sm:$0x1]
    %v11876 = vunpack.c.l.s4 1983009808
    %v11877 = vunpack.c.0.s8 %v11876
    %v11878 = vlaneseq
    %v11879 = vshrl.u32 %v11878, 7
    %v11880 = vsub.s32 %v11877, %v11879
    %v11881 = vrot.slane %v11766, %v11880
    %v11883 = vunpack.c.l.s4 1983009808
    %v11884 = vunpack.c.0.s8 %v11883
    %v11885 = vlaneseq
    %v11886 = vshrl.u32 %v11885, 7
    %v11887 = vsub.s32 %v11884, %v11886
    %v11888 = vrot.slane %v11768, %v11887
    %v11890 = vunpack.c.l.s4 1983009808
    %v11891 = vunpack.c.0.s8 %v11890
    %v11892 = vlaneseq
    %v11893 = vshrl.u32 %v11892, 7
    %v11894 = vsub.s32 %v11891, %v11893
    %v11895 = vrot.slane %v11776, %v11894
    %v11897 = vunpack.c.l.s4 1983009808
    %v11898 = vunpack.c.0.s8 %v11897
    %v11899 = vlaneseq
    %v11900 = vshrl.u32 %v11899, 7
    %v11901 = vsub.s32 %v11898, %v11900
    %v11902 = vrot.slane %v11778, %v11901
    %11903 = vrot.lane.b32.xlu0 %v11881, 64
    %v11904 = vpop.permute.xlu0 %11903
    %11905 = vrot.lane.b32.xlu0 %v11888, 64
    %v11906 = vpop.permute.xlu0 %11905
    %11907 = vrot.lane.b32.xlu0 %v11895, 64
    %v11908 = vpop.permute.xlu0 %11907
    %11909 = vrot.lane.b32.xlu0 %v11902, 64
    %v11910 = vpop.permute.xlu0 %11909
    %v11920 = vunpack.c.l.s4 1983009808
    %v11921 = vunpack.c.0.s8 %v11920
    %v11922 = vlaneseq
    %v11923 = vshrl.u32 %v11922, 7
    %v11924 = vsub.s32 %v11921, %v11923
    %v11925 = vrot.slane %v11770, %v11924
    %v11927 = vunpack.c.l.s4 1983009808
    %v11928 = vunpack.c.0.s8 %v11927
    %v11929 = vlaneseq
    %v11930 = vshrl.u32 %v11929, 7
    %v11931 = vsub.s32 %v11928, %v11930
    %v11932 = vrot.slane %v11772, %v11931
    %v11934 = vunpack.c.l.s4 1983009808
    %v11935 = vunpack.c.0.s8 %v11934
    %v11936 = vlaneseq
    %v11937 = vshrl.u32 %v11936, 7
    %v11938 = vsub.s32 %v11935, %v11937
    %v11939 = vrot.slane %v11780, %v11938
    %v11941 = vunpack.c.l.s4 1983009808
    %v11942 = vunpack.c.0.s8 %v11941
    %v11943 = vlaneseq
    %v11944 = vshrl.u32 %v11943, 7
    %v11945 = vsub.s32 %v11942, %v11944
    %v11946 = vrot.slane %v11782, %v11945
    %11947 = vrot.lane.b32.xlu0 %v11925, 64
    %v11948 = vpop.permute.xlu0 %11947
    %11949 = vrot.lane.b32.xlu0 %v11932, 64
    %v11950 = vpop.permute.xlu0 %11949
    %11951 = vrot.lane.b32.xlu0 %v11939, 64
    %v11952 = vpop.permute.xlu0 %11951
    %11953 = vrot.lane.b32.xlu0 %v11946, 64
    %v11954 = vpop.permute.xlu0 %11953
    %v11962 = vunpack.c.l.s4 1983009808
    %v11963 = vunpack.c.0.s8 %v11962
    %v11964 = vlaneseq
    %v11965 = vshrl.u32 %v11964, 7
    %v11966 = vsub.s32 %v11963, %v11965
    %v11967 = vrot.slane %v11774, %v11966
    %v11969 = vunpack.c.l.s4 1983009808
    %v11970 = vunpack.c.0.s8 %v11969
    %v11971 = vlaneseq
    %v11972 = vshrl.u32 %v11971, 7
    %v11973 = vsub.s32 %v11970, %v11972
    %v11974 = vrot.slane %v11784, %v11973
    %11975 = vrot.lane.b32.xlu0 %v11967, 64
    %v11976 = vpop.permute.xlu0 %11975
    %11977 = vrot.lane.b32.xlu0 %v11974, 64
    %v11978 = vpop.permute.xlu0 %11977
    %v11984 = vunpack.c.l.s4 1983009808
    %v11985 = vunpack.c.0.s8 %v11984
    %v11986 = vlaneseq
    %v11987 = vshrl.u32 %v11986, 7
    %v11988 = vsub.s32 %v11985, %v11987
    %v11989 = vrot.slane %v11786, %v11988
    %v11991 = vunpack.c.l.s4 1983009808
    %v11992 = vunpack.c.0.s8 %v11991
    %v11993 = vlaneseq
    %v11994 = vshrl.u32 %v11993, 7
    %v11995 = vsub.s32 %v11992, %v11994
    %v11996 = vrot.slane %v11788, %v11995
    %11997 = vrot.lane.b32.xlu0 %v11989, 64
    %v11998 = vpop.permute.xlu0 %11997
    %11999 = vrot.lane.b32.xlu0 %v11996, 64
    %v12000 = vpop.permute.xlu0 %11999
    %v12003 = vsel %vm10089, %v11765, %v11904
    %v12004 = vsel %vm10089, %v11767, %v11906
    %v12005 = vsel %vm10089, %v11775, %v11908
    %v12006 = vsel %vm10089, %v11777, %v11910
    %v12007 = vsel %vm10089, %v11767, %v11948
    %v12008 = vsel %vm10089, %v11769, %v11950
    %v12009 = vsel %vm10089, %v11777, %v11952
    %v12010 = vsel %vm10089, %v11779, %v11954
    %v12011 = vsel %vm10089, %v11771, %v11950
    %v12012 = vsel %vm10089, %v11773, %v11976
    %v12013 = vsel %vm10089, %v11781, %v11954
    %v12014 = vsel %vm10089, %v11783, %v11978
    %v12015 = vsel %vm10089, %v11785, %v11998
    %v12016 = vsel %vm10089, %v11787, %v12000
    %v12035 = vcombine.low %v12003, %v12007
    %v12036 = vcombine.low %v12011, %v12005
    %v12038 = vunpack.c.l.s4 1983009808
    %v12039 = vunpack.c.0.s8 %v12038
    %v12040 = vlaneseq
    %v12041 = vshrl.u32 %v12040, 7
    %v12042 = vsub.s32 %v12039, %v12041
    %v12043 = vrot.slane %v12035, %v12042
    %v12045 = vunpack.c.l.s4 1983009808
    %v12046 = vunpack.c.0.s8 %v12045
    %v12047 = vlaneseq
    %v12048 = vshrl.u32 %v12047, 7
    %v12049 = vsub.s32 %v12046, %v12048
    %v12050 = vrot.slane %v12036, %v12049
    %v12051 = vcombine.low %v12043, %v12050
    %v12053 = vunpack.c.l.s4 1983009808
    %v12054 = vunpack.c.0.s8 %v12053
    %v12055 = vlaneseq
    %v12056 = vshrl.u32 %v12055, 7
    %v12057 = vsub.s32 %v12054, %v12056
    %v12058 = vrot.slane %v11777, %v12057
    %v12059 = vcombine.low %v12004, %v12008
    %v12060 = vcombine.low %v12012, %v12006
    %v12062 = vunpack.c.l.s4 1983009808
    %v12063 = vunpack.c.0.s8 %v12062
    %v12064 = vlaneseq
    %v12065 = vshrl.u32 %v12064, 7
    %v12066 = vsub.s32 %v12063, %v12065
    %v12067 = vrot.slane %v12059, %v12066
    %v12069 = vunpack.c.l.s4 1983009808
    %v12070 = vunpack.c.0.s8 %v12069
    %v12071 = vlaneseq
    %v12072 = vshrl.u32 %v12071, 7
    %v12073 = vsub.s32 %v12070, %v12072
    %v12074 = vrot.slane %v12060, %v12073
    %v12075 = vcombine.low %v12067, %v12074
    %v12077 = vunpack.c.l.s4 1983009808
    %v12078 = vunpack.c.0.s8 %v12077
    %v12079 = vlaneseq
    %v12080 = vshrl.u32 %v12079, 7
    %v12081 = vsub.s32 %v12078, %v12080
    %v12082 = vrot.slane %v11779, %v12081
    %v12083 = vcombine.low %v12005, %v12009
    %v12084 = vcombine.low %v12013, %v12015
    %v12086 = vunpack.c.l.s4 1983009808
    %v12087 = vunpack.c.0.s8 %v12086
    %v12088 = vlaneseq
    %v12089 = vshrl.u32 %v12088, 7
    %v12090 = vsub.s32 %v12087, %v12089
    %v12091 = vrot.slane %v12083, %v12090
    %v12093 = vunpack.c.l.s4 1983009808
    %v12094 = vunpack.c.0.s8 %v12093
    %v12095 = vlaneseq
    %v12096 = vshrl.u32 %v12095, 7
    %v12097 = vsub.s32 %v12094, %v12096
    %v12098 = vrot.slane %v12084, %v12097
    %v12099 = vcombine.low %v12091, %v12098
    %v12101 = vunpack.c.l.s4 1983009808
    %v12102 = vunpack.c.0.s8 %v12101
    %v12103 = vlaneseq
    %v12104 = vshrl.u32 %v12103, 7
    %v12105 = vsub.s32 %v12102, %v12104
    %v12106 = vrot.slane %v11787, %v12105
    %v12107 = vcombine.low %v12006, %v12010
    %v12108 = vcombine.low %v12014, %v12016
    %v12110 = vunpack.c.l.s4 1983009808
    %v12111 = vunpack.c.0.s8 %v12110
    %v12112 = vlaneseq
    %v12113 = vshrl.u32 %v12112, 7
    %v12114 = vsub.s32 %v12111, %v12113
    %v12115 = vrot.slane %v12107, %v12114
    %v12117 = vunpack.c.l.s4 1983009808
    %v12118 = vunpack.c.0.s8 %v12117
    %v12119 = vlaneseq
    %v12120 = vshrl.u32 %v12119, 7
    %v12121 = vsub.s32 %v12118, %v12120
    %v12122 = vrot.slane %v12108, %v12121
    %v12123 = vcombine.low %v12115, %v12122
    %v12125 = vunpack.c.l.s4 1983009808
    %v12126 = vunpack.c.0.s8 %v12125
    %v12127 = vlaneseq
    %v12128 = vshrl.u32 %v12127, 7
    %v12129 = vsub.s32 %v12126, %v12128
    %v12130 = vrot.slane %v11789, %v12129
    %v12131 = vcombine.low %v12051, %v12075
    %v12132 = vcombine.high %v12051, %v12075
    %v12133 = vcombine.low %v12099, %v12123
    %v12134 = vcombine.high %v12099, %v12123
    %v12136 = vunpack.c.l.s4 1983009808
    %v12137 = vunpack.c.0.s8 %v12136
    %v12138 = vlaneseq
    %v12139 = vshrl.u32 %v12138, 7
    %v12140 = vsub.s32 %v12137, %v12139
    %v12141 = vrot.slane %v12131, %v12140
    %v12143 = vunpack.c.l.s4 1983009808
    %v12144 = vunpack.c.0.s8 %v12143
    %v12145 = vlaneseq
    %v12146 = vshrl.u32 %v12145, 7
    %v12147 = vsub.s32 %v12144, %v12146
    %v12148 = vrot.slane %v12132, %v12147
    %v12150 = vunpack.c.l.s4 1983009808
    %v12151 = vunpack.c.0.s8 %v12150
    %v12152 = vlaneseq
    %v12153 = vshrl.u32 %v12152, 7
    %v12154 = vsub.s32 %v12151, %v12153
    %v12155 = vrot.slane %v12133, %v12154
    %v12157 = vunpack.c.l.s4 1983009808
    %v12158 = vunpack.c.0.s8 %v12157
    %v12159 = vlaneseq
    %v12160 = vshrl.u32 %v12159, 7
    %v12161 = vsub.s32 %v12158, %v12160
    %v12162 = vrot.slane %v12134, %v12161
    %v12163 = vcombine.low %v12141, %v12155
    %v12164 = vcombine.high %v12141, %v12155
    %v12165 = vcombine.low %v12148, %v12162
    %v12166 = vcombine.high %v12148, %v12162
    %v12167 = vcombine.low %v12058, %v12082
    %v12168 = vcombine.low %v12106, %v12130
    %v12170 = vunpack.c.l.s4 1983009808
    %v12171 = vunpack.c.0.s8 %v12170
    %v12172 = vlaneseq
    %v12173 = vshrl.u32 %v12172, 7
    %v12174 = vsub.s32 %v12171, %v12173
    %v12175 = vrot.slane %v12167, %v12174
    %v12177 = vunpack.c.l.s4 1983009808
    %v12178 = vunpack.c.0.s8 %v12177
    %v12179 = vlaneseq
    %v12180 = vshrl.u32 %v12179, 7
    %v12181 = vsub.s32 %v12178, %v12180
    %v12182 = vrot.slane %v12168, %v12181
    %v12183 = vcombine.low %v12175, %v12182
    %v12189 = vpack.c.bf16 %v12163, %v12163
    %v12190 = vpack.c.bf16 %v12164, %v12164
    %v12191 = vpack.c.bf16 %v12165, %v12165
    %v12192 = vpack.c.bf16 %v12166, %v12166
    %v12193 = vpack.c.bf16 %v12183, %v12183
    %v12195 = vsel %vm10089, %v12193, 0
    %v12277 = vunpack.c.l.b16 %v11790
    %v12278 = vunpack.c.l.b16 %v11791
    %v12279 = vunpack.c.l.b16 %v11792
    %v12280 = vunpack.c.l.b16 %v11793
    %v12281 = vunpack.c.l.b16 %v11794
    %v12282 = vunpack.c.l.b16 %v11795
    %v12283 = vunpack.c.l.b16 %v11796
    %v12284 = vunpack.c.l.b16 %v11797
    %v12285 = vunpack.c.l.b16 %v11798
    %v12286 = vunpack.c.l.b16 %v11799
    %v12287 = vunpack.c.l.b16 %v11800
    %v12288 = vunpack.c.l.b16 %v11801
    %v12289 = vunpack.c.l.b16 %v11802
    %v12290 = vunpack.c.l.b16 %v11803
    %v12291 = vunpack.c.l.b16 %v11804
    %v12292 = vunpack.c.l.b16 %v11805
    %v12293 = vunpack.c.l.b16 %v11806
    %v12294 = vunpack.c.l.b16 %v11807
    %v12295 = vunpack.c.l.b16 %v11808
    %v12296 = vunpack.c.l.b16 %v11809
    %v12297 = vunpack.c.l.b16 %v11810
    %v12298 = vunpack.c.l.b16 %v11811
    %v12299 = vunpack.c.l.b16 %v11812
    %v12300 = vunpack.c.l.b16 %v11813
    %v12301 = vunpack.c.l.b16 %v11814
    %v12302 = vunpack.c.l.b16 %v11815
    %v12303 = vunpack.c.l.b16 %v11816
    %v12304 = vunpack.c.l.b16 %v11817
    %v12305 = vunpack.c.l.b16 %v11818
    %v12306 = vunpack.c.l.b16 %v11819
    %v12307 = vunpack.c.l.b16 %v11820
    %v12308 = vunpack.c.l.b16 %v11821
    %v12309 = vunpack.c.l.b16 %v11822
    %v12310 = vunpack.c.l.b16 %v11823
    %v12311 = vunpack.c.l.b16 %v11824
    %v12312 = vunpack.c.l.b16 %v11825
    %v12313 = vunpack.c.l.b16 %v11826
    %v12314 = vunpack.c.l.b16 %v11827
    %v12315 = vunpack.c.l.b16 %v11828
    %v12316 = vunpack.c.l.b16 %v11829
    %v12317 = vunpack.c.l.b16 %v11830
    %v12318 = vunpack.c.l.b16 %v11831
    %v12319 = vunpack.c.l.b16 %v11832
    %v12320 = vunpack.c.l.b16 %v11833
    %v12321 = vunpack.c.l.b16 %v11834
    %v12322 = vunpack.c.l.b16 %v11835
    %v12323 = vunpack.c.l.b16 %v11836
    %v12324 = vunpack.c.l.b16 %v11837
    %v12325 = vunpack.c.l.b16 %v11838
    %v12326 = vunpack.c.l.b16 %v11839
    %v12327 = vunpack.c.l.b16 %v11840
    %v12328 = vunpack.c.l.b16 %v11841
    %v12329 = vunpack.c.l.b16 %v11842
    %v12330 = vunpack.c.l.b16 %v11843
    %v12331 = vunpack.c.l.b16 %v11844
    %v12332 = vunpack.c.l.b16 %v11845
    %v12333 = vunpack.c.l.b16 %v11846
    %v12334 = vunpack.c.l.b16 %v11847
    %v12335 = vunpack.c.l.b16 %v11848
    %v12336 = vunpack.c.l.b16 %v11849
    %v12337 = vunpack.c.l.b16 %v11850
    %v12338 = vunpack.c.l.b16 %v11851
    %v12339 = vunpack.c.l.b16 %v11852
    %v12340 = vunpack.c.l.b16 %v11853
    %v12341 = vunpack.c.l.b16 %v11854
    %v12342 = vunpack.c.l.b16 %v11855
    %v12343 = vunpack.c.l.b16 %v11856
    %v12344 = vunpack.c.l.b16 %v11857
    %v12345 = vunpack.c.l.b16 %v11858
    %v12346 = vunpack.c.l.b16 %v11859
    %v12347 = vunpack.c.l.b16 %v11860
    %v12348 = vunpack.c.l.b16 %v11861
    %v12349 = vunpack.c.l.b16 %v11862
    %v12350 = vunpack.c.l.b16 %v11863
    %v12351 = vunpack.c.l.b16 %v11864
    %v12352 = vunpack.c.l.b16 %v11865
    %v12353 = vunpack.c.l.b16 %v11866
    %v12354 = vunpack.c.l.b16 %v11867
    %v12355 = vunpack.c.l.b16 %v11868
    %v12356 = vunpack.c.l.b16 %v11869
    %v12357 = vpack.c.b16 %v12278, %v12277
    %v12358 = vpack.c.b16 %v12280, %v12279
    %v12359 = vpack.c.b16 %v12282, %v12281
    %v12360 = vpack.c.b16 %v12284, %v12283
    %v12361 = vpack.c.b16 %v12286, %v12285
    %v12362 = vpack.c.b16 %v12288, %v12287
    %v12363 = vpack.c.b16 %v12290, %v12289
    %v12364 = vpack.c.b16 %v12292, %v12291
    %v12365 = vpack.c.b16 %v12294, %v12293
    %v12366 = vpack.c.b16 %v12296, %v12295
    %v12367 = vpack.c.b16 %v12298, %v12297
    %v12368 = vpack.c.b16 %v12300, %v12299
    %v12369 = vpack.c.b16 %v12302, %v12301
    %v12370 = vpack.c.b16 %v12304, %v12303
    %v12371 = vpack.c.b16 %v12306, %v12305
    %v12372 = vpack.c.b16 %v12308, %v12307
    %v12373 = vpack.c.b16 %v12310, %v12309
    %v12374 = vpack.c.b16 %v12312, %v12311
    %v12375 = vpack.c.b16 %v12314, %v12313
    %v12376 = vpack.c.b16 %v12316, %v12315
    %v12377 = vpack.c.b16 %v12318, %v12317
    %v12378 = vpack.c.b16 %v12320, %v12319
    %v12379 = vpack.c.b16 %v12322, %v12321
    %v12380 = vpack.c.b16 %v12324, %v12323
    %v12381 = vpack.c.b16 %v12326, %v12325
    %v12382 = vpack.c.b16 %v12328, %v12327
    %v12383 = vpack.c.b16 %v12330, %v12329
    %v12384 = vpack.c.b16 %v12332, %v12331
    %v12385 = vpack.c.b16 %v12334, %v12333
    %v12386 = vpack.c.b16 %v12336, %v12335
    %v12387 = vpack.c.b16 %v12338, %v12337
    %v12388 = vpack.c.b16 %v12340, %v12339
    %v12389 = vpack.c.b16 %v12342, %v12341
    %v12390 = vpack.c.b16 %v12344, %v12343
    %v12391 = vpack.c.b16 %v12346, %v12345
    %v12392 = vpack.c.b16 %v12348, %v12347
    %v12393 = vpack.c.b16 %v12350, %v12349
    %v12394 = vpack.c.b16 %v12352, %v12351
    %v12395 = vpack.c.b16 %v12354, %v12353
    %v12396 = vpack.c.b16 %v12356, %v12355
    %12437 = vmatprep.subr.bf16.mxu0 0
    %12438 = vmatpush1.bf16.msra.mxu0 %v12357
    %12439 = vmatprep.subr.bf16.mxu0 0
    %12440 = vmatpush1.bf16.msra.mxu0 %v12358
    %12441 = vmatprep.subr.bf16.mxu0 0
    %12442 = vmatpush1.bf16.msra.mxu0 %v12359
    %12443 = vmatprep.subr.bf16.mxu0 0
    %12444 = vmatpush1.bf16.msra.mxu0 %v12360
    %12445 = vmatprep.subr.bf16.mxu0 0
    %12446 = vmatpush1.bf16.msra.mxu0 %v12361
    %12447 = vmatprep.subr.bf16.mxu0 0
    %12448 = vmatpush1.bf16.msra.mxu0 %v12362
    %12449 = vmatprep.subr.bf16.mxu0 0
    %12450 = vmatpush1.bf16.msra.mxu0 %v12363
    %12451 = vmatprep.subr.bf16.mxu0 0
    %12452 = vmatpush1.bf16.msra.mxu0 %v12364
    %12453 = vmatprep.subr.bf16.mxu0 0
    %12454 = vmatpush1.bf16.msra.mxu0 %v12365
    %12455 = vmatprep.subr.bf16.mxu0 0
    %12456 = vmatpush1.bf16.msra.mxu0 %v12366
    %12457 = vmatprep.subr.bf16.mxu0 0
    %12458 = vmatpush1.bf16.msra.mxu0 %v12367
    %12459 = vmatprep.subr.bf16.mxu0 0
    %12460 = vmatpush1.bf16.msra.mxu0 %v12368
    %12461 = vmatprep.subr.bf16.mxu0 0
    %12462 = vmatpush1.bf16.msra.mxu0 %v12369
    %12463 = vmatprep.subr.bf16.mxu0 0
    %12464 = vmatpush1.bf16.msra.mxu0 %v12370
    %12465 = vmatprep.subr.bf16.mxu0 0
    %12466 = vmatpush1.bf16.msra.mxu0 %v12371
    %12467 = vmatprep.subr.bf16.mxu0 0
    %12468 = vmatpush1.bf16.msra.mxu0 %v12372
    %12469 = vmatprep.mubr.bf16.mxu0 %v12190
    %12470 = vmatmul.mubr.bf16.gmra.mrb[0].mxu0 %v12189
    %v12471 = vpop.f32.mrb[0].mxu0
    %v12472 = vadd.f32 0.0, %v12471
    %v12473 = vpop.f32.mrb[0].mxu0
    %v12474 = vpop.f32.mrb[0].mxu0
    %v12475 = vpop.f32.mrb[0].mxu0
    %12476 = vdwg.mxu0
    %12477 = vmatprep.subr.bf16.mxu0 0
    %12478 = vmatpush1.bf16.msra.mxu0 %v12373
    %12479 = vmatprep.subr.bf16.mxu0 0
    %12480 = vmatpush1.bf16.msra.mxu0 %v12374
    %12481 = vmatprep.subr.bf16.mxu0 0
    %12482 = vmatpush1.bf16.msra.mxu0 %v12375
    %12483 = vmatprep.subr.bf16.mxu0 0
    %12484 = vmatpush1.bf16.msra.mxu0 %v12376
    %12485 = vmatprep.subr.bf16.mxu0 0
    %12486 = vmatpush1.bf16.msra.mxu0 %v12377
    %12487 = vmatprep.subr.bf16.mxu0 0
    %12488 = vmatpush1.bf16.msra.mxu0 %v12378
    %12489 = vmatprep.subr.bf16.mxu0 0
    %12490 = vmatpush1.bf16.msra.mxu0 %v12379
    %12491 = vmatprep.subr.bf16.mxu0 0
    %12492 = vmatpush1.bf16.msra.mxu0 %v12380
    %12493 = vmatprep.subr.bf16.mxu0 0
    %12494 = vmatpush1.bf16.msra.mxu0 %v12381
    %12495 = vmatprep.subr.bf16.mxu0 0
    %12496 = vmatpush1.bf16.msra.mxu0 %v12382
    %12497 = vmatprep.subr.bf16.mxu0 0
    %12498 = vmatpush1.bf16.msra.mxu0 %v12383
    %12499 = vmatprep.subr.bf16.mxu0 0
    %12500 = vmatpush1.bf16.msra.mxu0 %v12384
    %12501 = vmatprep.subr.bf16.mxu0 0
    %12502 = vmatpush1.bf16.msra.mxu0 %v12385
    %12503 = vmatprep.subr.bf16.mxu0 0
    %12504 = vmatpush1.bf16.msra.mxu0 %v12386
    %12505 = vmatprep.subr.bf16.mxu0 0
    %12506 = vmatpush1.bf16.msra.mxu0 %v12387
    %12507 = vmatprep.subr.bf16.mxu0 0
    %12508 = vmatpush1.bf16.msra.mxu0 %v12388
    %12509 = vmatprep.mubr.bf16.mxu0 %v12192
    %12510 = vmatmul.mubr.bf16.gmra.mrb[0].mxu0 %v12191
    %v12511 = vpop.f32.mrb[0].mxu0
    %v12512 = vadd.f32 %v12472, %v12511
    %v12513 = vpop.f32.mrb[0].mxu0
    %v12514 = vpop.f32.mrb[0].mxu0
    %v12515 = vpop.f32.mrb[0].mxu0
    %12516 = vdwg.mxu0
    %12517 = vmatprep.subr.bf16.mxu0 0
    %12518 = vmatpush1.bf16.msra.mxu0 %v12389
    %12519 = vmatprep.subr.bf16.mxu0 0
    %12520 = vmatpush1.bf16.msra.mxu0 %v12390
    %12521 = vmatprep.subr.bf16.mxu0 0
    %12522 = vmatpush1.bf16.msra.mxu0 %v12391
    %12523 = vmatprep.subr.bf16.mxu0 0
    %12524 = vmatpush1.bf16.msra.mxu0 %v12392
    %12525 = vmatprep.subr.bf16.mxu0 0
    %12526 = vmatpush1.bf16.msra.mxu0 %v12393
    %12527 = vmatprep.subr.bf16.mxu0 0
    %12528 = vmatpush1.bf16.msra.mxu0 %v12394
    %12529 = vmatprep.subr.bf16.mxu0 0
    %12530 = vmatpush1.bf16.msra.mxu0 %v12395
    %12531 = vmatprep.subr.bf16.mxu0 0
    %12532 = vmatpush1.bf16.msra.mxu0 %v12396
    %12533 = vmatprep.subr.bf16.mxu0 0
    %12534 = vmatpush1.bf16.msra.mxu0 0
    %12535 = vmatprep.subr.bf16.mxu0 0
    %12536 = vmatpush1.bf16.msra.mxu0 0
    %12537 = vmatprep.subr.bf16.mxu0 0
    %12538 = vmatpush1.bf16.msra.mxu0 0
    %12539 = vmatprep.subr.bf16.mxu0 0
    %12540 = vmatpush1.bf16.msra.mxu0 0
    %12541 = vmatprep.subr.bf16.mxu0 0
    %12542 = vmatpush1.bf16.msra.mxu0 0
    %12543 = vmatprep.subr.bf16.mxu0 0
    %12544 = vmatpush1.bf16.msra.mxu0 0
    %12545 = vmatprep.subr.bf16.mxu0 0
    %12546 = vmatpush1.bf16.msra.mxu0 0
    %12547 = vmatprep.subr.bf16.mxu0 0
    %12548 = vmatpush1.bf16.msra.mxu0 0
    %12549 = vmatprep.mubr.bf16.mxu0 0
    %12550 = vmatmul.mubr.bf16.gmra.mrb[0].mxu0 %v12195
    %v12551 = vpop.f32.mrb[0].mxu0
    %v12552 = vadd.f32 %v12512, %v12551
    %v12553 = vpop.f32.mrb[0].mxu0
    %v12554 = vpop.f32.mrb[0].mxu0
    %v12555 = vpop.f32.mrb[0].mxu0
    %12556 = vdwg.mxu0
    %v12558 = vcombine.high %v12552, %v12552
    %v12560 = vunpack.c.l.s4 1983009808
    %v12561 = vunpack.c.0.s8 %v12560
    %v12562 = vlaneseq
    %v12563 = vshrl.u32 %v12562, 7
    %v12564 = vsub.s32 %v12561, %v12563
    %v12565 = vrot.slane %v12552, %v12564
    %v12567 = vunpack.c.l.s4 1983009808
    %v12568 = vunpack.c.0.s8 %v12567
    %v12569 = vlaneseq
    %v12570 = vshrl.u32 %v12569, 7
    %v12571 = vsub.s32 %v12568, %v12570
    %v12572 = vrot.slane %v12558, %v12571
    %v12573 = vcombine.high %v12565, %v12565
    %v12574 = vcombine.high %v12572, %v12572
    %v12580 = vlaneseq
    %v12581 = vshrl.u32 %v12580, 7
    %v12582 = vsub.s32 0, %v12581
    %v12583 = vrot.slane %v11870, %v12582
    %v12585 = vadd.f32 %v12565, %v12583
    %v12586 = vadd.f32 %v12573, %v12583
    %v12587 = vadd.f32 %v12572, %v12583
    %v12588 = vadd.f32 %v12574, %v12583
    %v12589 = vmax.f32 %v12585, 0.0
    %v12590 = vmax.f32 %v12586, 0.0
    %v12591 = vmax.f32 %v12587, 0.0
    %v12592 = vmax.f32 %v12588, 0.0
    %v12593 = vld [vmem:[%s7] sm:$0xff]
    %v12594 = vld [vmem:[%s7 + $0x8] sm:$0xff]
    %v12595 = vld [vmem:[%s7 + $0x10] sm:$0xff]
    %v12596 = vld [vmem:[%s7 + $0x18] sm:$0xff]
    %v12597 = vld [vmem:[%s7 + $0x20] sm:$0xff]
    %v12598 = vld [vmem:[%s7 + $0x28] sm:$0xff]
    %v12599 = vld [vmem:[%s7 + $0x30] sm:$0xff]
    %v12600 = vld [vmem:[%s7 + $0x38] sm:$0xff]
    %v12601 = vld [vmem:[%s7 + $0x40] sm:$0xff]
    %v12602 = vld [vmem:[%s7 + $0x48] sm:$0xff]
    %v12603 = vld [vmem:[%s7 + $0x50] sm:$0xff]
    %v12604 = vld [vmem:[%s7 + $0x58] sm:$0xff]
    %v12605 = vld [vmem:[%s7 + $0x60] sm:$0xff]
    %v12606 = vld [vmem:[%s7 + $0x68] sm:$0xff]
    %v12607 = vld [vmem:[%s7 + $0x70] sm:$0xff]
    %v12608 = vld [vmem:[%s7 + $0x78] sm:$0xff]
    %v12609 = vld [vmem:[%s7 + $0x80] sm:$0xff]
    %v12610 = vld [vmem:[%s7 + $0x88] sm:$0xff]
    %v12611 = vld [vmem:[%s7 + $0x90] sm:$0xff]
    %v12612 = vld [vmem:[%s7 + $0x98] sm:$0xff]
    %v12613 = vld [vmem:[%s7 + $0xa0] sm:$0xff]
    %v12614 = vld [vmem:[%s7 + $0xa8] sm:$0xff]
    %v12615 = vld [vmem:[%s7 + $0xb0] sm:$0xff]
    %v12616 = vld [vmem:[%s7 + $0xb8] sm:$0xff]
    %v12617 = vld [vmem:[%s7 + $0xc0] sm:$0xff]
    %v12618 = vld [vmem:[%s7 + $0xc8] sm:$0xff]
    %v12619 = vld [vmem:[%s7 + $0xd0] sm:$0xff]
    %v12620 = vld [vmem:[%s7 + $0xd8] sm:$0xff]
    %v12621 = vld [vmem:[%s7 + $0xe0] sm:$0xff]
    %v12622 = vld [vmem:[%s7 + $0xe8] sm:$0xff]
    %v12623 = vld [vmem:[%s7 + $0xf0] sm:$0xff]
    %v12624 = vld [vmem:[%s7 + $0xf8] sm:$0xff]
    %v12625 = vld [vmem:[%s7 + $0x100] sm:$0xff]
    %v12626 = vld [vmem:[%s7 + $0x108] sm:$0xff]
    %v12627 = vld [vmem:[%s7 + $0x110] sm:$0xff]
    %v12628 = vld [vmem:[%s7 + $0x118] sm:$0xff]
    %v12629 = vld [vmem:[%s7 + $0x120] sm:$0xff]
    %v12630 = vld [vmem:[%s7 + $0x128] sm:$0xff]
    %v12631 = vld [vmem:[%s7 + $0x130] sm:$0xff]
    %v12632 = vld [vmem:[%s7 + $0x138] sm:$0xff]
    %v12633 = vld [vmem:[%s7 + $0x140] sm:$0xff]
    %v12634 = vld [vmem:[%s7 + $0x148] sm:$0xff]
    %v12635 = vld [vmem:[%s7 + $0x150] sm:$0xff]
    %v12636 = vld [vmem:[%s7 + $0x158] sm:$0xff]
    %v12637 = vld [vmem:[%s7 + $0x160] sm:$0xff]
    %v12638 = vld [vmem:[%s7 + $0x168] sm:$0xff]
    %v12639 = vld [vmem:[%s7 + $0x170] sm:$0xff]
    %v12640 = vld [vmem:[%s7 + $0x178] sm:$0xff]
    %v12641 = vld [vmem:[%s7 + $0x180] sm:$0xff]
    %v12642 = vld [vmem:[%s7 + $0x188] sm:$0xff]
    %v12643 = vld [vmem:[%s7 + $0x190] sm:$0xff]
    %v12644 = vld [vmem:[%s7 + $0x198] sm:$0xff]
    %v12645 = vld [vmem:[%s7 + $0x1a0] sm:$0xff]
    %v12646 = vld [vmem:[%s7 + $0x1a8] sm:$0xff]
    %v12647 = vld [vmem:[%s7 + $0x1b0] sm:$0xff]
    %v12648 = vld [vmem:[%s7 + $0x1b8] sm:$0xff]
    %v12649 = vld [vmem:[%s7 + $0x1c0] sm:$0xff]
    %v12650 = vld [vmem:[%s7 + $0x1c8] sm:$0xff]
    %v12651 = vld [vmem:[%s7 + $0x1d0] sm:$0xff]
    %v12652 = vld [vmem:[%s7 + $0x1d8] sm:$0xff]
    %v12653 = vld [vmem:[%s7 + $0x1e0] sm:$0xff]
    %v12654 = vld [vmem:[%s7 + $0x1e8] sm:$0xff]
    %v12655 = vld [vmem:[%s7 + $0x1f0] sm:$0xff]
    %v12656 = vld [vmem:[%s7 + $0x1f8] sm:$0xff]
    %v12657 = vld [vmem:[%s8] sm:$0x3]
    %v12658 = vpack.c.bf16 %v12589, %v12589
    %v12659 = vpack.c.bf16 %v12590, %v12590
    %v12660 = vpack.c.bf16 %v12591, %v12591
    %v12661 = vpack.c.bf16 %v12592, %v12592
    %vm12662 = vcmask 1040384
    %v12664 = vsel %vm12662, %v12658, 0
    %v12667 = vsel %vm12662, %v12659, 0
    %v12670 = vsel %vm12662, %v12660, 0
    %v12673 = vsel %vm12662, %v12661, 0
    %v12739 = vunpack.c.l.b16 %v12593
    %v12740 = vunpack.c.h.b16 %v12593
    %v12741 = vunpack.c.l.b16 %v12594
    %v12742 = vunpack.c.h.b16 %v12594
    %v12743 = vunpack.c.l.b16 %v12595
    %v12744 = vunpack.c.h.b16 %v12595
    %v12745 = vunpack.c.l.b16 %v12596
    %v12746 = vunpack.c.h.b16 %v12596
    %v12747 = vunpack.c.l.b16 %v12597
    %v12748 = vunpack.c.h.b16 %v12597
    %v12749 = vunpack.c.l.b16 %v12598
    %v12750 = vunpack.c.h.b16 %v12598
    %v12751 = vunpack.c.l.b16 %v12599
    %v12752 = vunpack.c.h.b16 %v12599
    %v12753 = vunpack.c.l.b16 %v12600
    %v12754 = vunpack.c.h.b16 %v12600
    %v12755 = vunpack.c.l.b16 %v12601
    %v12756 = vunpack.c.h.b16 %v12601
    %v12757 = vunpack.c.l.b16 %v12602
    %v12758 = vunpack.c.h.b16 %v12602
    %v12759 = vunpack.c.l.b16 %v12603
    %v12760 = vunpack.c.h.b16 %v12603
    %v12761 = vunpack.c.l.b16 %v12604
    %v12762 = vunpack.c.h.b16 %v12604
    %v12763 = vunpack.c.l.b16 %v12605
    %v12764 = vunpack.c.h.b16 %v12605
    %v12765 = vunpack.c.l.b16 %v12606
    %v12766 = vunpack.c.h.b16 %v12606
    %v12767 = vunpack.c.l.b16 %v12607
    %v12768 = vunpack.c.h.b16 %v12607
    %v12769 = vunpack.c.l.b16 %v12608
    %v12770 = vunpack.c.h.b16 %v12608
    %v12771 = vunpack.c.l.b16 %v12609
    %v12772 = vunpack.c.h.b16 %v12609
    %v12773 = vunpack.c.l.b16 %v12610
    %v12774 = vunpack.c.h.b16 %v12610
    %v12775 = vunpack.c.l.b16 %v12611
    %v12776 = vunpack.c.h.b16 %v12611
    %v12777 = vunpack.c.l.b16 %v12612
    %v12778 = vunpack.c.h.b16 %v12612
    %v12779 = vunpack.c.l.b16 %v12613
    %v12780 = vunpack.c.h.b16 %v12613
    %v12781 = vunpack.c.l.b16 %v12614
    %v12782 = vunpack.c.h.b16 %v12614
    %v12783 = vunpack.c.l.b16 %v12615
    %v12784 = vunpack.c.h.b16 %v12615
    %v12785 = vunpack.c.l.b16 %v12616
    %v12786 = vunpack.c.h.b16 %v12616
    %v12787 = vunpack.c.l.b16 %v12617
    %v12788 = vunpack.c.h.b16 %v12617
    %v12789 = vunpack.c.l.b16 %v12618
    %v12790 = vunpack.c.h.b16 %v12618
    %v12791 = vunpack.c.l.b16 %v12619
    %v12792 = vunpack.c.h.b16 %v12619
    %v12793 = vunpack.c.l.b16 %v12620
    %v12794 = vunpack.c.h.b16 %v12620
    %v12795 = vunpack.c.l.b16 %v12621
    %v12796 = vunpack.c.h.b16 %v12621
    %v12797 = vunpack.c.l.b16 %v12622
    %v12798 = vunpack.c.h.b16 %v12622
    %v12799 = vunpack.c.l.b16 %v12623
    %v12800 = vunpack.c.h.b16 %v12623
    %v12801 = vunpack.c.l.b16 %v12624
    %v12802 = vunpack.c.h.b16 %v12624
    %v12803 = vunpack.c.l.b16 %v12625
    %v12804 = vunpack.c.h.b16 %v12625
    %v12805 = vunpack.c.l.b16 %v12626
    %v12806 = vunpack.c.h.b16 %v12626
    %v12807 = vunpack.c.l.b16 %v12627
    %v12808 = vunpack.c.h.b16 %v12627
    %v12809 = vunpack.c.l.b16 %v12628
    %v12810 = vunpack.c.h.b16 %v12628
    %v12811 = vunpack.c.l.b16 %v12629
    %v12812 = vunpack.c.h.b16 %v12629
    %v12813 = vunpack.c.l.b16 %v12630
    %v12814 = vunpack.c.h.b16 %v12630
    %v12815 = vunpack.c.l.b16 %v12631
    %v12816 = vunpack.c.h.b16 %v12631
    %v12817 = vunpack.c.l.b16 %v12632
    %v12818 = vunpack.c.h.b16 %v12632
    %v12819 = vunpack.c.l.b16 %v12633
    %v12820 = vunpack.c.h.b16 %v12633
    %v12821 = vunpack.c.l.b16 %v12634
    %v12822 = vunpack.c.h.b16 %v12634
    %v12823 = vunpack.c.l.b16 %v12635
    %v12824 = vunpack.c.h.b16 %v12635
    %v12825 = vunpack.c.l.b16 %v12636
    %v12826 = vunpack.c.h.b16 %v12636
    %v12827 = vunpack.c.l.b16 %v12637
    %v12828 = vunpack.c.h.b16 %v12637
    %v12829 = vunpack.c.l.b16 %v12638
    %v12830 = vunpack.c.h.b16 %v12638
    %v12831 = vunpack.c.l.b16 %v12639
    %v12832 = vunpack.c.h.b16 %v12639
    %v12833 = vunpack.c.l.b16 %v12640
    %v12834 = vunpack.c.h.b16 %v12640
    %v12835 = vunpack.c.l.b16 %v12641
    %v12836 = vunpack.c.h.b16 %v12641
    %v12837 = vunpack.c.l.b16 %v12642
    %v12838 = vunpack.c.h.b16 %v12642
    %v12839 = vunpack.c.l.b16 %v12643
    %v12840 = vunpack.c.h.b16 %v12643
    %v12841 = vunpack.c.l.b16 %v12644
    %v12842 = vunpack.c.h.b16 %v12644
    %v12843 = vunpack.c.l.b16 %v12645
    %v12844 = vunpack.c.h.b16 %v12645
    %v12845 = vunpack.c.l.b16 %v12646
    %v12846 = vunpack.c.h.b16 %v12646
    %v12847 = vunpack.c.l.b16 %v12647
    %v12848 = vunpack.c.h.b16 %v12647
    %v12849 = vunpack.c.l.b16 %v12648
    %v12850 = vunpack.c.h.b16 %v12648
    %v12851 = vunpack.c.l.b16 %v12649
    %v12852 = vunpack.c.h.b16 %v12649
    %v12853 = vunpack.c.l.b16 %v12650
    %v12854 = vunpack.c.h.b16 %v12650
    %v12855 = vunpack.c.l.b16 %v12651
    %v12856 = vunpack.c.h.b16 %v12651
    %v12857 = vunpack.c.l.b16 %v12652
    %v12858 = vunpack.c.h.b16 %v12652
    %v12859 = vunpack.c.l.b16 %v12653
    %v12860 = vunpack.c.h.b16 %v12653
    %v12861 = vunpack.c.l.b16 %v12654
    %v12862 = vunpack.c.h.b16 %v12654
    %v12863 = vunpack.c.l.b16 %v12655
    %v12864 = vunpack.c.h.b16 %v12655
    %v12865 = vunpack.c.l.b16 %v12656
    %v12866 = vunpack.c.h.b16 %v12656
    %v12867 = vpack.c.b16 %v12741, %v12739
    %v12868 = vpack.c.b16 %v12742, %v12740
    %v12869 = vpack.c.b16 %v12745, %v12743
    %v12870 = vpack.c.b16 %v12746, %v12744
    %v12871 = vpack.c.b16 %v12749, %v12747
    %v12872 = vpack.c.b16 %v12750, %v12748
    %v12873 = vpack.c.b16 %v12753, %v12751
    %v12874 = vpack.c.b16 %v12754, %v12752
    %v12875 = vpack.c.b16 %v12757, %v12755
    %v12876 = vpack.c.b16 %v12758, %v12756
    %v12877 = vpack.c.b16 %v12761, %v12759
    %v12878 = vpack.c.b16 %v12762, %v12760
    %v12879 = vpack.c.b16 %v12765, %v12763
    %v12880 = vpack.c.b16 %v12766, %v12764
    %v12881 = vpack.c.b16 %v12769, %v12767
    %v12882 = vpack.c.b16 %v12770, %v12768
    %v12883 = vpack.c.b16 %v12773, %v12771
    %v12884 = vpack.c.b16 %v12774, %v12772
    %v12885 = vpack.c.b16 %v12777, %v12775
    %v12886 = vpack.c.b16 %v12778, %v12776
    %v12887 = vpack.c.b16 %v12781, %v12779
    %v12888 = vpack.c.b16 %v12782, %v12780
    %v12889 = vpack.c.b16 %v12785, %v12783
    %v12890 = vpack.c.b16 %v12786, %v12784
    %v12891 = vpack.c.b16 %v12789, %v12787
    %v12892 = vpack.c.b16 %v12790, %v12788
    %v12893 = vpack.c.b16 %v12793, %v12791
    %v12894 = vpack.c.b16 %v12794, %v12792
    %v12895 = vpack.c.b16 %v12797, %v12795
    %v12896 = vpack.c.b16 %v12798, %v12796
    %v12897 = vpack.c.b16 %v12801, %v12799
    %v12898 = vpack.c.b16 %v12802, %v12800
    %v12899 = vpack.c.b16 %v12805, %v12803
    %v12900 = vpack.c.b16 %v12806, %v12804
    %v12901 = vpack.c.b16 %v12809, %v12807
    %v12902 = vpack.c.b16 %v12810, %v12808
    %v12903 = vpack.c.b16 %v12813, %v12811
    %v12904 = vpack.c.b16 %v12814, %v12812
    %v12905 = vpack.c.b16 %v12817, %v12815
    %v12906 = vpack.c.b16 %v12818, %v12816
    %v12907 = vpack.c.b16 %v12821, %v12819
    %v12908 = vpack.c.b16 %v12822, %v12820
    %v12909 = vpack.c.b16 %v12825, %v12823
    %v12910 = vpack.c.b16 %v12826, %v12824
    %v12911 = vpack.c.b16 %v12829, %v12827
    %v12912 = vpack.c.b16 %v12830, %v12828
    %v12913 = vpack.c.b16 %v12833, %v12831
    %v12914 = vpack.c.b16 %v12834, %v12832
    %v12915 = vpack.c.b16 %v12837, %v12835
    %v12916 = vpack.c.b16 %v12838, %v12836
    %v12917 = vpack.c.b16 %v12841, %v12839
    %v12918 = vpack.c.b16 %v12842, %v12840
    %v12919 = vpack.c.b16 %v12845, %v12843
    %v12920 = vpack.c.b16 %v12846, %v12844
    %v12921 = vpack.c.b16 %v12849, %v12847
    %v12922 = vpack.c.b16 %v12850, %v12848
    %v12923 = vpack.c.b16 %v12853, %v12851
    %v12924 = vpack.c.b16 %v12854, %v12852
    %v12925 = vpack.c.b16 %v12857, %v12855
    %v12926 = vpack.c.b16 %v12858, %v12856
    %v12927 = vpack.c.b16 %v12861, %v12859
    %v12928 = vpack.c.b16 %v12862, %v12860
    %v12929 = vpack.c.b16 %v12865, %v12863
    %v12930 = vpack.c.b16 %v12866, %v12864
    %12995 = vmatprep.subr.bf16.mxu0 %v12868
    %12996 = vmatpush1.bf16.msra.mxu0 %v12867
    %12997 = vmatprep.subr.bf16.mxu0 %v12870
    %12998 = vmatpush1.bf16.msra.mxu0 %v12869
    %12999 = vmatprep.subr.bf16.mxu0 %v12872
    %13000 = vmatpush1.bf16.msra.mxu0 %v12871
    %13001 = vmatprep.subr.bf16.mxu0 %v12874
    %13002 = vmatpush1.bf16.msra.mxu0 %v12873
    %13003 = vmatprep.subr.bf16.mxu0 %v12876
    %13004 = vmatpush1.bf16.msra.mxu0 %v12875
    %13005 = vmatprep.subr.bf16.mxu0 %v12878
    %13006 = vmatpush1.bf16.msra.mxu0 %v12877
    %13007 = vmatprep.subr.bf16.mxu0 %v12880
    %13008 = vmatpush1.bf16.msra.mxu0 %v12879
    %13009 = vmatprep.subr.bf16.mxu0 %v12882
    %13010 = vmatpush1.bf16.msra.mxu0 %v12881
    %13011 = vmatprep.subr.bf16.mxu0 %v12884
    %13012 = vmatpush1.bf16.msra.mxu0 %v12883
    %13013 = vmatprep.subr.bf16.mxu0 %v12886
    %13014 = vmatpush1.bf16.msra.mxu0 %v12885
    %13015 = vmatprep.subr.bf16.mxu0 %v12888
    %13016 = vmatpush1.bf16.msra.mxu0 %v12887
    %13017 = vmatprep.subr.bf16.mxu0 %v12890
    %13018 = vmatpush1.bf16.msra.mxu0 %v12889
    %13019 = vmatprep.subr.bf16.mxu0 %v12892
    %13020 = vmatpush1.bf16.msra.mxu0 %v12891
    %13021 = vmatprep.subr.bf16.mxu0 %v12894
    %13022 = vmatpush1.bf16.msra.mxu0 %v12893
    %13023 = vmatprep.subr.bf16.mxu0 %v12896
    %13024 = vmatpush1.bf16.msra.mxu0 %v12895
    %13025 = vmatprep.subr.bf16.mxu0 %v12898
    %13026 = vmatpush1.bf16.msra.mxu0 %v12897
    %13027 = vmatprep.mubr.bf16.mxu0 %v12667
    %13028 = vmatmul.mubr.bf16.gmra.mrb[0].mxu0 %v12664
    %v13029 = vpop.f32.mrb[0].mxu0
    %v13030 = vadd.f32 0.0, %v13029
    %v13031 = vpop.f32.mrb[0].mxu0
    %v13032 = vadd.f32 0.0, %v13031
    %v13033 = vpop.f32.mrb[0].mxu0
    %v13034 = vpop.f32.mrb[0].mxu0
    %13035 = vdwg.mxu0
    %13036 = vmatprep.subr.bf16.mxu0 %v12900
    %13037 = vmatpush1.bf16.msra.mxu0 %v12899
    %13038 = vmatprep.subr.bf16.mxu0 %v12902
    %13039 = vmatpush1.bf16.msra.mxu0 %v12901
    %13040 = vmatprep.subr.bf16.mxu0 %v12904
    %13041 = vmatpush1.bf16.msra.mxu0 %v12903
    %13042 = vmatprep.subr.bf16.mxu0 %v12906
    %13043 = vmatpush1.bf16.msra.mxu0 %v12905
    %13044 = vmatprep.subr.bf16.mxu0 %v12908
    %13045 = vmatpush1.bf16.msra.mxu0 %v12907
    %13046 = vmatprep.subr.bf16.mxu0 %v12910
    %13047 = vmatpush1.bf16.msra.mxu0 %v12909
    %13048 = vmatprep.subr.bf16.mxu0 %v12912
    %13049 = vmatpush1.bf16.msra.mxu0 %v12911
    %13050 = vmatprep.subr.bf16.mxu0 %v12914
    %13051 = vmatpush1.bf16.msra.mxu0 %v12913
    %13052 = vmatprep.subr.bf16.mxu0 %v12916
    %13053 = vmatpush1.bf16.msra.mxu0 %v12915
    %13054 = vmatprep.subr.bf16.mxu0 %v12918
    %13055 = vmatpush1.bf16.msra.mxu0 %v12917
    %13056 = vmatprep.subr.bf16.mxu0 %v12920
    %13057 = vmatpush1.bf16.msra.mxu0 %v12919
    %13058 = vmatprep.subr.bf16.mxu0 %v12922
    %13059 = vmatpush1.bf16.msra.mxu0 %v12921
    %13060 = vmatprep.subr.bf16.mxu0 %v12924
    %13061 = vmatpush1.bf16.msra.mxu0 %v12923
    %13062 = vmatprep.subr.bf16.mxu0 %v12926
    %13063 = vmatpush1.bf16.msra.mxu0 %v12925
    %13064 = vmatprep.subr.bf16.mxu0 %v12928
    %13065 = vmatpush1.bf16.msra.mxu0 %v12927
    %13066 = vmatprep.subr.bf16.mxu0 %v12930
    %13067 = vmatpush1.bf16.msra.mxu0 %v12929
    %13068 = vmatprep.mubr.bf16.mxu0 %v12673
    %13069 = vmatmul.mubr.bf16.gmra.mrb[0].mxu0 %v12670
    %v13070 = vpop.f32.mrb[0].mxu0
    %v13071 = vadd.f32 %v13030, %v13070
    %v13072 = vpop.f32.mrb[0].mxu0
    %v13073 = vadd.f32 %v13032, %v13072
    %v13074 = vpop.f32.mrb[0].mxu0
    %v13075 = vpop.f32.mrb[0].mxu0
    %13076 = vdwg.mxu0
    %v13078 = vlaneseq
    %v13079 = vshrl.u32 %v13078, 7
    %v13080 = vsub.s32 0, %v13079
    %v13081 = vrot.slane %v12657, %v13080
    %v13082 = vlaneseq
    %v13083 = vshrl.u32 %v13082, 7
    %v13084 = vsub.s32 1, %v13083
    %v13085 = vrot.slane %v12657, %v13084
    %v13088 = vadd.f32 %v13071, %v13081
    %v13089 = vadd.f32 %v13073, %v13085
    %v13090 = vmax.f32 %v13088, 0.0
    %v13091 = vmax.f32 %v13089, 0.0
    %v13092 = vld [vmem:[%s9] sm:$0xf]
    %v13093 = vld [vmem:[%s9 + $0x4] sm:$0xf]
    %v13094 = vld [vmem:[%s9 + $0x8] sm:$0xf]
    %v13095 = vld [vmem:[%s9 + $0xc] sm:$0xf]
    %v13096 = vld [vmem:[%s9 + $0x10] sm:$0xf]
    %v13097 = vld [vmem:[%s9 + $0x14] sm:$0xf]
    %v13098 = vld [vmem:[%s9 + $0x18] sm:$0xf]
    %v13099 = vld [vmem:[%s9 + $0x1c] sm:$0xf]
    %v13100 = vld [vmem:[%s9 + $0x20] sm:$0xf]
    %v13101 = vld [vmem:[%s9 + $0x24] sm:$0xf]
    %v13102 = vld [vmem:[%s9 + $0x28] sm:$0xf]
    %v13103 = vld [vmem:[%s9 + $0x2c] sm:$0xf]
    %v13104 = vld [vmem:[%s9 + $0x30] sm:$0xf]
    %v13105 = vld [vmem:[%s9 + $0x34] sm:$0xf]
    %v13106 = vld [vmem:[%s9 + $0x38] sm:$0xf]
    %v13107 = vld [vmem:[%s9 + $0x3c] sm:$0xf]
    %v13108 = vld [vmem:[%s9 + $0x40] sm:$0xf]
    %v13109 = vld [vmem:[%s9 + $0x44] sm:$0xf]
    %v13110 = vld [vmem:[%s9 + $0x48] sm:$0xf]
    %v13111 = vld [vmem:[%s9 + $0x4c] sm:$0xf]
    %v13112 = vld [vmem:[%s9 + $0x50] sm:$0xf]
    %v13113 = vld [vmem:[%s9 + $0x54] sm:$0xf]
    %v13114 = vld [vmem:[%s9 + $0x58] sm:$0xf]
    %v13115 = vld [vmem:[%s9 + $0x5c] sm:$0xf]
    %v13116 = vld [vmem:[%s9 + $0x60] sm:$0xf]
    %v13117 = vld [vmem:[%s9 + $0x64] sm:$0xf]
    %v13118 = vld [vmem:[%s9 + $0x68] sm:$0xf]
    %v13119 = vld [vmem:[%s9 + $0x6c] sm:$0xf]
    %v13120 = vld [vmem:[%s9 + $0x70] sm:$0xf]
    %v13121 = vld [vmem:[%s9 + $0x74] sm:$0xf]
    %v13122 = vld [vmem:[%s9 + $0x78] sm:$0xf]
    %v13123 = vld [vmem:[%s9 + $0x7c] sm:$0xf]
    %v13124 = vld [vmem:[%s10] sm:$0x1]
    %v13125 = vpack.c.bf16 %v13090, %v13090
    %v13126 = vpack.c.bf16 %v13091, %v13091
    %v13128 = vsel %vm12662, %v13125, 0
    %v13131 = vsel %vm12662, %v13126, 0
    %v13165 = vunpack.c.l.b16 %v13092
    %v13166 = vunpack.c.l.b16 %v13093
    %v13167 = vunpack.c.l.b16 %v13094
    %v13168 = vunpack.c.l.b16 %v13095
    %v13169 = vunpack.c.l.b16 %v13096
    %v13170 = vunpack.c.l.b16 %v13097
    %v13171 = vunpack.c.l.b16 %v13098
    %v13172 = vunpack.c.l.b16 %v13099
    %v13173 = vunpack.c.l.b16 %v13100
    %v13174 = vunpack.c.l.b16 %v13101
    %v13175 = vunpack.c.l.b16 %v13102
    %v13176 = vunpack.c.l.b16 %v13103
    %v13177 = vunpack.c.l.b16 %v13104
    %v13178 = vunpack.c.l.b16 %v13105
    %v13179 = vunpack.c.l.b16 %v13106
    %v13180 = vunpack.c.l.b16 %v13107
    %v13181 = vunpack.c.l.b16 %v13108
    %v13182 = vunpack.c.l.b16 %v13109
    %v13183 = vunpack.c.l.b16 %v13110
    %v13184 = vunpack.c.l.b16 %v13111
    %v13185 = vunpack.c.l.b16 %v13112
    %v13186 = vunpack.c.l.b16 %v13113
    %v13187 = vunpack.c.l.b16 %v13114
    %v13188 = vunpack.c.l.b16 %v13115
    %v13189 = vunpack.c.l.b16 %v13116
    %v13190 = vunpack.c.l.b16 %v13117
    %v13191 = vunpack.c.l.b16 %v13118
    %v13192 = vunpack.c.l.b16 %v13119
    %v13193 = vunpack.c.l.b16 %v13120
    %v13194 = vunpack.c.l.b16 %v13121
    %v13195 = vunpack.c.l.b16 %v13122
    %v13196 = vunpack.c.l.b16 %v13123
    %v13197 = vpack.c.b16 %v13166, %v13165
    %v13198 = vpack.c.b16 %v13168, %v13167
    %v13199 = vpack.c.b16 %v13170, %v13169
    %v13200 = vpack.c.b16 %v13172, %v13171
    %v13201 = vpack.c.b16 %v13174, %v13173
    %v13202 = vpack.c.b16 %v13176, %v13175
    %v13203 = vpack.c.b16 %v13178, %v13177
    %v13204 = vpack.c.b16 %v13180, %v13179
    %v13205 = vpack.c.b16 %v13182, %v13181
    %v13206 = vpack.c.b16 %v13184, %v13183
    %v13207 = vpack.c.b16 %v13186, %v13185
    %v13208 = vpack.c.b16 %v13188, %v13187
    %v13209 = vpack.c.b16 %v13190, %v13189
    %v13210 = vpack.c.b16 %v13192, %v13191
    %v13211 = vpack.c.b16 %v13194, %v13193
    %v13212 = vpack.c.b16 %v13196, %v13195
    %13229 = vmatprep.subr.bf16.mxu0 0
    %13230 = vmatpush1.bf16.msra.mxu0 %v13197
    %13231 = vmatprep.subr.bf16.mxu0 0
    %13232 = vmatpush1.bf16.msra.mxu0 %v13198
    %13233 = vmatprep.subr.bf16.mxu0 0
    %13234 = vmatpush1.bf16.msra.mxu0 %v13199
    %13235 = vmatprep.subr.bf16.mxu0 0
    %13236 = vmatpush1.bf16.msra.mxu0 %v13200
    %13237 = vmatprep.subr.bf16.mxu0 0
    %13238 = vmatpush1.bf16.msra.mxu0 %v13201
    %13239 = vmatprep.subr.bf16.mxu0 0
    %13240 = vmatpush1.bf16.msra.mxu0 %v13202
    %13241 = vmatprep.subr.bf16.mxu0 0
    %13242 = vmatpush1.bf16.msra.mxu0 %v13203
    %13243 = vmatprep.subr.bf16.mxu0 0
    %13244 = vmatpush1.bf16.msra.mxu0 %v13204
    %13245 = vmatprep.subr.bf16.mxu0 0
    %13246 = vmatpush1.bf16.msra.mxu0 %v13205
    %13247 = vmatprep.subr.bf16.mxu0 0
    %13248 = vmatpush1.bf16.msra.mxu0 %v13206
    %13249 = vmatprep.subr.bf16.mxu0 0
    %13250 = vmatpush1.bf16.msra.mxu0 %v13207
    %13251 = vmatprep.subr.bf16.mxu0 0
    %13252 = vmatpush1.bf16.msra.mxu0 %v13208
    %13253 = vmatprep.subr.bf16.mxu0 0
    %13254 = vmatpush1.bf16.msra.mxu0 %v13209
    %13255 = vmatprep.subr.bf16.mxu0 0
    %13256 = vmatpush1.bf16.msra.mxu0 %v13210
    %13257 = vmatprep.subr.bf16.mxu0 0
    %13258 = vmatpush1.bf16.msra.mxu0 %v13211
    %13259 = vmatprep.subr.bf16.mxu0 0
    %13260 = vmatpush1.bf16.msra.mxu0 %v13212
    %13261 = vmatprep.mubr.bf16.mxu0 %v13131
    %13262 = vmatmul.mubr.bf16.gmra.mrb[0].mxu0 %v13128
    %v13263 = vpop.f32.mrb[0].mxu0
    %v13264 = vadd.f32 0.0, %v13263
    %v13265 = vpop.f32.mrb[0].mxu0
    %v13266 = vpop.f32.mrb[0].mxu0
    %v13267 = vpop.f32.mrb[0].mxu0
    %13268 = vdwg.mxu0
    %v13270 = vlaneseq
    %v13271 = vshrl.u32 %v13270, 7
    %v13272 = vsub.s32 0, %v13271
    %v13273 = vrot.slane %v13124, %v13272
    %v13275 = vadd.f32 %v13264, %v13273
    %vm13276 = vcmask 123904
    %13277 = vst.msk [vmem:[#allocation2] sm:$0x3] %vm13276, %v13275
    // Predicated region
    $region46: #{convnet28_forward.1} parent=1 // pred_check
      _
    $region47: #{convnet28_forward.1} parent=1 // pred_check_branch
      %13279 = sbr.rel (0) target = $region49
    $region48: #{convnet28_forward.1} parent=1 // pred_region
      %s13281 = ssub.s32 32, 32
      %13282 = vsyncadd [#allocation3], %s13281
      %s13284 = sshll.u32 [#allocation2], 4
      %s13285 = int_to_ptr.vmem [resolvable:$true] %s13284
      %13287 = dma.vmem_to_hbm [thread:$0]  %s13285, 32, %s11, [#allocation3]
    $region49: #{convnet28_forward.1} parent=1 // pred_fallthru
      _
    // Predicated region
    $region50: #{convnet28_forward.1} parent=1 // pred_check
      _
    $region51: #{convnet28_forward.1} parent=1 // pred_check_branch
      %13289 = sbr.rel (0) target = $region53
    $region52: #{convnet28_forward.1} parent=1 // pred_region
      %13290 = dma.done [#allocation3], 32
    $region53: #{convnet28_forward.1} parent=1 // pred_fallthru
      _
    %13291 = vsyncpa [#allocation3], 1

</llo_original>
